<compile_context>
chip_gen: v5e
topology: v5e:2x2
jax: 0.10.0
libtpu: 0.0.40
codegen_flags: <defaults>
</compile_context>

<pallas_src>
import functools

import jax
import jax.numpy as jnp
from jax.experimental import pallas as pl
from jax.experimental.pallas import tpu as pltpu


# ------------------------------------------------------------------ utilities
def _rup(v, m):
    return (v + m - 1) // m * m


# --------------------------------------------------------------------------- #
# Fused kernel: per-phase matmul -> train-mode BatchNorm -> optional LeakyReLU #
#                                                                              #
#   grid = (P,)   P = number of "phase" row groups sharing the BN statistics   #
#   x   : [P, Mp, K]   bf16 patches   (block (1, Mp, K))                       #
#   w   : [P, K,  Np]  bf16 weights   (block (1, K,  Np))                      #
#   out : [P, Mp, Np]  bf16           (single resident block, written at end)  #
#   acc : [P, Mp, Np]  f32 VMEM scratch accumulator                            #
#                                                                              #
# Padded rows / channels are exactly zero, so summing the full accumulator and #
# dividing by the true element count gives exact BN statistics.                #
# --------------------------------------------------------------------------- #
def _fused_matmul_bn_kernel(n_true, neg_slope, apply_act,
                            x_ref, w_ref, o_ref, acc_ref):
    p = pl.program_id(0)
    acc_ref[p] = jnp.dot(x_ref[0], w_ref[0],
                         preferred_element_type=jnp.float32)

    @pl.when(p == pl.num_programs(0) - 1)
    def _():
        a = acc_ref[...]                                        # [P, Mp, Np] f32
        inv_n = 1.0 / float(n_true)
        mean = jnp.sum(a, axis=(0, 1), keepdims=True) * inv_n
        ex2 = jnp.sum(a * a, axis=(0, 1), keepdims=True) * inv_n
        var = jnp.maximum(ex2 - mean * mean, 0.0)               # biased (train) var
        inv_std = jax.lax.rsqrt(var + 1e-5)
        y = (a - mean) * inv_std
        if apply_act:
            y = jnp.where(y >= 0, y, y * neg_slope)             # LeakyReLU(0.2)
        o_ref[...] = y.astype(o_ref.dtype)


def fused_matmul_bn(patches, wstack, n_true, apply_act):
    """patches [P, Mp, K] bf16 @ wstack [P, K, Np] bf16 -> BN(+act) [P, Mp, Np] bf16."""
    P, Mp, K = patches.shape
    Np = wstack.shape[2]
    return pl.pallas_call(
        functools.partial(_fused_matmul_bn_kernel, n_true, 0.2, apply_act),
        out_shape=jax.ShapeDtypeStruct((P, Mp, Np), jnp.bfloat16),
        grid_spec=pltpu.PrefetchScalarGridSpec(
            num_scalar_prefetch=0,
            grid=(P,),
            in_specs=[pl.BlockSpec((1, Mp, K), lambda p: (p, 0, 0)),
                      pl.BlockSpec((1, K, Np), lambda p: (p, 0, 0))],
            out_specs=pl.BlockSpec((P, Mp, Np), lambda p: (0, 0, 0)),
            scratch_shapes=[pltpu.VMEM((P, Mp, Np), jnp.float32)]),
        compiler_params=pltpu.CompilerParams(
            dimension_semantics=("arbitrary",)),
    )(patches, wstack)


# --------------------------------------------------------------------------- #
# Final 3x3 conv:  matmul + bias + tanh  (single block, no BN).                #
# --------------------------------------------------------------------------- #
def _matmul_bias_tanh_kernel(x_ref, w_ref, b_ref, o_ref):
    acc = jnp.dot(x_ref[...], w_ref[...], preferred_element_type=jnp.float32)
    o_ref[...] = jnp.tanh(acc + b_ref[...])


def matmul_bias_tanh(x2d, wmat, bias_row):
    M, K = x2d.shape
    Np = wmat.shape[1]
    Mp = _rup(M, 16)
    xp = jnp.pad(x2d, ((0, Mp - M), (0, 0)))
    out = pl.pallas_call(
        _matmul_bias_tanh_kernel,
        out_shape=jax.ShapeDtypeStruct((Mp, Np), jnp.float32),
    )(xp, wmat, bias_row)
    return out[:M]


# ------------------------------------------------------- phase decomposition
def _convt_phase_patches(x_nhwc):
    """2x2-window patches of the (1-padded) input, one group per output phase.

    Output phase (ry, rx) at (py, px) reads input rows {py+ry-1, py+ry},
    cols {px+rx-1, px+rx}.  Returns ([4, Mp, 4*C] bf16, M = B*H*W)."""
    B, H, W, C = x_nhwc.shape
    xp = jnp.pad(x_nhwc, ((0, 0), (1, 1), (1, 1), (0, 0)))
    groups = []
    for ry in (0, 1):
        for rx in (0, 1):
            parts = [xp[:, ry + dy:ry + dy + H, rx + dx:rx + dx + W, :]
                     for dy in (0, 1) for dx in (0, 1)]
            groups.append(
                jnp.concatenate(parts, axis=-1).reshape(B * H * W, 4 * C))
    patches = jnp.stack(groups, axis=0)                       # [4, M, 4C]
    M = B * H * W
    Mp = _rup(M, 16)
    patches = jnp.pad(patches, ((0, 0), (0, Mp - M), (0, 0)))
    return patches.astype(jnp.bfloat16), M


def _convt_phase_weights(w):
    """ConvTranspose2d weight [Cin, Cout, 4, 4] -> per-phase [4, 4*Cin, Cout].

    Window tap (dy, dx) of output phase (ry, rx) multiplies kernel element
    (ky, kx) = (3 - ry - 2*dy, 3 - rx - 2*dx)."""
    mats = []
    for ry in (0, 1):
        for rx in (0, 1):
            taps = [w[:, :, 3 - ry - 2 * dy, 3 - rx - 2 * dx]  # each [Cin, Cout]
                    for dy in (0, 1) for dx in (0, 1)]
            mats.append(jnp.concatenate(taps, axis=0))         # [4*Cin, Cout]
    return jnp.stack(mats, axis=0)                             # [4, 4*Cin, Cout]


def _convt_unshuffle(y, B, H, W, Cout):
    """[4, Mp, Np] kernel output -> [B, 2H, 2W, Cout] (interleave the phases)."""
    M = B * H * W
    y = y[:, :M, :Cout].reshape(2, 2, B, H, W, Cout)           # [ry, rx, B, H, W, C]
    y = jnp.transpose(y, (2, 3, 0, 4, 1, 5))                   # [B, H, ry, W, rx, C]
    return y.reshape(B, 2 * H, 2 * W, Cout)


# ------------------------------------------------------------ weight prep
def prepare_params(params):
    """Pad / reorder / cast all weights once (outside the jitted forward)."""
    bf16 = jnp.bfloat16
    F, in_chans = params["fc_w"].shape
    Kp, Np = _rup(in_chans, 128), _rup(F, 128)
    fc_w = jnp.pad(params["fc_w"].T, ((0, Kp - in_chans), (0, Np - F)))
    prep = {"fc_w": fc_w.astype(bf16)[None]}                   # [1, Kp, Np]
    for name in ("ct1", "ct2", "ct3", "ct4"):
        prep[name + "_w"] = _convt_phase_weights(
            params[name + "_w"]).astype(bf16)                  # [4, 4*Cin, Cout]
    w = params["conv_w"]                                       # [Cout=3, Cin, 3, 3]
    Cout, Cin = w.shape[0], w.shape[1]
    wmat = jnp.transpose(w, (2, 3, 1, 0)).reshape(9 * Cin, Cout)
    Ncp = _rup(Cout, 128)
    prep["conv_w"] = jnp.pad(wmat, ((0, 0), (0, Ncp - Cout))).astype(bf16)
    prep["conv_b"] = jnp.pad(params["conv_b"], (0, Ncp - Cout)).reshape(1, Ncp)
    return prep


# ---------------------------------------------------------------- forward
def generator_forward(x, prep):
    B, in_chans = x.shape
    F = prep["ct1_w"].shape[1] // 4            # fc out_features = convT1 in_channels

    # fc -> BN (no activation).  fc bias cancels under the parameter-free BN.
    Kp = prep["fc_w"].shape[1]
    Mp = _rup(B, 16)
    xfc = jnp.pad(x.astype(jnp.bfloat16),
                  ((0, Mp - B), (0, Kp - in_chans)))[None]     # [1, Mp, Kp]
    h = fused_matmul_bn(xfc, prep["fc_w"], n_true=B, apply_act=False)
    h = h[0, :B, :F].reshape(B, 1, 1, F)                       # NHWC 1x1 map

    # 4x (ConvTranspose2d -> BN -> LeakyReLU), each as ONE fused kernel.
    for name in ("ct1", "ct2", "ct3", "ct4"):
        w = prep[name + "_w"]                                  # [4, 4*Cin, Cout]
        Cout = w.shape[2]
        B_, H, W, _ = h.shape
        patches, M = _convt_phase_patches(h)                   # [4, Mp, 4*Cin]
        y = fused_matmul_bn(patches, w, n_true=4 * M, apply_act=True)
        h = _convt_unshuffle(y, B_, H, W, Cout)                # [B, 2H, 2W, Cout]

    # final Conv2d 3x3 (pad 1) + bias + tanh (fused in one small kernel).
    # TODO(synk): could be folded into the ct4 epilogue to save one more launch.
    B_, H, W, C = h.shape
    z = jnp.pad(h, ((0, 0), (1, 1), (1, 1), (0, 0)))
    patches = jnp.concatenate(
        [z[:, ky:ky + H, kx:kx + W, :] for ky in range(3) for kx in range(3)],
        axis=-1).reshape(B_ * H * W, 9 * C)
    out = matmul_bias_tanh(patches, prep["conv_w"], prep["conv_b"])
    out = out[:, :3].reshape(B_, H, W, 3)
    return jnp.transpose(out, (0, 3, 1, 2))                    # NCHW


# ------------------------------------------------ pure-JAX reference (check)
def _ref_bn(x, axes):
    mean = jnp.mean(x, axis=axes, keepdims=True)
    var = jnp.mean(jnp.square(x - mean), axis=axes, keepdims=True)   # biased
    return (x - mean) * jax.lax.rsqrt(var + 1e-5)


def _ref_conv_transpose(x_nhwc, w, b):
    # ConvTranspose2d(k=4, s=2, p=1) == zero-insert (lhs_dilation) + pad k-1-p
    # + correlation with the spatially flipped kernel.
    wf = jnp.transpose(w[:, :, ::-1, ::-1], (2, 3, 0, 1))      # HWIO
    y = jax.lax.conv_general_dilated(
        x_nhwc, wf, window_strides=(1, 1), padding=[(2, 2), (2, 2)],
        lhs_dilation=(2, 2), dimension_numbers=("NHWC", "HWIO", "NHWC"))
    return y + b


def _ref_conv(x_nhwc, w, b):
    wf = jnp.transpose(w, (2, 3, 1, 0))                        # HWIO
    y = jax.lax.conv_general_dilated(
        x_nhwc, wf, window_strides=(1, 1), padding=[(1, 1), (1, 1)],
        dimension_numbers=("NHWC", "HWIO", "NHWC"))
    return y + b


def reference_forward(x, params):
    B = x.shape[0]
    h = x @ params["fc_w"].T + params["fc_b"]
    h = _ref_bn(h, axes=(0,))
    h = h.reshape(B, 1, 1, h.shape[1])
    for name in ("ct1", "ct2", "ct3", "ct4"):
        h = _ref_conv_transpose(h, params[name + "_w"], params[name + "_b"])
        h = _ref_bn(h, axes=(0, 1, 2))
        h = jnp.where(h >= 0, h, 0.2 * h)
    h = _ref_conv(h, params["conv_w"], params["conv_b"])
    h = jnp.tanh(h)
    return jnp.transpose(h, (0, 3, 1, 2))


# ----------------------------------------------------------------- parameters
def init_params(key, in_chans, out_features):
    ks = jax.random.split(key, 12)

    def lin(k, shape, fan_in):
        return jax.random.uniform(k, shape, jnp.float32,
                                  -1.0 / jnp.sqrt(fan_in), 1.0 / jnp.sqrt(fan_in))

    F_ = out_features
    return {
        "fc_w":  lin(ks[0], (F_, in_chans), in_chans),
        "fc_b":  lin(ks[1], (F_,), in_chans),
        # ConvTranspose2d weights: [Cin, Cout, 4, 4]
        "ct1_w": lin(ks[2], (F_, 512, 4, 4), F_ * 16),
        "ct1_b": lin(ks[3], (512,), F_ * 16),
        "ct2_w": lin(ks[4], (512, 256, 4, 4), 512 * 16),
        "ct2_b": lin(ks[5], (256,), 512 * 16),
        "ct3_w": lin(ks[6], (256, 256, 4, 4), 256 * 16),
        "ct3_b": lin(ks[7], (256,), 256 * 16),
        "ct4_w": lin(ks[8], (256, 128, 4, 4), 256 * 16),
        "ct4_b": lin(ks[9], (128,), 256 * 16),
        # Conv2d weight: [Cout, Cin, 3, 3]
        "conv_w": lin(ks[10], (3, 128, 3, 3), 128 * 9),
        "conv_b": lin(ks[11], (3,), 128 * 9),
    }


if __name__ == "__main__":
    BATCH, IN_CHANS, OUT_FEATURES = 2, 32, 64

    key = jax.random.PRNGKey(0)
    k_x, k_p = jax.random.split(key)
    x = jax.random.normal(k_x, (BATCH, IN_CHANS), jnp.float32)   # latent input
    params = init_params(k_p, IN_CHANS, OUT_FEATURES)

    prep = prepare_params(params)                  # one-time weight prep (bf16)
    out = jax.jit(generator_forward)(x, prep)
    out = jax.block_until_ready(out)

    assert out.shape == (BATCH, 3, 16, 16), out.shape
    assert bool(jnp.all(jnp.isfinite(out)))
    assert bool(jnp.all(jnp.abs(out) <= 1.0 + 1e-5))             # tanh range

    # Correctness vs. a pure-JAX (lax.conv) reference using the same
    # bf16-rounded weights/inputs (tolerance covers bf16 activation storage).
    quant = lambda a: a.astype(jnp.bfloat16).astype(jnp.float32)
    params_q = jax.tree_util.tree_map(quant, params)
    ref = jax.jit(reference_forward)(quant(x), params_q)
    ref = jax.block_until_ready(ref)
    diff = jnp.abs(out - ref)
    max_err = float(jnp.max(diff))
    mean_err = float(jnp.mean(diff))
    assert max_err < 0.2 and mean_err < 0.03, (max_err, mean_err)

    print("KERNEL_OK")
</pallas_src>

<mosaic_0001>
module attributes {stable_mosaic.version = 11 : i64} {
  func.func @_fused_matmul_bn_kernel(%arg0: i32, %arg1: memref<1x16x128xbf16, #tpu.memory_space<vmem>>, %arg2: memref<1x128x128xbf16, #tpu.memory_space<vmem>>, %arg3: memref<1x16x128xbf16, #tpu.memory_space<vmem>>, %arg4: memref<1x16x128xf32, #tpu.memory_space<vmem>>) attributes {dimension_semantics = [#tpu.dimension_semantics<arbitrary>], iteration_bounds = array<i64: 1>, scalar_prefetch = 0 : i64, scratch_operands = 1 : i64, tpu.core_type = #tpu.core_type<tc>, window_params = [{transform_indices = @transform_0, window_bounds = array<i64: 1, 16, 128>}, {transform_indices = @transform_1, window_bounds = array<i64: 1, 128, 128>}, {pipeline_mode = #tpu.pipeline_mode<synchronous>, transform_indices = @transform_2, window_bounds = array<i64: 1, 16, 128>}]} {
    %c0 = arith.constant 0 : index
    %c0_0 = arith.constant 0 : index
    %c0_1 = arith.constant 0 : index
    %0 = vector.load %arg1[%c0, %c0_0, %c0_1] : memref<1x16x128xbf16, #tpu.memory_space<vmem>>, vector<1x16x128xbf16>
    %1 = vector.shape_cast %0 : vector<1x16x128xbf16> to vector<16x128xbf16>
    %c0_2 = arith.constant 0 : index
    %c0_3 = arith.constant 0 : index
    %c0_4 = arith.constant 0 : index
    %2 = vector.load %arg2[%c0_2, %c0_3, %c0_4] : memref<1x128x128xbf16, #tpu.memory_space<vmem>>, vector<1x128x128xbf16>
    %3 = vector.shape_cast %2 : vector<1x128x128xbf16> to vector<128x128xbf16>
    %cst = arith.constant dense<0.000000e+00> : vector<16x128xf32>
    %4 = tpu.matmul %1, %3, %cst {dimension_numbers = #tpu.dot_dimension_numbers<[1], [0], [0], [1], [0, 0, 1, 1], [], []>} : vector<16x128xbf16>, vector<128x128xbf16>, vector<16x128xf32> -> vector<16x128xf32>
    %5 = arith.index_cast %arg0 : i32 to index
    %c0_5 = arith.constant 0 : index
    %c0_6 = arith.constant 0 : index
    %6 = vector.load %arg4[%5, %c0_5, %c0_6] : memref<1x16x128xf32, #tpu.memory_space<vmem>>, vector<1x16x128xf32>
    %7 = vector.shape_cast %6 : vector<1x16x128xf32> to vector<16x128xf32>
    %8 = vector.shape_cast %4 : vector<16x128xf32> to vector<1x16x128xf32>
    tpu.vector_store %arg4[%5, %c0_5, %c0_6], %8 {strides = array<i32>} : memref<1x16x128xf32, #tpu.memory_space<vmem>>, vector<1x16x128xf32>,
    %c0_i32 = arith.constant 0 : i32
    %9 = arith.cmpi eq, %arg0, %c0_i32 : i32
    %10 = arith.extui %9 : i1 to i32
    %c0_i32_7 = arith.constant 0 : i32
    %11 = arith.cmpi ne, %10, %c0_i32_7 : i32
    scf.if %11 {
      %c0_8 = arith.constant 0 : index
      %c0_9 = arith.constant 0 : index
      %c0_10 = arith.constant 0 : index
      %12 = vector.load %arg4[%c0_8, %c0_9, %c0_10] : memref<1x16x128xf32, #tpu.memory_space<vmem>>, vector<1x16x128xf32>
      %cst_11 = arith.constant dense<0.000000e+00> : vector<128xf32>
      %13 = vector.multi_reduction <add>, %12, %cst_11 [0, 1] : vector<1x16x128xf32> to vector<128xf32>
      %14 = vector.shape_cast %13 : vector<128xf32> to vector<1x1x128xf32>
      %cst_12 = arith.constant 5.000000e-01 : f32
      %15 = vector.broadcast %cst_12 : f32 to vector<1x1x128xf32>
      %16 = arith.mulf %14, %15 : vector<1x1x128xf32>
      %17 = arith.mulf %12, %12 : vector<1x16x128xf32>
      %cst_13 = arith.constant dense<0.000000e+00> : vector<128xf32>
      %18 = vector.multi_reduction <add>, %17, %cst_13 [0, 1] : vector<1x16x128xf32> to vector<128xf32>
      %19 = vector.shape_cast %18 : vector<128xf32> to vector<1x1x128xf32>
      %cst_14 = arith.constant 5.000000e-01 : f32
      %20 = vector.broadcast %cst_14 : f32 to vector<1x1x128xf32>
      %21 = arith.mulf %19, %20 : vector<1x1x128xf32>
      %22 = arith.mulf %16, %16 : vector<1x1x128xf32>
      %23 = arith.subf %21, %22 : vector<1x1x128xf32>
      %cst_15 = arith.constant 0.000000e+00 : f32
      %24 = vector.broadcast %cst_15 : f32 to vector<1x1x128xf32>
      %25 = arith.maximumf %23, %24 : vector<1x1x128xf32>
      %cst_16 = arith.constant 9.99999974E-6 : f32
      %26 = vector.broadcast %cst_16 : f32 to vector<1x1x128xf32>
      %27 = arith.addf %25, %26 : vector<1x1x128xf32>
      %28 = math.rsqrt %27 : vector<1x1x128xf32>
      %29 = vector.broadcast %16 : vector<1x1x128xf32> to vector<1x16x128xf32>
      %30 = arith.subf %12, %29 : vector<1x16x128xf32>
      %31 = vector.broadcast %28 : vector<1x1x128xf32> to vector<1x16x128xf32>
      %32 = arith.mulf %30, %31 : vector<1x16x128xf32>
      %33 = arith.truncf %32 : vector<1x16x128xf32> to vector<1x16x128xbf16>
      %c0_17 = arith.constant 0 : index
      %c0_18 = arith.constant 0 : index
      %c0_19 = arith.constant 0 : index
      %34 = vector.load %arg3[%c0_17, %c0_18, %c0_19] : memref<1x16x128xbf16, #tpu.memory_space<vmem>>, vector<1x16x128xbf16>
      tpu.vector_store %arg3[%c0_17, %c0_18, %c0_19], %33 {strides = array<i32>} : memref<1x16x128xbf16, #tpu.memory_space<vmem>>, vector<1x16x128xbf16>,
    } else {
    }
    return
  }
  func.func @transform_0(%arg0: i32) -> (i32, i32, i32) {
    %c0_i32 = arith.constant 0 : i32
    %c0_i32_0 = arith.constant 0 : i32
    %c0_i32_1 = arith.constant 0 : i32
    return %arg0, %c0_i32, %c0_i32_0 : i32, i32, i32
  }
  func.func @transform_1(%arg0: i32) -> (i32, i32, i32) {
    %c0_i32 = arith.constant 0 : i32
    %c0_i32_0 = arith.constant 0 : i32
    %c0_i32_1 = arith.constant 0 : i32
    return %arg0, %c0_i32, %c0_i32_0 : i32, i32, i32
  }
  func.func @transform_2(%arg0: i32) -> (i32, i32, i32) {
    %c0_i32 = arith.constant 0 : i32
    %c0_i32_0 = arith.constant 0 : i32
    %c0_i32_1 = arith.constant 0 : i32
    %c0_i32_2 = arith.constant 0 : i32
    return %c0_i32, %c0_i32_0, %c0_i32_1 : i32, i32, i32
  }
}

module attributes {stable_mosaic.version = 11 : i64} {
  func.func @_fused_matmul_bn_kernel(%arg0: i32, %arg1: memref<1x16x256xbf16, #tpu.memory_space<vmem>>, %arg2: memref<1x256x512xbf16, #tpu.memory_space<vmem>>, %arg3: memref<4x16x512xbf16, #tpu.memory_space<vmem>>, %arg4: memref<4x16x512xf32, #tpu.memory_space<vmem>>) attributes {dimension_semantics = [#tpu.dimension_semantics<arbitrary>], iteration_bounds = array<i64: 4>, scalar_prefetch = 0 : i64, scratch_operands = 1 : i64, tpu.core_type = #tpu.core_type<tc>, window_params = [{transform_indices = @transform_0, window_bounds = array<i64: 1, 16, 256>}, {transform_indices = @transform_1, window_bounds = array<i64: 1, 256, 512>}, {pipeline_mode = #tpu.pipeline_mode<synchronous>, transform_indices = @transform_2, window_bounds = array<i64: 4, 16, 512>}]} {
    %c0 = arith.constant 0 : index
    %c0_0 = arith.constant 0 : index
    %c0_1 = arith.constant 0 : index
    %0 = vector.load %arg1[%c0, %c0_0, %c0_1] : memref<1x16x256xbf16, #tpu.memory_space<vmem>>, vector<1x16x256xbf16>
    %1 = vector.shape_cast %0 : vector<1x16x256xbf16> to vector<16x256xbf16>
    %c0_2 = arith.constant 0 : index
    %c0_3 = arith.constant 0 : index
    %c0_4 = arith.constant 0 : index
    %2 = vector.load %arg2[%c0_2, %c0_3, %c0_4] : memref<1x256x512xbf16, #tpu.memory_space<vmem>>, vector<1x256x512xbf16>
    %3 = vector.shape_cast %2 : vector<1x256x512xbf16> to vector<256x512xbf16>
    %cst = arith.constant dense<0.000000e+00> : vector<16x512xf32>
    %4 = tpu.matmul %1, %3, %cst {dimension_numbers = #tpu.dot_dimension_numbers<[1], [0], [0], [1], [0, 0, 1, 1], [], []>} : vector<16x256xbf16>, vector<256x512xbf16>, vector<16x512xf32> -> vector<16x512xf32>
    %5 = arith.index_cast %arg0 : i32 to index
    %c0_5 = arith.constant 0 : index
    %c0_6 = arith.constant 0 : index
    %6 = vector.load %arg4[%5, %c0_5, %c0_6] : memref<4x16x512xf32, #tpu.memory_space<vmem>>, vector<1x16x512xf32>
    %7 = vector.shape_cast %6 : vector<1x16x512xf32> to vector<16x512xf32>
    %8 = vector.shape_cast %4 : vector<16x512xf32> to vector<1x16x512xf32>
    tpu.vector_store %arg4[%5, %c0_5, %c0_6], %8 {strides = array<i32>} : memref<4x16x512xf32, #tpu.memory_space<vmem>>, vector<1x16x512xf32>,
    %c3_i32 = arith.constant 3 : i32
    %9 = arith.cmpi eq, %arg0, %c3_i32 : i32
    %10 = arith.extui %9 : i1 to i32
    %c0_i32 = arith.constant 0 : i32
    %11 = arith.cmpi ne, %10, %c0_i32 : i32
    scf.if %11 {
      %c0_7 = arith.constant 0 : index
      %c0_8 = arith.constant 0 : index
      %c0_9 = arith.constant 0 : index
      %12 = vector.load %arg4[%c0_7, %c0_8, %c0_9] : memref<4x16x512xf32, #tpu.memory_space<vmem>>, vector<4x16x512xf32>
      %cst_10 = arith.constant dense<0.000000e+00> : vector<512xf32>
      %13 = vector.multi_reduction <add>, %12, %cst_10 [0, 1] : vector<4x16x512xf32> to vector<512xf32>
      %14 = vector.shape_cast %13 : vector<512xf32> to vector<1x1x512xf32>
      %cst_11 = arith.constant 1.250000e-01 : f32
      %15 = vector.broadcast %cst_11 : f32 to vector<1x1x512xf32>
      %16 = arith.mulf %14, %15 : vector<1x1x512xf32>
      %17 = arith.mulf %12, %12 : vector<4x16x512xf32>
      %cst_12 = arith.constant dense<0.000000e+00> : vector<512xf32>
      %18 = vector.multi_reduction <add>, %17, %cst_12 [0, 1] : vector<4x16x512xf32> to vector<512xf32>
      %19 = vector.shape_cast %18 : vector<512xf32> to vector<1x1x512xf32>
      %cst_13 = arith.constant 1.250000e-01 : f32
      %20 = vector.broadcast %cst_13 : f32 to vector<1x1x512xf32>
      %21 = arith.mulf %19, %20 : vector<1x1x512xf32>
      %22 = arith.mulf %16, %16 : vector<1x1x512xf32>
      %23 = arith.subf %21, %22 : vector<1x1x512xf32>
      %cst_14 = arith.constant 0.000000e+00 : f32
      %24 = vector.broadcast %cst_14 : f32 to vector<1x1x512xf32>
      %25 = arith.maximumf %23, %24 : vector<1x1x512xf32>
      %cst_15 = arith.constant 9.99999974E-6 : f32
      %26 = vector.broadcast %cst_15 : f32 to vector<1x1x512xf32>
      %27 = arith.addf %25, %26 : vector<1x1x512xf32>
      %28 = math.rsqrt %27 : vector<1x1x512xf32>
      %29 = vector.broadcast %16 : vector<1x1x512xf32> to vector<4x16x512xf32>
      %30 = arith.subf %12, %29 : vector<4x16x512xf32>
      %31 = vector.broadcast %28 : vector<1x1x512xf32> to vector<4x16x512xf32>
      %32 = arith.mulf %30, %31 : vector<4x16x512xf32>
      %cst_16 = arith.constant 0.000000e+00 : f32
      %33 = vector.broadcast %cst_16 : f32 to vector<4x16x512xf32>
      %34 = arith.cmpf oge, %32, %33 : vector<4x16x512xf32>
      %cst_17 = arith.constant 2.000000e-01 : f32
      %35 = vector.broadcast %cst_17 : f32 to vector<4x16x512xf32>
      %36 = arith.mulf %32, %35 : vector<4x16x512xf32>
      %37 = arith.select %34, %32, %36 : vector<4x16x512xi1>, vector<4x16x512xf32>
      %38 = arith.truncf %37 : vector<4x16x512xf32> to vector<4x16x512xbf16>
      %c0_18 = arith.constant 0 : index
      %c0_19 = arith.constant 0 : index
      %c0_20 = arith.constant 0 : index
      %39 = vector.load %arg3[%c0_18, %c0_19, %c0_20] : memref<4x16x512xbf16, #tpu.memory_space<vmem>>, vector<4x16x512xbf16>
      tpu.vector_store %arg3[%c0_18, %c0_19, %c0_20], %38 {strides = array<i32>} : memref<4x16x512xbf16, #tpu.memory_space<vmem>>, vector<4x16x512xbf16>,
    } else {
    }
    return
  }
  func.func @transform_0(%arg0: i32) -> (i32, i32, i32) {
    %c0_i32 = arith.constant 0 : i32
    %c0_i32_0 = arith.constant 0 : i32
    %c0_i32_1 = arith.constant 0 : i32
    return %arg0, %c0_i32, %c0_i32_0 : i32, i32, i32
  }
  func.func @transform_1(%arg0: i32) -> (i32, i32, i32) {
    %c0_i32 = arith.constant 0 : i32
    %c0_i32_0 = arith.constant 0 : i32
    %c0_i32_1 = arith.constant 0 : i32
    return %arg0, %c0_i32, %c0_i32_0 : i32, i32, i32
  }
  func.func @transform_2(%arg0: i32) -> (i32, i32, i32) {
    %c0_i32 = arith.constant 0 : i32
    %c0_i32_0 = arith.constant 0 : i32
    %c0_i32_1 = arith.constant 0 : i32
    %c0_i32_2 = arith.constant 0 : i32
    return %c0_i32, %c0_i32_0, %c0_i32_1 : i32, i32, i32
  }
}

module attributes {stable_mosaic.version = 11 : i64} {
  func.func @_fused_matmul_bn_kernel(%arg0: i32, %arg1: memref<1x16x2048xbf16, #tpu.memory_space<vmem>>, %arg2: memref<1x2048x256xbf16, #tpu.memory_space<vmem>>, %arg3: memref<4x16x256xbf16, #tpu.memory_space<vmem>>, %arg4: memref<4x16x256xf32, #tpu.memory_space<vmem>>) attributes {dimension_semantics = [#tpu.dimension_semantics<arbitrary>], iteration_bounds = array<i64: 4>, scalar_prefetch = 0 : i64, scratch_operands = 1 : i64, tpu.core_type = #tpu.core_type<tc>, window_params = [{transform_indices = @transform_0, window_bounds = array<i64: 1, 16, 2048>}, {transform_indices = @transform_1, window_bounds = array<i64: 1, 2048, 256>}, {pipeline_mode = #tpu.pipeline_mode<synchronous>, transform_indices = @transform_2, window_bounds = array<i64: 4, 16, 256>}]} {
    %c0 = arith.constant 0 : index
    %c0_0 = arith.constant 0 : index
    %c0_1 = arith.constant 0 : index
    %0 = vector.load %arg1[%c0, %c0_0, %c0_1] : memref<1x16x2048xbf16, #tpu.memory_space<vmem>>, vector<1x16x2048xbf16>
    %1 = vector.shape_cast %0 : vector<1x16x2048xbf16> to vector<16x2048xbf16>
    %c0_2 = arith.constant 0 : index
    %c0_3 = arith.constant 0 : index
    %c0_4 = arith.constant 0 : index
    %2 = vector.load %arg2[%c0_2, %c0_3, %c0_4] : memref<1x2048x256xbf16, #tpu.memory_space<vmem>>, vector<1x2048x256xbf16>
    %3 = vector.shape_cast %2 : vector<1x2048x256xbf16> to vector<2048x256xbf16>
    %cst = arith.constant dense<0.000000e+00> : vector<16x256xf32>
    %4 = tpu.matmul %1, %3, %cst {dimension_numbers = #tpu.dot_dimension_numbers<[1], [0], [0], [1], [0, 0, 1, 1], [], []>} : vector<16x2048xbf16>, vector<2048x256xbf16>, vector<16x256xf32> -> vector<16x256xf32>
    %5 = arith.index_cast %arg0 : i32 to index
    %c0_5 = arith.constant 0 : index
    %c0_6 = arith.constant 0 : index
    %6 = vector.load %arg4[%5, %c0_5, %c0_6] : memref<4x16x256xf32, #tpu.memory_space<vmem>>, vector<1x16x256xf32>
    %7 = vector.shape_cast %6 : vector<1x16x256xf32> to vector<16x256xf32>
    %8 = vector.shape_cast %4 : vector<16x256xf32> to vector<1x16x256xf32>
    tpu.vector_store %arg4[%5, %c0_5, %c0_6], %8 {strides = array<i32>} : memref<4x16x256xf32, #tpu.memory_space<vmem>>, vector<1x16x256xf32>,
    %c3_i32 = arith.constant 3 : i32
    %9 = arith.cmpi eq, %arg0, %c3_i32 : i32
    %10 = arith.extui %9 : i1 to i32
    %c0_i32 = arith.constant 0 : i32
    %11 = arith.cmpi ne, %10, %c0_i32 : i32
    scf.if %11 {
      %c0_7 = arith.constant 0 : index
      %c0_8 = arith.constant 0 : index
      %c0_9 = arith.constant 0 : index
      %12 = vector.load %arg4[%c0_7, %c0_8, %c0_9] : memref<4x16x256xf32, #tpu.memory_space<vmem>>, vector<4x16x256xf32>
      %cst_10 = arith.constant dense<0.000000e+00> : vector<256xf32>
      %13 = vector.multi_reduction <add>, %12, %cst_10 [0, 1] : vector<4x16x256xf32> to vector<256xf32>
      %14 = vector.shape_cast %13 : vector<256xf32> to vector<1x1x256xf32>
      %cst_11 = arith.constant 3.125000e-02 : f32
      %15 = vector.broadcast %cst_11 : f32 to vector<1x1x256xf32>
      %16 = arith.mulf %14, %15 : vector<1x1x256xf32>
      %17 = arith.mulf %12, %12 : vector<4x16x256xf32>
      %cst_12 = arith.constant dense<0.000000e+00> : vector<256xf32>
      %18 = vector.multi_reduction <add>, %17, %cst_12 [0, 1] : vector<4x16x256xf32> to vector<256xf32>
      %19 = vector.shape_cast %18 : vector<256xf32> to vector<1x1x256xf32>
      %cst_13 = arith.constant 3.125000e-02 : f32
      %20 = vector.broadcast %cst_13 : f32 to vector<1x1x256xf32>
      %21 = arith.mulf %19, %20 : vector<1x1x256xf32>
      %22 = arith.mulf %16, %16 : vector<1x1x256xf32>
      %23 = arith.subf %21, %22 : vector<1x1x256xf32>
      %cst_14 = arith.constant 0.000000e+00 : f32
      %24 = vector.broadcast %cst_14 : f32 to vector<1x1x256xf32>
      %25 = arith.maximumf %23, %24 : vector<1x1x256xf32>
      %cst_15 = arith.constant 9.99999974E-6 : f32
      %26 = vector.broadcast %cst_15 : f32 to vector<1x1x256xf32>
      %27 = arith.addf %25, %26 : vector<1x1x256xf32>
      %28 = math.rsqrt %27 : vector<1x1x256xf32>
      %29 = vector.broadcast %16 : vector<1x1x256xf32> to vector<4x16x256xf32>
      %30 = arith.subf %12, %29 : vector<4x16x256xf32>
      %31 = vector.broadcast %28 : vector<1x1x256xf32> to vector<4x16x256xf32>
      %32 = arith.mulf %30, %31 : vector<4x16x256xf32>
      %cst_16 = arith.constant 0.000000e+00 : f32
      %33 = vector.broadcast %cst_16 : f32 to vector<4x16x256xf32>
      %34 = arith.cmpf oge, %32, %33 : vector<4x16x256xf32>
      %cst_17 = arith.constant 2.000000e-01 : f32
      %35 = vector.broadcast %cst_17 : f32 to vector<4x16x256xf32>
      %36 = arith.mulf %32, %35 : vector<4x16x256xf32>
      %37 = arith.select %34, %32, %36 : vector<4x16x256xi1>, vector<4x16x256xf32>
      %38 = arith.truncf %37 : vector<4x16x256xf32> to vector<4x16x256xbf16>
      %c0_18 = arith.constant 0 : index
      %c0_19 = arith.constant 0 : index
      %c0_20 = arith.constant 0 : index
      %39 = vector.load %arg3[%c0_18, %c0_19, %c0_20] : memref<4x16x256xbf16, #tpu.memory_space<vmem>>, vector<4x16x256xbf16>
      tpu.vector_store %arg3[%c0_18, %c0_19, %c0_20], %38 {strides = array<i32>} : memref<4x16x256xbf16, #tpu.memory_space<vmem>>, vector<4x16x256xbf16>,
    } else {
    }
    return
  }
  func.func @transform_0(%arg0: i32) -> (i32, i32, i32) {
    %c0_i32 = arith.constant 0 : i32
    %c0_i32_0 = arith.constant 0 : i32
    %c0_i32_1 = arith.constant 0 : i32
    return %arg0, %c0_i32, %c0_i32_0 : i32, i32, i32
  }
  func.func @transform_1(%arg0: i32) -> (i32, i32, i32) {
    %c0_i32 = arith.constant 0 : i32
    %c0_i32_0 = arith.constant 0 : i32
    %c0_i32_1 = arith.constant 0 : i32
    return %arg0, %c0_i32, %c0_i32_0 : i32, i32, i32
  }
  func.func @transform_2(%arg0: i32) -> (i32, i32, i32) {
    %c0_i32 = arith.constant 0 : i32
    %c0_i32_0 = arith.constant 0 : i32
    %c0_i32_1 = arith.constant 0 : i32
    %c0_i32_2 = arith.constant 0 : i32
    return %c0_i32, %c0_i32_0, %c0_i32_1 : i32, i32, i32
  }
}

module attributes {stable_mosaic.version = 11 : i64} {
  func.func @_fused_matmul_bn_kernel(%arg0: i32, %arg1: memref<1x32x1024xbf16, #tpu.memory_space<vmem>>, %arg2: memref<1x1024x256xbf16, #tpu.memory_space<vmem>>, %arg3: memref<4x32x256xbf16, #tpu.memory_space<vmem>>, %arg4: memref<4x32x256xf32, #tpu.memory_space<vmem>>) attributes {dimension_semantics = [#tpu.dimension_semantics<arbitrary>], iteration_bounds = array<i64: 4>, scalar_prefetch = 0 : i64, scratch_operands = 1 : i64, tpu.core_type = #tpu.core_type<tc>, window_params = [{transform_indices = @transform_0, window_bounds = array<i64: 1, 32, 1024>}, {transform_indices = @transform_1, window_bounds = array<i64: 1, 1024, 256>}, {pipeline_mode = #tpu.pipeline_mode<synchronous>, transform_indices = @transform_2, window_bounds = array<i64: 4, 32, 256>}]} {
    %c0 = arith.constant 0 : index
    %c0_0 = arith.constant 0 : index
    %c0_1 = arith.constant 0 : index
    %0 = vector.load %arg1[%c0, %c0_0, %c0_1] : memref<1x32x1024xbf16, #tpu.memory_space<vmem>>, vector<1x32x1024xbf16>
    %1 = vector.shape_cast %0 : vector<1x32x1024xbf16> to vector<32x1024xbf16>
    %c0_2 = arith.constant 0 : index
    %c0_3 = arith.constant 0 : index
    %c0_4 = arith.constant 0 : index
    %2 = vector.load %arg2[%c0_2, %c0_3, %c0_4] : memref<1x1024x256xbf16, #tpu.memory_space<vmem>>, vector<1x1024x256xbf16>
    %3 = vector.shape_cast %2 : vector<1x1024x256xbf16> to vector<1024x256xbf16>
    %cst = arith.constant dense<0.000000e+00> : vector<32x256xf32>
    %4 = tpu.matmul %1, %3, %cst {dimension_numbers = #tpu.dot_dimension_numbers<[1], [0], [0], [1], [0, 0, 1, 1], [], []>} : vector<32x1024xbf16>, vector<1024x256xbf16>, vector<32x256xf32> -> vector<32x256xf32>
    %5 = arith.index_cast %arg0 : i32 to index
    %c0_5 = arith.constant 0 : index
    %c0_6 = arith.constant 0 : index
    %6 = vector.load %arg4[%5, %c0_5, %c0_6] : memref<4x32x256xf32, #tpu.memory_space<vmem>>, vector<1x32x256xf32>
    %7 = vector.shape_cast %6 : vector<1x32x256xf32> to vector<32x256xf32>
    %8 = vector.shape_cast %4 : vector<32x256xf32> to vector<1x32x256xf32>
    tpu.vector_store %arg4[%5, %c0_5, %c0_6], %8 {strides = array<i32>} : memref<4x32x256xf32, #tpu.memory_space<vmem>>, vector<1x32x256xf32>,
    %c3_i32 = arith.constant 3 : i32
    %9 = arith.cmpi eq, %arg0, %c3_i32 : i32
    %10 = arith.extui %9 : i1 to i32
    %c0_i32 = arith.constant 0 : i32
    %11 = arith.cmpi ne, %10, %c0_i32 : i32
    scf.if %11 {
      %c0_7 = arith.constant 0 : index
      %c0_8 = arith.constant 0 : index
      %c0_9 = arith.constant 0 : index
      %12 = vector.load %arg4[%c0_7, %c0_8, %c0_9] : memref<4x32x256xf32, #tpu.memory_space<vmem>>, vector<4x32x256xf32>
      %cst_10 = arith.constant dense<0.000000e+00> : vector<256xf32>
      %13 = vector.multi_reduction <add>, %12, %cst_10 [0, 1] : vector<4x32x256xf32> to vector<256xf32>
      %14 = vector.shape_cast %13 : vector<256xf32> to vector<1x1x256xf32>
      %cst_11 = arith.constant 7.812500e-03 : f32
      %15 = vector.broadcast %cst_11 : f32 to vector<1x1x256xf32>
      %16 = arith.mulf %14, %15 : vector<1x1x256xf32>
      %17 = arith.mulf %12, %12 : vector<4x32x256xf32>
      %cst_12 = arith.constant dense<0.000000e+00> : vector<256xf32>
      %18 = vector.multi_reduction <add>, %17, %cst_12 [0, 1] : vector<4x32x256xf32> to vector<256xf32>
      %19 = vector.shape_cast %18 : vector<256xf32> to vector<1x1x256xf32>
      %cst_13 = arith.constant 7.812500e-03 : f32
      %20 = vector.broadcast %cst_13 : f32 to vector<1x1x256xf32>
      %21 = arith.mulf %19, %20 : vector<1x1x256xf32>
      %22 = arith.mulf %16, %16 : vector<1x1x256xf32>
      %23 = arith.subf %21, %22 : vector<1x1x256xf32>
      %cst_14 = arith.constant 0.000000e+00 : f32
      %24 = vector.broadcast %cst_14 : f32 to vector<1x1x256xf32>
      %25 = arith.maximumf %23, %24 : vector<1x1x256xf32>
      %cst_15 = arith.constant 9.99999974E-6 : f32
      %26 = vector.broadcast %cst_15 : f32 to vector<1x1x256xf32>
      %27 = arith.addf %25, %26 : vector<1x1x256xf32>
      %28 = math.rsqrt %27 : vector<1x1x256xf32>
      %29 = vector.broadcast %16 : vector<1x1x256xf32> to vector<4x32x256xf32>
      %30 = arith.subf %12, %29 : vector<4x32x256xf32>
      %31 = vector.broadcast %28 : vector<1x1x256xf32> to vector<4x32x256xf32>
      %32 = arith.mulf %30, %31 : vector<4x32x256xf32>
      %cst_16 = arith.constant 0.000000e+00 : f32
      %33 = vector.broadcast %cst_16 : f32 to vector<4x32x256xf32>
      %34 = arith.cmpf oge, %32, %33 : vector<4x32x256xf32>
      %cst_17 = arith.constant 2.000000e-01 : f32
      %35 = vector.broadcast %cst_17 : f32 to vector<4x32x256xf32>
      %36 = arith.mulf %32, %35 : vector<4x32x256xf32>
      %37 = arith.select %34, %32, %36 : vector<4x32x256xi1>, vector<4x32x256xf32>
      %38 = arith.truncf %37 : vector<4x32x256xf32> to vector<4x32x256xbf16>
      %c0_18 = arith.constant 0 : index
      %c0_19 = arith.constant 0 : index
      %c0_20 = arith.constant 0 : index
      %39 = vector.load %arg3[%c0_18, %c0_19, %c0_20] : memref<4x32x256xbf16, #tpu.memory_space<vmem>>, vector<4x32x256xbf16>
      tpu.vector_store %arg3[%c0_18, %c0_19, %c0_20], %38 {strides = array<i32>} : memref<4x32x256xbf16, #tpu.memory_space<vmem>>, vector<4x32x256xbf16>,
    } else {
    }
    return
  }
  func.func @transform_0(%arg0: i32) -> (i32, i32, i32) {
    %c0_i32 = arith.constant 0 : i32
    %c0_i32_0 = arith.constant 0 : i32
    %c0_i32_1 = arith.constant 0 : i32
    return %arg0, %c0_i32, %c0_i32_0 : i32, i32, i32
  }
  func.func @transform_1(%arg0: i32) -> (i32, i32, i32) {
    %c0_i32 = arith.constant 0 : i32
    %c0_i32_0 = arith.constant 0 : i32
    %c0_i32_1 = arith.constant 0 : i32
    return %arg0, %c0_i32, %c0_i32_0 : i32, i32, i32
  }
  func.func @transform_2(%arg0: i32) -> (i32, i32, i32) {
    %c0_i32 = arith.constant 0 : i32
    %c0_i32_0 = arith.constant 0 : i32
    %c0_i32_1 = arith.constant 0 : i32
    %c0_i32_2 = arith.constant 0 : i32
    return %c0_i32, %c0_i32_0, %c0_i32_1 : i32, i32, i32
  }
}

module attributes {stable_mosaic.version = 11 : i64} {
  func.func @_fused_matmul_bn_kernel(%arg0: i32, %arg1: memref<1x128x1024xbf16, #tpu.memory_space<vmem>>, %arg2: memref<1x1024x128xbf16, #tpu.memory_space<vmem>>, %arg3: memref<4x128x128xbf16, #tpu.memory_space<vmem>>, %arg4: memref<4x128x128xf32, #tpu.memory_space<vmem>>) attributes {dimension_semantics = [#tpu.dimension_semantics<arbitrary>], iteration_bounds = array<i64: 4>, scalar_prefetch = 0 : i64, scratch_operands = 1 : i64, tpu.core_type = #tpu.core_type<tc>, window_params = [{transform_indices = @transform_0, window_bounds = array<i64: 1, 128, 1024>}, {transform_indices = @transform_1, window_bounds = array<i64: 1, 1024, 128>}, {pipeline_mode = #tpu.pipeline_mode<synchronous>, transform_indices = @transform_2, window_bounds = array<i64: 4, 128, 128>}]} {
    %c0 = arith.constant 0 : index
    %c0_0 = arith.constant 0 : index
    %c0_1 = arith.constant 0 : index
    %0 = vector.load %arg1[%c0, %c0_0, %c0_1] : memref<1x128x1024xbf16, #tpu.memory_space<vmem>>, vector<1x128x1024xbf16>
    %1 = vector.shape_cast %0 : vector<1x128x1024xbf16> to vector<128x1024xbf16>
    %c0_2 = arith.constant 0 : index
    %c0_3 = arith.constant 0 : index
    %c0_4 = arith.constant 0 : index
    %2 = vector.load %arg2[%c0_2, %c0_3, %c0_4] : memref<1x1024x128xbf16, #tpu.memory_space<vmem>>, vector<1x1024x128xbf16>
    %3 = vector.shape_cast %2 : vector<1x1024x128xbf16> to vector<1024x128xbf16>
    %cst = arith.constant dense<0.000000e+00> : vector<128x128xf32>
    %4 = tpu.matmul %1, %3, %cst {dimension_numbers = #tpu.dot_dimension_numbers<[1], [0], [0], [1], [0, 0, 1, 1], [], []>} : vector<128x1024xbf16>, vector<1024x128xbf16>, vector<128x128xf32> -> vector<128x128xf32>
    %5 = arith.index_cast %arg0 : i32 to index
    %c0_5 = arith.constant 0 : index
    %c0_6 = arith.constant 0 : index
    %6 = vector.load %arg4[%5, %c0_5, %c0_6] : memref<4x128x128xf32, #tpu.memory_space<vmem>>, vector<1x128x128xf32>
    %7 = vector.shape_cast %6 : vector<1x128x128xf32> to vector<128x128xf32>
    %8 = vector.shape_cast %4 : vector<128x128xf32> to vector<1x128x128xf32>
    tpu.vector_store %arg4[%5, %c0_5, %c0_6], %8 {strides = array<i32>} : memref<4x128x128xf32, #tpu.memory_space<vmem>>, vector<1x128x128xf32>,
    %c3_i32 = arith.constant 3 : i32
    %9 = arith.cmpi eq, %arg0, %c3_i32 : i32
    %10 = arith.extui %9 : i1 to i32
    %c0_i32 = arith.constant 0 : i32
    %11 = arith.cmpi ne, %10, %c0_i32 : i32
    scf.if %11 {
      %c0_7 = arith.constant 0 : index
      %c0_8 = arith.constant 0 : index
      %c0_9 = arith.constant 0 : index
      %12 = vector.load %arg4[%c0_7, %c0_8, %c0_9] : memref<4x128x128xf32, #tpu.memory_space<vmem>>, vector<4x128x128xf32>
      %cst_10 = arith.constant dense<0.000000e+00> : vector<128xf32>
      %13 = vector.multi_reduction <add>, %12, %cst_10 [0, 1] : vector<4x128x128xf32> to vector<128xf32>
      %14 = vector.shape_cast %13 : vector<128xf32> to vector<1x1x128xf32>
      %cst_11 = arith.constant 0.001953125 : f32
      %15 = vector.broadcast %cst_11 : f32 to vector<1x1x128xf32>
      %16 = arith.mulf %14, %15 : vector<1x1x128xf32>
      %17 = arith.mulf %12, %12 : vector<4x128x128xf32>
      %cst_12 = arith.constant dense<0.000000e+00> : vector<128xf32>
      %18 = vector.multi_reduction <add>, %17, %cst_12 [0, 1] : vector<4x128x128xf32> to vector<128xf32>
      %19 = vector.shape_cast %18 : vector<128xf32> to vector<1x1x128xf32>
      %cst_13 = arith.constant 0.001953125 : f32
      %20 = vector.broadcast %cst_13 : f32 to vector<1x1x128xf32>
      %21 = arith.mulf %19, %20 : vector<1x1x128xf32>
      %22 = arith.mulf %16, %16 : vector<1x1x128xf32>
      %23 = arith.subf %21, %22 : vector<1x1x128xf32>
      %cst_14 = arith.constant 0.000000e+00 : f32
      %24 = vector.broadcast %cst_14 : f32 to vector<1x1x128xf32>
      %25 = arith.maximumf %23, %24 : vector<1x1x128xf32>
      %cst_15 = arith.constant 9.99999974E-6 : f32
      %26 = vector.broadcast %cst_15 : f32 to vector<1x1x128xf32>
      %27 = arith.addf %25, %26 : vector<1x1x128xf32>
      %28 = math.rsqrt %27 : vector<1x1x128xf32>
      %29 = vector.broadcast %16 : vector<1x1x128xf32> to vector<4x128x128xf32>
      %30 = arith.subf %12, %29 : vector<4x128x128xf32>
      %31 = vector.broadcast %28 : vector<1x1x128xf32> to vector<4x128x128xf32>
      %32 = arith.mulf %30, %31 : vector<4x128x128xf32>
      %cst_16 = arith.constant 0.000000e+00 : f32
      %33 = vector.broadcast %cst_16 : f32 to vector<4x128x128xf32>
      %34 = arith.cmpf oge, %32, %33 : vector<4x128x128xf32>
      %cst_17 = arith.constant 2.000000e-01 : f32
      %35 = vector.broadcast %cst_17 : f32 to vector<4x128x128xf32>
      %36 = arith.mulf %32, %35 : vector<4x128x128xf32>
      %37 = arith.select %34, %32, %36 : vector<4x128x128xi1>, vector<4x128x128xf32>
      %38 = arith.truncf %37 : vector<4x128x128xf32> to vector<4x128x128xbf16>
      %c0_18 = arith.constant 0 : index
      %c0_19 = arith.constant 0 : index
      %c0_20 = arith.constant 0 : index
      %39 = vector.load %arg3[%c0_18, %c0_19, %c0_20] : memref<4x128x128xbf16, #tpu.memory_space<vmem>>, vector<4x128x128xbf16>
      tpu.vector_store %arg3[%c0_18, %c0_19, %c0_20], %38 {strides = array<i32>} : memref<4x128x128xbf16, #tpu.memory_space<vmem>>, vector<4x128x128xbf16>,
    } else {
    }
    return
  }
  func.func @transform_0(%arg0: i32) -> (i32, i32, i32) {
    %c0_i32 = arith.constant 0 : i32
    %c0_i32_0 = arith.constant 0 : i32
    %c0_i32_1 = arith.constant 0 : i32
    return %arg0, %c0_i32, %c0_i32_0 : i32, i32, i32
  }
  func.func @transform_1(%arg0: i32) -> (i32, i32, i32) {
    %c0_i32 = arith.constant 0 : i32
    %c0_i32_0 = arith.constant 0 : i32
    %c0_i32_1 = arith.constant 0 : i32
    return %arg0, %c0_i32, %c0_i32_0 : i32, i32, i32
  }
  func.func @transform_2(%arg0: i32) -> (i32, i32, i32) {
    %c0_i32 = arith.constant 0 : i32
    %c0_i32_0 = arith.constant 0 : i32
    %c0_i32_1 = arith.constant 0 : i32
    %c0_i32_2 = arith.constant 0 : i32
    return %c0_i32, %c0_i32_0, %c0_i32_1 : i32, i32, i32
  }
}

module attributes {stable_mosaic.version = 11 : i64} {
  func.func @_matmul_bias_tanh_kernel(%arg0: memref<512x1152xbf16, #tpu.memory_space<vmem>>, %arg1: memref<1152x128xbf16, #tpu.memory_space<vmem>>, %arg2: memref<1x128xf32, #tpu.memory_space<vmem>>, %arg3: memref<512x128xf32, #tpu.memory_space<vmem>>) attributes {dimension_semantics = [], scalar_prefetch = 0 : i64, scratch_operands = 0 : i64, tpu.core_type = #tpu.core_type<tc>} {
    %c0 = arith.constant 0 : index
    %c0_0 = arith.constant 0 : index
    %0 = vector.load %arg0[%c0, %c0_0] : memref<512x1152xbf16, #tpu.memory_space<vmem>>, vector<512x1152xbf16>
    %c0_1 = arith.constant 0 : index
    %c0_2 = arith.constant 0 : index
    %1 = vector.load %arg1[%c0_1, %c0_2] : memref<1152x128xbf16, #tpu.memory_space<vmem>>, vector<1152x128xbf16>
    %cst = arith.constant dense<0.000000e+00> : vector<512x128xf32>
    %2 = tpu.matmul %0, %1, %cst {dimension_numbers = #tpu.dot_dimension_numbers<[1], [0], [0], [1], [0, 0, 1, 1], [], []>} : vector<512x1152xbf16>, vector<1152x128xbf16>, vector<512x128xf32> -> vector<512x128xf32>
    %c0_3 = arith.constant 0 : index
    %c0_4 = arith.constant 0 : index
    %3 = vector.load %arg2[%c0_3, %c0_4] : memref<1x128xf32, #tpu.memory_space<vmem>>, vector<1x128xf32>
    %4 = vector.broadcast %3 : vector<1x128xf32> to vector<512x128xf32>
    %5 = arith.addf %2, %4 : vector<512x128xf32>
    %6 = math.tanh %5 : vector<512x128xf32>
    %c0_5 = arith.constant 0 : index
    %c0_6 = arith.constant 0 : index
    %7 = vector.load %arg3[%c0_5, %c0_6] : memref<512x128xf32, #tpu.memory_space<vmem>>, vector<512x128xf32>
    tpu.vector_store %arg3[%c0_5, %c0_6], %6 {strides = array<i32>} : memref<512x128xf32, #tpu.memory_space<vmem>>, vector<512x128xf32>,
    return
  }
}

</mosaic_0001>

<llo_original>
// kernel: generator_forward.6
$region0: #{generator_forward.6}
  #allocation0 [shape = 'u32[]', space=smem, size = 0x4, offset = 0x4, fixed_abs, tag = 'smem constant byte address 0x4 - core index']
  #allocation1 [shape = 'u32[72,128]{1,0:T(1,128)}', space=vmem, size = 0x9000, scoped, tag = 'internal scratch']
  #allocation2 [shape = 'f32[1,16,128]{2,1,0:T(8,128)}', space=vmem, size = 0x2000, scoped, tag = 'scratch operand']
  %s0 = inlined_call_operand.vmem [shape: bf16[1,16,128], index: 0, kind: input, shape index: {}]
  %s1 = inlined_call_operand.hbm [shape: bf16[1,128,128], index: 1, kind: input, shape index: {}]
  %s2 = inlined_call_operand.vmem [shape: bf16[1,16,128], index: 2, kind: output, shape index: {}]
  %s3 = sld [smem:[#allocation0]]
  $region26: #{generator_forward.6} parent=0
    _
  %s5 = ssub.s32 1, %s3
  %s6 = scalar_select 0, %s5, %s3
  $region1: #{generator_forward.6} parent=0
    #allocation3 [shape = 'u8[32768]{0}', space=vmem, size = 0x8000, scoped, tag = 'input window, operand 1, single buffered']
    #allocation4 [shape = 's32[1]{0}', space=sflag, size = 0x4, scoped, tag = 'scoped memory for generator_forward.6']
    %7 = vsyncpa [#allocation4], 0
    // Predicated region
    $region2: #{generator_forward.6} parent=1 // pred_check
      _
    $region3: #{generator_forward.6} parent=1 // pred_check_branch
      %9 = sbr.rel (0) target = $region5
    $region4: #{generator_forward.6} parent=1 // pred_region
      _
    $region5: #{generator_forward.6} parent=1 // pred_fallthru
      _
    // Predicated region
    $region6: #{generator_forward.6} parent=1 // pred_check
      _
    $region7: #{generator_forward.6} parent=1 // pred_check_branch
      %11 = sbr.rel (0) target = $region9
    $region8: #{generator_forward.6} parent=1 // pred_region
      %13 = vsyncadd [#allocation4], 0
      %s14 = sshll.u32 %s1, 4
      %s15 = int_to_ptr.hbm [resolvable:$true] %s14
      %s16 = sshll.u32 [#allocation3], 4
      %s17 = int_to_ptr.vmem [resolvable:$true] %s16
      %22 = dma.hbm_to_vmem [thread:$0]  %s15, 1024, %s17, [#allocation4], 64, 64, 4
    $region9: #{generator_forward.6} parent=1 // pred_fallthru
      _
    // Predicated region
    $region10: #{generator_forward.6} parent=1 // pred_check
      _
    $region11: #{generator_forward.6} parent=1 // pred_check_branch
      %24 = sbr.rel (0) target = $region13
    $region12: #{generator_forward.6} parent=1 // pred_region
      %26 = dma.done [#allocation4], 1024
    $region13: #{generator_forward.6} parent=1 // pred_fallthru
      _
    %v27 = vld [vmem:[%s0] sm:$0xf]
    %v28 = vld [vmem:[%s0 + $0x4] sm:$0xf]
    %v29 = vld [vmem:[#allocation3] sm:$0xf]
    %v30 = vld [vmem:[#allocation3 + $0x4] sm:$0xf]
    %v31 = vld [vmem:[#allocation3 + $0x8] sm:$0xf]
    %v32 = vld [vmem:[#allocation3 + $0xc] sm:$0xf]
    %v33 = vld [vmem:[#allocation3 + $0x10] sm:$0xf]
    %v34 = vld [vmem:[#allocation3 + $0x14] sm:$0xf]
    %v35 = vld [vmem:[#allocation3 + $0x18] sm:$0xf]
    %v36 = vld [vmem:[#allocation3 + $0x1c] sm:$0xf]
    %v37 = vld [vmem:[#allocation3 + $0x20] sm:$0xf]
    %v38 = vld [vmem:[#allocation3 + $0x24] sm:$0xf]
    %v39 = vld [vmem:[#allocation3 + $0x28] sm:$0xf]
    %v40 = vld [vmem:[#allocation3 + $0x2c] sm:$0xf]
    %v41 = vld [vmem:[#allocation3 + $0x30] sm:$0xf]
    %v42 = vld [vmem:[#allocation3 + $0x34] sm:$0xf]
    %v43 = vld [vmem:[#allocation3 + $0x38] sm:$0xf]
    %v44 = vld [vmem:[#allocation3 + $0x3c] sm:$0xf]
    %v47 = vunpack.c.l.b16 %v27
    %v48 = vunpack.c.l.b16 %v28
    %v49 = vpack.c.b16 %v48, %v47
    %v67 = vunpack.c.l.b16 %v29
    %v68 = vunpack.c.l.b16 %v30
    %v69 = vunpack.c.l.b16 %v31
    %v70 = vunpack.c.l.b16 %v32
    %v71 = vunpack.c.l.b16 %v33
    %v72 = vunpack.c.l.b16 %v34
    %v73 = vunpack.c.l.b16 %v35
    %v74 = vunpack.c.l.b16 %v36
    %v75 = vunpack.c.l.b16 %v37
    %v76 = vunpack.c.l.b16 %v38
    %v77 = vunpack.c.l.b16 %v39
    %v78 = vunpack.c.l.b16 %v40
    %v79 = vunpack.c.l.b16 %v41
    %v80 = vunpack.c.l.b16 %v42
    %v81 = vunpack.c.l.b16 %v43
    %v82 = vunpack.c.l.b16 %v44
    %v83 = vpack.c.b16 %v68, %v67
    %v84 = vpack.c.b16 %v70, %v69
    %v85 = vpack.c.b16 %v72, %v71
    %v86 = vpack.c.b16 %v74, %v73
    %v87 = vpack.c.b16 %v76, %v75
    %v88 = vpack.c.b16 %v78, %v77
    %v89 = vpack.c.b16 %v80, %v79
    %v90 = vpack.c.b16 %v82, %v81
    %99 = vmatpush.bf16.msra.mxu0 %v90
    %100 = vmatpush.bf16.msra.mxu0 %v89
    %101 = vmatpush.bf16.msra.mxu0 %v88
    %102 = vmatpush.bf16.msra.mxu0 %v87
    %103 = vmatpush.bf16.msra.mxu0 %v86
    %104 = vmatpush.bf16.msra.mxu0 %v85
    %105 = vmatpush.bf16.msra.mxu0 %v84
    %106 = vmatpush.bf16.msra.mxu0 %v83
    %107 = vmatmul.bf16.gmra.mxu0 %v49
    %v108 = vpop.f32.mrf.mxu0
    %v109 = vadd.f32 0.0, %v108
    %v110 = vpop.f32.mrf.mxu0
    %v111 = vadd.f32 0.0, %v110
    %112 = vdwg.mxu0
    %s113 = smul.u32 0, 16
    %s114 = scalar_lea.vmem [#allocation2], %s113
    %115 = vst [vmem:[%s114] sm:$0xff] %v109
    %116 = vst [vmem:[%s114 + $0x8] sm:$0xff] %v111
    %p117 = scmp.eq.s32.totalorder 0, 0
    // Predicated region
    $region14: #{generator_forward.6} parent=1 // pred_check
      %p118 = pneg %p117
    $region15: #{generator_forward.6} parent=1 // pred_check_branch
      %120 = sbr.rel (%p118) target = $region17
    $region16: #{generator_forward.6} parent=1 // pred_region
      %v121 = vld [vmem:[#allocation2] sm:$0xff]
      %v122 = vld [vmem:[#allocation2 + $0x8] sm:$0xff]
      %v123 = vadd.f32 %v121, %v122
      %v124 = vrot.slane %v123, 4
      %v125 = vadd.f32 %v123, %v124
      %v126 = vrot.slane %v125, 2
      %v127 = vadd.f32 %v125, %v126
      %v128 = vrot.slane %v127, 1
      %v129 = vadd.f32 %v127, %v128
      %v130 = vmul.f32 %v129, 0.5
      %v131 = vmul.f32 %v121, %v121
      %v132 = vmul.f32 %v122, %v122
      %v133 = vadd.f32 %v131, %v132
      %v134 = vrot.slane %v133, 4
      %v135 = vadd.f32 %v133, %v134
      %v136 = vrot.slane %v135, 2
      %v137 = vadd.f32 %v135, %v136
      %v138 = vrot.slane %v137, 1
      %v139 = vadd.f32 %v137, %v138
      %v140 = vmul.f32 %v139, 0.5
      %v141 = vmul.f32 %v130, %v130
      %v142 = vsub.f32 %v140, %v141
      %v143 = vmax.f32 %v142, 0.0
      %v144 = vadd.f32 %v143, 1e-05
      %v145 = vrsqrt.pop %v144
      %v146 = vmul.f32 %v145, %v144
      %v147 = vmul.f32 %v146, %v145
      %v148 = vmul.f32 0.5, %v147
      %v149 = vsub.f32 1.5, %v148
      %v150 = vmul.f32 %v145, %v149
      %vm151 = vweird.f32 %v144
      %vm152 = vweird.f32 %v145
      %vm153 = vmor %vm151, %vm152
      %v154 = vsel %vm153, %v145, %v150
      %v155 = vsub.f32 %v121, %v130
      %v156 = vsub.f32 %v122, %v130
      %v157 = vmul.f32 %v155, %v154
      %v158 = vmul.f32 %v156, %v154
      %v159 = vpack.c.bf16 %v157, %v157
      %v160 = vpack.c.bf16 %v158, %v158
      %161 = vst [vmem:[%s2] sm:$0xf] %v159
      %162 = vst [vmem:[%s2 + $0x4] sm:$0xf] %v160
    $region17: #{generator_forward.6} parent=1 // pred_fallthru
      _
    // Predicated region
    $region18: #{generator_forward.6} parent=1 // pred_check
      _
    $region19: #{generator_forward.6} parent=1 // pred_check_branch
      %164 = sbr.rel (0) target = $region21
    $region20: #{generator_forward.6} parent=1 // pred_region
      _
    $region21: #{generator_forward.6} parent=1 // pred_fallthru
      _
    // Predicated region
    $region22: #{generator_forward.6} parent=1 // pred_check
      _
    $region23: #{generator_forward.6} parent=1 // pred_check_branch
      %166 = sbr.rel (0) target = $region25
    $region24: #{generator_forward.6} parent=1 // pred_region
      _
    $region25: #{generator_forward.6} parent=1 // pred_fallthru
      _
    %167 = vsyncpa [#allocation4], 1

// kernel: generator_forward.7
$region0: #{generator_forward.7}
  #allocation0 [shape = 'u32[]', space=smem, size = 0x4, offset = 0x4, fixed_abs, tag = 'smem constant byte address 0x4 - core index']
  #allocation1 [shape = 'u32[72,128]{1,0:T(1,128)}', space=vmem, size = 0x9000, scoped, tag = 'internal scratch']
  #allocation2 [shape = 'f32[4,16,512]{2,1,0:T(8,128)}', space=vmem, size = 0x20000, scoped, tag = 'scratch operand']
  %s0 = inlined_call_operand.vmem [shape: bf16[4,16,256], index: 0, kind: input, shape index: {}]
  %s1 = inlined_call_operand.hbm [shape: bf16[4,256,512], index: 1, kind: input, shape index: {}]
  %s2 = inlined_call_operand.vmem [shape: bf16[4,16,512], index: 2, kind: output, shape index: {}]
  %s3 = sld [smem:[#allocation0]]
  $region49: #{generator_forward.7} parent=0
    _
  %s5 = ssub.s32 1, %s3
  %s6 = scalar_select 0, %s5, %s3
  $region1: #{generator_forward.7} parent=0
    #allocation3 [shape = 'u8[524288]{0}', space=vmem, size = 0x80000, scoped, tag = 'input window, operand 1']
    #allocation4 [shape = 's32[2]{0}', space=sflag, size = 0x8, scoped, tag = 'scoped memory for generator_forward.7']
    %7 = vsyncpa [#allocation4], 0
    %s8 = scalar_lea.sflag [#allocation4], 1
    %9 = vsyncpa %s8, 0
    loop: start=0, step=1, limit=6
    $region2: #{generator_forward.7} parent=1 // loop_pre_header
      _
    $region3: #{generator_forward.7} parent=1 // loop_header
      %s11 = sphi 0, %s15
      %p12 = scmp.ge.s32.totalorder %s11, 6
      %s21 = sphi 0, %s23
      %s24 = sphi 0, %s21
      %s25 = sphi 0, %s24
      %s41 = sphi 0, %s25
      %s47 = sphi 0, %s49
      %s50 = sphi 0, %s47
      %s51 = sphi 0, %s50
      %s67 = sphi 0, %s51
      %s71 = sphi 0, %s71
      %s73 = sphi 0, %s71
      %s74 = sphi 0, %s73
      %s88 = sphi 0, %s74
    $region4: #{generator_forward.7} parent=1 // loop_header_branch
      %14 = sbr.rel (%p12) target = $region8
    $region5: #{generator_forward.7} parent=1 // loop_body
      %s16 = ssub.s32 %s11, 1
      %s17 = ssub.s32 %s11, 2
      %s18 = sadd.s32 %s11, 1
      %s19 = ssub.s32 %s11, %s18
      %p20 = scmp.eq.s32.totalorder %s19, 0
      %s22 = sadd.s32 %s21, 1
      %s23 = scalar_select %p20, %s21, %s22
      %p26 = pneg %p20
      %p27 = scmp.eq.s32.totalorder %s11, 3
      %p28 = por %p26, %p27
      %p29 = scmp.ne.s32.totalorder %s21, %s24
      %p30 = scmp.eq.s32.totalorder %s11, 0
      %p31 = por %p29, %p30
      %p32 = scmp.ne.s32.totalorder %s21, %s24
      %p33 = scmp.eq.s32.totalorder %s16, 3
      %p34 = por %p32, %p33
      %p35 = scmp.ne.s32.totalorder %s24, %s25
      %p36 = scmp.eq.s32.totalorder %s16, 0
      %p37 = por %p35, %p36
      %p38 = scmp.ne.s32.totalorder %s24, %s25
      %p39 = scmp.eq.s32.totalorder %s17, 3
      %p40 = por %p38, %p39
      %p42 = scmp.ne.s32.totalorder %s25, %s41
      %p43 = scmp.eq.s32.totalorder %s17, 0
      %p44 = por %p42, %p43
      %s45 = ssub.s32 %s11, %s18
      %p46 = scmp.eq.s32.totalorder %s45, 0
      %s48 = sadd.s32 %s47, 1
      %s49 = scalar_select %p46, %s47, %s48
      %p52 = pneg %p46
      %p53 = scmp.eq.s32.totalorder %s11, 3
      %p54 = por %p52, %p53
      %p55 = scmp.ne.s32.totalorder %s47, %s50
      %p56 = scmp.eq.s32.totalorder %s11, 0
      %p57 = por %p55, %p56
      %p58 = scmp.ne.s32.totalorder %s47, %s50
      %p59 = scmp.eq.s32.totalorder %s16, 3
      %p60 = por %p58, %p59
      %p61 = scmp.ne.s32.totalorder %s50, %s51
      %p62 = scmp.eq.s32.totalorder %s16, 0
      %p63 = por %p61, %p62
      %p64 = scmp.ne.s32.totalorder %s50, %s51
      %p65 = scmp.eq.s32.totalorder %s17, 3
      %p66 = por %p64, %p65
      %p68 = scmp.ne.s32.totalorder %s51, %s67
      %p69 = scmp.eq.s32.totalorder %s17, 0
      %p70 = por %p68, %p69
      %s72 = sadd.s32 %s71, 1
      %p75 = scmp.eq.s32.totalorder %s11, 3
      %p76 = scmp.ne.s32.totalorder %s71, %s73
      %p77 = scmp.eq.s32.totalorder %s11, 0
      %p78 = por %p76, %p77
      %p79 = scmp.ne.s32.totalorder %s71, %s73
      %p80 = scmp.eq.s32.totalorder %s16, 3
      %p81 = por %p79, %p80
      %p82 = scmp.ne.s32.totalorder %s73, %s74
      %p83 = scmp.eq.s32.totalorder %s16, 0
      %p84 = por %p82, %p83
      %p85 = scmp.ne.s32.totalorder %s73, %s74
      %p86 = scmp.eq.s32.totalorder %s17, 3
      %p87 = por %p85, %p86
      %p89 = scmp.ne.s32.totalorder %s74, %s88
      %p90 = scmp.eq.s32.totalorder %s17, 0
      %p91 = por %p89, %p90
      %p92 = scmp.le.s32.totalorder 1, %s11
      %p93 = scmp.lt.s32.totalorder %s11, 5
      %p94 = pnand %p92, %p93
      %p95 = pneg %p94
      // Predicated region
      $region9: #{generator_forward.7} parent=5 // pred_check
        _
      $region10: #{generator_forward.7} parent=5 // pred_check_branch
        %97 = sbr.rel (%p94) target = $region12
      $region11: #{generator_forward.7} parent=5 // pred_region
        %s98 = ssub.s32 %s11, 1
      $region12: #{generator_forward.7} parent=5 // pred_fallthru
        _
      %p99 = scmp.lt.s32.totalorder %s11, 4
      // Predicated region
      $region13: #{generator_forward.7} parent=5 // pred_check
        %p100 = pneg %p99
      $region14: #{generator_forward.7} parent=5 // pred_check_branch
        %102 = sbr.rel (%p100) target = $region16
      $region15: #{generator_forward.7} parent=5 // pred_region
        // Predicated region
        $region17: #{generator_forward.7} parent=15 // pred_check
          %p103 = pneg %p31
        $region18: #{generator_forward.7} parent=15 // pred_check_branch
          %105 = sbr.rel (%p103) target = $region20
        $region19: #{generator_forward.7} parent=15 // pred_region
          %p106 = scmp.lt.s32.totalorder %s11, 3
          %s107 = scalar_select %p106, %s11, 3
          %s108 = smul.addr %s107, 4
          %s109 = smul.addr %s108, 4
          %s110 = scalar_lea.vmem %s0, %s109
        $region20: #{generator_forward.7} parent=15 // pred_fallthru
          _
        // Predicated region
        $region21: #{generator_forward.7} parent=15 // pred_check
          %p111 = pneg %p57
        $region22: #{generator_forward.7} parent=15 // pred_check_branch
          %113 = sbr.rel (%p111) target = $region24
        $region23: #{generator_forward.7} parent=15 // pred_region
          %s114 = sand.u32 %s47, 1
          %s115 = scalar_lea.sflag [#allocation4], %s114
          %s116 = sand.u32 %s47, 1
          %s117 = smul.addr %s116, 512
          %s118 = scalar_lea.vmem [#allocation3], %s117
          %120 = vsyncadd %s115, 0
          %s121 = smul.addr %s11, 128
          %s122 = smul.addr %s121, 4
          %s123 = scalar_lea.hbm %s1, %s122
          %s124 = sshll.u32 %s123, 4
          %s125 = int_to_ptr.hbm [resolvable:$true] %s124
          %s126 = sshll.u32 %s118, 4
          %s127 = int_to_ptr.vmem [resolvable:$true] %s126
          %132 = dma.hbm_to_vmem [thread:$0]  %s125, 8192, %s127, %s115, 256, 256, 16
        $region24: #{generator_forward.7} parent=15 // pred_fallthru
          _
      $region16: #{generator_forward.7} parent=5 // pred_fallthru
        _
      %p133 = scmp.le.s32.totalorder 1, %s11
      %p134 = scmp.lt.s32.totalorder %s11, 5
      %p135 = pnand %p133, %p134
      %p136 = pneg %p135
      // Predicated region
      $region25: #{generator_forward.7} parent=5 // pred_check
        _
      $region26: #{generator_forward.7} parent=5 // pred_check_branch
        %138 = sbr.rel (%p135) target = $region28
      $region27: #{generator_forward.7} parent=5 // pred_region
        %s139 = ssub.s32 %s11, 1
        %s140 = sand.u32 %s50, 1
        %s141 = scalar_lea.sflag [#allocation4], %s140
        %s142 = sand.u32 %s50, 1
        %s143 = smul.addr %s142, 512
        %s144 = scalar_lea.vmem [#allocation3], %s143
        // Predicated region
        $region29: #{generator_forward.7} parent=27 // pred_check
          %p145 = pneg %p63
        $region30: #{generator_forward.7} parent=27 // pred_check_branch
          %147 = sbr.rel (%p145) target = $region32
        $region31: #{generator_forward.7} parent=27 // pred_region
          %149 = dma.done %s141, 8192
        $region32: #{generator_forward.7} parent=27 // pred_fallthru
          _
        %p150 = scmp.lt.s32.totalorder %s16, 3
        %s151 = scalar_select %p150, %s16, 3
        %s152 = smul.addr %s151, 4
        %s153 = smul.addr %s152, 4
        %s154 = scalar_lea.vmem %s0, %s153
        %p155 = pneg %p37
        %p156 = pneg %p34
        %s157 = sand.u32 %s50, 1
        %s158 = scalar_lea.sflag [#allocation4], %s157
        %s159 = sand.u32 %s50, 1
        %s160 = smul.addr %s159, 512
        %s161 = scalar_lea.vmem [#allocation3], %s160
        %p162 = pneg %p63
        %p163 = pneg %p60
        %p164 = pneg %p84
        %p165 = pneg %p81
        %p166 = scmp.lt.s32.totalorder %s16, 3
        %s167 = scalar_select %p166, %s16, 3
        %s168 = smul.addr %s167, 4
        %s169 = smul.addr %s168, 4
        %s170 = scalar_lea.vmem %s0, %s169
        %v171 = vld [vmem:[%s170] sm:$0xff]
        %v172 = vld [vmem:[%s170 + $0x8] sm:$0xff]
        %v173 = vld [vmem:[%s144] sm:$0xff]
        %v174 = vld [vmem:[%s144 + $0x8] sm:$0xff]
        %v175 = vld [vmem:[%s144 + $0x10] sm:$0xff]
        %v176 = vld [vmem:[%s144 + $0x18] sm:$0xff]
        %v177 = vld [vmem:[%s144 + $0x20] sm:$0xff]
        %v178 = vld [vmem:[%s144 + $0x28] sm:$0xff]
        %v179 = vld [vmem:[%s144 + $0x30] sm:$0xff]
        %v180 = vld [vmem:[%s144 + $0x38] sm:$0xff]
        %v181 = vld [vmem:[%s144 + $0x40] sm:$0xff]
        %v182 = vld [vmem:[%s144 + $0x48] sm:$0xff]
        %v183 = vld [vmem:[%s144 + $0x50] sm:$0xff]
        %v184 = vld [vmem:[%s144 + $0x58] sm:$0xff]
        %v185 = vld [vmem:[%s144 + $0x60] sm:$0xff]
        %v186 = vld [vmem:[%s144 + $0x68] sm:$0xff]
        %v187 = vld [vmem:[%s144 + $0x70] sm:$0xff]
        %v188 = vld [vmem:[%s144 + $0x78] sm:$0xff]
        %v189 = vld [vmem:[%s144 + $0x80] sm:$0xff]
        %v190 = vld [vmem:[%s144 + $0x88] sm:$0xff]
        %v191 = vld [vmem:[%s144 + $0x90] sm:$0xff]
        %v192 = vld [vmem:[%s144 + $0x98] sm:$0xff]
        %v193 = vld [vmem:[%s144 + $0xa0] sm:$0xff]
        %v194 = vld [vmem:[%s144 + $0xa8] sm:$0xff]
        %v195 = vld [vmem:[%s144 + $0xb0] sm:$0xff]
        %v196 = vld [vmem:[%s144 + $0xb8] sm:$0xff]
        %v197 = vld [vmem:[%s144 + $0xc0] sm:$0xff]
        %v198 = vld [vmem:[%s144 + $0xc8] sm:$0xff]
        %v199 = vld [vmem:[%s144 + $0xd0] sm:$0xff]
        %v200 = vld [vmem:[%s144 + $0xd8] sm:$0xff]
        %v201 = vld [vmem:[%s144 + $0xe0] sm:$0xff]
        %v202 = vld [vmem:[%s144 + $0xe8] sm:$0xff]
        %v203 = vld [vmem:[%s144 + $0xf0] sm:$0xff]
        %v204 = vld [vmem:[%s144 + $0xf8] sm:$0xff]
        %v205 = vld [vmem:[%s144 + $0x100] sm:$0xff]
        %v206 = vld [vmem:[%s144 + $0x108] sm:$0xff]
        %v207 = vld [vmem:[%s144 + $0x110] sm:$0xff]
        %v208 = vld [vmem:[%s144 + $0x118] sm:$0xff]
        %v209 = vld [vmem:[%s144 + $0x120] sm:$0xff]
        %v210 = vld [vmem:[%s144 + $0x128] sm:$0xff]
        %v211 = vld [vmem:[%s144 + $0x130] sm:$0xff]
        %v212 = vld [vmem:[%s144 + $0x138] sm:$0xff]
        %v213 = vld [vmem:[%s144 + $0x140] sm:$0xff]
        %v214 = vld [vmem:[%s144 + $0x148] sm:$0xff]
        %v215 = vld [vmem:[%s144 + $0x150] sm:$0xff]
        %v216 = vld [vmem:[%s144 + $0x158] sm:$0xff]
        %v217 = vld [vmem:[%s144 + $0x160] sm:$0xff]
        %v218 = vld [vmem:[%s144 + $0x168] sm:$0xff]
        %v219 = vld [vmem:[%s144 + $0x170] sm:$0xff]
        %v220 = vld [vmem:[%s144 + $0x178] sm:$0xff]
        %v221 = vld [vmem:[%s144 + $0x180] sm:$0xff]
        %v222 = vld [vmem:[%s144 + $0x188] sm:$0xff]
        %v223 = vld [vmem:[%s144 + $0x190] sm:$0xff]
        %v224 = vld [vmem:[%s144 + $0x198] sm:$0xff]
        %v225 = vld [vmem:[%s144 + $0x1a0] sm:$0xff]
        %v226 = vld [vmem:[%s144 + $0x1a8] sm:$0xff]
        %v227 = vld [vmem:[%s144 + $0x1b0] sm:$0xff]
        %v228 = vld [vmem:[%s144 + $0x1b8] sm:$0xff]
        %v229 = vld [vmem:[%s144 + $0x1c0] sm:$0xff]
        %v230 = vld [vmem:[%s144 + $0x1c8] sm:$0xff]
        %v231 = vld [vmem:[%s144 + $0x1d0] sm:$0xff]
        %v232 = vld [vmem:[%s144 + $0x1d8] sm:$0xff]
        %v233 = vld [vmem:[%s144 + $0x1e0] sm:$0xff]
        %v234 = vld [vmem:[%s144 + $0x1e8] sm:$0xff]
        %v235 = vld [vmem:[%s144 + $0x1f0] sm:$0xff]
        %v236 = vld [vmem:[%s144 + $0x1f8] sm:$0xff]
        %v239 = vunpack.c.l.b16 %v171
        %v240 = vunpack.c.h.b16 %v171
        %v241 = vunpack.c.l.b16 %v172
        %v242 = vunpack.c.h.b16 %v172
        %v243 = vpack.c.b16 %v241, %v239
        %v244 = vpack.c.b16 %v242, %v240
        %v311 = vunpack.c.l.b16 %v173
        %v312 = vunpack.c.h.b16 %v173
        %v313 = vunpack.c.l.b16 %v174
        %v314 = vunpack.c.h.b16 %v174
        %v315 = vunpack.c.l.b16 %v175
        %v316 = vunpack.c.h.b16 %v175
        %v317 = vunpack.c.l.b16 %v176
        %v318 = vunpack.c.h.b16 %v176
        %v319 = vunpack.c.l.b16 %v177
        %v320 = vunpack.c.h.b16 %v177
        %v321 = vunpack.c.l.b16 %v178
        %v322 = vunpack.c.h.b16 %v178
        %v323 = vunpack.c.l.b16 %v179
        %v324 = vunpack.c.h.b16 %v179
        %v325 = vunpack.c.l.b16 %v180
        %v326 = vunpack.c.h.b16 %v180
        %v327 = vunpack.c.l.b16 %v181
        %v328 = vunpack.c.h.b16 %v181
        %v329 = vunpack.c.l.b16 %v182
        %v330 = vunpack.c.h.b16 %v182
        %v331 = vunpack.c.l.b16 %v183
        %v332 = vunpack.c.h.b16 %v183
        %v333 = vunpack.c.l.b16 %v184
        %v334 = vunpack.c.h.b16 %v184
        %v335 = vunpack.c.l.b16 %v185
        %v336 = vunpack.c.h.b16 %v185
        %v337 = vunpack.c.l.b16 %v186
        %v338 = vunpack.c.h.b16 %v186
        %v339 = vunpack.c.l.b16 %v187
        %v340 = vunpack.c.h.b16 %v187
        %v341 = vunpack.c.l.b16 %v188
        %v342 = vunpack.c.h.b16 %v188
        %v343 = vunpack.c.l.b16 %v189
        %v344 = vunpack.c.h.b16 %v189
        %v345 = vunpack.c.l.b16 %v190
        %v346 = vunpack.c.h.b16 %v190
        %v347 = vunpack.c.l.b16 %v191
        %v348 = vunpack.c.h.b16 %v191
        %v349 = vunpack.c.l.b16 %v192
        %v350 = vunpack.c.h.b16 %v192
        %v351 = vunpack.c.l.b16 %v193
        %v352 = vunpack.c.h.b16 %v193
        %v353 = vunpack.c.l.b16 %v194
        %v354 = vunpack.c.h.b16 %v194
        %v355 = vunpack.c.l.b16 %v195
        %v356 = vunpack.c.h.b16 %v195
        %v357 = vunpack.c.l.b16 %v196
        %v358 = vunpack.c.h.b16 %v196
        %v359 = vunpack.c.l.b16 %v197
        %v360 = vunpack.c.h.b16 %v197
        %v361 = vunpack.c.l.b16 %v198
        %v362 = vunpack.c.h.b16 %v198
        %v363 = vunpack.c.l.b16 %v199
        %v364 = vunpack.c.h.b16 %v199
        %v365 = vunpack.c.l.b16 %v200
        %v366 = vunpack.c.h.b16 %v200
        %v367 = vunpack.c.l.b16 %v201
        %v368 = vunpack.c.h.b16 %v201
        %v369 = vunpack.c.l.b16 %v202
        %v370 = vunpack.c.h.b16 %v202
        %v371 = vunpack.c.l.b16 %v203
        %v372 = vunpack.c.h.b16 %v203
        %v373 = vunpack.c.l.b16 %v204
        %v374 = vunpack.c.h.b16 %v204
        %v375 = vunpack.c.l.b16 %v205
        %v376 = vunpack.c.h.b16 %v205
        %v377 = vunpack.c.l.b16 %v206
        %v378 = vunpack.c.h.b16 %v206
        %v379 = vunpack.c.l.b16 %v207
        %v380 = vunpack.c.h.b16 %v207
        %v381 = vunpack.c.l.b16 %v208
        %v382 = vunpack.c.h.b16 %v208
        %v383 = vunpack.c.l.b16 %v209
        %v384 = vunpack.c.h.b16 %v209
        %v385 = vunpack.c.l.b16 %v210
        %v386 = vunpack.c.h.b16 %v210
        %v387 = vunpack.c.l.b16 %v211
        %v388 = vunpack.c.h.b16 %v211
        %v389 = vunpack.c.l.b16 %v212
        %v390 = vunpack.c.h.b16 %v212
        %v391 = vunpack.c.l.b16 %v213
        %v392 = vunpack.c.h.b16 %v213
        %v393 = vunpack.c.l.b16 %v214
        %v394 = vunpack.c.h.b16 %v214
        %v395 = vunpack.c.l.b16 %v215
        %v396 = vunpack.c.h.b16 %v215
        %v397 = vunpack.c.l.b16 %v216
        %v398 = vunpack.c.h.b16 %v216
        %v399 = vunpack.c.l.b16 %v217
        %v400 = vunpack.c.h.b16 %v217
        %v401 = vunpack.c.l.b16 %v218
        %v402 = vunpack.c.h.b16 %v218
        %v403 = vunpack.c.l.b16 %v219
        %v404 = vunpack.c.h.b16 %v219
        %v405 = vunpack.c.l.b16 %v220
        %v406 = vunpack.c.h.b16 %v220
        %v407 = vunpack.c.l.b16 %v221
        %v408 = vunpack.c.h.b16 %v221
        %v409 = vunpack.c.l.b16 %v222
        %v410 = vunpack.c.h.b16 %v222
        %v411 = vunpack.c.l.b16 %v223
        %v412 = vunpack.c.h.b16 %v223
        %v413 = vunpack.c.l.b16 %v224
        %v414 = vunpack.c.h.b16 %v224
        %v415 = vunpack.c.l.b16 %v225
        %v416 = vunpack.c.h.b16 %v225
        %v417 = vunpack.c.l.b16 %v226
        %v418 = vunpack.c.h.b16 %v226
        %v419 = vunpack.c.l.b16 %v227
        %v420 = vunpack.c.h.b16 %v227
        %v421 = vunpack.c.l.b16 %v228
        %v422 = vunpack.c.h.b16 %v228
        %v423 = vunpack.c.l.b16 %v229
        %v424 = vunpack.c.h.b16 %v229
        %v425 = vunpack.c.l.b16 %v230
        %v426 = vunpack.c.h.b16 %v230
        %v427 = vunpack.c.l.b16 %v231
        %v428 = vunpack.c.h.b16 %v231
        %v429 = vunpack.c.l.b16 %v232
        %v430 = vunpack.c.h.b16 %v232
        %v431 = vunpack.c.l.b16 %v233
        %v432 = vunpack.c.h.b16 %v233
        %v433 = vunpack.c.l.b16 %v234
        %v434 = vunpack.c.h.b16 %v234
        %v435 = vunpack.c.l.b16 %v235
        %v436 = vunpack.c.h.b16 %v235
        %v437 = vunpack.c.l.b16 %v236
        %v438 = vunpack.c.h.b16 %v236
        %v439 = vpack.c.b16 %v315, %v311
        %v440 = vpack.c.b16 %v316, %v312
        %v441 = vpack.c.b16 %v317, %v313
        %v442 = vpack.c.b16 %v318, %v314
        %v443 = vpack.c.b16 %v323, %v319
        %v444 = vpack.c.b16 %v324, %v320
        %v445 = vpack.c.b16 %v325, %v321
        %v446 = vpack.c.b16 %v326, %v322
        %v447 = vpack.c.b16 %v331, %v327
        %v448 = vpack.c.b16 %v332, %v328
        %v449 = vpack.c.b16 %v333, %v329
        %v450 = vpack.c.b16 %v334, %v330
        %v451 = vpack.c.b16 %v339, %v335
        %v452 = vpack.c.b16 %v340, %v336
        %v453 = vpack.c.b16 %v341, %v337
        %v454 = vpack.c.b16 %v342, %v338
        %v455 = vpack.c.b16 %v347, %v343
        %v456 = vpack.c.b16 %v348, %v344
        %v457 = vpack.c.b16 %v349, %v345
        %v458 = vpack.c.b16 %v350, %v346
        %v459 = vpack.c.b16 %v355, %v351
        %v460 = vpack.c.b16 %v356, %v352
        %v461 = vpack.c.b16 %v357, %v353
        %v462 = vpack.c.b16 %v358, %v354
        %v463 = vpack.c.b16 %v363, %v359
        %v464 = vpack.c.b16 %v364, %v360
        %v465 = vpack.c.b16 %v365, %v361
        %v466 = vpack.c.b16 %v366, %v362
        %v467 = vpack.c.b16 %v371, %v367
        %v468 = vpack.c.b16 %v372, %v368
        %v469 = vpack.c.b16 %v373, %v369
        %v470 = vpack.c.b16 %v374, %v370
        %v471 = vpack.c.b16 %v379, %v375
        %v472 = vpack.c.b16 %v380, %v376
        %v473 = vpack.c.b16 %v381, %v377
        %v474 = vpack.c.b16 %v382, %v378
        %v475 = vpack.c.b16 %v387, %v383
        %v476 = vpack.c.b16 %v388, %v384
        %v477 = vpack.c.b16 %v389, %v385
        %v478 = vpack.c.b16 %v390, %v386
        %v479 = vpack.c.b16 %v395, %v391
        %v480 = vpack.c.b16 %v396, %v392
        %v481 = vpack.c.b16 %v397, %v393
        %v482 = vpack.c.b16 %v398, %v394
        %v483 = vpack.c.b16 %v403, %v399
        %v484 = vpack.c.b16 %v404, %v400
        %v485 = vpack.c.b16 %v405, %v401
        %v486 = vpack.c.b16 %v406, %v402
        %v487 = vpack.c.b16 %v411, %v407
        %v488 = vpack.c.b16 %v412, %v408
        %v489 = vpack.c.b16 %v413, %v409
        %v490 = vpack.c.b16 %v414, %v410
        %v491 = vpack.c.b16 %v419, %v415
        %v492 = vpack.c.b16 %v420, %v416
        %v493 = vpack.c.b16 %v421, %v417
        %v494 = vpack.c.b16 %v422, %v418
        %v495 = vpack.c.b16 %v427, %v423
        %v496 = vpack.c.b16 %v428, %v424
        %v497 = vpack.c.b16 %v429, %v425
        %v498 = vpack.c.b16 %v430, %v426
        %v499 = vpack.c.b16 %v435, %v431
        %v500 = vpack.c.b16 %v436, %v432
        %v501 = vpack.c.b16 %v437, %v433
        %v502 = vpack.c.b16 %v438, %v434
        %567 = vmatpush.bf16.msra.mxu0 %v467
        %568 = vmatpush.bf16.msra.mxu0 %v463
        %569 = vmatpush.bf16.msra.mxu0 %v459
        %570 = vmatpush.bf16.msra.mxu0 %v455
        %571 = vmatpush.bf16.msra.mxu0 %v451
        %572 = vmatpush.bf16.msra.mxu0 %v447
        %573 = vmatpush.bf16.msra.mxu0 %v443
        %574 = vmatpush.bf16.msra.mxu0 %v439
        %575 = vmatmul.bf16.gmra.mxu0 %v243
        %v576 = vpop.f32.mrf.mxu0
        %v577 = vadd.f32 0.0, %v576
        %v578 = vpop.f32.mrf.mxu0
        %v579 = vadd.f32 0.0, %v578
        %580 = vdwg.mxu0
        %581 = vmatpush.bf16.msra.mxu0 %v499
        %582 = vmatpush.bf16.msra.mxu0 %v495
        %583 = vmatpush.bf16.msra.mxu0 %v491
        %584 = vmatpush.bf16.msra.mxu0 %v487
        %585 = vmatpush.bf16.msra.mxu0 %v483
        %586 = vmatpush.bf16.msra.mxu0 %v479
        %587 = vmatpush.bf16.msra.mxu0 %v475
        %588 = vmatpush.bf16.msra.mxu0 %v471
        %589 = vmatmul.bf16.gmra.mxu0 %v244
        %v590 = vpop.f32.mrf.mxu0
        %v591 = vadd.f32 %v577, %v590
        %v592 = vpop.f32.mrf.mxu0
        %v593 = vadd.f32 %v579, %v592
        %594 = vdwg.mxu0
        %595 = vmatpush.bf16.msra.mxu0 %v468
        %596 = vmatpush.bf16.msra.mxu0 %v464
        %597 = vmatpush.bf16.msra.mxu0 %v460
        %598 = vmatpush.bf16.msra.mxu0 %v456
        %599 = vmatpush.bf16.msra.mxu0 %v452
        %600 = vmatpush.bf16.msra.mxu0 %v448
        %601 = vmatpush.bf16.msra.mxu0 %v444
        %602 = vmatpush.bf16.msra.mxu0 %v440
        %603 = vmatmul.bf16.gmra.mxu0 %v243
        %v604 = vpop.f32.mrf.mxu0
        %v605 = vadd.f32 0.0, %v604
        %v606 = vpop.f32.mrf.mxu0
        %v607 = vadd.f32 0.0, %v606
        %608 = vdwg.mxu0
        %609 = vmatpush.bf16.msra.mxu0 %v500
        %610 = vmatpush.bf16.msra.mxu0 %v496
        %611 = vmatpush.bf16.msra.mxu0 %v492
        %612 = vmatpush.bf16.msra.mxu0 %v488
        %613 = vmatpush.bf16.msra.mxu0 %v484
        %614 = vmatpush.bf16.msra.mxu0 %v480
        %615 = vmatpush.bf16.msra.mxu0 %v476
        %616 = vmatpush.bf16.msra.mxu0 %v472
        %617 = vmatmul.bf16.gmra.mxu0 %v244
        %v618 = vpop.f32.mrf.mxu0
        %v619 = vadd.f32 %v605, %v618
        %v620 = vpop.f32.mrf.mxu0
        %v621 = vadd.f32 %v607, %v620
        %622 = vdwg.mxu0
        %623 = vmatpush.bf16.msra.mxu0 %v469
        %624 = vmatpush.bf16.msra.mxu0 %v465
        %625 = vmatpush.bf16.msra.mxu0 %v461
        %626 = vmatpush.bf16.msra.mxu0 %v457
        %627 = vmatpush.bf16.msra.mxu0 %v453
        %628 = vmatpush.bf16.msra.mxu0 %v449
        %629 = vmatpush.bf16.msra.mxu0 %v445
        %630 = vmatpush.bf16.msra.mxu0 %v441
        %631 = vmatmul.bf16.gmra.mxu0 %v243
        %v632 = vpop.f32.mrf.mxu0
        %v633 = vadd.f32 0.0, %v632
        %v634 = vpop.f32.mrf.mxu0
        %v635 = vadd.f32 0.0, %v634
        %636 = vdwg.mxu0
        %637 = vmatpush.bf16.msra.mxu0 %v501
        %638 = vmatpush.bf16.msra.mxu0 %v497
        %639 = vmatpush.bf16.msra.mxu0 %v493
        %640 = vmatpush.bf16.msra.mxu0 %v489
        %641 = vmatpush.bf16.msra.mxu0 %v485
        %642 = vmatpush.bf16.msra.mxu0 %v481
        %643 = vmatpush.bf16.msra.mxu0 %v477
        %644 = vmatpush.bf16.msra.mxu0 %v473
        %645 = vmatmul.bf16.gmra.mxu0 %v244
        %v646 = vpop.f32.mrf.mxu0
        %v647 = vadd.f32 %v633, %v646
        %v648 = vpop.f32.mrf.mxu0
        %v649 = vadd.f32 %v635, %v648
        %650 = vdwg.mxu0
        %651 = vmatpush.bf16.msra.mxu0 %v470
        %652 = vmatpush.bf16.msra.mxu0 %v466
        %653 = vmatpush.bf16.msra.mxu0 %v462
        %654 = vmatpush.bf16.msra.mxu0 %v458
        %655 = vmatpush.bf16.msra.mxu0 %v454
        %656 = vmatpush.bf16.msra.mxu0 %v450
        %657 = vmatpush.bf16.msra.mxu0 %v446
        %658 = vmatpush.bf16.msra.mxu0 %v442
        %659 = vmatmul.bf16.gmra.mxu0 %v243
        %v660 = vpop.f32.mrf.mxu0
        %v661 = vadd.f32 0.0, %v660
        %v662 = vpop.f32.mrf.mxu0
        %v663 = vadd.f32 0.0, %v662
        %664 = vdwg.mxu0
        %665 = vmatpush.bf16.msra.mxu0 %v502
        %666 = vmatpush.bf16.msra.mxu0 %v498
        %667 = vmatpush.bf16.msra.mxu0 %v494
        %668 = vmatpush.bf16.msra.mxu0 %v490
        %669 = vmatpush.bf16.msra.mxu0 %v486
        %670 = vmatpush.bf16.msra.mxu0 %v482
        %671 = vmatpush.bf16.msra.mxu0 %v478
        %672 = vmatpush.bf16.msra.mxu0 %v474
        %673 = vmatmul.bf16.gmra.mxu0 %v244
        %v674 = vpop.f32.mrf.mxu0
        %v675 = vadd.f32 %v661, %v674
        %v676 = vpop.f32.mrf.mxu0
        %v677 = vadd.f32 %v663, %v676
        %678 = vdwg.mxu0
        %s679 = smul.u32 %s16, 8
        %s680 = smul.addr %s679, 8
        %s681 = scalar_lea.vmem [#allocation2], %s680
        %682 = vst [vmem:[%s681] sm:$0xff] %v591
        %683 = vst [vmem:[%s681 + $0x8] sm:$0xff] %v619
        %684 = vst [vmem:[%s681 + $0x10] sm:$0xff] %v647
        %685 = vst [vmem:[%s681 + $0x18] sm:$0xff] %v675
        %686 = vst [vmem:[%s681 + $0x20] sm:$0xff] %v593
        %687 = vst [vmem:[%s681 + $0x28] sm:$0xff] %v621
        %688 = vst [vmem:[%s681 + $0x30] sm:$0xff] %v649
        %689 = vst [vmem:[%s681 + $0x38] sm:$0xff] %v677
        %p690 = scmp.eq.s32.totalorder %s16, 3
        // Predicated region
        $region33: #{generator_forward.7} parent=27 // pred_check
          %p691 = pneg %p690
        $region34: #{generator_forward.7} parent=27 // pred_check_branch
          %693 = sbr.rel (%p691) target = $region36
        $region35: #{generator_forward.7} parent=27 // pred_region
          %v694 = vld [vmem:[#allocation2] sm:$0xff]
          %v695 = vld [vmem:[#allocation2 + $0x8] sm:$0xff]
          %v696 = vld [vmem:[#allocation2 + $0x10] sm:$0xff]
          %v697 = vld [vmem:[#allocation2 + $0x18] sm:$0xff]
          %v698 = vld [vmem:[#allocation2 + $0x20] sm:$0xff]
          %v699 = vld [vmem:[#allocation2 + $0x28] sm:$0xff]
          %v700 = vld [vmem:[#allocation2 + $0x30] sm:$0xff]
          %v701 = vld [vmem:[#allocation2 + $0x38] sm:$0xff]
          %v702 = vld [vmem:[#allocation2 + $0x40] sm:$0xff]
          %v703 = vld [vmem:[#allocation2 + $0x48] sm:$0xff]
          %v704 = vld [vmem:[#allocation2 + $0x50] sm:$0xff]
          %v705 = vld [vmem:[#allocation2 + $0x58] sm:$0xff]
          %v706 = vld [vmem:[#allocation2 + $0x60] sm:$0xff]
          %v707 = vld [vmem:[#allocation2 + $0x68] sm:$0xff]
          %v708 = vld [vmem:[#allocation2 + $0x70] sm:$0xff]
          %v709 = vld [vmem:[#allocation2 + $0x78] sm:$0xff]
          %v710 = vld [vmem:[#allocation2 + $0x80] sm:$0xff]
          %v711 = vld [vmem:[#allocation2 + $0x88] sm:$0xff]
          %v712 = vld [vmem:[#allocation2 + $0x90] sm:$0xff]
          %v713 = vld [vmem:[#allocation2 + $0x98] sm:$0xff]
          %v714 = vld [vmem:[#allocation2 + $0xa0] sm:$0xff]
          %v715 = vld [vmem:[#allocation2 + $0xa8] sm:$0xff]
          %v716 = vld [vmem:[#allocation2 + $0xb0] sm:$0xff]
          %v717 = vld [vmem:[#allocation2 + $0xb8] sm:$0xff]
          %v718 = vld [vmem:[#allocation2 + $0xc0] sm:$0xff]
          %v719 = vld [vmem:[#allocation2 + $0xc8] sm:$0xff]
          %v720 = vld [vmem:[#allocation2 + $0xd0] sm:$0xff]
          %v721 = vld [vmem:[#allocation2 + $0xd8] sm:$0xff]
          %v722 = vld [vmem:[#allocation2 + $0xe0] sm:$0xff]
          %v723 = vld [vmem:[#allocation2 + $0xe8] sm:$0xff]
          %v724 = vld [vmem:[#allocation2 + $0xf0] sm:$0xff]
          %v725 = vld [vmem:[#allocation2 + $0xf8] sm:$0xff]
          %v726 = vadd.f32 %v694, %v698
          %v727 = vadd.f32 %v726, %v702
          %v728 = vadd.f32 %v727, %v706
          %v729 = vadd.f32 %v728, %v710
          %v730 = vadd.f32 %v729, %v714
          %v731 = vadd.f32 %v730, %v718
          %v732 = vadd.f32 %v731, %v722
          %v733 = vrot.slane %v732, 4
          %v734 = vadd.f32 %v732, %v733
          %v735 = vrot.slane %v734, 2
          %v736 = vadd.f32 %v734, %v735
          %v737 = vrot.slane %v736, 1
          %v738 = vadd.f32 %v736, %v737
          %v739 = vadd.f32 %v695, %v699
          %v740 = vadd.f32 %v739, %v703
          %v741 = vadd.f32 %v740, %v707
          %v742 = vadd.f32 %v741, %v711
          %v743 = vadd.f32 %v742, %v715
          %v744 = vadd.f32 %v743, %v719
          %v745 = vadd.f32 %v744, %v723
          %v746 = vrot.slane %v745, 4
          %v747 = vadd.f32 %v745, %v746
          %v748 = vrot.slane %v747, 2
          %v749 = vadd.f32 %v747, %v748
          %v750 = vrot.slane %v749, 1
          %v751 = vadd.f32 %v749, %v750
          %v752 = vadd.f32 %v696, %v700
          %v753 = vadd.f32 %v752, %v704
          %v754 = vadd.f32 %v753, %v708
          %v755 = vadd.f32 %v754, %v712
          %v756 = vadd.f32 %v755, %v716
          %v757 = vadd.f32 %v756, %v720
          %v758 = vadd.f32 %v757, %v724
          %v759 = vrot.slane %v758, 4
          %v760 = vadd.f32 %v758, %v759
          %v761 = vrot.slane %v760, 2
          %v762 = vadd.f32 %v760, %v761
          %v763 = vrot.slane %v762, 1
          %v764 = vadd.f32 %v762, %v763
          %v765 = vadd.f32 %v697, %v701
          %v766 = vadd.f32 %v765, %v705
          %v767 = vadd.f32 %v766, %v709
          %v768 = vadd.f32 %v767, %v713
          %v769 = vadd.f32 %v768, %v717
          %v770 = vadd.f32 %v769, %v721
          %v771 = vadd.f32 %v770, %v725
          %v772 = vrot.slane %v771, 4
          %v773 = vadd.f32 %v771, %v772
          %v774 = vrot.slane %v773, 2
          %v775 = vadd.f32 %v773, %v774
          %v776 = vrot.slane %v775, 1
          %v777 = vadd.f32 %v775, %v776
          %v778 = vmul.f32 %v738, 0.125
          %v779 = vmul.f32 %v751, 0.125
          %v780 = vmul.f32 %v764, 0.125
          %v781 = vmul.f32 %v777, 0.125
          %v782 = vmul.f32 %v694, %v694
          %v783 = vmul.f32 %v695, %v695
          %v784 = vmul.f32 %v696, %v696
          %v785 = vmul.f32 %v697, %v697
          %v786 = vmul.f32 %v698, %v698
          %v787 = vmul.f32 %v699, %v699
          %v788 = vmul.f32 %v700, %v700
          %v789 = vmul.f32 %v701, %v701
          %v790 = vmul.f32 %v702, %v702
          %v791 = vmul.f32 %v703, %v703
          %v792 = vmul.f32 %v704, %v704
          %v793 = vmul.f32 %v705, %v705
          %v794 = vmul.f32 %v706, %v706
          %v795 = vmul.f32 %v707, %v707
          %v796 = vmul.f32 %v708, %v708
          %v797 = vmul.f32 %v709, %v709
          %v798 = vmul.f32 %v710, %v710
          %v799 = vmul.f32 %v711, %v711
          %v800 = vmul.f32 %v712, %v712
          %v801 = vmul.f32 %v713, %v713
          %v802 = vmul.f32 %v714, %v714
          %v803 = vmul.f32 %v715, %v715
          %v804 = vmul.f32 %v716, %v716
          %v805 = vmul.f32 %v717, %v717
          %v806 = vmul.f32 %v718, %v718
          %v807 = vmul.f32 %v719, %v719
          %v808 = vmul.f32 %v720, %v720
          %v809 = vmul.f32 %v721, %v721
          %v810 = vmul.f32 %v722, %v722
          %v811 = vmul.f32 %v723, %v723
          %v812 = vmul.f32 %v724, %v724
          %v813 = vmul.f32 %v725, %v725
          %v814 = vadd.f32 %v782, %v786
          %v815 = vadd.f32 %v814, %v790
          %v816 = vadd.f32 %v815, %v794
          %v817 = vadd.f32 %v816, %v798
          %v818 = vadd.f32 %v817, %v802
          %v819 = vadd.f32 %v818, %v806
          %v820 = vadd.f32 %v819, %v810
          %v821 = vrot.slane %v820, 4
          %v822 = vadd.f32 %v820, %v821
          %v823 = vrot.slane %v822, 2
          %v824 = vadd.f32 %v822, %v823
          %v825 = vrot.slane %v824, 1
          %v826 = vadd.f32 %v824, %v825
          %v827 = vadd.f32 %v783, %v787
          %v828 = vadd.f32 %v827, %v791
          %v829 = vadd.f32 %v828, %v795
          %v830 = vadd.f32 %v829, %v799
          %v831 = vadd.f32 %v830, %v803
          %v832 = vadd.f32 %v831, %v807
          %v833 = vadd.f32 %v832, %v811
          %v834 = vrot.slane %v833, 4
          %v835 = vadd.f32 %v833, %v834
          %v836 = vrot.slane %v835, 2
          %v837 = vadd.f32 %v835, %v836
          %v838 = vrot.slane %v837, 1
          %v839 = vadd.f32 %v837, %v838
          %v840 = vadd.f32 %v784, %v788
          %v841 = vadd.f32 %v840, %v792
          %v842 = vadd.f32 %v841, %v796
          %v843 = vadd.f32 %v842, %v800
          %v844 = vadd.f32 %v843, %v804
          %v845 = vadd.f32 %v844, %v808
          %v846 = vadd.f32 %v845, %v812
          %v847 = vrot.slane %v846, 4
          %v848 = vadd.f32 %v846, %v847
          %v849 = vrot.slane %v848, 2
          %v850 = vadd.f32 %v848, %v849
          %v851 = vrot.slane %v850, 1
          %v852 = vadd.f32 %v850, %v851
          %v853 = vadd.f32 %v785, %v789
          %v854 = vadd.f32 %v853, %v793
          %v855 = vadd.f32 %v854, %v797
          %v856 = vadd.f32 %v855, %v801
          %v857 = vadd.f32 %v856, %v805
          %v858 = vadd.f32 %v857, %v809
          %v859 = vadd.f32 %v858, %v813
          %v860 = vrot.slane %v859, 4
          %v861 = vadd.f32 %v859, %v860
          %v862 = vrot.slane %v861, 2
          %v863 = vadd.f32 %v861, %v862
          %v864 = vrot.slane %v863, 1
          %v865 = vadd.f32 %v863, %v864
          %v866 = vmul.f32 %v826, 0.125
          %v867 = vmul.f32 %v839, 0.125
          %v868 = vmul.f32 %v852, 0.125
          %v869 = vmul.f32 %v865, 0.125
          %v870 = vmul.f32 %v778, %v778
          %v871 = vmul.f32 %v779, %v779
          %v872 = vmul.f32 %v780, %v780
          %v873 = vmul.f32 %v781, %v781
          %v874 = vsub.f32 %v866, %v870
          %v875 = vsub.f32 %v867, %v871
          %v876 = vsub.f32 %v868, %v872
          %v877 = vsub.f32 %v869, %v873
          %v878 = vmax.f32 %v874, 0.0
          %v879 = vmax.f32 %v875, 0.0
          %v880 = vmax.f32 %v876, 0.0
          %v881 = vmax.f32 %v877, 0.0
          %v882 = vadd.f32 %v878, 1e-05
          %v883 = vadd.f32 %v879, 1e-05
          %v884 = vadd.f32 %v880, 1e-05
          %v885 = vadd.f32 %v881, 1e-05
          %v886 = vrsqrt.pop %v882
          %v887 = vmul.f32 %v886, %v882
          %v888 = vmul.f32 %v887, %v886
          %v889 = vmul.f32 0.5, %v888
          %v890 = vsub.f32 1.5, %v889
          %v891 = vmul.f32 %v886, %v890
          %vm892 = vweird.f32 %v882
          %vm893 = vweird.f32 %v886
          %vm894 = vmor %vm892, %vm893
          %v895 = vsel %vm894, %v886, %v891
          %v896 = vrsqrt.pop %v883
          %v897 = vmul.f32 %v896, %v883
          %v898 = vmul.f32 %v897, %v896
          %v899 = vmul.f32 0.5, %v898
          %v900 = vsub.f32 1.5, %v899
          %v901 = vmul.f32 %v896, %v900
          %vm902 = vweird.f32 %v883
          %vm903 = vweird.f32 %v896
          %vm904 = vmor %vm902, %vm903
          %v905 = vsel %vm904, %v896, %v901
          %v906 = vrsqrt.pop %v884
          %v907 = vmul.f32 %v906, %v884
          %v908 = vmul.f32 %v907, %v906
          %v909 = vmul.f32 0.5, %v908
          %v910 = vsub.f32 1.5, %v909
          %v911 = vmul.f32 %v906, %v910
          %vm912 = vweird.f32 %v884
          %vm913 = vweird.f32 %v906
          %vm914 = vmor %vm912, %vm913
          %v915 = vsel %vm914, %v906, %v911
          %v916 = vrsqrt.pop %v885
          %v917 = vmul.f32 %v916, %v885
          %v918 = vmul.f32 %v917, %v916
          %v919 = vmul.f32 0.5, %v918
          %v920 = vsub.f32 1.5, %v919
          %v921 = vmul.f32 %v916, %v920
          %vm922 = vweird.f32 %v885
          %vm923 = vweird.f32 %v916
          %vm924 = vmor %vm922, %vm923
          %v925 = vsel %vm924, %v916, %v921
          %v926 = vsub.f32 %v694, %v778
          %v927 = vsub.f32 %v695, %v779
          %v928 = vsub.f32 %v696, %v780
          %v929 = vsub.f32 %v697, %v781
          %v930 = vsub.f32 %v698, %v778
          %v931 = vsub.f32 %v699, %v779
          %v932 = vsub.f32 %v700, %v780
          %v933 = vsub.f32 %v701, %v781
          %v934 = vsub.f32 %v702, %v778
          %v935 = vsub.f32 %v703, %v779
          %v936 = vsub.f32 %v704, %v780
          %v937 = vsub.f32 %v705, %v781
          %v938 = vsub.f32 %v706, %v778
          %v939 = vsub.f32 %v707, %v779
          %v940 = vsub.f32 %v708, %v780
          %v941 = vsub.f32 %v709, %v781
          %v942 = vsub.f32 %v710, %v778
          %v943 = vsub.f32 %v711, %v779
          %v944 = vsub.f32 %v712, %v780
          %v945 = vsub.f32 %v713, %v781
          %v946 = vsub.f32 %v714, %v778
          %v947 = vsub.f32 %v715, %v779
          %v948 = vsub.f32 %v716, %v780
          %v949 = vsub.f32 %v717, %v781
          %v950 = vsub.f32 %v718, %v778
          %v951 = vsub.f32 %v719, %v779
          %v952 = vsub.f32 %v720, %v780
          %v953 = vsub.f32 %v721, %v781
          %v954 = vsub.f32 %v722, %v778
          %v955 = vsub.f32 %v723, %v779
          %v956 = vsub.f32 %v724, %v780
          %v957 = vsub.f32 %v725, %v781
          %v958 = vmul.f32 %v926, %v895
          %v959 = vmul.f32 %v927, %v905
          %v960 = vmul.f32 %v928, %v915
          %v961 = vmul.f32 %v929, %v925
          %v962 = vmul.f32 %v930, %v895
          %v963 = vmul.f32 %v931, %v905
          %v964 = vmul.f32 %v932, %v915
          %v965 = vmul.f32 %v933, %v925
          %v966 = vmul.f32 %v934, %v895
          %v967 = vmul.f32 %v935, %v905
          %v968 = vmul.f32 %v936, %v915
          %v969 = vmul.f32 %v937, %v925
          %v970 = vmul.f32 %v938, %v895
          %v971 = vmul.f32 %v939, %v905
          %v972 = vmul.f32 %v940, %v915
          %v973 = vmul.f32 %v941, %v925
          %v974 = vmul.f32 %v942, %v895
          %v975 = vmul.f32 %v943, %v905
          %v976 = vmul.f32 %v944, %v915
          %v977 = vmul.f32 %v945, %v925
          %v978 = vmul.f32 %v946, %v895
          %v979 = vmul.f32 %v947, %v905
          %v980 = vmul.f32 %v948, %v915
          %v981 = vmul.f32 %v949, %v925
          %v982 = vmul.f32 %v950, %v895
          %v983 = vmul.f32 %v951, %v905
          %v984 = vmul.f32 %v952, %v915
          %v985 = vmul.f32 %v953, %v925
          %v986 = vmul.f32 %v954, %v895
          %v987 = vmul.f32 %v955, %v905
          %v988 = vmul.f32 %v956, %v915
          %v989 = vmul.f32 %v957, %v925
          %vm990 = vcmp.ge.f32.partialorder %v958, 0.0
          %vm991 = vcmp.ge.f32.partialorder %v959, 0.0
          %vm992 = vcmp.ge.f32.partialorder %v960, 0.0
          %vm993 = vcmp.ge.f32.partialorder %v961, 0.0
          %vm994 = vcmp.ge.f32.partialorder %v962, 0.0
          %vm995 = vcmp.ge.f32.partialorder %v963, 0.0
          %vm996 = vcmp.ge.f32.partialorder %v964, 0.0
          %vm997 = vcmp.ge.f32.partialorder %v965, 0.0
          %vm998 = vcmp.ge.f32.partialorder %v966, 0.0
          %vm999 = vcmp.ge.f32.partialorder %v967, 0.0
          %vm1000 = vcmp.ge.f32.partialorder %v968, 0.0
          %vm1001 = vcmp.ge.f32.partialorder %v969, 0.0
          %vm1002 = vcmp.ge.f32.partialorder %v970, 0.0
          %vm1003 = vcmp.ge.f32.partialorder %v971, 0.0
          %vm1004 = vcmp.ge.f32.partialorder %v972, 0.0
          %vm1005 = vcmp.ge.f32.partialorder %v973, 0.0
          %vm1006 = vcmp.ge.f32.partialorder %v974, 0.0
          %vm1007 = vcmp.ge.f32.partialorder %v975, 0.0
          %vm1008 = vcmp.ge.f32.partialorder %v976, 0.0
          %vm1009 = vcmp.ge.f32.partialorder %v977, 0.0
          %vm1010 = vcmp.ge.f32.partialorder %v978, 0.0
          %vm1011 = vcmp.ge.f32.partialorder %v979, 0.0
          %vm1012 = vcmp.ge.f32.partialorder %v980, 0.0
          %vm1013 = vcmp.ge.f32.partialorder %v981, 0.0
          %vm1014 = vcmp.ge.f32.partialorder %v982, 0.0
          %vm1015 = vcmp.ge.f32.partialorder %v983, 0.0
          %vm1016 = vcmp.ge.f32.partialorder %v984, 0.0
          %vm1017 = vcmp.ge.f32.partialorder %v985, 0.0
          %vm1018 = vcmp.ge.f32.partialorder %v986, 0.0
          %vm1019 = vcmp.ge.f32.partialorder %v987, 0.0
          %vm1020 = vcmp.ge.f32.partialorder %v988, 0.0
          %vm1021 = vcmp.ge.f32.partialorder %v989, 0.0
          %v1022 = vmul.f32 %v958, 0.2
          %v1023 = vmul.f32 %v959, 0.2
          %v1024 = vmul.f32 %v960, 0.2
          %v1025 = vmul.f32 %v961, 0.2
          %v1026 = vmul.f32 %v962, 0.2
          %v1027 = vmul.f32 %v963, 0.2
          %v1028 = vmul.f32 %v964, 0.2
          %v1029 = vmul.f32 %v965, 0.2
          %v1030 = vmul.f32 %v966, 0.2
          %v1031 = vmul.f32 %v967, 0.2
          %v1032 = vmul.f32 %v968, 0.2
          %v1033 = vmul.f32 %v969, 0.2
          %v1034 = vmul.f32 %v970, 0.2
          %v1035 = vmul.f32 %v971, 0.2
          %v1036 = vmul.f32 %v972, 0.2
          %v1037 = vmul.f32 %v973, 0.2
          %v1038 = vmul.f32 %v974, 0.2
          %v1039 = vmul.f32 %v975, 0.2
          %v1040 = vmul.f32 %v976, 0.2
          %v1041 = vmul.f32 %v977, 0.2
          %v1042 = vmul.f32 %v978, 0.2
          %v1043 = vmul.f32 %v979, 0.2
          %v1044 = vmul.f32 %v980, 0.2
          %v1045 = vmul.f32 %v981, 0.2
          %v1046 = vmul.f32 %v982, 0.2
          %v1047 = vmul.f32 %v983, 0.2
          %v1048 = vmul.f32 %v984, 0.2
          %v1049 = vmul.f32 %v985, 0.2
          %v1050 = vmul.f32 %v986, 0.2
          %v1051 = vmul.f32 %v987, 0.2
          %v1052 = vmul.f32 %v988, 0.2
          %v1053 = vmul.f32 %v989, 0.2
          %v1054 = vsel %vm990, %v958, %v1022
          %v1055 = vsel %vm991, %v959, %v1023
          %v1056 = vsel %vm992, %v960, %v1024
          %v1057 = vsel %vm993, %v961, %v1025
          %v1058 = vsel %vm994, %v962, %v1026
          %v1059 = vsel %vm995, %v963, %v1027
          %v1060 = vsel %vm996, %v964, %v1028
          %v1061 = vsel %vm997, %v965, %v1029
          %v1062 = vsel %vm998, %v966, %v1030
          %v1063 = vsel %vm999, %v967, %v1031
          %v1064 = vsel %vm1000, %v968, %v1032
          %v1065 = vsel %vm1001, %v969, %v1033
          %v1066 = vsel %vm1002, %v970, %v1034
          %v1067 = vsel %vm1003, %v971, %v1035
          %v1068 = vsel %vm1004, %v972, %v1036
          %v1069 = vsel %vm1005, %v973, %v1037
          %v1070 = vsel %vm1006, %v974, %v1038
          %v1071 = vsel %vm1007, %v975, %v1039
          %v1072 = vsel %vm1008, %v976, %v1040
          %v1073 = vsel %vm1009, %v977, %v1041
          %v1074 = vsel %vm1010, %v978, %v1042
          %v1075 = vsel %vm1011, %v979, %v1043
          %v1076 = vsel %vm1012, %v980, %v1044
          %v1077 = vsel %vm1013, %v981, %v1045
          %v1078 = vsel %vm1014, %v982, %v1046
          %v1079 = vsel %vm1015, %v983, %v1047
          %v1080 = vsel %vm1016, %v984, %v1048
          %v1081 = vsel %vm1017, %v985, %v1049
          %v1082 = vsel %vm1018, %v986, %v1050
          %v1083 = vsel %vm1019, %v987, %v1051
          %v1084 = vsel %vm1020, %v988, %v1052
          %v1085 = vsel %vm1021, %v989, %v1053
          %v1086 = vpack.c.bf16 %v1055, %v1054
          %v1087 = vpack.c.bf16 %v1057, %v1056
          %v1088 = vpack.c.bf16 %v1059, %v1058
          %v1089 = vpack.c.bf16 %v1061, %v1060
          %v1090 = vpack.c.bf16 %v1063, %v1062
          %v1091 = vpack.c.bf16 %v1065, %v1064
          %v1092 = vpack.c.bf16 %v1067, %v1066
          %v1093 = vpack.c.bf16 %v1069, %v1068
          %v1094 = vpack.c.bf16 %v1071, %v1070
          %v1095 = vpack.c.bf16 %v1073, %v1072
          %v1096 = vpack.c.bf16 %v1075, %v1074
          %v1097 = vpack.c.bf16 %v1077, %v1076
          %v1098 = vpack.c.bf16 %v1079, %v1078
          %v1099 = vpack.c.bf16 %v1081, %v1080
          %v1100 = vpack.c.bf16 %v1083, %v1082
          %v1101 = vpack.c.bf16 %v1085, %v1084
          %1102 = vst [vmem:[%s2] sm:$0xff] %v1086
          %1103 = vst [vmem:[%s2 + $0x8] sm:$0xff] %v1087
          %1104 = vst [vmem:[%s2 + $0x10] sm:$0xff] %v1088
          %1105 = vst [vmem:[%s2 + $0x18] sm:$0xff] %v1089
          %1106 = vst [vmem:[%s2 + $0x20] sm:$0xff] %v1090
          %1107 = vst [vmem:[%s2 + $0x28] sm:$0xff] %v1091
          %1108 = vst [vmem:[%s2 + $0x30] sm:$0xff] %v1092
          %1109 = vst [vmem:[%s2 + $0x38] sm:$0xff] %v1093
          %1110 = vst [vmem:[%s2 + $0x40] sm:$0xff] %v1094
          %1111 = vst [vmem:[%s2 + $0x48] sm:$0xff] %v1095
          %1112 = vst [vmem:[%s2 + $0x50] sm:$0xff] %v1096
          %1113 = vst [vmem:[%s2 + $0x58] sm:$0xff] %v1097
          %1114 = vst [vmem:[%s2 + $0x60] sm:$0xff] %v1098
          %1115 = vst [vmem:[%s2 + $0x68] sm:$0xff] %v1099
          %1116 = vst [vmem:[%s2 + $0x70] sm:$0xff] %v1100
          %1117 = vst [vmem:[%s2 + $0x78] sm:$0xff] %v1101
        $region36: #{generator_forward.7} parent=27 // pred_fallthru
          _
        // Predicated region
        $region37: #{generator_forward.7} parent=27 // pred_check
          %p1118 = pneg %p81
        $region38: #{generator_forward.7} parent=27 // pred_check_branch
          %1120 = sbr.rel (%p1118) target = $region40
        $region39: #{generator_forward.7} parent=27 // pred_region
          _
        $region40: #{generator_forward.7} parent=27 // pred_fallthru
          _
        // Predicated region
        $region41: #{generator_forward.7} parent=27 // pred_check
          %p1121 = pneg %p81
        $region42: #{generator_forward.7} parent=27 // pred_check_branch
          %1123 = sbr.rel (%p1121) target = $region44
        $region43: #{generator_forward.7} parent=27 // pred_region
          _
        $region44: #{generator_forward.7} parent=27 // pred_fallthru
          _
      $region28: #{generator_forward.7} parent=5 // pred_fallthru
        _
      %p1124 = scmp.le.s32.totalorder 2, %s11
      // Predicated region
      $region45: #{generator_forward.7} parent=5 // pred_check
        %p1125 = pneg %p1124
      $region46: #{generator_forward.7} parent=5 // pred_check_branch
        %1127 = sbr.rel (%p1125) target = $region48
      $region47: #{generator_forward.7} parent=5 // pred_region
        %s1128 = ssub.s32 %s11, 2
      $region48: #{generator_forward.7} parent=5 // pred_fallthru
        _
    $region6: #{generator_forward.7} parent=1 // loop_footer
      %s15 = sadd.s32 1, %s11
    $region7: #{generator_forward.7} parent=1 // loop_footer_branch
      %10 = sbr.rel target = $region3
    $region8: #{generator_forward.7} parent=1 // loop_exit
      _
    %1129 = vsyncpa [#allocation4], 1
    %s1130 = scalar_lea.sflag [#allocation4], 1
    %1131 = vsyncpa %s1130, 1

// kernel: generator_forward.8
$region0: #{generator_forward.8}
  #allocation0 [shape = 'u32[]', space=smem, size = 0x4, offset = 0x4, fixed_abs, tag = 'smem constant byte address 0x4 - core index']
  #allocation1 [shape = 'u32[72,128]{1,0:T(1,128)}', space=vmem, size = 0x9000, scoped, tag = 'internal scratch']
  #allocation2 [shape = 'f32[4,16,256]{2,1,0:T(8,128)}', space=vmem, size = 0x10000, scoped, tag = 'scratch operand']
  %s0 = inlined_call_operand.vmem [shape: bf16[4,16,2048], index: 0, kind: input, shape index: {}]
  %s1 = inlined_call_operand.hbm [shape: bf16[4,2048,256], index: 1, kind: input, shape index: {}]
  %s2 = inlined_call_operand.vmem [shape: bf16[4,16,256], index: 2, kind: output, shape index: {}]
  %s3 = sld [smem:[#allocation0]]
  $region49: #{generator_forward.8} parent=0
    _
  %s5 = ssub.s32 1, %s3
  %s6 = scalar_select 0, %s5, %s3
  $region1: #{generator_forward.8} parent=0
    #allocation3 [shape = 'u8[2097152]{0}', space=vmem, size = 0x200000, scoped, tag = 'input window, operand 1']
    #allocation4 [shape = 's32[2]{0}', space=sflag, size = 0x8, scoped, tag = 'scoped memory for generator_forward.8']
    %7 = vsyncpa [#allocation4], 0
    %s8 = scalar_lea.sflag [#allocation4], 1
    %9 = vsyncpa %s8, 0
    loop: start=0, step=1, limit=6
    $region2: #{generator_forward.8} parent=1 // loop_pre_header
      _
    $region3: #{generator_forward.8} parent=1 // loop_header
      %s11 = sphi 0, %s15
      %p12 = scmp.ge.s32.totalorder %s11, 6
      %s21 = sphi 0, %s23
      %s24 = sphi 0, %s21
      %s25 = sphi 0, %s24
      %s41 = sphi 0, %s25
      %s47 = sphi 0, %s49
      %s50 = sphi 0, %s47
      %s51 = sphi 0, %s50
      %s67 = sphi 0, %s51
      %s71 = sphi 0, %s71
      %s73 = sphi 0, %s71
      %s74 = sphi 0, %s73
      %s88 = sphi 0, %s74
    $region4: #{generator_forward.8} parent=1 // loop_header_branch
      %14 = sbr.rel (%p12) target = $region8
    $region5: #{generator_forward.8} parent=1 // loop_body
      %s16 = ssub.s32 %s11, 1
      %s17 = ssub.s32 %s11, 2
      %s18 = sadd.s32 %s11, 1
      %s19 = ssub.s32 %s11, %s18
      %p20 = scmp.eq.s32.totalorder %s19, 0
      %s22 = sadd.s32 %s21, 1
      %s23 = scalar_select %p20, %s21, %s22
      %p26 = pneg %p20
      %p27 = scmp.eq.s32.totalorder %s11, 3
      %p28 = por %p26, %p27
      %p29 = scmp.ne.s32.totalorder %s21, %s24
      %p30 = scmp.eq.s32.totalorder %s11, 0
      %p31 = por %p29, %p30
      %p32 = scmp.ne.s32.totalorder %s21, %s24
      %p33 = scmp.eq.s32.totalorder %s16, 3
      %p34 = por %p32, %p33
      %p35 = scmp.ne.s32.totalorder %s24, %s25
      %p36 = scmp.eq.s32.totalorder %s16, 0
      %p37 = por %p35, %p36
      %p38 = scmp.ne.s32.totalorder %s24, %s25
      %p39 = scmp.eq.s32.totalorder %s17, 3
      %p40 = por %p38, %p39
      %p42 = scmp.ne.s32.totalorder %s25, %s41
      %p43 = scmp.eq.s32.totalorder %s17, 0
      %p44 = por %p42, %p43
      %s45 = ssub.s32 %s11, %s18
      %p46 = scmp.eq.s32.totalorder %s45, 0
      %s48 = sadd.s32 %s47, 1
      %s49 = scalar_select %p46, %s47, %s48
      %p52 = pneg %p46
      %p53 = scmp.eq.s32.totalorder %s11, 3
      %p54 = por %p52, %p53
      %p55 = scmp.ne.s32.totalorder %s47, %s50
      %p56 = scmp.eq.s32.totalorder %s11, 0
      %p57 = por %p55, %p56
      %p58 = scmp.ne.s32.totalorder %s47, %s50
      %p59 = scmp.eq.s32.totalorder %s16, 3
      %p60 = por %p58, %p59
      %p61 = scmp.ne.s32.totalorder %s50, %s51
      %p62 = scmp.eq.s32.totalorder %s16, 0
      %p63 = por %p61, %p62
      %p64 = scmp.ne.s32.totalorder %s50, %s51
      %p65 = scmp.eq.s32.totalorder %s17, 3
      %p66 = por %p64, %p65
      %p68 = scmp.ne.s32.totalorder %s51, %s67
      %p69 = scmp.eq.s32.totalorder %s17, 0
      %p70 = por %p68, %p69
      %s72 = sadd.s32 %s71, 1
      %p75 = scmp.eq.s32.totalorder %s11, 3
      %p76 = scmp.ne.s32.totalorder %s71, %s73
      %p77 = scmp.eq.s32.totalorder %s11, 0
      %p78 = por %p76, %p77
      %p79 = scmp.ne.s32.totalorder %s71, %s73
      %p80 = scmp.eq.s32.totalorder %s16, 3
      %p81 = por %p79, %p80
      %p82 = scmp.ne.s32.totalorder %s73, %s74
      %p83 = scmp.eq.s32.totalorder %s16, 0
      %p84 = por %p82, %p83
      %p85 = scmp.ne.s32.totalorder %s73, %s74
      %p86 = scmp.eq.s32.totalorder %s17, 3
      %p87 = por %p85, %p86
      %p89 = scmp.ne.s32.totalorder %s74, %s88
      %p90 = scmp.eq.s32.totalorder %s17, 0
      %p91 = por %p89, %p90
      %p92 = scmp.le.s32.totalorder 1, %s11
      %p93 = scmp.lt.s32.totalorder %s11, 5
      %p94 = pnand %p92, %p93
      %p95 = pneg %p94
      // Predicated region
      $region9: #{generator_forward.8} parent=5 // pred_check
        _
      $region10: #{generator_forward.8} parent=5 // pred_check_branch
        %97 = sbr.rel (%p94) target = $region12
      $region11: #{generator_forward.8} parent=5 // pred_region
        %s98 = ssub.s32 %s11, 1
      $region12: #{generator_forward.8} parent=5 // pred_fallthru
        _
      %p99 = scmp.lt.s32.totalorder %s11, 4
      // Predicated region
      $region13: #{generator_forward.8} parent=5 // pred_check
        %p100 = pneg %p99
      $region14: #{generator_forward.8} parent=5 // pred_check_branch
        %102 = sbr.rel (%p100) target = $region16
      $region15: #{generator_forward.8} parent=5 // pred_region
        // Predicated region
        $region17: #{generator_forward.8} parent=15 // pred_check
          %p103 = pneg %p31
        $region18: #{generator_forward.8} parent=15 // pred_check_branch
          %105 = sbr.rel (%p103) target = $region20
        $region19: #{generator_forward.8} parent=15 // pred_region
          %p106 = scmp.lt.s32.totalorder %s11, 3
          %s107 = scalar_select %p106, %s11, 3
          %s108 = smul.addr %s107, 32
          %s109 = smul.addr %s108, 4
          %s110 = scalar_lea.vmem %s0, %s109
        $region20: #{generator_forward.8} parent=15 // pred_fallthru
          _
        // Predicated region
        $region21: #{generator_forward.8} parent=15 // pred_check
          %p111 = pneg %p57
        $region22: #{generator_forward.8} parent=15 // pred_check_branch
          %113 = sbr.rel (%p111) target = $region24
        $region23: #{generator_forward.8} parent=15 // pred_region
          %s114 = sand.u32 %s47, 1
          %s115 = scalar_lea.sflag [#allocation4], %s114
          %s116 = sand.u32 %s47, 1
          %s117 = smul.addr %s116, 2048
          %s118 = scalar_lea.vmem [#allocation3], %s117
          %120 = vsyncadd %s115, 0
          %s121 = smul.addr %s11, 512
          %s122 = smul.addr %s121, 4
          %s123 = scalar_lea.hbm %s1, %s122
          %s124 = sshll.u32 %s123, 4
          %s125 = int_to_ptr.hbm [resolvable:$true] %s124
          %s126 = sshll.u32 %s118, 4
          %s127 = int_to_ptr.vmem [resolvable:$true] %s126
          %132 = dma.hbm_to_vmem [thread:$0]  %s125, 32768, %s127, %s115, 128, 128, 8
        $region24: #{generator_forward.8} parent=15 // pred_fallthru
          _
      $region16: #{generator_forward.8} parent=5 // pred_fallthru
        _
      %p133 = scmp.le.s32.totalorder 1, %s11
      %p134 = scmp.lt.s32.totalorder %s11, 5
      %p135 = pnand %p133, %p134
      %p136 = pneg %p135
      // Predicated region
      $region25: #{generator_forward.8} parent=5 // pred_check
        _
      $region26: #{generator_forward.8} parent=5 // pred_check_branch
        %138 = sbr.rel (%p135) target = $region28
      $region27: #{generator_forward.8} parent=5 // pred_region
        %s139 = ssub.s32 %s11, 1
        %s140 = sand.u32 %s50, 1
        %s141 = scalar_lea.sflag [#allocation4], %s140
        %s142 = sand.u32 %s50, 1
        %s143 = smul.addr %s142, 2048
        %s144 = scalar_lea.vmem [#allocation3], %s143
        // Predicated region
        $region29: #{generator_forward.8} parent=27 // pred_check
          %p145 = pneg %p63
        $region30: #{generator_forward.8} parent=27 // pred_check_branch
          %147 = sbr.rel (%p145) target = $region32
        $region31: #{generator_forward.8} parent=27 // pred_region
          %149 = dma.done %s141, 32768
        $region32: #{generator_forward.8} parent=27 // pred_fallthru
          _
        %p150 = scmp.lt.s32.totalorder %s16, 3
        %s151 = scalar_select %p150, %s16, 3
        %s152 = smul.addr %s151, 32
        %s153 = smul.addr %s152, 4
        %s154 = scalar_lea.vmem %s0, %s153
        %p155 = pneg %p37
        %p156 = pneg %p34
        %s157 = sand.u32 %s50, 1
        %s158 = scalar_lea.sflag [#allocation4], %s157
        %s159 = sand.u32 %s50, 1
        %s160 = smul.addr %s159, 2048
        %s161 = scalar_lea.vmem [#allocation3], %s160
        %p162 = pneg %p63
        %p163 = pneg %p60
        %p164 = pneg %p84
        %p165 = pneg %p81
        %p166 = scmp.lt.s32.totalorder %s16, 3
        %s167 = scalar_select %p166, %s16, 3
        %s168 = smul.addr %s167, 32
        %s169 = smul.addr %s168, 4
        %s170 = scalar_lea.vmem %s0, %s169
        %v171 = vld [vmem:[%s170] sm:$0xff]
        %v172 = vld [vmem:[%s170 + $0x8] sm:$0xff]
        %v173 = vld [vmem:[%s170 + $0x10] sm:$0xff]
        %v174 = vld [vmem:[%s170 + $0x18] sm:$0xff]
        %v175 = vld [vmem:[%s170 + $0x20] sm:$0xff]
        %v176 = vld [vmem:[%s170 + $0x28] sm:$0xff]
        %v177 = vld [vmem:[%s170 + $0x30] sm:$0xff]
        %v178 = vld [vmem:[%s170 + $0x38] sm:$0xff]
        %v179 = vld [vmem:[%s170 + $0x40] sm:$0xff]
        %v180 = vld [vmem:[%s170 + $0x48] sm:$0xff]
        %v181 = vld [vmem:[%s170 + $0x50] sm:$0xff]
        %v182 = vld [vmem:[%s170 + $0x58] sm:$0xff]
        %v183 = vld [vmem:[%s170 + $0x60] sm:$0xff]
        %v184 = vld [vmem:[%s170 + $0x68] sm:$0xff]
        %v185 = vld [vmem:[%s170 + $0x70] sm:$0xff]
        %v186 = vld [vmem:[%s170 + $0x78] sm:$0xff]
        %v187 = vld [vmem:[%s144] sm:$0xff]
        %v188 = vld [vmem:[%s144 + $0x8] sm:$0xff]
        %v189 = vld [vmem:[%s144 + $0x10] sm:$0xff]
        %v190 = vld [vmem:[%s144 + $0x18] sm:$0xff]
        %v191 = vld [vmem:[%s144 + $0x20] sm:$0xff]
        %v192 = vld [vmem:[%s144 + $0x28] sm:$0xff]
        %v193 = vld [vmem:[%s144 + $0x30] sm:$0xff]
        %v194 = vld [vmem:[%s144 + $0x38] sm:$0xff]
        %v195 = vld [vmem:[%s144 + $0x40] sm:$0xff]
        %v196 = vld [vmem:[%s144 + $0x48] sm:$0xff]
        %v197 = vld [vmem:[%s144 + $0x50] sm:$0xff]
        %v198 = vld [vmem:[%s144 + $0x58] sm:$0xff]
        %v199 = vld [vmem:[%s144 + $0x60] sm:$0xff]
        %v200 = vld [vmem:[%s144 + $0x68] sm:$0xff]
        %v201 = vld [vmem:[%s144 + $0x70] sm:$0xff]
        %v202 = vld [vmem:[%s144 + $0x78] sm:$0xff]
        %v203 = vld [vmem:[%s144 + $0x80] sm:$0xff]
        %v204 = vld [vmem:[%s144 + $0x88] sm:$0xff]
        %v205 = vld [vmem:[%s144 + $0x90] sm:$0xff]
        %v206 = vld [vmem:[%s144 + $0x98] sm:$0xff]
        %v207 = vld [vmem:[%s144 + $0xa0] sm:$0xff]
        %v208 = vld [vmem:[%s144 + $0xa8] sm:$0xff]
        %v209 = vld [vmem:[%s144 + $0xb0] sm:$0xff]
        %v210 = vld [vmem:[%s144 + $0xb8] sm:$0xff]
        %v211 = vld [vmem:[%s144 + $0xc0] sm:$0xff]
        %v212 = vld [vmem:[%s144 + $0xc8] sm:$0xff]
        %v213 = vld [vmem:[%s144 + $0xd0] sm:$0xff]
        %v214 = vld [vmem:[%s144 + $0xd8] sm:$0xff]
        %v215 = vld [vmem:[%s144 + $0xe0] sm:$0xff]
        %v216 = vld [vmem:[%s144 + $0xe8] sm:$0xff]
        %v217 = vld [vmem:[%s144 + $0xf0] sm:$0xff]
        %v218 = vld [vmem:[%s144 + $0xf8] sm:$0xff]
        %v219 = vld [vmem:[%s144 + $0x100] sm:$0xff]
        %v220 = vld [vmem:[%s144 + $0x108] sm:$0xff]
        %v221 = vld [vmem:[%s144 + $0x110] sm:$0xff]
        %v222 = vld [vmem:[%s144 + $0x118] sm:$0xff]
        %v223 = vld [vmem:[%s144 + $0x120] sm:$0xff]
        %v224 = vld [vmem:[%s144 + $0x128] sm:$0xff]
        %v225 = vld [vmem:[%s144 + $0x130] sm:$0xff]
        %v226 = vld [vmem:[%s144 + $0x138] sm:$0xff]
        %v227 = vld [vmem:[%s144 + $0x140] sm:$0xff]
        %v228 = vld [vmem:[%s144 + $0x148] sm:$0xff]
        %v229 = vld [vmem:[%s144 + $0x150] sm:$0xff]
        %v230 = vld [vmem:[%s144 + $0x158] sm:$0xff]
        %v231 = vld [vmem:[%s144 + $0x160] sm:$0xff]
        %v232 = vld [vmem:[%s144 + $0x168] sm:$0xff]
        %v233 = vld [vmem:[%s144 + $0x170] sm:$0xff]
        %v234 = vld [vmem:[%s144 + $0x178] sm:$0xff]
        %v235 = vld [vmem:[%s144 + $0x180] sm:$0xff]
        %v236 = vld [vmem:[%s144 + $0x188] sm:$0xff]
        %v237 = vld [vmem:[%s144 + $0x190] sm:$0xff]
        %v238 = vld [vmem:[%s144 + $0x198] sm:$0xff]
        %v239 = vld [vmem:[%s144 + $0x1a0] sm:$0xff]
        %v240 = vld [vmem:[%s144 + $0x1a8] sm:$0xff]
        %v241 = vld [vmem:[%s144 + $0x1b0] sm:$0xff]
        %v242 = vld [vmem:[%s144 + $0x1b8] sm:$0xff]
        %v243 = vld [vmem:[%s144 + $0x1c0] sm:$0xff]
        %v244 = vld [vmem:[%s144 + $0x1c8] sm:$0xff]
        %v245 = vld [vmem:[%s144 + $0x1d0] sm:$0xff]
        %v246 = vld [vmem:[%s144 + $0x1d8] sm:$0xff]
        %v247 = vld [vmem:[%s144 + $0x1e0] sm:$0xff]
        %v248 = vld [vmem:[%s144 + $0x1e8] sm:$0xff]
        %v249 = vld [vmem:[%s144 + $0x1f0] sm:$0xff]
        %v250 = vld [vmem:[%s144 + $0x1f8] sm:$0xff]
        %v251 = vld [vmem:[%s144 + $0x200] sm:$0xff]
        %v252 = vld [vmem:[%s144 + $0x208] sm:$0xff]
        %v253 = vld [vmem:[%s144 + $0x210] sm:$0xff]
        %v254 = vld [vmem:[%s144 + $0x218] sm:$0xff]
        %v255 = vld [vmem:[%s144 + $0x220] sm:$0xff]
        %v256 = vld [vmem:[%s144 + $0x228] sm:$0xff]
        %v257 = vld [vmem:[%s144 + $0x230] sm:$0xff]
        %v258 = vld [vmem:[%s144 + $0x238] sm:$0xff]
        %v259 = vld [vmem:[%s144 + $0x240] sm:$0xff]
        %v260 = vld [vmem:[%s144 + $0x248] sm:$0xff]
        %v261 = vld [vmem:[%s144 + $0x250] sm:$0xff]
        %v262 = vld [vmem:[%s144 + $0x258] sm:$0xff]
        %v263 = vld [vmem:[%s144 + $0x260] sm:$0xff]
        %v264 = vld [vmem:[%s144 + $0x268] sm:$0xff]
        %v265 = vld [vmem:[%s144 + $0x270] sm:$0xff]
        %v266 = vld [vmem:[%s144 + $0x278] sm:$0xff]
        %v267 = vld [vmem:[%s144 + $0x280] sm:$0xff]
        %v268 = vld [vmem:[%s144 + $0x288] sm:$0xff]
        %v269 = vld [vmem:[%s144 + $0x290] sm:$0xff]
        %v270 = vld [vmem:[%s144 + $0x298] sm:$0xff]
        %v271 = vld [vmem:[%s144 + $0x2a0] sm:$0xff]
        %v272 = vld [vmem:[%s144 + $0x2a8] sm:$0xff]
        %v273 = vld [vmem:[%s144 + $0x2b0] sm:$0xff]
        %v274 = vld [vmem:[%s144 + $0x2b8] sm:$0xff]
        %v275 = vld [vmem:[%s144 + $0x2c0] sm:$0xff]
        %v276 = vld [vmem:[%s144 + $0x2c8] sm:$0xff]
        %v277 = vld [vmem:[%s144 + $0x2d0] sm:$0xff]
        %v278 = vld [vmem:[%s144 + $0x2d8] sm:$0xff]
        %v279 = vld [vmem:[%s144 + $0x2e0] sm:$0xff]
        %v280 = vld [vmem:[%s144 + $0x2e8] sm:$0xff]
        %v281 = vld [vmem:[%s144 + $0x2f0] sm:$0xff]
        %v282 = vld [vmem:[%s144 + $0x2f8] sm:$0xff]
        %v283 = vld [vmem:[%s144 + $0x300] sm:$0xff]
        %v284 = vld [vmem:[%s144 + $0x308] sm:$0xff]
        %v285 = vld [vmem:[%s144 + $0x310] sm:$0xff]
        %v286 = vld [vmem:[%s144 + $0x318] sm:$0xff]
        %v287 = vld [vmem:[%s144 + $0x320] sm:$0xff]
        %v288 = vld [vmem:[%s144 + $0x328] sm:$0xff]
        %v289 = vld [vmem:[%s144 + $0x330] sm:$0xff]
        %v290 = vld [vmem:[%s144 + $0x338] sm:$0xff]
        %v291 = vld [vmem:[%s144 + $0x340] sm:$0xff]
        %v292 = vld [vmem:[%s144 + $0x348] sm:$0xff]
        %v293 = vld [vmem:[%s144 + $0x350] sm:$0xff]
        %v294 = vld [vmem:[%s144 + $0x358] sm:$0xff]
        %v295 = vld [vmem:[%s144 + $0x360] sm:$0xff]
        %v296 = vld [vmem:[%s144 + $0x368] sm:$0xff]
        %v297 = vld [vmem:[%s144 + $0x370] sm:$0xff]
        %v298 = vld [vmem:[%s144 + $0x378] sm:$0xff]
        %v299 = vld [vmem:[%s144 + $0x380] sm:$0xff]
        %v300 = vld [vmem:[%s144 + $0x388] sm:$0xff]
        %v301 = vld [vmem:[%s144 + $0x390] sm:$0xff]
        %v302 = vld [vmem:[%s144 + $0x398] sm:$0xff]
        %v303 = vld [vmem:[%s144 + $0x3a0] sm:$0xff]
        %v304 = vld [vmem:[%s144 + $0x3a8] sm:$0xff]
        %v305 = vld [vmem:[%s144 + $0x3b0] sm:$0xff]
        %v306 = vld [vmem:[%s144 + $0x3b8] sm:$0xff]
        %v307 = vld [vmem:[%s144 + $0x3c0] sm:$0xff]
        %v308 = vld [vmem:[%s144 + $0x3c8] sm:$0xff]
        %v309 = vld [vmem:[%s144 + $0x3d0] sm:$0xff]
        %v310 = vld [vmem:[%s144 + $0x3d8] sm:$0xff]
        %v311 = vld [vmem:[%s144 + $0x3e0] sm:$0xff]
        %v312 = vld [vmem:[%s144 + $0x3e8] sm:$0xff]
        %v313 = vld [vmem:[%s144 + $0x3f0] sm:$0xff]
        %v314 = vld [vmem:[%s144 + $0x3f8] sm:$0xff]
        %v315 = vld [vmem:[%s144 + $0x400] sm:$0xff]
        %v316 = vld [vmem:[%s144 + $0x408] sm:$0xff]
        %v317 = vld [vmem:[%s144 + $0x410] sm:$0xff]
        %v318 = vld [vmem:[%s144 + $0x418] sm:$0xff]
        %v319 = vld [vmem:[%s144 + $0x420] sm:$0xff]
        %v320 = vld [vmem:[%s144 + $0x428] sm:$0xff]
        %v321 = vld [vmem:[%s144 + $0x430] sm:$0xff]
        %v322 = vld [vmem:[%s144 + $0x438] sm:$0xff]
        %v323 = vld [vmem:[%s144 + $0x440] sm:$0xff]
        %v324 = vld [vmem:[%s144 + $0x448] sm:$0xff]
        %v325 = vld [vmem:[%s144 + $0x450] sm:$0xff]
        %v326 = vld [vmem:[%s144 + $0x458] sm:$0xff]
        %v327 = vld [vmem:[%s144 + $0x460] sm:$0xff]
        %v328 = vld [vmem:[%s144 + $0x468] sm:$0xff]
        %v329 = vld [vmem:[%s144 + $0x470] sm:$0xff]
        %v330 = vld [vmem:[%s144 + $0x478] sm:$0xff]
        %v331 = vld [vmem:[%s144 + $0x480] sm:$0xff]
        %v332 = vld [vmem:[%s144 + $0x488] sm:$0xff]
        %v333 = vld [vmem:[%s144 + $0x490] sm:$0xff]
        %v334 = vld [vmem:[%s144 + $0x498] sm:$0xff]
        %v335 = vld [vmem:[%s144 + $0x4a0] sm:$0xff]
        %v336 = vld [vmem:[%s144 + $0x4a8] sm:$0xff]
        %v337 = vld [vmem:[%s144 + $0x4b0] sm:$0xff]
        %v338 = vld [vmem:[%s144 + $0x4b8] sm:$0xff]
        %v339 = vld [vmem:[%s144 + $0x4c0] sm:$0xff]
        %v340 = vld [vmem:[%s144 + $0x4c8] sm:$0xff]
        %v341 = vld [vmem:[%s144 + $0x4d0] sm:$0xff]
        %v342 = vld [vmem:[%s144 + $0x4d8] sm:$0xff]
        %v343 = vld [vmem:[%s144 + $0x4e0] sm:$0xff]
        %v344 = vld [vmem:[%s144 + $0x4e8] sm:$0xff]
        %v345 = vld [vmem:[%s144 + $0x4f0] sm:$0xff]
        %v346 = vld [vmem:[%s144 + $0x4f8] sm:$0xff]
        %v347 = vld [vmem:[%s144 + $0x500] sm:$0xff]
        %v348 = vld [vmem:[%s144 + $0x508] sm:$0xff]
        %v349 = vld [vmem:[%s144 + $0x510] sm:$0xff]
        %v350 = vld [vmem:[%s144 + $0x518] sm:$0xff]
        %v351 = vld [vmem:[%s144 + $0x520] sm:$0xff]
        %v352 = vld [vmem:[%s144 + $0x528] sm:$0xff]
        %v353 = vld [vmem:[%s144 + $0x530] sm:$0xff]
        %v354 = vld [vmem:[%s144 + $0x538] sm:$0xff]
        %v355 = vld [vmem:[%s144 + $0x540] sm:$0xff]
        %v356 = vld [vmem:[%s144 + $0x548] sm:$0xff]
        %v357 = vld [vmem:[%s144 + $0x550] sm:$0xff]
        %v358 = vld [vmem:[%s144 + $0x558] sm:$0xff]
        %v359 = vld [vmem:[%s144 + $0x560] sm:$0xff]
        %v360 = vld [vmem:[%s144 + $0x568] sm:$0xff]
        %v361 = vld [vmem:[%s144 + $0x570] sm:$0xff]
        %v362 = vld [vmem:[%s144 + $0x578] sm:$0xff]
        %v363 = vld [vmem:[%s144 + $0x580] sm:$0xff]
        %v364 = vld [vmem:[%s144 + $0x588] sm:$0xff]
        %v365 = vld [vmem:[%s144 + $0x590] sm:$0xff]
        %v366 = vld [vmem:[%s144 + $0x598] sm:$0xff]
        %v367 = vld [vmem:[%s144 + $0x5a0] sm:$0xff]
        %v368 = vld [vmem:[%s144 + $0x5a8] sm:$0xff]
        %v369 = vld [vmem:[%s144 + $0x5b0] sm:$0xff]
        %v370 = vld [vmem:[%s144 + $0x5b8] sm:$0xff]
        %v371 = vld [vmem:[%s144 + $0x5c0] sm:$0xff]
        %v372 = vld [vmem:[%s144 + $0x5c8] sm:$0xff]
        %v373 = vld [vmem:[%s144 + $0x5d0] sm:$0xff]
        %v374 = vld [vmem:[%s144 + $0x5d8] sm:$0xff]
        %v375 = vld [vmem:[%s144 + $0x5e0] sm:$0xff]
        %v376 = vld [vmem:[%s144 + $0x5e8] sm:$0xff]
        %v377 = vld [vmem:[%s144 + $0x5f0] sm:$0xff]
        %v378 = vld [vmem:[%s144 + $0x5f8] sm:$0xff]
        %v379 = vld [vmem:[%s144 + $0x600] sm:$0xff]
        %v380 = vld [vmem:[%s144 + $0x608] sm:$0xff]
        %v381 = vld [vmem:[%s144 + $0x610] sm:$0xff]
        %v382 = vld [vmem:[%s144 + $0x618] sm:$0xff]
        %v383 = vld [vmem:[%s144 + $0x620] sm:$0xff]
        %v384 = vld [vmem:[%s144 + $0x628] sm:$0xff]
        %v385 = vld [vmem:[%s144 + $0x630] sm:$0xff]
        %v386 = vld [vmem:[%s144 + $0x638] sm:$0xff]
        %v387 = vld [vmem:[%s144 + $0x640] sm:$0xff]
        %v388 = vld [vmem:[%s144 + $0x648] sm:$0xff]
        %v389 = vld [vmem:[%s144 + $0x650] sm:$0xff]
        %v390 = vld [vmem:[%s144 + $0x658] sm:$0xff]
        %v391 = vld [vmem:[%s144 + $0x660] sm:$0xff]
        %v392 = vld [vmem:[%s144 + $0x668] sm:$0xff]
        %v393 = vld [vmem:[%s144 + $0x670] sm:$0xff]
        %v394 = vld [vmem:[%s144 + $0x678] sm:$0xff]
        %v395 = vld [vmem:[%s144 + $0x680] sm:$0xff]
        %v396 = vld [vmem:[%s144 + $0x688] sm:$0xff]
        %v397 = vld [vmem:[%s144 + $0x690] sm:$0xff]
        %v398 = vld [vmem:[%s144 + $0x698] sm:$0xff]
        %v399 = vld [vmem:[%s144 + $0x6a0] sm:$0xff]
        %v400 = vld [vmem:[%s144 + $0x6a8] sm:$0xff]
        %v401 = vld [vmem:[%s144 + $0x6b0] sm:$0xff]
        %v402 = vld [vmem:[%s144 + $0x6b8] sm:$0xff]
        %v403 = vld [vmem:[%s144 + $0x6c0] sm:$0xff]
        %v404 = vld [vmem:[%s144 + $0x6c8] sm:$0xff]
        %v405 = vld [vmem:[%s144 + $0x6d0] sm:$0xff]
        %v406 = vld [vmem:[%s144 + $0x6d8] sm:$0xff]
        %v407 = vld [vmem:[%s144 + $0x6e0] sm:$0xff]
        %v408 = vld [vmem:[%s144 + $0x6e8] sm:$0xff]
        %v409 = vld [vmem:[%s144 + $0x6f0] sm:$0xff]
        %v410 = vld [vmem:[%s144 + $0x6f8] sm:$0xff]
        %v411 = vld [vmem:[%s144 + $0x700] sm:$0xff]
        %v412 = vld [vmem:[%s144 + $0x708] sm:$0xff]
        %v413 = vld [vmem:[%s144 + $0x710] sm:$0xff]
        %v414 = vld [vmem:[%s144 + $0x718] sm:$0xff]
        %v415 = vld [vmem:[%s144 + $0x720] sm:$0xff]
        %v416 = vld [vmem:[%s144 + $0x728] sm:$0xff]
        %v417 = vld [vmem:[%s144 + $0x730] sm:$0xff]
        %v418 = vld [vmem:[%s144 + $0x738] sm:$0xff]
        %v419 = vld [vmem:[%s144 + $0x740] sm:$0xff]
        %v420 = vld [vmem:[%s144 + $0x748] sm:$0xff]
        %v421 = vld [vmem:[%s144 + $0x750] sm:$0xff]
        %v422 = vld [vmem:[%s144 + $0x758] sm:$0xff]
        %v423 = vld [vmem:[%s144 + $0x760] sm:$0xff]
        %v424 = vld [vmem:[%s144 + $0x768] sm:$0xff]
        %v425 = vld [vmem:[%s144 + $0x770] sm:$0xff]
        %v426 = vld [vmem:[%s144 + $0x778] sm:$0xff]
        %v427 = vld [vmem:[%s144 + $0x780] sm:$0xff]
        %v428 = vld [vmem:[%s144 + $0x788] sm:$0xff]
        %v429 = vld [vmem:[%s144 + $0x790] sm:$0xff]
        %v430 = vld [vmem:[%s144 + $0x798] sm:$0xff]
        %v431 = vld [vmem:[%s144 + $0x7a0] sm:$0xff]
        %v432 = vld [vmem:[%s144 + $0x7a8] sm:$0xff]
        %v433 = vld [vmem:[%s144 + $0x7b0] sm:$0xff]
        %v434 = vld [vmem:[%s144 + $0x7b8] sm:$0xff]
        %v435 = vld [vmem:[%s144 + $0x7c0] sm:$0xff]
        %v436 = vld [vmem:[%s144 + $0x7c8] sm:$0xff]
        %v437 = vld [vmem:[%s144 + $0x7d0] sm:$0xff]
        %v438 = vld [vmem:[%s144 + $0x7d8] sm:$0xff]
        %v439 = vld [vmem:[%s144 + $0x7e0] sm:$0xff]
        %v440 = vld [vmem:[%s144 + $0x7e8] sm:$0xff]
        %v441 = vld [vmem:[%s144 + $0x7f0] sm:$0xff]
        %v442 = vld [vmem:[%s144 + $0x7f8] sm:$0xff]
        %v459 = vunpack.c.l.b16 %v171
        %v460 = vunpack.c.h.b16 %v171
        %v461 = vunpack.c.l.b16 %v172
        %v462 = vunpack.c.h.b16 %v172
        %v463 = vunpack.c.l.b16 %v173
        %v464 = vunpack.c.h.b16 %v173
        %v465 = vunpack.c.l.b16 %v174
        %v466 = vunpack.c.h.b16 %v174
        %v467 = vunpack.c.l.b16 %v175
        %v468 = vunpack.c.h.b16 %v175
        %v469 = vunpack.c.l.b16 %v176
        %v470 = vunpack.c.h.b16 %v176
        %v471 = vunpack.c.l.b16 %v177
        %v472 = vunpack.c.h.b16 %v177
        %v473 = vunpack.c.l.b16 %v178
        %v474 = vunpack.c.h.b16 %v178
        %v475 = vunpack.c.l.b16 %v179
        %v476 = vunpack.c.h.b16 %v179
        %v477 = vunpack.c.l.b16 %v180
        %v478 = vunpack.c.h.b16 %v180
        %v479 = vunpack.c.l.b16 %v181
        %v480 = vunpack.c.h.b16 %v181
        %v481 = vunpack.c.l.b16 %v182
        %v482 = vunpack.c.h.b16 %v182
        %v483 = vunpack.c.l.b16 %v183
        %v484 = vunpack.c.h.b16 %v183
        %v485 = vunpack.c.l.b16 %v184
        %v486 = vunpack.c.h.b16 %v184
        %v487 = vunpack.c.l.b16 %v185
        %v488 = vunpack.c.h.b16 %v185
        %v489 = vunpack.c.l.b16 %v186
        %v490 = vunpack.c.h.b16 %v186
        %v491 = vpack.c.b16 %v475, %v459
        %v492 = vpack.c.b16 %v476, %v460
        %v493 = vpack.c.b16 %v477, %v461
        %v494 = vpack.c.b16 %v478, %v462
        %v495 = vpack.c.b16 %v479, %v463
        %v496 = vpack.c.b16 %v480, %v464
        %v497 = vpack.c.b16 %v481, %v465
        %v498 = vpack.c.b16 %v482, %v466
        %v499 = vpack.c.b16 %v483, %v467
        %v500 = vpack.c.b16 %v484, %v468
        %v501 = vpack.c.b16 %v485, %v469
        %v502 = vpack.c.b16 %v486, %v470
        %v503 = vpack.c.b16 %v487, %v471
        %v504 = vpack.c.b16 %v488, %v472
        %v505 = vpack.c.b16 %v489, %v473
        %v506 = vpack.c.b16 %v490, %v474
        %v779 = vunpack.c.l.b16 %v187
        %v780 = vunpack.c.h.b16 %v187
        %v781 = vunpack.c.l.b16 %v188
        %v782 = vunpack.c.h.b16 %v188
        %v783 = vunpack.c.l.b16 %v189
        %v784 = vunpack.c.h.b16 %v189
        %v785 = vunpack.c.l.b16 %v190
        %v786 = vunpack.c.h.b16 %v190
        %v787 = vunpack.c.l.b16 %v191
        %v788 = vunpack.c.h.b16 %v191
        %v789 = vunpack.c.l.b16 %v192
        %v790 = vunpack.c.h.b16 %v192
        %v791 = vunpack.c.l.b16 %v193
        %v792 = vunpack.c.h.b16 %v193
        %v793 = vunpack.c.l.b16 %v194
        %v794 = vunpack.c.h.b16 %v194
        %v795 = vunpack.c.l.b16 %v195
        %v796 = vunpack.c.h.b16 %v195
        %v797 = vunpack.c.l.b16 %v196
        %v798 = vunpack.c.h.b16 %v196
        %v799 = vunpack.c.l.b16 %v197
        %v800 = vunpack.c.h.b16 %v197
        %v801 = vunpack.c.l.b16 %v198
        %v802 = vunpack.c.h.b16 %v198
        %v803 = vunpack.c.l.b16 %v199
        %v804 = vunpack.c.h.b16 %v199
        %v805 = vunpack.c.l.b16 %v200
        %v806 = vunpack.c.h.b16 %v200
        %v807 = vunpack.c.l.b16 %v201
        %v808 = vunpack.c.h.b16 %v201
        %v809 = vunpack.c.l.b16 %v202
        %v810 = vunpack.c.h.b16 %v202
        %v811 = vunpack.c.l.b16 %v203
        %v812 = vunpack.c.h.b16 %v203
        %v813 = vunpack.c.l.b16 %v204
        %v814 = vunpack.c.h.b16 %v204
        %v815 = vunpack.c.l.b16 %v205
        %v816 = vunpack.c.h.b16 %v205
        %v817 = vunpack.c.l.b16 %v206
        %v818 = vunpack.c.h.b16 %v206
        %v819 = vunpack.c.l.b16 %v207
        %v820 = vunpack.c.h.b16 %v207
        %v821 = vunpack.c.l.b16 %v208
        %v822 = vunpack.c.h.b16 %v208
        %v823 = vunpack.c.l.b16 %v209
        %v824 = vunpack.c.h.b16 %v209
        %v825 = vunpack.c.l.b16 %v210
        %v826 = vunpack.c.h.b16 %v210
        %v827 = vunpack.c.l.b16 %v211
        %v828 = vunpack.c.h.b16 %v211
        %v829 = vunpack.c.l.b16 %v212
        %v830 = vunpack.c.h.b16 %v212
        %v831 = vunpack.c.l.b16 %v213
        %v832 = vunpack.c.h.b16 %v213
        %v833 = vunpack.c.l.b16 %v214
        %v834 = vunpack.c.h.b16 %v214
        %v835 = vunpack.c.l.b16 %v215
        %v836 = vunpack.c.h.b16 %v215
        %v837 = vunpack.c.l.b16 %v216
        %v838 = vunpack.c.h.b16 %v216
        %v839 = vunpack.c.l.b16 %v217
        %v840 = vunpack.c.h.b16 %v217
        %v841 = vunpack.c.l.b16 %v218
        %v842 = vunpack.c.h.b16 %v218
        %v843 = vunpack.c.l.b16 %v219
        %v844 = vunpack.c.h.b16 %v219
        %v845 = vunpack.c.l.b16 %v220
        %v846 = vunpack.c.h.b16 %v220
        %v847 = vunpack.c.l.b16 %v221
        %v848 = vunpack.c.h.b16 %v221
        %v849 = vunpack.c.l.b16 %v222
        %v850 = vunpack.c.h.b16 %v222
        %v851 = vunpack.c.l.b16 %v223
        %v852 = vunpack.c.h.b16 %v223
        %v853 = vunpack.c.l.b16 %v224
        %v854 = vunpack.c.h.b16 %v224
        %v855 = vunpack.c.l.b16 %v225
        %v856 = vunpack.c.h.b16 %v225
        %v857 = vunpack.c.l.b16 %v226
        %v858 = vunpack.c.h.b16 %v226
        %v859 = vunpack.c.l.b16 %v227
        %v860 = vunpack.c.h.b16 %v227
        %v861 = vunpack.c.l.b16 %v228
        %v862 = vunpack.c.h.b16 %v228
        %v863 = vunpack.c.l.b16 %v229
        %v864 = vunpack.c.h.b16 %v229
        %v865 = vunpack.c.l.b16 %v230
        %v866 = vunpack.c.h.b16 %v230
        %v867 = vunpack.c.l.b16 %v231
        %v868 = vunpack.c.h.b16 %v231
        %v869 = vunpack.c.l.b16 %v232
        %v870 = vunpack.c.h.b16 %v232
        %v871 = vunpack.c.l.b16 %v233
        %v872 = vunpack.c.h.b16 %v233
        %v873 = vunpack.c.l.b16 %v234
        %v874 = vunpack.c.h.b16 %v234
        %v875 = vunpack.c.l.b16 %v235
        %v876 = vunpack.c.h.b16 %v235
        %v877 = vunpack.c.l.b16 %v236
        %v878 = vunpack.c.h.b16 %v236
        %v879 = vunpack.c.l.b16 %v237
        %v880 = vunpack.c.h.b16 %v237
        %v881 = vunpack.c.l.b16 %v238
        %v882 = vunpack.c.h.b16 %v238
        %v883 = vunpack.c.l.b16 %v239
        %v884 = vunpack.c.h.b16 %v239
        %v885 = vunpack.c.l.b16 %v240
        %v886 = vunpack.c.h.b16 %v240
        %v887 = vunpack.c.l.b16 %v241
        %v888 = vunpack.c.h.b16 %v241
        %v889 = vunpack.c.l.b16 %v242
        %v890 = vunpack.c.h.b16 %v242
        %v891 = vunpack.c.l.b16 %v243
        %v892 = vunpack.c.h.b16 %v243
        %v893 = vunpack.c.l.b16 %v244
        %v894 = vunpack.c.h.b16 %v244
        %v895 = vunpack.c.l.b16 %v245
        %v896 = vunpack.c.h.b16 %v245
        %v897 = vunpack.c.l.b16 %v246
        %v898 = vunpack.c.h.b16 %v246
        %v899 = vunpack.c.l.b16 %v247
        %v900 = vunpack.c.h.b16 %v247
        %v901 = vunpack.c.l.b16 %v248
        %v902 = vunpack.c.h.b16 %v248
        %v903 = vunpack.c.l.b16 %v249
        %v904 = vunpack.c.h.b16 %v249
        %v905 = vunpack.c.l.b16 %v250
        %v906 = vunpack.c.h.b16 %v250
        %v907 = vunpack.c.l.b16 %v251
        %v908 = vunpack.c.h.b16 %v251
        %v909 = vunpack.c.l.b16 %v252
        %v910 = vunpack.c.h.b16 %v252
        %v911 = vunpack.c.l.b16 %v253
        %v912 = vunpack.c.h.b16 %v253
        %v913 = vunpack.c.l.b16 %v254
        %v914 = vunpack.c.h.b16 %v254
        %v915 = vunpack.c.l.b16 %v255
        %v916 = vunpack.c.h.b16 %v255
        %v917 = vunpack.c.l.b16 %v256
        %v918 = vunpack.c.h.b16 %v256
        %v919 = vunpack.c.l.b16 %v257
        %v920 = vunpack.c.h.b16 %v257
        %v921 = vunpack.c.l.b16 %v258
        %v922 = vunpack.c.h.b16 %v258
        %v923 = vunpack.c.l.b16 %v259
        %v924 = vunpack.c.h.b16 %v259
        %v925 = vunpack.c.l.b16 %v260
        %v926 = vunpack.c.h.b16 %v260
        %v927 = vunpack.c.l.b16 %v261
        %v928 = vunpack.c.h.b16 %v261
        %v929 = vunpack.c.l.b16 %v262
        %v930 = vunpack.c.h.b16 %v262
        %v931 = vunpack.c.l.b16 %v263
        %v932 = vunpack.c.h.b16 %v263
        %v933 = vunpack.c.l.b16 %v264
        %v934 = vunpack.c.h.b16 %v264
        %v935 = vunpack.c.l.b16 %v265
        %v936 = vunpack.c.h.b16 %v265
        %v937 = vunpack.c.l.b16 %v266
        %v938 = vunpack.c.h.b16 %v266
        %v939 = vunpack.c.l.b16 %v267
        %v940 = vunpack.c.h.b16 %v267
        %v941 = vunpack.c.l.b16 %v268
        %v942 = vunpack.c.h.b16 %v268
        %v943 = vunpack.c.l.b16 %v269
        %v944 = vunpack.c.h.b16 %v269
        %v945 = vunpack.c.l.b16 %v270
        %v946 = vunpack.c.h.b16 %v270
        %v947 = vunpack.c.l.b16 %v271
        %v948 = vunpack.c.h.b16 %v271
        %v949 = vunpack.c.l.b16 %v272
        %v950 = vunpack.c.h.b16 %v272
        %v951 = vunpack.c.l.b16 %v273
        %v952 = vunpack.c.h.b16 %v273
        %v953 = vunpack.c.l.b16 %v274
        %v954 = vunpack.c.h.b16 %v274
        %v955 = vunpack.c.l.b16 %v275
        %v956 = vunpack.c.h.b16 %v275
        %v957 = vunpack.c.l.b16 %v276
        %v958 = vunpack.c.h.b16 %v276
        %v959 = vunpack.c.l.b16 %v277
        %v960 = vunpack.c.h.b16 %v277
        %v961 = vunpack.c.l.b16 %v278
        %v962 = vunpack.c.h.b16 %v278
        %v963 = vunpack.c.l.b16 %v279
        %v964 = vunpack.c.h.b16 %v279
        %v965 = vunpack.c.l.b16 %v280
        %v966 = vunpack.c.h.b16 %v280
        %v967 = vunpack.c.l.b16 %v281
        %v968 = vunpack.c.h.b16 %v281
        %v969 = vunpack.c.l.b16 %v282
        %v970 = vunpack.c.h.b16 %v282
        %v971 = vunpack.c.l.b16 %v283
        %v972 = vunpack.c.h.b16 %v283
        %v973 = vunpack.c.l.b16 %v284
        %v974 = vunpack.c.h.b16 %v284
        %v975 = vunpack.c.l.b16 %v285
        %v976 = vunpack.c.h.b16 %v285
        %v977 = vunpack.c.l.b16 %v286
        %v978 = vunpack.c.h.b16 %v286
        %v979 = vunpack.c.l.b16 %v287
        %v980 = vunpack.c.h.b16 %v287
        %v981 = vunpack.c.l.b16 %v288
        %v982 = vunpack.c.h.b16 %v288
        %v983 = vunpack.c.l.b16 %v289
        %v984 = vunpack.c.h.b16 %v289
        %v985 = vunpack.c.l.b16 %v290
        %v986 = vunpack.c.h.b16 %v290
        %v987 = vunpack.c.l.b16 %v291
        %v988 = vunpack.c.h.b16 %v291
        %v989 = vunpack.c.l.b16 %v292
        %v990 = vunpack.c.h.b16 %v292
        %v991 = vunpack.c.l.b16 %v293
        %v992 = vunpack.c.h.b16 %v293
        %v993 = vunpack.c.l.b16 %v294
        %v994 = vunpack.c.h.b16 %v294
        %v995 = vunpack.c.l.b16 %v295
        %v996 = vunpack.c.h.b16 %v295
        %v997 = vunpack.c.l.b16 %v296
        %v998 = vunpack.c.h.b16 %v296
        %v999 = vunpack.c.l.b16 %v297
        %v1000 = vunpack.c.h.b16 %v297
        %v1001 = vunpack.c.l.b16 %v298
        %v1002 = vunpack.c.h.b16 %v298
        %v1003 = vunpack.c.l.b16 %v299
        %v1004 = vunpack.c.h.b16 %v299
        %v1005 = vunpack.c.l.b16 %v300
        %v1006 = vunpack.c.h.b16 %v300
        %v1007 = vunpack.c.l.b16 %v301
        %v1008 = vunpack.c.h.b16 %v301
        %v1009 = vunpack.c.l.b16 %v302
        %v1010 = vunpack.c.h.b16 %v302
        %v1011 = vunpack.c.l.b16 %v303
        %v1012 = vunpack.c.h.b16 %v303
        %v1013 = vunpack.c.l.b16 %v304
        %v1014 = vunpack.c.h.b16 %v304
        %v1015 = vunpack.c.l.b16 %v305
        %v1016 = vunpack.c.h.b16 %v305
        %v1017 = vunpack.c.l.b16 %v306
        %v1018 = vunpack.c.h.b16 %v306
        %v1019 = vunpack.c.l.b16 %v307
        %v1020 = vunpack.c.h.b16 %v307
        %v1021 = vunpack.c.l.b16 %v308
        %v1022 = vunpack.c.h.b16 %v308
        %v1023 = vunpack.c.l.b16 %v309
        %v1024 = vunpack.c.h.b16 %v309
        %v1025 = vunpack.c.l.b16 %v310
        %v1026 = vunpack.c.h.b16 %v310
        %v1027 = vunpack.c.l.b16 %v311
        %v1028 = vunpack.c.h.b16 %v311
        %v1029 = vunpack.c.l.b16 %v312
        %v1030 = vunpack.c.h.b16 %v312
        %v1031 = vunpack.c.l.b16 %v313
        %v1032 = vunpack.c.h.b16 %v313
        %v1033 = vunpack.c.l.b16 %v314
        %v1034 = vunpack.c.h.b16 %v314
        %v1035 = vunpack.c.l.b16 %v315
        %v1036 = vunpack.c.h.b16 %v315
        %v1037 = vunpack.c.l.b16 %v316
        %v1038 = vunpack.c.h.b16 %v316
        %v1039 = vunpack.c.l.b16 %v317
        %v1040 = vunpack.c.h.b16 %v317
        %v1041 = vunpack.c.l.b16 %v318
        %v1042 = vunpack.c.h.b16 %v318
        %v1043 = vunpack.c.l.b16 %v319
        %v1044 = vunpack.c.h.b16 %v319
        %v1045 = vunpack.c.l.b16 %v320
        %v1046 = vunpack.c.h.b16 %v320
        %v1047 = vunpack.c.l.b16 %v321
        %v1048 = vunpack.c.h.b16 %v321
        %v1049 = vunpack.c.l.b16 %v322
        %v1050 = vunpack.c.h.b16 %v322
        %v1051 = vunpack.c.l.b16 %v323
        %v1052 = vunpack.c.h.b16 %v323
        %v1053 = vunpack.c.l.b16 %v324
        %v1054 = vunpack.c.h.b16 %v324
        %v1055 = vunpack.c.l.b16 %v325
        %v1056 = vunpack.c.h.b16 %v325
        %v1057 = vunpack.c.l.b16 %v326
        %v1058 = vunpack.c.h.b16 %v326
        %v1059 = vunpack.c.l.b16 %v327
        %v1060 = vunpack.c.h.b16 %v327
        %v1061 = vunpack.c.l.b16 %v328
        %v1062 = vunpack.c.h.b16 %v328
        %v1063 = vunpack.c.l.b16 %v329
        %v1064 = vunpack.c.h.b16 %v329
        %v1065 = vunpack.c.l.b16 %v330
        %v1066 = vunpack.c.h.b16 %v330
        %v1067 = vunpack.c.l.b16 %v331
        %v1068 = vunpack.c.h.b16 %v331
        %v1069 = vunpack.c.l.b16 %v332
        %v1070 = vunpack.c.h.b16 %v332
        %v1071 = vunpack.c.l.b16 %v333
        %v1072 = vunpack.c.h.b16 %v333
        %v1073 = vunpack.c.l.b16 %v334
        %v1074 = vunpack.c.h.b16 %v334
        %v1075 = vunpack.c.l.b16 %v335
        %v1076 = vunpack.c.h.b16 %v335
        %v1077 = vunpack.c.l.b16 %v336
        %v1078 = vunpack.c.h.b16 %v336
        %v1079 = vunpack.c.l.b16 %v337
        %v1080 = vunpack.c.h.b16 %v337
        %v1081 = vunpack.c.l.b16 %v338
        %v1082 = vunpack.c.h.b16 %v338
        %v1083 = vunpack.c.l.b16 %v339
        %v1084 = vunpack.c.h.b16 %v339
        %v1085 = vunpack.c.l.b16 %v340
        %v1086 = vunpack.c.h.b16 %v340
        %v1087 = vunpack.c.l.b16 %v341
        %v1088 = vunpack.c.h.b16 %v341
        %v1089 = vunpack.c.l.b16 %v342
        %v1090 = vunpack.c.h.b16 %v342
        %v1091 = vunpack.c.l.b16 %v343
        %v1092 = vunpack.c.h.b16 %v343
        %v1093 = vunpack.c.l.b16 %v344
        %v1094 = vunpack.c.h.b16 %v344
        %v1095 = vunpack.c.l.b16 %v345
        %v1096 = vunpack.c.h.b16 %v345
        %v1097 = vunpack.c.l.b16 %v346
        %v1098 = vunpack.c.h.b16 %v346
        %v1099 = vunpack.c.l.b16 %v347
        %v1100 = vunpack.c.h.b16 %v347
        %v1101 = vunpack.c.l.b16 %v348
        %v1102 = vunpack.c.h.b16 %v348
        %v1103 = vunpack.c.l.b16 %v349
        %v1104 = vunpack.c.h.b16 %v349
        %v1105 = vunpack.c.l.b16 %v350
        %v1106 = vunpack.c.h.b16 %v350
        %v1107 = vunpack.c.l.b16 %v351
        %v1108 = vunpack.c.h.b16 %v351
        %v1109 = vunpack.c.l.b16 %v352
        %v1110 = vunpack.c.h.b16 %v352
        %v1111 = vunpack.c.l.b16 %v353
        %v1112 = vunpack.c.h.b16 %v353
        %v1113 = vunpack.c.l.b16 %v354
        %v1114 = vunpack.c.h.b16 %v354
        %v1115 = vunpack.c.l.b16 %v355
        %v1116 = vunpack.c.h.b16 %v355
        %v1117 = vunpack.c.l.b16 %v356
        %v1118 = vunpack.c.h.b16 %v356
        %v1119 = vunpack.c.l.b16 %v357
        %v1120 = vunpack.c.h.b16 %v357
        %v1121 = vunpack.c.l.b16 %v358
        %v1122 = vunpack.c.h.b16 %v358
        %v1123 = vunpack.c.l.b16 %v359
        %v1124 = vunpack.c.h.b16 %v359
        %v1125 = vunpack.c.l.b16 %v360
        %v1126 = vunpack.c.h.b16 %v360
        %v1127 = vunpack.c.l.b16 %v361
        %v1128 = vunpack.c.h.b16 %v361
        %v1129 = vunpack.c.l.b16 %v362
        %v1130 = vunpack.c.h.b16 %v362
        %v1131 = vunpack.c.l.b16 %v363
        %v1132 = vunpack.c.h.b16 %v363
        %v1133 = vunpack.c.l.b16 %v364
        %v1134 = vunpack.c.h.b16 %v364
        %v1135 = vunpack.c.l.b16 %v365
        %v1136 = vunpack.c.h.b16 %v365
        %v1137 = vunpack.c.l.b16 %v366
        %v1138 = vunpack.c.h.b16 %v366
        %v1139 = vunpack.c.l.b16 %v367
        %v1140 = vunpack.c.h.b16 %v367
        %v1141 = vunpack.c.l.b16 %v368
        %v1142 = vunpack.c.h.b16 %v368
        %v1143 = vunpack.c.l.b16 %v369
        %v1144 = vunpack.c.h.b16 %v369
        %v1145 = vunpack.c.l.b16 %v370
        %v1146 = vunpack.c.h.b16 %v370
        %v1147 = vunpack.c.l.b16 %v371
        %v1148 = vunpack.c.h.b16 %v371
        %v1149 = vunpack.c.l.b16 %v372
        %v1150 = vunpack.c.h.b16 %v372
        %v1151 = vunpack.c.l.b16 %v373
        %v1152 = vunpack.c.h.b16 %v373
        %v1153 = vunpack.c.l.b16 %v374
        %v1154 = vunpack.c.h.b16 %v374
        %v1155 = vunpack.c.l.b16 %v375
        %v1156 = vunpack.c.h.b16 %v375
        %v1157 = vunpack.c.l.b16 %v376
        %v1158 = vunpack.c.h.b16 %v376
        %v1159 = vunpack.c.l.b16 %v377
        %v1160 = vunpack.c.h.b16 %v377
        %v1161 = vunpack.c.l.b16 %v378
        %v1162 = vunpack.c.h.b16 %v378
        %v1163 = vunpack.c.l.b16 %v379
        %v1164 = vunpack.c.h.b16 %v379
        %v1165 = vunpack.c.l.b16 %v380
        %v1166 = vunpack.c.h.b16 %v380
        %v1167 = vunpack.c.l.b16 %v381
        %v1168 = vunpack.c.h.b16 %v381
        %v1169 = vunpack.c.l.b16 %v382
        %v1170 = vunpack.c.h.b16 %v382
        %v1171 = vunpack.c.l.b16 %v383
        %v1172 = vunpack.c.h.b16 %v383
        %v1173 = vunpack.c.l.b16 %v384
        %v1174 = vunpack.c.h.b16 %v384
        %v1175 = vunpack.c.l.b16 %v385
        %v1176 = vunpack.c.h.b16 %v385
        %v1177 = vunpack.c.l.b16 %v386
        %v1178 = vunpack.c.h.b16 %v386
        %v1179 = vunpack.c.l.b16 %v387
        %v1180 = vunpack.c.h.b16 %v387
        %v1181 = vunpack.c.l.b16 %v388
        %v1182 = vunpack.c.h.b16 %v388
        %v1183 = vunpack.c.l.b16 %v389
        %v1184 = vunpack.c.h.b16 %v389
        %v1185 = vunpack.c.l.b16 %v390
        %v1186 = vunpack.c.h.b16 %v390
        %v1187 = vunpack.c.l.b16 %v391
        %v1188 = vunpack.c.h.b16 %v391
        %v1189 = vunpack.c.l.b16 %v392
        %v1190 = vunpack.c.h.b16 %v392
        %v1191 = vunpack.c.l.b16 %v393
        %v1192 = vunpack.c.h.b16 %v393
        %v1193 = vunpack.c.l.b16 %v394
        %v1194 = vunpack.c.h.b16 %v394
        %v1195 = vunpack.c.l.b16 %v395
        %v1196 = vunpack.c.h.b16 %v395
        %v1197 = vunpack.c.l.b16 %v396
        %v1198 = vunpack.c.h.b16 %v396
        %v1199 = vunpack.c.l.b16 %v397
        %v1200 = vunpack.c.h.b16 %v397
        %v1201 = vunpack.c.l.b16 %v398
        %v1202 = vunpack.c.h.b16 %v398
        %v1203 = vunpack.c.l.b16 %v399
        %v1204 = vunpack.c.h.b16 %v399
        %v1205 = vunpack.c.l.b16 %v400
        %v1206 = vunpack.c.h.b16 %v400
        %v1207 = vunpack.c.l.b16 %v401
        %v1208 = vunpack.c.h.b16 %v401
        %v1209 = vunpack.c.l.b16 %v402
        %v1210 = vunpack.c.h.b16 %v402
        %v1211 = vunpack.c.l.b16 %v403
        %v1212 = vunpack.c.h.b16 %v403
        %v1213 = vunpack.c.l.b16 %v404
        %v1214 = vunpack.c.h.b16 %v404
        %v1215 = vunpack.c.l.b16 %v405
        %v1216 = vunpack.c.h.b16 %v405
        %v1217 = vunpack.c.l.b16 %v406
        %v1218 = vunpack.c.h.b16 %v406
        %v1219 = vunpack.c.l.b16 %v407
        %v1220 = vunpack.c.h.b16 %v407
        %v1221 = vunpack.c.l.b16 %v408
        %v1222 = vunpack.c.h.b16 %v408
        %v1223 = vunpack.c.l.b16 %v409
        %v1224 = vunpack.c.h.b16 %v409
        %v1225 = vunpack.c.l.b16 %v410
        %v1226 = vunpack.c.h.b16 %v410
        %v1227 = vunpack.c.l.b16 %v411
        %v1228 = vunpack.c.h.b16 %v411
        %v1229 = vunpack.c.l.b16 %v412
        %v1230 = vunpack.c.h.b16 %v412
        %v1231 = vunpack.c.l.b16 %v413
        %v1232 = vunpack.c.h.b16 %v413
        %v1233 = vunpack.c.l.b16 %v414
        %v1234 = vunpack.c.h.b16 %v414
        %v1235 = vunpack.c.l.b16 %v415
        %v1236 = vunpack.c.h.b16 %v415
        %v1237 = vunpack.c.l.b16 %v416
        %v1238 = vunpack.c.h.b16 %v416
        %v1239 = vunpack.c.l.b16 %v417
        %v1240 = vunpack.c.h.b16 %v417
        %v1241 = vunpack.c.l.b16 %v418
        %v1242 = vunpack.c.h.b16 %v418
        %v1243 = vunpack.c.l.b16 %v419
        %v1244 = vunpack.c.h.b16 %v419
        %v1245 = vunpack.c.l.b16 %v420
        %v1246 = vunpack.c.h.b16 %v420
        %v1247 = vunpack.c.l.b16 %v421
        %v1248 = vunpack.c.h.b16 %v421
        %v1249 = vunpack.c.l.b16 %v422
        %v1250 = vunpack.c.h.b16 %v422
        %v1251 = vunpack.c.l.b16 %v423
        %v1252 = vunpack.c.h.b16 %v423
        %v1253 = vunpack.c.l.b16 %v424
        %v1254 = vunpack.c.h.b16 %v424
        %v1255 = vunpack.c.l.b16 %v425
        %v1256 = vunpack.c.h.b16 %v425
        %v1257 = vunpack.c.l.b16 %v426
        %v1258 = vunpack.c.h.b16 %v426
        %v1259 = vunpack.c.l.b16 %v427
        %v1260 = vunpack.c.h.b16 %v427
        %v1261 = vunpack.c.l.b16 %v428
        %v1262 = vunpack.c.h.b16 %v428
        %v1263 = vunpack.c.l.b16 %v429
        %v1264 = vunpack.c.h.b16 %v429
        %v1265 = vunpack.c.l.b16 %v430
        %v1266 = vunpack.c.h.b16 %v430
        %v1267 = vunpack.c.l.b16 %v431
        %v1268 = vunpack.c.h.b16 %v431
        %v1269 = vunpack.c.l.b16 %v432
        %v1270 = vunpack.c.h.b16 %v432
        %v1271 = vunpack.c.l.b16 %v433
        %v1272 = vunpack.c.h.b16 %v433
        %v1273 = vunpack.c.l.b16 %v434
        %v1274 = vunpack.c.h.b16 %v434
        %v1275 = vunpack.c.l.b16 %v435
        %v1276 = vunpack.c.h.b16 %v435
        %v1277 = vunpack.c.l.b16 %v436
        %v1278 = vunpack.c.h.b16 %v436
        %v1279 = vunpack.c.l.b16 %v437
        %v1280 = vunpack.c.h.b16 %v437
        %v1281 = vunpack.c.l.b16 %v438
        %v1282 = vunpack.c.h.b16 %v438
        %v1283 = vunpack.c.l.b16 %v439
        %v1284 = vunpack.c.h.b16 %v439
        %v1285 = vunpack.c.l.b16 %v440
        %v1286 = vunpack.c.h.b16 %v440
        %v1287 = vunpack.c.l.b16 %v441
        %v1288 = vunpack.c.h.b16 %v441
        %v1289 = vunpack.c.l.b16 %v442
        %v1290 = vunpack.c.h.b16 %v442
        %v1291 = vpack.c.b16 %v781, %v779
        %v1292 = vpack.c.b16 %v782, %v780
        %v1293 = vpack.c.b16 %v785, %v783
        %v1294 = vpack.c.b16 %v786, %v784
        %v1295 = vpack.c.b16 %v789, %v787
        %v1296 = vpack.c.b16 %v790, %v788
        %v1297 = vpack.c.b16 %v793, %v791
        %v1298 = vpack.c.b16 %v794, %v792
        %v1299 = vpack.c.b16 %v797, %v795
        %v1300 = vpack.c.b16 %v798, %v796
        %v1301 = vpack.c.b16 %v801, %v799
        %v1302 = vpack.c.b16 %v802, %v800
        %v1303 = vpack.c.b16 %v805, %v803
        %v1304 = vpack.c.b16 %v806, %v804
        %v1305 = vpack.c.b16 %v809, %v807
        %v1306 = vpack.c.b16 %v810, %v808
        %v1307 = vpack.c.b16 %v813, %v811
        %v1308 = vpack.c.b16 %v814, %v812
        %v1309 = vpack.c.b16 %v817, %v815
        %v1310 = vpack.c.b16 %v818, %v816
        %v1311 = vpack.c.b16 %v821, %v819
        %v1312 = vpack.c.b16 %v822, %v820
        %v1313 = vpack.c.b16 %v825, %v823
        %v1314 = vpack.c.b16 %v826, %v824
        %v1315 = vpack.c.b16 %v829, %v827
        %v1316 = vpack.c.b16 %v830, %v828
        %v1317 = vpack.c.b16 %v833, %v831
        %v1318 = vpack.c.b16 %v834, %v832
        %v1319 = vpack.c.b16 %v837, %v835
        %v1320 = vpack.c.b16 %v838, %v836
        %v1321 = vpack.c.b16 %v841, %v839
        %v1322 = vpack.c.b16 %v842, %v840
        %v1323 = vpack.c.b16 %v845, %v843
        %v1324 = vpack.c.b16 %v846, %v844
        %v1325 = vpack.c.b16 %v849, %v847
        %v1326 = vpack.c.b16 %v850, %v848
        %v1327 = vpack.c.b16 %v853, %v851
        %v1328 = vpack.c.b16 %v854, %v852
        %v1329 = vpack.c.b16 %v857, %v855
        %v1330 = vpack.c.b16 %v858, %v856
        %v1331 = vpack.c.b16 %v861, %v859
        %v1332 = vpack.c.b16 %v862, %v860
        %v1333 = vpack.c.b16 %v865, %v863
        %v1334 = vpack.c.b16 %v866, %v864
        %v1335 = vpack.c.b16 %v869, %v867
        %v1336 = vpack.c.b16 %v870, %v868
        %v1337 = vpack.c.b16 %v873, %v871
        %v1338 = vpack.c.b16 %v874, %v872
        %v1339 = vpack.c.b16 %v877, %v875
        %v1340 = vpack.c.b16 %v878, %v876
        %v1341 = vpack.c.b16 %v881, %v879
        %v1342 = vpack.c.b16 %v882, %v880
        %v1343 = vpack.c.b16 %v885, %v883
        %v1344 = vpack.c.b16 %v886, %v884
        %v1345 = vpack.c.b16 %v889, %v887
        %v1346 = vpack.c.b16 %v890, %v888
        %v1347 = vpack.c.b16 %v893, %v891
        %v1348 = vpack.c.b16 %v894, %v892
        %v1349 = vpack.c.b16 %v897, %v895
        %v1350 = vpack.c.b16 %v898, %v896
        %v1351 = vpack.c.b16 %v901, %v899
        %v1352 = vpack.c.b16 %v902, %v900
        %v1353 = vpack.c.b16 %v905, %v903
        %v1354 = vpack.c.b16 %v906, %v904
        %v1355 = vpack.c.b16 %v909, %v907
        %v1356 = vpack.c.b16 %v910, %v908
        %v1357 = vpack.c.b16 %v913, %v911
        %v1358 = vpack.c.b16 %v914, %v912
        %v1359 = vpack.c.b16 %v917, %v915
        %v1360 = vpack.c.b16 %v918, %v916
        %v1361 = vpack.c.b16 %v921, %v919
        %v1362 = vpack.c.b16 %v922, %v920
        %v1363 = vpack.c.b16 %v925, %v923
        %v1364 = vpack.c.b16 %v926, %v924
        %v1365 = vpack.c.b16 %v929, %v927
        %v1366 = vpack.c.b16 %v930, %v928
        %v1367 = vpack.c.b16 %v933, %v931
        %v1368 = vpack.c.b16 %v934, %v932
        %v1369 = vpack.c.b16 %v937, %v935
        %v1370 = vpack.c.b16 %v938, %v936
        %v1371 = vpack.c.b16 %v941, %v939
        %v1372 = vpack.c.b16 %v942, %v940
        %v1373 = vpack.c.b16 %v945, %v943
        %v1374 = vpack.c.b16 %v946, %v944
        %v1375 = vpack.c.b16 %v949, %v947
        %v1376 = vpack.c.b16 %v950, %v948
        %v1377 = vpack.c.b16 %v953, %v951
        %v1378 = vpack.c.b16 %v954, %v952
        %v1379 = vpack.c.b16 %v957, %v955
        %v1380 = vpack.c.b16 %v958, %v956
        %v1381 = vpack.c.b16 %v961, %v959
        %v1382 = vpack.c.b16 %v962, %v960
        %v1383 = vpack.c.b16 %v965, %v963
        %v1384 = vpack.c.b16 %v966, %v964
        %v1385 = vpack.c.b16 %v969, %v967
        %v1386 = vpack.c.b16 %v970, %v968
        %v1387 = vpack.c.b16 %v973, %v971
        %v1388 = vpack.c.b16 %v974, %v972
        %v1389 = vpack.c.b16 %v977, %v975
        %v1390 = vpack.c.b16 %v978, %v976
        %v1391 = vpack.c.b16 %v981, %v979
        %v1392 = vpack.c.b16 %v982, %v980
        %v1393 = vpack.c.b16 %v985, %v983
        %v1394 = vpack.c.b16 %v986, %v984
        %v1395 = vpack.c.b16 %v989, %v987
        %v1396 = vpack.c.b16 %v990, %v988
        %v1397 = vpack.c.b16 %v993, %v991
        %v1398 = vpack.c.b16 %v994, %v992
        %v1399 = vpack.c.b16 %v997, %v995
        %v1400 = vpack.c.b16 %v998, %v996
        %v1401 = vpack.c.b16 %v1001, %v999
        %v1402 = vpack.c.b16 %v1002, %v1000
        %v1403 = vpack.c.b16 %v1005, %v1003
        %v1404 = vpack.c.b16 %v1006, %v1004
        %v1405 = vpack.c.b16 %v1009, %v1007
        %v1406 = vpack.c.b16 %v1010, %v1008
        %v1407 = vpack.c.b16 %v1013, %v1011
        %v1408 = vpack.c.b16 %v1014, %v1012
        %v1409 = vpack.c.b16 %v1017, %v1015
        %v1410 = vpack.c.b16 %v1018, %v1016
        %v1411 = vpack.c.b16 %v1021, %v1019
        %v1412 = vpack.c.b16 %v1022, %v1020
        %v1413 = vpack.c.b16 %v1025, %v1023
        %v1414 = vpack.c.b16 %v1026, %v1024
        %v1415 = vpack.c.b16 %v1029, %v1027
        %v1416 = vpack.c.b16 %v1030, %v1028
        %v1417 = vpack.c.b16 %v1033, %v1031
        %v1418 = vpack.c.b16 %v1034, %v1032
        %v1419 = vpack.c.b16 %v1037, %v1035
        %v1420 = vpack.c.b16 %v1038, %v1036
        %v1421 = vpack.c.b16 %v1041, %v1039
        %v1422 = vpack.c.b16 %v1042, %v1040
        %v1423 = vpack.c.b16 %v1045, %v1043
        %v1424 = vpack.c.b16 %v1046, %v1044
        %v1425 = vpack.c.b16 %v1049, %v1047
        %v1426 = vpack.c.b16 %v1050, %v1048
        %v1427 = vpack.c.b16 %v1053, %v1051
        %v1428 = vpack.c.b16 %v1054, %v1052
        %v1429 = vpack.c.b16 %v1057, %v1055
        %v1430 = vpack.c.b16 %v1058, %v1056
        %v1431 = vpack.c.b16 %v1061, %v1059
        %v1432 = vpack.c.b16 %v1062, %v1060
        %v1433 = vpack.c.b16 %v1065, %v1063
        %v1434 = vpack.c.b16 %v1066, %v1064
        %v1435 = vpack.c.b16 %v1069, %v1067
        %v1436 = vpack.c.b16 %v1070, %v1068
        %v1437 = vpack.c.b16 %v1073, %v1071
        %v1438 = vpack.c.b16 %v1074, %v1072
        %v1439 = vpack.c.b16 %v1077, %v1075
        %v1440 = vpack.c.b16 %v1078, %v1076
        %v1441 = vpack.c.b16 %v1081, %v1079
        %v1442 = vpack.c.b16 %v1082, %v1080
        %v1443 = vpack.c.b16 %v1085, %v1083
        %v1444 = vpack.c.b16 %v1086, %v1084
        %v1445 = vpack.c.b16 %v1089, %v1087
        %v1446 = vpack.c.b16 %v1090, %v1088
        %v1447 = vpack.c.b16 %v1093, %v1091
        %v1448 = vpack.c.b16 %v1094, %v1092
        %v1449 = vpack.c.b16 %v1097, %v1095
        %v1450 = vpack.c.b16 %v1098, %v1096
        %v1451 = vpack.c.b16 %v1101, %v1099
        %v1452 = vpack.c.b16 %v1102, %v1100
        %v1453 = vpack.c.b16 %v1105, %v1103
        %v1454 = vpack.c.b16 %v1106, %v1104
        %v1455 = vpack.c.b16 %v1109, %v1107
        %v1456 = vpack.c.b16 %v1110, %v1108
        %v1457 = vpack.c.b16 %v1113, %v1111
        %v1458 = vpack.c.b16 %v1114, %v1112
        %v1459 = vpack.c.b16 %v1117, %v1115
        %v1460 = vpack.c.b16 %v1118, %v1116
        %v1461 = vpack.c.b16 %v1121, %v1119
        %v1462 = vpack.c.b16 %v1122, %v1120
        %v1463 = vpack.c.b16 %v1125, %v1123
        %v1464 = vpack.c.b16 %v1126, %v1124
        %v1465 = vpack.c.b16 %v1129, %v1127
        %v1466 = vpack.c.b16 %v1130, %v1128
        %v1467 = vpack.c.b16 %v1133, %v1131
        %v1468 = vpack.c.b16 %v1134, %v1132
        %v1469 = vpack.c.b16 %v1137, %v1135
        %v1470 = vpack.c.b16 %v1138, %v1136
        %v1471 = vpack.c.b16 %v1141, %v1139
        %v1472 = vpack.c.b16 %v1142, %v1140
        %v1473 = vpack.c.b16 %v1145, %v1143
        %v1474 = vpack.c.b16 %v1146, %v1144
        %v1475 = vpack.c.b16 %v1149, %v1147
        %v1476 = vpack.c.b16 %v1150, %v1148
        %v1477 = vpack.c.b16 %v1153, %v1151
        %v1478 = vpack.c.b16 %v1154, %v1152
        %v1479 = vpack.c.b16 %v1157, %v1155
        %v1480 = vpack.c.b16 %v1158, %v1156
        %v1481 = vpack.c.b16 %v1161, %v1159
        %v1482 = vpack.c.b16 %v1162, %v1160
        %v1483 = vpack.c.b16 %v1165, %v1163
        %v1484 = vpack.c.b16 %v1166, %v1164
        %v1485 = vpack.c.b16 %v1169, %v1167
        %v1486 = vpack.c.b16 %v1170, %v1168
        %v1487 = vpack.c.b16 %v1173, %v1171
        %v1488 = vpack.c.b16 %v1174, %v1172
        %v1489 = vpack.c.b16 %v1177, %v1175
        %v1490 = vpack.c.b16 %v1178, %v1176
        %v1491 = vpack.c.b16 %v1181, %v1179
        %v1492 = vpack.c.b16 %v1182, %v1180
        %v1493 = vpack.c.b16 %v1185, %v1183
        %v1494 = vpack.c.b16 %v1186, %v1184
        %v1495 = vpack.c.b16 %v1189, %v1187
        %v1496 = vpack.c.b16 %v1190, %v1188
        %v1497 = vpack.c.b16 %v1193, %v1191
        %v1498 = vpack.c.b16 %v1194, %v1192
        %v1499 = vpack.c.b16 %v1197, %v1195
        %v1500 = vpack.c.b16 %v1198, %v1196
        %v1501 = vpack.c.b16 %v1201, %v1199
        %v1502 = vpack.c.b16 %v1202, %v1200
        %v1503 = vpack.c.b16 %v1205, %v1203
        %v1504 = vpack.c.b16 %v1206, %v1204
        %v1505 = vpack.c.b16 %v1209, %v1207
        %v1506 = vpack.c.b16 %v1210, %v1208
        %v1507 = vpack.c.b16 %v1213, %v1211
        %v1508 = vpack.c.b16 %v1214, %v1212
        %v1509 = vpack.c.b16 %v1217, %v1215
        %v1510 = vpack.c.b16 %v1218, %v1216
        %v1511 = vpack.c.b16 %v1221, %v1219
        %v1512 = vpack.c.b16 %v1222, %v1220
        %v1513 = vpack.c.b16 %v1225, %v1223
        %v1514 = vpack.c.b16 %v1226, %v1224
        %v1515 = vpack.c.b16 %v1229, %v1227
        %v1516 = vpack.c.b16 %v1230, %v1228
        %v1517 = vpack.c.b16 %v1233, %v1231
        %v1518 = vpack.c.b16 %v1234, %v1232
        %v1519 = vpack.c.b16 %v1237, %v1235
        %v1520 = vpack.c.b16 %v1238, %v1236
        %v1521 = vpack.c.b16 %v1241, %v1239
        %v1522 = vpack.c.b16 %v1242, %v1240
        %v1523 = vpack.c.b16 %v1245, %v1243
        %v1524 = vpack.c.b16 %v1246, %v1244
        %v1525 = vpack.c.b16 %v1249, %v1247
        %v1526 = vpack.c.b16 %v1250, %v1248
        %v1527 = vpack.c.b16 %v1253, %v1251
        %v1528 = vpack.c.b16 %v1254, %v1252
        %v1529 = vpack.c.b16 %v1257, %v1255
        %v1530 = vpack.c.b16 %v1258, %v1256
        %v1531 = vpack.c.b16 %v1261, %v1259
        %v1532 = vpack.c.b16 %v1262, %v1260
        %v1533 = vpack.c.b16 %v1265, %v1263
        %v1534 = vpack.c.b16 %v1266, %v1264
        %v1535 = vpack.c.b16 %v1269, %v1267
        %v1536 = vpack.c.b16 %v1270, %v1268
        %v1537 = vpack.c.b16 %v1273, %v1271
        %v1538 = vpack.c.b16 %v1274, %v1272
        %v1539 = vpack.c.b16 %v1277, %v1275
        %v1540 = vpack.c.b16 %v1278, %v1276
        %v1541 = vpack.c.b16 %v1281, %v1279
        %v1542 = vpack.c.b16 %v1282, %v1280
        %v1543 = vpack.c.b16 %v1285, %v1283
        %v1544 = vpack.c.b16 %v1286, %v1284
        %v1545 = vpack.c.b16 %v1289, %v1287
        %v1546 = vpack.c.b16 %v1290, %v1288
        %1803 = vmatpush.bf16.msra.mxu0 %v1305
        %1804 = vmatpush.bf16.msra.mxu0 %v1303
        %1805 = vmatpush.bf16.msra.mxu0 %v1301
        %1806 = vmatpush.bf16.msra.mxu0 %v1299
        %1807 = vmatpush.bf16.msra.mxu0 %v1297
        %1808 = vmatpush.bf16.msra.mxu0 %v1295
        %1809 = vmatpush.bf16.msra.mxu0 %v1293
        %1810 = vmatpush.bf16.msra.mxu0 %v1291
        %1811 = vmatmul.bf16.gmra.mxu0 %v491
        %v1812 = vpop.f32.mrf.mxu0
        %v1813 = vadd.f32 0.0, %v1812
        %v1814 = vpop.f32.mrf.mxu0
        %v1815 = vadd.f32 0.0, %v1814
        %1816 = vdwg.mxu0
        %1817 = vmatpush.bf16.msra.mxu0 %v1321
        %1818 = vmatpush.bf16.msra.mxu0 %v1319
        %1819 = vmatpush.bf16.msra.mxu0 %v1317
        %1820 = vmatpush.bf16.msra.mxu0 %v1315
        %1821 = vmatpush.bf16.msra.mxu0 %v1313
        %1822 = vmatpush.bf16.msra.mxu0 %v1311
        %1823 = vmatpush.bf16.msra.mxu0 %v1309
        %1824 = vmatpush.bf16.msra.mxu0 %v1307
        %1825 = vmatmul.bf16.gmra.mxu0 %v492
        %v1826 = vpop.f32.mrf.mxu0
        %v1827 = vadd.f32 %v1813, %v1826
        %v1828 = vpop.f32.mrf.mxu0
        %v1829 = vadd.f32 %v1815, %v1828
        %1830 = vdwg.mxu0
        %1831 = vmatpush.bf16.msra.mxu0 %v1337
        %1832 = vmatpush.bf16.msra.mxu0 %v1335
        %1833 = vmatpush.bf16.msra.mxu0 %v1333
        %1834 = vmatpush.bf16.msra.mxu0 %v1331
        %1835 = vmatpush.bf16.msra.mxu0 %v1329
        %1836 = vmatpush.bf16.msra.mxu0 %v1327
        %1837 = vmatpush.bf16.msra.mxu0 %v1325
        %1838 = vmatpush.bf16.msra.mxu0 %v1323
        %1839 = vmatmul.bf16.gmra.mxu0 %v493
        %v1840 = vpop.f32.mrf.mxu0
        %v1841 = vadd.f32 %v1827, %v1840
        %v1842 = vpop.f32.mrf.mxu0
        %v1843 = vadd.f32 %v1829, %v1842
        %1844 = vdwg.mxu0
        %1845 = vmatpush.bf16.msra.mxu0 %v1353
        %1846 = vmatpush.bf16.msra.mxu0 %v1351
        %1847 = vmatpush.bf16.msra.mxu0 %v1349
        %1848 = vmatpush.bf16.msra.mxu0 %v1347
        %1849 = vmatpush.bf16.msra.mxu0 %v1345
        %1850 = vmatpush.bf16.msra.mxu0 %v1343
        %1851 = vmatpush.bf16.msra.mxu0 %v1341
        %1852 = vmatpush.bf16.msra.mxu0 %v1339
        %1853 = vmatmul.bf16.gmra.mxu0 %v494
        %v1854 = vpop.f32.mrf.mxu0
        %v1855 = vadd.f32 %v1841, %v1854
        %v1856 = vpop.f32.mrf.mxu0
        %v1857 = vadd.f32 %v1843, %v1856
        %1858 = vdwg.mxu0
        %1859 = vmatpush.bf16.msra.mxu0 %v1369
        %1860 = vmatpush.bf16.msra.mxu0 %v1367
        %1861 = vmatpush.bf16.msra.mxu0 %v1365
        %1862 = vmatpush.bf16.msra.mxu0 %v1363
        %1863 = vmatpush.bf16.msra.mxu0 %v1361
        %1864 = vmatpush.bf16.msra.mxu0 %v1359
        %1865 = vmatpush.bf16.msra.mxu0 %v1357
        %1866 = vmatpush.bf16.msra.mxu0 %v1355
        %1867 = vmatmul.bf16.gmra.mxu0 %v495
        %v1868 = vpop.f32.mrf.mxu0
        %v1869 = vadd.f32 %v1855, %v1868
        %v1870 = vpop.f32.mrf.mxu0
        %v1871 = vadd.f32 %v1857, %v1870
        %1872 = vdwg.mxu0
        %1873 = vmatpush.bf16.msra.mxu0 %v1385
        %1874 = vmatpush.bf16.msra.mxu0 %v1383
        %1875 = vmatpush.bf16.msra.mxu0 %v1381
        %1876 = vmatpush.bf16.msra.mxu0 %v1379
        %1877 = vmatpush.bf16.msra.mxu0 %v1377
        %1878 = vmatpush.bf16.msra.mxu0 %v1375
        %1879 = vmatpush.bf16.msra.mxu0 %v1373
        %1880 = vmatpush.bf16.msra.mxu0 %v1371
        %1881 = vmatmul.bf16.gmra.mxu0 %v496
        %v1882 = vpop.f32.mrf.mxu0
        %v1883 = vadd.f32 %v1869, %v1882
        %v1884 = vpop.f32.mrf.mxu0
        %v1885 = vadd.f32 %v1871, %v1884
        %1886 = vdwg.mxu0
        %1887 = vmatpush.bf16.msra.mxu0 %v1401
        %1888 = vmatpush.bf16.msra.mxu0 %v1399
        %1889 = vmatpush.bf16.msra.mxu0 %v1397
        %1890 = vmatpush.bf16.msra.mxu0 %v1395
        %1891 = vmatpush.bf16.msra.mxu0 %v1393
        %1892 = vmatpush.bf16.msra.mxu0 %v1391
        %1893 = vmatpush.bf16.msra.mxu0 %v1389
        %1894 = vmatpush.bf16.msra.mxu0 %v1387
        %1895 = vmatmul.bf16.gmra.mxu0 %v497
        %v1896 = vpop.f32.mrf.mxu0
        %v1897 = vadd.f32 %v1883, %v1896
        %v1898 = vpop.f32.mrf.mxu0
        %v1899 = vadd.f32 %v1885, %v1898
        %1900 = vdwg.mxu0
        %1901 = vmatpush.bf16.msra.mxu0 %v1417
        %1902 = vmatpush.bf16.msra.mxu0 %v1415
        %1903 = vmatpush.bf16.msra.mxu0 %v1413
        %1904 = vmatpush.bf16.msra.mxu0 %v1411
        %1905 = vmatpush.bf16.msra.mxu0 %v1409
        %1906 = vmatpush.bf16.msra.mxu0 %v1407
        %1907 = vmatpush.bf16.msra.mxu0 %v1405
        %1908 = vmatpush.bf16.msra.mxu0 %v1403
        %1909 = vmatmul.bf16.gmra.mxu0 %v498
        %v1910 = vpop.f32.mrf.mxu0
        %v1911 = vadd.f32 %v1897, %v1910
        %v1912 = vpop.f32.mrf.mxu0
        %v1913 = vadd.f32 %v1899, %v1912
        %1914 = vdwg.mxu0
        %1915 = vmatpush.bf16.msra.mxu0 %v1433
        %1916 = vmatpush.bf16.msra.mxu0 %v1431
        %1917 = vmatpush.bf16.msra.mxu0 %v1429
        %1918 = vmatpush.bf16.msra.mxu0 %v1427
        %1919 = vmatpush.bf16.msra.mxu0 %v1425
        %1920 = vmatpush.bf16.msra.mxu0 %v1423
        %1921 = vmatpush.bf16.msra.mxu0 %v1421
        %1922 = vmatpush.bf16.msra.mxu0 %v1419
        %1923 = vmatmul.bf16.gmra.mxu0 %v499
        %v1924 = vpop.f32.mrf.mxu0
        %v1925 = vadd.f32 %v1911, %v1924
        %v1926 = vpop.f32.mrf.mxu0
        %v1927 = vadd.f32 %v1913, %v1926
        %1928 = vdwg.mxu0
        %1929 = vmatpush.bf16.msra.mxu0 %v1449
        %1930 = vmatpush.bf16.msra.mxu0 %v1447
        %1931 = vmatpush.bf16.msra.mxu0 %v1445
        %1932 = vmatpush.bf16.msra.mxu0 %v1443
        %1933 = vmatpush.bf16.msra.mxu0 %v1441
        %1934 = vmatpush.bf16.msra.mxu0 %v1439
        %1935 = vmatpush.bf16.msra.mxu0 %v1437
        %1936 = vmatpush.bf16.msra.mxu0 %v1435
        %1937 = vmatmul.bf16.gmra.mxu0 %v500
        %v1938 = vpop.f32.mrf.mxu0
        %v1939 = vadd.f32 %v1925, %v1938
        %v1940 = vpop.f32.mrf.mxu0
        %v1941 = vadd.f32 %v1927, %v1940
        %1942 = vdwg.mxu0
        %1943 = vmatpush.bf16.msra.mxu0 %v1465
        %1944 = vmatpush.bf16.msra.mxu0 %v1463
        %1945 = vmatpush.bf16.msra.mxu0 %v1461
        %1946 = vmatpush.bf16.msra.mxu0 %v1459
        %1947 = vmatpush.bf16.msra.mxu0 %v1457
        %1948 = vmatpush.bf16.msra.mxu0 %v1455
        %1949 = vmatpush.bf16.msra.mxu0 %v1453
        %1950 = vmatpush.bf16.msra.mxu0 %v1451
        %1951 = vmatmul.bf16.gmra.mxu0 %v501
        %v1952 = vpop.f32.mrf.mxu0
        %v1953 = vadd.f32 %v1939, %v1952
        %v1954 = vpop.f32.mrf.mxu0
        %v1955 = vadd.f32 %v1941, %v1954
        %1956 = vdwg.mxu0
        %1957 = vmatpush.bf16.msra.mxu0 %v1481
        %1958 = vmatpush.bf16.msra.mxu0 %v1479
        %1959 = vmatpush.bf16.msra.mxu0 %v1477
        %1960 = vmatpush.bf16.msra.mxu0 %v1475
        %1961 = vmatpush.bf16.msra.mxu0 %v1473
        %1962 = vmatpush.bf16.msra.mxu0 %v1471
        %1963 = vmatpush.bf16.msra.mxu0 %v1469
        %1964 = vmatpush.bf16.msra.mxu0 %v1467
        %1965 = vmatmul.bf16.gmra.mxu0 %v502
        %v1966 = vpop.f32.mrf.mxu0
        %v1967 = vadd.f32 %v1953, %v1966
        %v1968 = vpop.f32.mrf.mxu0
        %v1969 = vadd.f32 %v1955, %v1968
        %1970 = vdwg.mxu0
        %1971 = vmatpush.bf16.msra.mxu0 %v1497
        %1972 = vmatpush.bf16.msra.mxu0 %v1495
        %1973 = vmatpush.bf16.msra.mxu0 %v1493
        %1974 = vmatpush.bf16.msra.mxu0 %v1491
        %1975 = vmatpush.bf16.msra.mxu0 %v1489
        %1976 = vmatpush.bf16.msra.mxu0 %v1487
        %1977 = vmatpush.bf16.msra.mxu0 %v1485
        %1978 = vmatpush.bf16.msra.mxu0 %v1483
        %1979 = vmatmul.bf16.gmra.mxu0 %v503
        %v1980 = vpop.f32.mrf.mxu0
        %v1981 = vadd.f32 %v1967, %v1980
        %v1982 = vpop.f32.mrf.mxu0
        %v1983 = vadd.f32 %v1969, %v1982
        %1984 = vdwg.mxu0
        %1985 = vmatpush.bf16.msra.mxu0 %v1513
        %1986 = vmatpush.bf16.msra.mxu0 %v1511
        %1987 = vmatpush.bf16.msra.mxu0 %v1509
        %1988 = vmatpush.bf16.msra.mxu0 %v1507
        %1989 = vmatpush.bf16.msra.mxu0 %v1505
        %1990 = vmatpush.bf16.msra.mxu0 %v1503
        %1991 = vmatpush.bf16.msra.mxu0 %v1501
        %1992 = vmatpush.bf16.msra.mxu0 %v1499
        %1993 = vmatmul.bf16.gmra.mxu0 %v504
        %v1994 = vpop.f32.mrf.mxu0
        %v1995 = vadd.f32 %v1981, %v1994
        %v1996 = vpop.f32.mrf.mxu0
        %v1997 = vadd.f32 %v1983, %v1996
        %1998 = vdwg.mxu0
        %1999 = vmatpush.bf16.msra.mxu0 %v1529
        %2000 = vmatpush.bf16.msra.mxu0 %v1527
        %2001 = vmatpush.bf16.msra.mxu0 %v1525
        %2002 = vmatpush.bf16.msra.mxu0 %v1523
        %2003 = vmatpush.bf16.msra.mxu0 %v1521
        %2004 = vmatpush.bf16.msra.mxu0 %v1519
        %2005 = vmatpush.bf16.msra.mxu0 %v1517
        %2006 = vmatpush.bf16.msra.mxu0 %v1515
        %2007 = vmatmul.bf16.gmra.mxu0 %v505
        %v2008 = vpop.f32.mrf.mxu0
        %v2009 = vadd.f32 %v1995, %v2008
        %v2010 = vpop.f32.mrf.mxu0
        %v2011 = vadd.f32 %v1997, %v2010
        %2012 = vdwg.mxu0
        %2013 = vmatpush.bf16.msra.mxu0 %v1545
        %2014 = vmatpush.bf16.msra.mxu0 %v1543
        %2015 = vmatpush.bf16.msra.mxu0 %v1541
        %2016 = vmatpush.bf16.msra.mxu0 %v1539
        %2017 = vmatpush.bf16.msra.mxu0 %v1537
        %2018 = vmatpush.bf16.msra.mxu0 %v1535
        %2019 = vmatpush.bf16.msra.mxu0 %v1533
        %2020 = vmatpush.bf16.msra.mxu0 %v1531
        %2021 = vmatmul.bf16.gmra.mxu0 %v506
        %v2022 = vpop.f32.mrf.mxu0
        %v2023 = vadd.f32 %v2009, %v2022
        %v2024 = vpop.f32.mrf.mxu0
        %v2025 = vadd.f32 %v2011, %v2024
        %2026 = vdwg.mxu0
        %2027 = vmatpush.bf16.msra.mxu0 %v1306
        %2028 = vmatpush.bf16.msra.mxu0 %v1304
        %2029 = vmatpush.bf16.msra.mxu0 %v1302
        %2030 = vmatpush.bf16.msra.mxu0 %v1300
        %2031 = vmatpush.bf16.msra.mxu0 %v1298
        %2032 = vmatpush.bf16.msra.mxu0 %v1296
        %2033 = vmatpush.bf16.msra.mxu0 %v1294
        %2034 = vmatpush.bf16.msra.mxu0 %v1292
        %2035 = vmatmul.bf16.gmra.mxu0 %v491
        %v2036 = vpop.f32.mrf.mxu0
        %v2037 = vadd.f32 0.0, %v2036
        %v2038 = vpop.f32.mrf.mxu0
        %v2039 = vadd.f32 0.0, %v2038
        %2040 = vdwg.mxu0
        %2041 = vmatpush.bf16.msra.mxu0 %v1322
        %2042 = vmatpush.bf16.msra.mxu0 %v1320
        %2043 = vmatpush.bf16.msra.mxu0 %v1318
        %2044 = vmatpush.bf16.msra.mxu0 %v1316
        %2045 = vmatpush.bf16.msra.mxu0 %v1314
        %2046 = vmatpush.bf16.msra.mxu0 %v1312
        %2047 = vmatpush.bf16.msra.mxu0 %v1310
        %2048 = vmatpush.bf16.msra.mxu0 %v1308
        %2049 = vmatmul.bf16.gmra.mxu0 %v492
        %v2050 = vpop.f32.mrf.mxu0
        %v2051 = vadd.f32 %v2037, %v2050
        %v2052 = vpop.f32.mrf.mxu0
        %v2053 = vadd.f32 %v2039, %v2052
        %2054 = vdwg.mxu0
        %2055 = vmatpush.bf16.msra.mxu0 %v1338
        %2056 = vmatpush.bf16.msra.mxu0 %v1336
        %2057 = vmatpush.bf16.msra.mxu0 %v1334
        %2058 = vmatpush.bf16.msra.mxu0 %v1332
        %2059 = vmatpush.bf16.msra.mxu0 %v1330
        %2060 = vmatpush.bf16.msra.mxu0 %v1328
        %2061 = vmatpush.bf16.msra.mxu0 %v1326
        %2062 = vmatpush.bf16.msra.mxu0 %v1324
        %2063 = vmatmul.bf16.gmra.mxu0 %v493
        %v2064 = vpop.f32.mrf.mxu0
        %v2065 = vadd.f32 %v2051, %v2064
        %v2066 = vpop.f32.mrf.mxu0
        %v2067 = vadd.f32 %v2053, %v2066
        %2068 = vdwg.mxu0
        %2069 = vmatpush.bf16.msra.mxu0 %v1354
        %2070 = vmatpush.bf16.msra.mxu0 %v1352
        %2071 = vmatpush.bf16.msra.mxu0 %v1350
        %2072 = vmatpush.bf16.msra.mxu0 %v1348
        %2073 = vmatpush.bf16.msra.mxu0 %v1346
        %2074 = vmatpush.bf16.msra.mxu0 %v1344
        %2075 = vmatpush.bf16.msra.mxu0 %v1342
        %2076 = vmatpush.bf16.msra.mxu0 %v1340
        %2077 = vmatmul.bf16.gmra.mxu0 %v494
        %v2078 = vpop.f32.mrf.mxu0
        %v2079 = vadd.f32 %v2065, %v2078
        %v2080 = vpop.f32.mrf.mxu0
        %v2081 = vadd.f32 %v2067, %v2080
        %2082 = vdwg.mxu0
        %2083 = vmatpush.bf16.msra.mxu0 %v1370
        %2084 = vmatpush.bf16.msra.mxu0 %v1368
        %2085 = vmatpush.bf16.msra.mxu0 %v1366
        %2086 = vmatpush.bf16.msra.mxu0 %v1364
        %2087 = vmatpush.bf16.msra.mxu0 %v1362
        %2088 = vmatpush.bf16.msra.mxu0 %v1360
        %2089 = vmatpush.bf16.msra.mxu0 %v1358
        %2090 = vmatpush.bf16.msra.mxu0 %v1356
        %2091 = vmatmul.bf16.gmra.mxu0 %v495
        %v2092 = vpop.f32.mrf.mxu0
        %v2093 = vadd.f32 %v2079, %v2092
        %v2094 = vpop.f32.mrf.mxu0
        %v2095 = vadd.f32 %v2081, %v2094
        %2096 = vdwg.mxu0
        %2097 = vmatpush.bf16.msra.mxu0 %v1386
        %2098 = vmatpush.bf16.msra.mxu0 %v1384
        %2099 = vmatpush.bf16.msra.mxu0 %v1382
        %2100 = vmatpush.bf16.msra.mxu0 %v1380
        %2101 = vmatpush.bf16.msra.mxu0 %v1378
        %2102 = vmatpush.bf16.msra.mxu0 %v1376
        %2103 = vmatpush.bf16.msra.mxu0 %v1374
        %2104 = vmatpush.bf16.msra.mxu0 %v1372
        %2105 = vmatmul.bf16.gmra.mxu0 %v496
        %v2106 = vpop.f32.mrf.mxu0
        %v2107 = vadd.f32 %v2093, %v2106
        %v2108 = vpop.f32.mrf.mxu0
        %v2109 = vadd.f32 %v2095, %v2108
        %2110 = vdwg.mxu0
        %2111 = vmatpush.bf16.msra.mxu0 %v1402
        %2112 = vmatpush.bf16.msra.mxu0 %v1400
        %2113 = vmatpush.bf16.msra.mxu0 %v1398
        %2114 = vmatpush.bf16.msra.mxu0 %v1396
        %2115 = vmatpush.bf16.msra.mxu0 %v1394
        %2116 = vmatpush.bf16.msra.mxu0 %v1392
        %2117 = vmatpush.bf16.msra.mxu0 %v1390
        %2118 = vmatpush.bf16.msra.mxu0 %v1388
        %2119 = vmatmul.bf16.gmra.mxu0 %v497
        %v2120 = vpop.f32.mrf.mxu0
        %v2121 = vadd.f32 %v2107, %v2120
        %v2122 = vpop.f32.mrf.mxu0
        %v2123 = vadd.f32 %v2109, %v2122
        %2124 = vdwg.mxu0
        %2125 = vmatpush.bf16.msra.mxu0 %v1418
        %2126 = vmatpush.bf16.msra.mxu0 %v1416
        %2127 = vmatpush.bf16.msra.mxu0 %v1414
        %2128 = vmatpush.bf16.msra.mxu0 %v1412
        %2129 = vmatpush.bf16.msra.mxu0 %v1410
        %2130 = vmatpush.bf16.msra.mxu0 %v1408
        %2131 = vmatpush.bf16.msra.mxu0 %v1406
        %2132 = vmatpush.bf16.msra.mxu0 %v1404
        %2133 = vmatmul.bf16.gmra.mxu0 %v498
        %v2134 = vpop.f32.mrf.mxu0
        %v2135 = vadd.f32 %v2121, %v2134
        %v2136 = vpop.f32.mrf.mxu0
        %v2137 = vadd.f32 %v2123, %v2136
        %2138 = vdwg.mxu0
        %2139 = vmatpush.bf16.msra.mxu0 %v1434
        %2140 = vmatpush.bf16.msra.mxu0 %v1432
        %2141 = vmatpush.bf16.msra.mxu0 %v1430
        %2142 = vmatpush.bf16.msra.mxu0 %v1428
        %2143 = vmatpush.bf16.msra.mxu0 %v1426
        %2144 = vmatpush.bf16.msra.mxu0 %v1424
        %2145 = vmatpush.bf16.msra.mxu0 %v1422
        %2146 = vmatpush.bf16.msra.mxu0 %v1420
        %2147 = vmatmul.bf16.gmra.mxu0 %v499
        %v2148 = vpop.f32.mrf.mxu0
        %v2149 = vadd.f32 %v2135, %v2148
        %v2150 = vpop.f32.mrf.mxu0
        %v2151 = vadd.f32 %v2137, %v2150
        %2152 = vdwg.mxu0
        %2153 = vmatpush.bf16.msra.mxu0 %v1450
        %2154 = vmatpush.bf16.msra.mxu0 %v1448
        %2155 = vmatpush.bf16.msra.mxu0 %v1446
        %2156 = vmatpush.bf16.msra.mxu0 %v1444
        %2157 = vmatpush.bf16.msra.mxu0 %v1442
        %2158 = vmatpush.bf16.msra.mxu0 %v1440
        %2159 = vmatpush.bf16.msra.mxu0 %v1438
        %2160 = vmatpush.bf16.msra.mxu0 %v1436
        %2161 = vmatmul.bf16.gmra.mxu0 %v500
        %v2162 = vpop.f32.mrf.mxu0
        %v2163 = vadd.f32 %v2149, %v2162
        %v2164 = vpop.f32.mrf.mxu0
        %v2165 = vadd.f32 %v2151, %v2164
        %2166 = vdwg.mxu0
        %2167 = vmatpush.bf16.msra.mxu0 %v1466
        %2168 = vmatpush.bf16.msra.mxu0 %v1464
        %2169 = vmatpush.bf16.msra.mxu0 %v1462
        %2170 = vmatpush.bf16.msra.mxu0 %v1460
        %2171 = vmatpush.bf16.msra.mxu0 %v1458
        %2172 = vmatpush.bf16.msra.mxu0 %v1456
        %2173 = vmatpush.bf16.msra.mxu0 %v1454
        %2174 = vmatpush.bf16.msra.mxu0 %v1452
        %2175 = vmatmul.bf16.gmra.mxu0 %v501
        %v2176 = vpop.f32.mrf.mxu0
        %v2177 = vadd.f32 %v2163, %v2176
        %v2178 = vpop.f32.mrf.mxu0
        %v2179 = vadd.f32 %v2165, %v2178
        %2180 = vdwg.mxu0
        %2181 = vmatpush.bf16.msra.mxu0 %v1482
        %2182 = vmatpush.bf16.msra.mxu0 %v1480
        %2183 = vmatpush.bf16.msra.mxu0 %v1478
        %2184 = vmatpush.bf16.msra.mxu0 %v1476
        %2185 = vmatpush.bf16.msra.mxu0 %v1474
        %2186 = vmatpush.bf16.msra.mxu0 %v1472
        %2187 = vmatpush.bf16.msra.mxu0 %v1470
        %2188 = vmatpush.bf16.msra.mxu0 %v1468
        %2189 = vmatmul.bf16.gmra.mxu0 %v502
        %v2190 = vpop.f32.mrf.mxu0
        %v2191 = vadd.f32 %v2177, %v2190
        %v2192 = vpop.f32.mrf.mxu0
        %v2193 = vadd.f32 %v2179, %v2192
        %2194 = vdwg.mxu0
        %2195 = vmatpush.bf16.msra.mxu0 %v1498
        %2196 = vmatpush.bf16.msra.mxu0 %v1496
        %2197 = vmatpush.bf16.msra.mxu0 %v1494
        %2198 = vmatpush.bf16.msra.mxu0 %v1492
        %2199 = vmatpush.bf16.msra.mxu0 %v1490
        %2200 = vmatpush.bf16.msra.mxu0 %v1488
        %2201 = vmatpush.bf16.msra.mxu0 %v1486
        %2202 = vmatpush.bf16.msra.mxu0 %v1484
        %2203 = vmatmul.bf16.gmra.mxu0 %v503
        %v2204 = vpop.f32.mrf.mxu0
        %v2205 = vadd.f32 %v2191, %v2204
        %v2206 = vpop.f32.mrf.mxu0
        %v2207 = vadd.f32 %v2193, %v2206
        %2208 = vdwg.mxu0
        %2209 = vmatpush.bf16.msra.mxu0 %v1514
        %2210 = vmatpush.bf16.msra.mxu0 %v1512
        %2211 = vmatpush.bf16.msra.mxu0 %v1510
        %2212 = vmatpush.bf16.msra.mxu0 %v1508
        %2213 = vmatpush.bf16.msra.mxu0 %v1506
        %2214 = vmatpush.bf16.msra.mxu0 %v1504
        %2215 = vmatpush.bf16.msra.mxu0 %v1502
        %2216 = vmatpush.bf16.msra.mxu0 %v1500
        %2217 = vmatmul.bf16.gmra.mxu0 %v504
        %v2218 = vpop.f32.mrf.mxu0
        %v2219 = vadd.f32 %v2205, %v2218
        %v2220 = vpop.f32.mrf.mxu0
        %v2221 = vadd.f32 %v2207, %v2220
        %2222 = vdwg.mxu0
        %2223 = vmatpush.bf16.msra.mxu0 %v1530
        %2224 = vmatpush.bf16.msra.mxu0 %v1528
        %2225 = vmatpush.bf16.msra.mxu0 %v1526
        %2226 = vmatpush.bf16.msra.mxu0 %v1524
        %2227 = vmatpush.bf16.msra.mxu0 %v1522
        %2228 = vmatpush.bf16.msra.mxu0 %v1520
        %2229 = vmatpush.bf16.msra.mxu0 %v1518
        %2230 = vmatpush.bf16.msra.mxu0 %v1516
        %2231 = vmatmul.bf16.gmra.mxu0 %v505
        %v2232 = vpop.f32.mrf.mxu0
        %v2233 = vadd.f32 %v2219, %v2232
        %v2234 = vpop.f32.mrf.mxu0
        %v2235 = vadd.f32 %v2221, %v2234
        %2236 = vdwg.mxu0
        %2237 = vmatpush.bf16.msra.mxu0 %v1546
        %2238 = vmatpush.bf16.msra.mxu0 %v1544
        %2239 = vmatpush.bf16.msra.mxu0 %v1542
        %2240 = vmatpush.bf16.msra.mxu0 %v1540
        %2241 = vmatpush.bf16.msra.mxu0 %v1538
        %2242 = vmatpush.bf16.msra.mxu0 %v1536
        %2243 = vmatpush.bf16.msra.mxu0 %v1534
        %2244 = vmatpush.bf16.msra.mxu0 %v1532
        %2245 = vmatmul.bf16.gmra.mxu0 %v506
        %v2246 = vpop.f32.mrf.mxu0
        %v2247 = vadd.f32 %v2233, %v2246
        %v2248 = vpop.f32.mrf.mxu0
        %v2249 = vadd.f32 %v2235, %v2248
        %2250 = vdwg.mxu0
        %s2251 = smul.u32 %s16, 4
        %s2252 = smul.addr %s2251, 8
        %s2253 = scalar_lea.vmem [#allocation2], %s2252
        %2254 = vst [vmem:[%s2253] sm:$0xff] %v2023
        %2255 = vst [vmem:[%s2253 + $0x8] sm:$0xff] %v2247
        %2256 = vst [vmem:[%s2253 + $0x10] sm:$0xff] %v2025
        %2257 = vst [vmem:[%s2253 + $0x18] sm:$0xff] %v2249
        %p2258 = scmp.eq.s32.totalorder %s16, 3
        // Predicated region
        $region33: #{generator_forward.8} parent=27 // pred_check
          %p2259 = pneg %p2258
        $region34: #{generator_forward.8} parent=27 // pred_check_branch
          %2261 = sbr.rel (%p2259) target = $region36
        $region35: #{generator_forward.8} parent=27 // pred_region
          %v2262 = vld [vmem:[#allocation2] sm:$0xff]
          %v2263 = vld [vmem:[#allocation2 + $0x8] sm:$0xff]
          %v2264 = vld [vmem:[#allocation2 + $0x10] sm:$0xff]
          %v2265 = vld [vmem:[#allocation2 + $0x18] sm:$0xff]
          %v2266 = vld [vmem:[#allocation2 + $0x20] sm:$0xff]
          %v2267 = vld [vmem:[#allocation2 + $0x28] sm:$0xff]
          %v2268 = vld [vmem:[#allocation2 + $0x30] sm:$0xff]
          %v2269 = vld [vmem:[#allocation2 + $0x38] sm:$0xff]
          %v2270 = vld [vmem:[#allocation2 + $0x40] sm:$0xff]
          %v2271 = vld [vmem:[#allocation2 + $0x48] sm:$0xff]
          %v2272 = vld [vmem:[#allocation2 + $0x50] sm:$0xff]
          %v2273 = vld [vmem:[#allocation2 + $0x58] sm:$0xff]
          %v2274 = vld [vmem:[#allocation2 + $0x60] sm:$0xff]
          %v2275 = vld [vmem:[#allocation2 + $0x68] sm:$0xff]
          %v2276 = vld [vmem:[#allocation2 + $0x70] sm:$0xff]
          %v2277 = vld [vmem:[#allocation2 + $0x78] sm:$0xff]
          %v2278 = vadd.f32 %v2262, %v2264
          %v2279 = vadd.f32 %v2278, %v2266
          %v2280 = vadd.f32 %v2279, %v2268
          %v2281 = vadd.f32 %v2280, %v2270
          %v2282 = vadd.f32 %v2281, %v2272
          %v2283 = vadd.f32 %v2282, %v2274
          %v2284 = vadd.f32 %v2283, %v2276
          %v2285 = vrot.slane %v2284, 4
          %v2286 = vadd.f32 %v2284, %v2285
          %v2287 = vrot.slane %v2286, 2
          %v2288 = vadd.f32 %v2286, %v2287
          %v2289 = vrot.slane %v2288, 1
          %v2290 = vadd.f32 %v2288, %v2289
          %v2291 = vadd.f32 %v2263, %v2265
          %v2292 = vadd.f32 %v2291, %v2267
          %v2293 = vadd.f32 %v2292, %v2269
          %v2294 = vadd.f32 %v2293, %v2271
          %v2295 = vadd.f32 %v2294, %v2273
          %v2296 = vadd.f32 %v2295, %v2275
          %v2297 = vadd.f32 %v2296, %v2277
          %v2298 = vrot.slane %v2297, 4
          %v2299 = vadd.f32 %v2297, %v2298
          %v2300 = vrot.slane %v2299, 2
          %v2301 = vadd.f32 %v2299, %v2300
          %v2302 = vrot.slane %v2301, 1
          %v2303 = vadd.f32 %v2301, %v2302
          %v2304 = vmul.f32 %v2290, 0.03125
          %v2305 = vmul.f32 %v2303, 0.03125
          %v2306 = vmul.f32 %v2262, %v2262
          %v2307 = vmul.f32 %v2263, %v2263
          %v2308 = vmul.f32 %v2264, %v2264
          %v2309 = vmul.f32 %v2265, %v2265
          %v2310 = vmul.f32 %v2266, %v2266
          %v2311 = vmul.f32 %v2267, %v2267
          %v2312 = vmul.f32 %v2268, %v2268
          %v2313 = vmul.f32 %v2269, %v2269
          %v2314 = vmul.f32 %v2270, %v2270
          %v2315 = vmul.f32 %v2271, %v2271
          %v2316 = vmul.f32 %v2272, %v2272
          %v2317 = vmul.f32 %v2273, %v2273
          %v2318 = vmul.f32 %v2274, %v2274
          %v2319 = vmul.f32 %v2275, %v2275
          %v2320 = vmul.f32 %v2276, %v2276
          %v2321 = vmul.f32 %v2277, %v2277
          %v2322 = vadd.f32 %v2306, %v2308
          %v2323 = vadd.f32 %v2322, %v2310
          %v2324 = vadd.f32 %v2323, %v2312
          %v2325 = vadd.f32 %v2324, %v2314
          %v2326 = vadd.f32 %v2325, %v2316
          %v2327 = vadd.f32 %v2326, %v2318
          %v2328 = vadd.f32 %v2327, %v2320
          %v2329 = vrot.slane %v2328, 4
          %v2330 = vadd.f32 %v2328, %v2329
          %v2331 = vrot.slane %v2330, 2
          %v2332 = vadd.f32 %v2330, %v2331
          %v2333 = vrot.slane %v2332, 1
          %v2334 = vadd.f32 %v2332, %v2333
          %v2335 = vadd.f32 %v2307, %v2309
          %v2336 = vadd.f32 %v2335, %v2311
          %v2337 = vadd.f32 %v2336, %v2313
          %v2338 = vadd.f32 %v2337, %v2315
          %v2339 = vadd.f32 %v2338, %v2317
          %v2340 = vadd.f32 %v2339, %v2319
          %v2341 = vadd.f32 %v2340, %v2321
          %v2342 = vrot.slane %v2341, 4
          %v2343 = vadd.f32 %v2341, %v2342
          %v2344 = vrot.slane %v2343, 2
          %v2345 = vadd.f32 %v2343, %v2344
          %v2346 = vrot.slane %v2345, 1
          %v2347 = vadd.f32 %v2345, %v2346
          %v2348 = vmul.f32 %v2334, 0.03125
          %v2349 = vmul.f32 %v2347, 0.03125
          %v2350 = vmul.f32 %v2304, %v2304
          %v2351 = vmul.f32 %v2305, %v2305
          %v2352 = vsub.f32 %v2348, %v2350
          %v2353 = vsub.f32 %v2349, %v2351
          %v2354 = vmax.f32 %v2352, 0.0
          %v2355 = vmax.f32 %v2353, 0.0
          %v2356 = vadd.f32 %v2354, 1e-05
          %v2357 = vadd.f32 %v2355, 1e-05
          %v2358 = vrsqrt.pop %v2356
          %v2359 = vmul.f32 %v2358, %v2356
          %v2360 = vmul.f32 %v2359, %v2358
          %v2361 = vmul.f32 0.5, %v2360
          %v2362 = vsub.f32 1.5, %v2361
          %v2363 = vmul.f32 %v2358, %v2362
          %vm2364 = vweird.f32 %v2356
          %vm2365 = vweird.f32 %v2358
          %vm2366 = vmor %vm2364, %vm2365
          %v2367 = vsel %vm2366, %v2358, %v2363
          %v2368 = vrsqrt.pop %v2357
          %v2369 = vmul.f32 %v2368, %v2357
          %v2370 = vmul.f32 %v2369, %v2368
          %v2371 = vmul.f32 0.5, %v2370
          %v2372 = vsub.f32 1.5, %v2371
          %v2373 = vmul.f32 %v2368, %v2372
          %vm2374 = vweird.f32 %v2357
          %vm2375 = vweird.f32 %v2368
          %vm2376 = vmor %vm2374, %vm2375
          %v2377 = vsel %vm2376, %v2368, %v2373
          %v2378 = vsub.f32 %v2262, %v2304
          %v2379 = vsub.f32 %v2263, %v2305
          %v2380 = vsub.f32 %v2264, %v2304
          %v2381 = vsub.f32 %v2265, %v2305
          %v2382 = vsub.f32 %v2266, %v2304
          %v2383 = vsub.f32 %v2267, %v2305
          %v2384 = vsub.f32 %v2268, %v2304
          %v2385 = vsub.f32 %v2269, %v2305
          %v2386 = vsub.f32 %v2270, %v2304
          %v2387 = vsub.f32 %v2271, %v2305
          %v2388 = vsub.f32 %v2272, %v2304
          %v2389 = vsub.f32 %v2273, %v2305
          %v2390 = vsub.f32 %v2274, %v2304
          %v2391 = vsub.f32 %v2275, %v2305
          %v2392 = vsub.f32 %v2276, %v2304
          %v2393 = vsub.f32 %v2277, %v2305
          %v2394 = vmul.f32 %v2378, %v2367
          %v2395 = vmul.f32 %v2379, %v2377
          %v2396 = vmul.f32 %v2380, %v2367
          %v2397 = vmul.f32 %v2381, %v2377
          %v2398 = vmul.f32 %v2382, %v2367
          %v2399 = vmul.f32 %v2383, %v2377
          %v2400 = vmul.f32 %v2384, %v2367
          %v2401 = vmul.f32 %v2385, %v2377
          %v2402 = vmul.f32 %v2386, %v2367
          %v2403 = vmul.f32 %v2387, %v2377
          %v2404 = vmul.f32 %v2388, %v2367
          %v2405 = vmul.f32 %v2389, %v2377
          %v2406 = vmul.f32 %v2390, %v2367
          %v2407 = vmul.f32 %v2391, %v2377
          %v2408 = vmul.f32 %v2392, %v2367
          %v2409 = vmul.f32 %v2393, %v2377
          %vm2410 = vcmp.ge.f32.partialorder %v2394, 0.0
          %vm2411 = vcmp.ge.f32.partialorder %v2395, 0.0
          %vm2412 = vcmp.ge.f32.partialorder %v2396, 0.0
          %vm2413 = vcmp.ge.f32.partialorder %v2397, 0.0
          %vm2414 = vcmp.ge.f32.partialorder %v2398, 0.0
          %vm2415 = vcmp.ge.f32.partialorder %v2399, 0.0
          %vm2416 = vcmp.ge.f32.partialorder %v2400, 0.0
          %vm2417 = vcmp.ge.f32.partialorder %v2401, 0.0
          %vm2418 = vcmp.ge.f32.partialorder %v2402, 0.0
          %vm2419 = vcmp.ge.f32.partialorder %v2403, 0.0
          %vm2420 = vcmp.ge.f32.partialorder %v2404, 0.0
          %vm2421 = vcmp.ge.f32.partialorder %v2405, 0.0
          %vm2422 = vcmp.ge.f32.partialorder %v2406, 0.0
          %vm2423 = vcmp.ge.f32.partialorder %v2407, 0.0
          %vm2424 = vcmp.ge.f32.partialorder %v2408, 0.0
          %vm2425 = vcmp.ge.f32.partialorder %v2409, 0.0
          %v2426 = vmul.f32 %v2394, 0.2
          %v2427 = vmul.f32 %v2395, 0.2
          %v2428 = vmul.f32 %v2396, 0.2
          %v2429 = vmul.f32 %v2397, 0.2
          %v2430 = vmul.f32 %v2398, 0.2
          %v2431 = vmul.f32 %v2399, 0.2
          %v2432 = vmul.f32 %v2400, 0.2
          %v2433 = vmul.f32 %v2401, 0.2
          %v2434 = vmul.f32 %v2402, 0.2
          %v2435 = vmul.f32 %v2403, 0.2
          %v2436 = vmul.f32 %v2404, 0.2
          %v2437 = vmul.f32 %v2405, 0.2
          %v2438 = vmul.f32 %v2406, 0.2
          %v2439 = vmul.f32 %v2407, 0.2
          %v2440 = vmul.f32 %v2408, 0.2
          %v2441 = vmul.f32 %v2409, 0.2
          %v2442 = vsel %vm2410, %v2394, %v2426
          %v2443 = vsel %vm2411, %v2395, %v2427
          %v2444 = vsel %vm2412, %v2396, %v2428
          %v2445 = vsel %vm2413, %v2397, %v2429
          %v2446 = vsel %vm2414, %v2398, %v2430
          %v2447 = vsel %vm2415, %v2399, %v2431
          %v2448 = vsel %vm2416, %v2400, %v2432
          %v2449 = vsel %vm2417, %v2401, %v2433
          %v2450 = vsel %vm2418, %v2402, %v2434
          %v2451 = vsel %vm2419, %v2403, %v2435
          %v2452 = vsel %vm2420, %v2404, %v2436
          %v2453 = vsel %vm2421, %v2405, %v2437
          %v2454 = vsel %vm2422, %v2406, %v2438
          %v2455 = vsel %vm2423, %v2407, %v2439
          %v2456 = vsel %vm2424, %v2408, %v2440
          %v2457 = vsel %vm2425, %v2409, %v2441
          %v2458 = vpack.c.bf16 %v2443, %v2442
          %v2459 = vpack.c.bf16 %v2445, %v2444
          %v2460 = vpack.c.bf16 %v2447, %v2446
          %v2461 = vpack.c.bf16 %v2449, %v2448
          %v2462 = vpack.c.bf16 %v2451, %v2450
          %v2463 = vpack.c.bf16 %v2453, %v2452
          %v2464 = vpack.c.bf16 %v2455, %v2454
          %v2465 = vpack.c.bf16 %v2457, %v2456
          %2466 = vst [vmem:[%s2] sm:$0xff] %v2458
          %2467 = vst [vmem:[%s2 + $0x8] sm:$0xff] %v2459
          %2468 = vst [vmem:[%s2 + $0x10] sm:$0xff] %v2460
          %2469 = vst [vmem:[%s2 + $0x18] sm:$0xff] %v2461
          %2470 = vst [vmem:[%s2 + $0x20] sm:$0xff] %v2462
          %2471 = vst [vmem:[%s2 + $0x28] sm:$0xff] %v2463
          %2472 = vst [vmem:[%s2 + $0x30] sm:$0xff] %v2464
          %2473 = vst [vmem:[%s2 + $0x38] sm:$0xff] %v2465
        $region36: #{generator_forward.8} parent=27 // pred_fallthru
          _
        // Predicated region
        $region37: #{generator_forward.8} parent=27 // pred_check
          %p2474 = pneg %p81
        $region38: #{generator_forward.8} parent=27 // pred_check_branch
          %2476 = sbr.rel (%p2474) target = $region40
        $region39: #{generator_forward.8} parent=27 // pred_region
          _
        $region40: #{generator_forward.8} parent=27 // pred_fallthru
          _
        // Predicated region
        $region41: #{generator_forward.8} parent=27 // pred_check
          %p2477 = pneg %p81
        $region42: #{generator_forward.8} parent=27 // pred_check_branch
          %2479 = sbr.rel (%p2477) target = $region44
        $region43: #{generator_forward.8} parent=27 // pred_region
          _
        $region44: #{generator_forward.8} parent=27 // pred_fallthru
          _
      $region28: #{generator_forward.8} parent=5 // pred_fallthru
        _
      %p2480 = scmp.le.s32.totalorder 2, %s11
      // Predicated region
      $region45: #{generator_forward.8} parent=5 // pred_check
        %p2481 = pneg %p2480
      $region46: #{generator_forward.8} parent=5 // pred_check_branch
        %2483 = sbr.rel (%p2481) target = $region48
      $region47: #{generator_forward.8} parent=5 // pred_region
        %s2484 = ssub.s32 %s11, 2
      $region48: #{generator_forward.8} parent=5 // pred_fallthru
        _
    $region6: #{generator_forward.8} parent=1 // loop_footer
      %s15 = sadd.s32 1, %s11
    $region7: #{generator_forward.8} parent=1 // loop_footer_branch
      %10 = sbr.rel target = $region3
    $region8: #{generator_forward.8} parent=1 // loop_exit
      _
    %2485 = vsyncpa [#allocation4], 1
    %s2486 = scalar_lea.sflag [#allocation4], 1
    %2487 = vsyncpa %s2486, 1

// kernel: generator_forward.9
$region0: #{generator_forward.9}
  #allocation0 [shape = 'u32[]', space=smem, size = 0x4, offset = 0x4, fixed_abs, tag = 'smem constant byte address 0x4 - core index']
  #allocation1 [shape = 'u32[72,128]{1,0:T(1,128)}', space=vmem, size = 0x9000, scoped, tag = 'internal scratch']
  #allocation2 [shape = 'f32[4,32,256]{2,1,0:T(8,128)}', space=vmem, size = 0x20000, scoped, tag = 'scratch operand']
  %s0 = inlined_call_operand.vmem [shape: bf16[4,32,1024], index: 0, kind: input, shape index: {}]
  %s1 = inlined_call_operand.hbm [shape: bf16[4,1024,256], index: 1, kind: input, shape index: {}]
  %s2 = inlined_call_operand.vmem [shape: bf16[4,32,256], index: 2, kind: output, shape index: {}]
  %s3 = sld [smem:[#allocation0]]
  $region49: #{generator_forward.9} parent=0
    _
  %s5 = ssub.s32 1, %s3
  %s6 = scalar_select 0, %s5, %s3
  $region1: #{generator_forward.9} parent=0
    #allocation3 [shape = 'u8[1048576]{0}', space=vmem, size = 0x100000, scoped, tag = 'input window, operand 1']
    #allocation4 [shape = 's32[2]{0}', space=sflag, size = 0x8, scoped, tag = 'scoped memory for generator_forward.9']
    %7 = vsyncpa [#allocation4], 0
    %s8 = scalar_lea.sflag [#allocation4], 1
    %9 = vsyncpa %s8, 0
    loop: start=0, step=1, limit=6
    $region2: #{generator_forward.9} parent=1 // loop_pre_header
      _
    $region3: #{generator_forward.9} parent=1 // loop_header
      %s11 = sphi 0, %s15
      %p12 = scmp.ge.s32.totalorder %s11, 6
      %s21 = sphi 0, %s23
      %s24 = sphi 0, %s21
      %s25 = sphi 0, %s24
      %s41 = sphi 0, %s25
      %s47 = sphi 0, %s49
      %s50 = sphi 0, %s47
      %s51 = sphi 0, %s50
      %s67 = sphi 0, %s51
      %s71 = sphi 0, %s71
      %s73 = sphi 0, %s71
      %s74 = sphi 0, %s73
      %s88 = sphi 0, %s74
    $region4: #{generator_forward.9} parent=1 // loop_header_branch
      %14 = sbr.rel (%p12) target = $region8
    $region5: #{generator_forward.9} parent=1 // loop_body
      %s16 = ssub.s32 %s11, 1
      %s17 = ssub.s32 %s11, 2
      %s18 = sadd.s32 %s11, 1
      %s19 = ssub.s32 %s11, %s18
      %p20 = scmp.eq.s32.totalorder %s19, 0
      %s22 = sadd.s32 %s21, 1
      %s23 = scalar_select %p20, %s21, %s22
      %p26 = pneg %p20
      %p27 = scmp.eq.s32.totalorder %s11, 3
      %p28 = por %p26, %p27
      %p29 = scmp.ne.s32.totalorder %s21, %s24
      %p30 = scmp.eq.s32.totalorder %s11, 0
      %p31 = por %p29, %p30
      %p32 = scmp.ne.s32.totalorder %s21, %s24
      %p33 = scmp.eq.s32.totalorder %s16, 3
      %p34 = por %p32, %p33
      %p35 = scmp.ne.s32.totalorder %s24, %s25
      %p36 = scmp.eq.s32.totalorder %s16, 0
      %p37 = por %p35, %p36
      %p38 = scmp.ne.s32.totalorder %s24, %s25
      %p39 = scmp.eq.s32.totalorder %s17, 3
      %p40 = por %p38, %p39
      %p42 = scmp.ne.s32.totalorder %s25, %s41
      %p43 = scmp.eq.s32.totalorder %s17, 0
      %p44 = por %p42, %p43
      %s45 = ssub.s32 %s11, %s18
      %p46 = scmp.eq.s32.totalorder %s45, 0
      %s48 = sadd.s32 %s47, 1
      %s49 = scalar_select %p46, %s47, %s48
      %p52 = pneg %p46
      %p53 = scmp.eq.s32.totalorder %s11, 3
      %p54 = por %p52, %p53
      %p55 = scmp.ne.s32.totalorder %s47, %s50
      %p56 = scmp.eq.s32.totalorder %s11, 0
      %p57 = por %p55, %p56
      %p58 = scmp.ne.s32.totalorder %s47, %s50
      %p59 = scmp.eq.s32.totalorder %s16, 3
      %p60 = por %p58, %p59
      %p61 = scmp.ne.s32.totalorder %s50, %s51
      %p62 = scmp.eq.s32.totalorder %s16, 0
      %p63 = por %p61, %p62
      %p64 = scmp.ne.s32.totalorder %s50, %s51
      %p65 = scmp.eq.s32.totalorder %s17, 3
      %p66 = por %p64, %p65
      %p68 = scmp.ne.s32.totalorder %s51, %s67
      %p69 = scmp.eq.s32.totalorder %s17, 0
      %p70 = por %p68, %p69
      %s72 = sadd.s32 %s71, 1
      %p75 = scmp.eq.s32.totalorder %s11, 3
      %p76 = scmp.ne.s32.totalorder %s71, %s73
      %p77 = scmp.eq.s32.totalorder %s11, 0
      %p78 = por %p76, %p77
      %p79 = scmp.ne.s32.totalorder %s71, %s73
      %p80 = scmp.eq.s32.totalorder %s16, 3
      %p81 = por %p79, %p80
      %p82 = scmp.ne.s32.totalorder %s73, %s74
      %p83 = scmp.eq.s32.totalorder %s16, 0
      %p84 = por %p82, %p83
      %p85 = scmp.ne.s32.totalorder %s73, %s74
      %p86 = scmp.eq.s32.totalorder %s17, 3
      %p87 = por %p85, %p86
      %p89 = scmp.ne.s32.totalorder %s74, %s88
      %p90 = scmp.eq.s32.totalorder %s17, 0
      %p91 = por %p89, %p90
      %p92 = scmp.le.s32.totalorder 1, %s11
      %p93 = scmp.lt.s32.totalorder %s11, 5
      %p94 = pnand %p92, %p93
      %p95 = pneg %p94
      // Predicated region
      $region9: #{generator_forward.9} parent=5 // pred_check
        _
      $region10: #{generator_forward.9} parent=5 // pred_check_branch
        %97 = sbr.rel (%p94) target = $region12
      $region11: #{generator_forward.9} parent=5 // pred_region
        %s98 = ssub.s32 %s11, 1
      $region12: #{generator_forward.9} parent=5 // pred_fallthru
        _
      %p99 = scmp.lt.s32.totalorder %s11, 4
      // Predicated region
      $region13: #{generator_forward.9} parent=5 // pred_check
        %p100 = pneg %p99
      $region14: #{generator_forward.9} parent=5 // pred_check_branch
        %102 = sbr.rel (%p100) target = $region16
      $region15: #{generator_forward.9} parent=5 // pred_region
        // Predicated region
        $region17: #{generator_forward.9} parent=15 // pred_check
          %p103 = pneg %p31
        $region18: #{generator_forward.9} parent=15 // pred_check_branch
          %105 = sbr.rel (%p103) target = $region20
        $region19: #{generator_forward.9} parent=15 // pred_region
          %p106 = scmp.lt.s32.totalorder %s11, 3
          %s107 = scalar_select %p106, %s11, 3
          %s108 = smul.addr %s107, 32
          %s109 = smul.addr %s108, 4
          %s110 = scalar_lea.vmem %s0, %s109
        $region20: #{generator_forward.9} parent=15 // pred_fallthru
          _
        // Predicated region
        $region21: #{generator_forward.9} parent=15 // pred_check
          %p111 = pneg %p57
        $region22: #{generator_forward.9} parent=15 // pred_check_branch
          %113 = sbr.rel (%p111) target = $region24
        $region23: #{generator_forward.9} parent=15 // pred_region
          %s114 = sand.u32 %s47, 1
          %s115 = scalar_lea.sflag [#allocation4], %s114
          %s116 = sand.u32 %s47, 1
          %s117 = smul.addr %s116, 1024
          %s118 = scalar_lea.vmem [#allocation3], %s117
          %120 = vsyncadd %s115, 0
          %s121 = smul.addr %s11, 256
          %s122 = smul.addr %s121, 4
          %s123 = scalar_lea.hbm %s1, %s122
          %s124 = sshll.u32 %s123, 4
          %s125 = int_to_ptr.hbm [resolvable:$true] %s124
          %s126 = sshll.u32 %s118, 4
          %s127 = int_to_ptr.vmem [resolvable:$true] %s126
          %132 = dma.hbm_to_vmem [thread:$0]  %s125, 16384, %s127, %s115, 128, 128, 8
        $region24: #{generator_forward.9} parent=15 // pred_fallthru
          _
      $region16: #{generator_forward.9} parent=5 // pred_fallthru
        _
      %p133 = scmp.le.s32.totalorder 1, %s11
      %p134 = scmp.lt.s32.totalorder %s11, 5
      %p135 = pnand %p133, %p134
      %p136 = pneg %p135
      // Predicated region
      $region25: #{generator_forward.9} parent=5 // pred_check
        _
      $region26: #{generator_forward.9} parent=5 // pred_check_branch
        %138 = sbr.rel (%p135) target = $region28
      $region27: #{generator_forward.9} parent=5 // pred_region
        %s139 = ssub.s32 %s11, 1
        %s140 = sand.u32 %s50, 1
        %s141 = scalar_lea.sflag [#allocation4], %s140
        %s142 = sand.u32 %s50, 1
        %s143 = smul.addr %s142, 1024
        %s144 = scalar_lea.vmem [#allocation3], %s143
        // Predicated region
        $region29: #{generator_forward.9} parent=27 // pred_check
          %p145 = pneg %p63
        $region30: #{generator_forward.9} parent=27 // pred_check_branch
          %147 = sbr.rel (%p145) target = $region32
        $region31: #{generator_forward.9} parent=27 // pred_region
          %149 = dma.done %s141, 16384
        $region32: #{generator_forward.9} parent=27 // pred_fallthru
          _
        %p150 = scmp.lt.s32.totalorder %s16, 3
        %s151 = scalar_select %p150, %s16, 3
        %s152 = smul.addr %s151, 32
        %s153 = smul.addr %s152, 4
        %s154 = scalar_lea.vmem %s0, %s153
        %p155 = pneg %p37
        %p156 = pneg %p34
        %s157 = sand.u32 %s50, 1
        %s158 = scalar_lea.sflag [#allocation4], %s157
        %s159 = sand.u32 %s50, 1
        %s160 = smul.addr %s159, 1024
        %s161 = scalar_lea.vmem [#allocation3], %s160
        %p162 = pneg %p63
        %p163 = pneg %p60
        %p164 = pneg %p84
        %p165 = pneg %p81
        %p166 = scmp.lt.s32.totalorder %s16, 3
        %s167 = scalar_select %p166, %s16, 3
        %s168 = smul.addr %s167, 32
        %s169 = smul.addr %s168, 4
        %s170 = scalar_lea.vmem %s0, %s169
        %v171 = vld [vmem:[%s170] sm:$0xff]
        %v172 = vld [vmem:[%s170 + $0x8] sm:$0xff]
        %v173 = vld [vmem:[%s170 + $0x10] sm:$0xff]
        %v174 = vld [vmem:[%s170 + $0x18] sm:$0xff]
        %v175 = vld [vmem:[%s170 + $0x20] sm:$0xff]
        %v176 = vld [vmem:[%s170 + $0x28] sm:$0xff]
        %v177 = vld [vmem:[%s170 + $0x30] sm:$0xff]
        %v178 = vld [vmem:[%s170 + $0x38] sm:$0xff]
        %v179 = vld [vmem:[%s170 + $0x40] sm:$0xff]
        %v180 = vld [vmem:[%s170 + $0x48] sm:$0xff]
        %v181 = vld [vmem:[%s170 + $0x50] sm:$0xff]
        %v182 = vld [vmem:[%s170 + $0x58] sm:$0xff]
        %v183 = vld [vmem:[%s170 + $0x60] sm:$0xff]
        %v184 = vld [vmem:[%s170 + $0x68] sm:$0xff]
        %v185 = vld [vmem:[%s170 + $0x70] sm:$0xff]
        %v186 = vld [vmem:[%s170 + $0x78] sm:$0xff]
        %v187 = vld [vmem:[%s144] sm:$0xff]
        %v188 = vld [vmem:[%s144 + $0x8] sm:$0xff]
        %v189 = vld [vmem:[%s144 + $0x10] sm:$0xff]
        %v190 = vld [vmem:[%s144 + $0x18] sm:$0xff]
        %v191 = vld [vmem:[%s144 + $0x20] sm:$0xff]
        %v192 = vld [vmem:[%s144 + $0x28] sm:$0xff]
        %v193 = vld [vmem:[%s144 + $0x30] sm:$0xff]
        %v194 = vld [vmem:[%s144 + $0x38] sm:$0xff]
        %v195 = vld [vmem:[%s144 + $0x40] sm:$0xff]
        %v196 = vld [vmem:[%s144 + $0x48] sm:$0xff]
        %v197 = vld [vmem:[%s144 + $0x50] sm:$0xff]
        %v198 = vld [vmem:[%s144 + $0x58] sm:$0xff]
        %v199 = vld [vmem:[%s144 + $0x60] sm:$0xff]
        %v200 = vld [vmem:[%s144 + $0x68] sm:$0xff]
        %v201 = vld [vmem:[%s144 + $0x70] sm:$0xff]
        %v202 = vld [vmem:[%s144 + $0x78] sm:$0xff]
        %v203 = vld [vmem:[%s144 + $0x80] sm:$0xff]
        %v204 = vld [vmem:[%s144 + $0x88] sm:$0xff]
        %v205 = vld [vmem:[%s144 + $0x90] sm:$0xff]
        %v206 = vld [vmem:[%s144 + $0x98] sm:$0xff]
        %v207 = vld [vmem:[%s144 + $0xa0] sm:$0xff]
        %v208 = vld [vmem:[%s144 + $0xa8] sm:$0xff]
        %v209 = vld [vmem:[%s144 + $0xb0] sm:$0xff]
        %v210 = vld [vmem:[%s144 + $0xb8] sm:$0xff]
        %v211 = vld [vmem:[%s144 + $0xc0] sm:$0xff]
        %v212 = vld [vmem:[%s144 + $0xc8] sm:$0xff]
        %v213 = vld [vmem:[%s144 + $0xd0] sm:$0xff]
        %v214 = vld [vmem:[%s144 + $0xd8] sm:$0xff]
        %v215 = vld [vmem:[%s144 + $0xe0] sm:$0xff]
        %v216 = vld [vmem:[%s144 + $0xe8] sm:$0xff]
        %v217 = vld [vmem:[%s144 + $0xf0] sm:$0xff]
        %v218 = vld [vmem:[%s144 + $0xf8] sm:$0xff]
        %v219 = vld [vmem:[%s144 + $0x100] sm:$0xff]
        %v220 = vld [vmem:[%s144 + $0x108] sm:$0xff]
        %v221 = vld [vmem:[%s144 + $0x110] sm:$0xff]
        %v222 = vld [vmem:[%s144 + $0x118] sm:$0xff]
        %v223 = vld [vmem:[%s144 + $0x120] sm:$0xff]
        %v224 = vld [vmem:[%s144 + $0x128] sm:$0xff]
        %v225 = vld [vmem:[%s144 + $0x130] sm:$0xff]
        %v226 = vld [vmem:[%s144 + $0x138] sm:$0xff]
        %v227 = vld [vmem:[%s144 + $0x140] sm:$0xff]
        %v228 = vld [vmem:[%s144 + $0x148] sm:$0xff]
        %v229 = vld [vmem:[%s144 + $0x150] sm:$0xff]
        %v230 = vld [vmem:[%s144 + $0x158] sm:$0xff]
        %v231 = vld [vmem:[%s144 + $0x160] sm:$0xff]
        %v232 = vld [vmem:[%s144 + $0x168] sm:$0xff]
        %v233 = vld [vmem:[%s144 + $0x170] sm:$0xff]
        %v234 = vld [vmem:[%s144 + $0x178] sm:$0xff]
        %v235 = vld [vmem:[%s144 + $0x180] sm:$0xff]
        %v236 = vld [vmem:[%s144 + $0x188] sm:$0xff]
        %v237 = vld [vmem:[%s144 + $0x190] sm:$0xff]
        %v238 = vld [vmem:[%s144 + $0x198] sm:$0xff]
        %v239 = vld [vmem:[%s144 + $0x1a0] sm:$0xff]
        %v240 = vld [vmem:[%s144 + $0x1a8] sm:$0xff]
        %v241 = vld [vmem:[%s144 + $0x1b0] sm:$0xff]
        %v242 = vld [vmem:[%s144 + $0x1b8] sm:$0xff]
        %v243 = vld [vmem:[%s144 + $0x1c0] sm:$0xff]
        %v244 = vld [vmem:[%s144 + $0x1c8] sm:$0xff]
        %v245 = vld [vmem:[%s144 + $0x1d0] sm:$0xff]
        %v246 = vld [vmem:[%s144 + $0x1d8] sm:$0xff]
        %v247 = vld [vmem:[%s144 + $0x1e0] sm:$0xff]
        %v248 = vld [vmem:[%s144 + $0x1e8] sm:$0xff]
        %v249 = vld [vmem:[%s144 + $0x1f0] sm:$0xff]
        %v250 = vld [vmem:[%s144 + $0x1f8] sm:$0xff]
        %v251 = vld [vmem:[%s144 + $0x200] sm:$0xff]
        %v252 = vld [vmem:[%s144 + $0x208] sm:$0xff]
        %v253 = vld [vmem:[%s144 + $0x210] sm:$0xff]
        %v254 = vld [vmem:[%s144 + $0x218] sm:$0xff]
        %v255 = vld [vmem:[%s144 + $0x220] sm:$0xff]
        %v256 = vld [vmem:[%s144 + $0x228] sm:$0xff]
        %v257 = vld [vmem:[%s144 + $0x230] sm:$0xff]
        %v258 = vld [vmem:[%s144 + $0x238] sm:$0xff]
        %v259 = vld [vmem:[%s144 + $0x240] sm:$0xff]
        %v260 = vld [vmem:[%s144 + $0x248] sm:$0xff]
        %v261 = vld [vmem:[%s144 + $0x250] sm:$0xff]
        %v262 = vld [vmem:[%s144 + $0x258] sm:$0xff]
        %v263 = vld [vmem:[%s144 + $0x260] sm:$0xff]
        %v264 = vld [vmem:[%s144 + $0x268] sm:$0xff]
        %v265 = vld [vmem:[%s144 + $0x270] sm:$0xff]
        %v266 = vld [vmem:[%s144 + $0x278] sm:$0xff]
        %v267 = vld [vmem:[%s144 + $0x280] sm:$0xff]
        %v268 = vld [vmem:[%s144 + $0x288] sm:$0xff]
        %v269 = vld [vmem:[%s144 + $0x290] sm:$0xff]
        %v270 = vld [vmem:[%s144 + $0x298] sm:$0xff]
        %v271 = vld [vmem:[%s144 + $0x2a0] sm:$0xff]
        %v272 = vld [vmem:[%s144 + $0x2a8] sm:$0xff]
        %v273 = vld [vmem:[%s144 + $0x2b0] sm:$0xff]
        %v274 = vld [vmem:[%s144 + $0x2b8] sm:$0xff]
        %v275 = vld [vmem:[%s144 + $0x2c0] sm:$0xff]
        %v276 = vld [vmem:[%s144 + $0x2c8] sm:$0xff]
        %v277 = vld [vmem:[%s144 + $0x2d0] sm:$0xff]
        %v278 = vld [vmem:[%s144 + $0x2d8] sm:$0xff]
        %v279 = vld [vmem:[%s144 + $0x2e0] sm:$0xff]
        %v280 = vld [vmem:[%s144 + $0x2e8] sm:$0xff]
        %v281 = vld [vmem:[%s144 + $0x2f0] sm:$0xff]
        %v282 = vld [vmem:[%s144 + $0x2f8] sm:$0xff]
        %v283 = vld [vmem:[%s144 + $0x300] sm:$0xff]
        %v284 = vld [vmem:[%s144 + $0x308] sm:$0xff]
        %v285 = vld [vmem:[%s144 + $0x310] sm:$0xff]
        %v286 = vld [vmem:[%s144 + $0x318] sm:$0xff]
        %v287 = vld [vmem:[%s144 + $0x320] sm:$0xff]
        %v288 = vld [vmem:[%s144 + $0x328] sm:$0xff]
        %v289 = vld [vmem:[%s144 + $0x330] sm:$0xff]
        %v290 = vld [vmem:[%s144 + $0x338] sm:$0xff]
        %v291 = vld [vmem:[%s144 + $0x340] sm:$0xff]
        %v292 = vld [vmem:[%s144 + $0x348] sm:$0xff]
        %v293 = vld [vmem:[%s144 + $0x350] sm:$0xff]
        %v294 = vld [vmem:[%s144 + $0x358] sm:$0xff]
        %v295 = vld [vmem:[%s144 + $0x360] sm:$0xff]
        %v296 = vld [vmem:[%s144 + $0x368] sm:$0xff]
        %v297 = vld [vmem:[%s144 + $0x370] sm:$0xff]
        %v298 = vld [vmem:[%s144 + $0x378] sm:$0xff]
        %v299 = vld [vmem:[%s144 + $0x380] sm:$0xff]
        %v300 = vld [vmem:[%s144 + $0x388] sm:$0xff]
        %v301 = vld [vmem:[%s144 + $0x390] sm:$0xff]
        %v302 = vld [vmem:[%s144 + $0x398] sm:$0xff]
        %v303 = vld [vmem:[%s144 + $0x3a0] sm:$0xff]
        %v304 = vld [vmem:[%s144 + $0x3a8] sm:$0xff]
        %v305 = vld [vmem:[%s144 + $0x3b0] sm:$0xff]
        %v306 = vld [vmem:[%s144 + $0x3b8] sm:$0xff]
        %v307 = vld [vmem:[%s144 + $0x3c0] sm:$0xff]
        %v308 = vld [vmem:[%s144 + $0x3c8] sm:$0xff]
        %v309 = vld [vmem:[%s144 + $0x3d0] sm:$0xff]
        %v310 = vld [vmem:[%s144 + $0x3d8] sm:$0xff]
        %v311 = vld [vmem:[%s144 + $0x3e0] sm:$0xff]
        %v312 = vld [vmem:[%s144 + $0x3e8] sm:$0xff]
        %v313 = vld [vmem:[%s144 + $0x3f0] sm:$0xff]
        %v314 = vld [vmem:[%s144 + $0x3f8] sm:$0xff]
        %v331 = vunpack.c.l.b16 %v171
        %v332 = vunpack.c.h.b16 %v171
        %v333 = vunpack.c.l.b16 %v172
        %v334 = vunpack.c.h.b16 %v172
        %v335 = vunpack.c.l.b16 %v173
        %v336 = vunpack.c.h.b16 %v173
        %v337 = vunpack.c.l.b16 %v174
        %v338 = vunpack.c.h.b16 %v174
        %v339 = vunpack.c.l.b16 %v175
        %v340 = vunpack.c.h.b16 %v175
        %v341 = vunpack.c.l.b16 %v176
        %v342 = vunpack.c.h.b16 %v176
        %v343 = vunpack.c.l.b16 %v177
        %v344 = vunpack.c.h.b16 %v177
        %v345 = vunpack.c.l.b16 %v178
        %v346 = vunpack.c.h.b16 %v178
        %v347 = vunpack.c.l.b16 %v179
        %v348 = vunpack.c.h.b16 %v179
        %v349 = vunpack.c.l.b16 %v180
        %v350 = vunpack.c.h.b16 %v180
        %v351 = vunpack.c.l.b16 %v181
        %v352 = vunpack.c.h.b16 %v181
        %v353 = vunpack.c.l.b16 %v182
        %v354 = vunpack.c.h.b16 %v182
        %v355 = vunpack.c.l.b16 %v183
        %v356 = vunpack.c.h.b16 %v183
        %v357 = vunpack.c.l.b16 %v184
        %v358 = vunpack.c.h.b16 %v184
        %v359 = vunpack.c.l.b16 %v185
        %v360 = vunpack.c.h.b16 %v185
        %v361 = vunpack.c.l.b16 %v186
        %v362 = vunpack.c.h.b16 %v186
        %v363 = vpack.c.b16 %v339, %v331
        %v364 = vpack.c.b16 %v340, %v332
        %v365 = vpack.c.b16 %v341, %v333
        %v366 = vpack.c.b16 %v342, %v334
        %v367 = vpack.c.b16 %v343, %v335
        %v368 = vpack.c.b16 %v344, %v336
        %v369 = vpack.c.b16 %v345, %v337
        %v370 = vpack.c.b16 %v346, %v338
        %v371 = vpack.c.b16 %v355, %v347
        %v372 = vpack.c.b16 %v356, %v348
        %v373 = vpack.c.b16 %v357, %v349
        %v374 = vpack.c.b16 %v358, %v350
        %v375 = vpack.c.b16 %v359, %v351
        %v376 = vpack.c.b16 %v360, %v352
        %v377 = vpack.c.b16 %v361, %v353
        %v378 = vpack.c.b16 %v362, %v354
        %v523 = vunpack.c.l.b16 %v187
        %v524 = vunpack.c.h.b16 %v187
        %v525 = vunpack.c.l.b16 %v188
        %v526 = vunpack.c.h.b16 %v188
        %v527 = vunpack.c.l.b16 %v189
        %v528 = vunpack.c.h.b16 %v189
        %v529 = vunpack.c.l.b16 %v190
        %v530 = vunpack.c.h.b16 %v190
        %v531 = vunpack.c.l.b16 %v191
        %v532 = vunpack.c.h.b16 %v191
        %v533 = vunpack.c.l.b16 %v192
        %v534 = vunpack.c.h.b16 %v192
        %v535 = vunpack.c.l.b16 %v193
        %v536 = vunpack.c.h.b16 %v193
        %v537 = vunpack.c.l.b16 %v194
        %v538 = vunpack.c.h.b16 %v194
        %v539 = vunpack.c.l.b16 %v195
        %v540 = vunpack.c.h.b16 %v195
        %v541 = vunpack.c.l.b16 %v196
        %v542 = vunpack.c.h.b16 %v196
        %v543 = vunpack.c.l.b16 %v197
        %v544 = vunpack.c.h.b16 %v197
        %v545 = vunpack.c.l.b16 %v198
        %v546 = vunpack.c.h.b16 %v198
        %v547 = vunpack.c.l.b16 %v199
        %v548 = vunpack.c.h.b16 %v199
        %v549 = vunpack.c.l.b16 %v200
        %v550 = vunpack.c.h.b16 %v200
        %v551 = vunpack.c.l.b16 %v201
        %v552 = vunpack.c.h.b16 %v201
        %v553 = vunpack.c.l.b16 %v202
        %v554 = vunpack.c.h.b16 %v202
        %v555 = vunpack.c.l.b16 %v203
        %v556 = vunpack.c.h.b16 %v203
        %v557 = vunpack.c.l.b16 %v204
        %v558 = vunpack.c.h.b16 %v204
        %v559 = vunpack.c.l.b16 %v205
        %v560 = vunpack.c.h.b16 %v205
        %v561 = vunpack.c.l.b16 %v206
        %v562 = vunpack.c.h.b16 %v206
        %v563 = vunpack.c.l.b16 %v207
        %v564 = vunpack.c.h.b16 %v207
        %v565 = vunpack.c.l.b16 %v208
        %v566 = vunpack.c.h.b16 %v208
        %v567 = vunpack.c.l.b16 %v209
        %v568 = vunpack.c.h.b16 %v209
        %v569 = vunpack.c.l.b16 %v210
        %v570 = vunpack.c.h.b16 %v210
        %v571 = vunpack.c.l.b16 %v211
        %v572 = vunpack.c.h.b16 %v211
        %v573 = vunpack.c.l.b16 %v212
        %v574 = vunpack.c.h.b16 %v212
        %v575 = vunpack.c.l.b16 %v213
        %v576 = vunpack.c.h.b16 %v213
        %v577 = vunpack.c.l.b16 %v214
        %v578 = vunpack.c.h.b16 %v214
        %v579 = vunpack.c.l.b16 %v215
        %v580 = vunpack.c.h.b16 %v215
        %v581 = vunpack.c.l.b16 %v216
        %v582 = vunpack.c.h.b16 %v216
        %v583 = vunpack.c.l.b16 %v217
        %v584 = vunpack.c.h.b16 %v217
        %v585 = vunpack.c.l.b16 %v218
        %v586 = vunpack.c.h.b16 %v218
        %v587 = vunpack.c.l.b16 %v219
        %v588 = vunpack.c.h.b16 %v219
        %v589 = vunpack.c.l.b16 %v220
        %v590 = vunpack.c.h.b16 %v220
        %v591 = vunpack.c.l.b16 %v221
        %v592 = vunpack.c.h.b16 %v221
        %v593 = vunpack.c.l.b16 %v222
        %v594 = vunpack.c.h.b16 %v222
        %v595 = vunpack.c.l.b16 %v223
        %v596 = vunpack.c.h.b16 %v223
        %v597 = vunpack.c.l.b16 %v224
        %v598 = vunpack.c.h.b16 %v224
        %v599 = vunpack.c.l.b16 %v225
        %v600 = vunpack.c.h.b16 %v225
        %v601 = vunpack.c.l.b16 %v226
        %v602 = vunpack.c.h.b16 %v226
        %v603 = vunpack.c.l.b16 %v227
        %v604 = vunpack.c.h.b16 %v227
        %v605 = vunpack.c.l.b16 %v228
        %v606 = vunpack.c.h.b16 %v228
        %v607 = vunpack.c.l.b16 %v229
        %v608 = vunpack.c.h.b16 %v229
        %v609 = vunpack.c.l.b16 %v230
        %v610 = vunpack.c.h.b16 %v230
        %v611 = vunpack.c.l.b16 %v231
        %v612 = vunpack.c.h.b16 %v231
        %v613 = vunpack.c.l.b16 %v232
        %v614 = vunpack.c.h.b16 %v232
        %v615 = vunpack.c.l.b16 %v233
        %v616 = vunpack.c.h.b16 %v233
        %v617 = vunpack.c.l.b16 %v234
        %v618 = vunpack.c.h.b16 %v234
        %v619 = vunpack.c.l.b16 %v235
        %v620 = vunpack.c.h.b16 %v235
        %v621 = vunpack.c.l.b16 %v236
        %v622 = vunpack.c.h.b16 %v236
        %v623 = vunpack.c.l.b16 %v237
        %v624 = vunpack.c.h.b16 %v237
        %v625 = vunpack.c.l.b16 %v238
        %v626 = vunpack.c.h.b16 %v238
        %v627 = vunpack.c.l.b16 %v239
        %v628 = vunpack.c.h.b16 %v239
        %v629 = vunpack.c.l.b16 %v240
        %v630 = vunpack.c.h.b16 %v240
        %v631 = vunpack.c.l.b16 %v241
        %v632 = vunpack.c.h.b16 %v241
        %v633 = vunpack.c.l.b16 %v242
        %v634 = vunpack.c.h.b16 %v242
        %v635 = vunpack.c.l.b16 %v243
        %v636 = vunpack.c.h.b16 %v243
        %v637 = vunpack.c.l.b16 %v244
        %v638 = vunpack.c.h.b16 %v244
        %v639 = vunpack.c.l.b16 %v245
        %v640 = vunpack.c.h.b16 %v245
        %v641 = vunpack.c.l.b16 %v246
        %v642 = vunpack.c.h.b16 %v246
        %v643 = vunpack.c.l.b16 %v247
        %v644 = vunpack.c.h.b16 %v247
        %v645 = vunpack.c.l.b16 %v248
        %v646 = vunpack.c.h.b16 %v248
        %v647 = vunpack.c.l.b16 %v249
        %v648 = vunpack.c.h.b16 %v249
        %v649 = vunpack.c.l.b16 %v250
        %v650 = vunpack.c.h.b16 %v250
        %v651 = vunpack.c.l.b16 %v251
        %v652 = vunpack.c.h.b16 %v251
        %v653 = vunpack.c.l.b16 %v252
        %v654 = vunpack.c.h.b16 %v252
        %v655 = vunpack.c.l.b16 %v253
        %v656 = vunpack.c.h.b16 %v253
        %v657 = vunpack.c.l.b16 %v254
        %v658 = vunpack.c.h.b16 %v254
        %v659 = vunpack.c.l.b16 %v255
        %v660 = vunpack.c.h.b16 %v255
        %v661 = vunpack.c.l.b16 %v256
        %v662 = vunpack.c.h.b16 %v256
        %v663 = vunpack.c.l.b16 %v257
        %v664 = vunpack.c.h.b16 %v257
        %v665 = vunpack.c.l.b16 %v258
        %v666 = vunpack.c.h.b16 %v258
        %v667 = vunpack.c.l.b16 %v259
        %v668 = vunpack.c.h.b16 %v259
        %v669 = vunpack.c.l.b16 %v260
        %v670 = vunpack.c.h.b16 %v260
        %v671 = vunpack.c.l.b16 %v261
        %v672 = vunpack.c.h.b16 %v261
        %v673 = vunpack.c.l.b16 %v262
        %v674 = vunpack.c.h.b16 %v262
        %v675 = vunpack.c.l.b16 %v263
        %v676 = vunpack.c.h.b16 %v263
        %v677 = vunpack.c.l.b16 %v264
        %v678 = vunpack.c.h.b16 %v264
        %v679 = vunpack.c.l.b16 %v265
        %v680 = vunpack.c.h.b16 %v265
        %v681 = vunpack.c.l.b16 %v266
        %v682 = vunpack.c.h.b16 %v266
        %v683 = vunpack.c.l.b16 %v267
        %v684 = vunpack.c.h.b16 %v267
        %v685 = vunpack.c.l.b16 %v268
        %v686 = vunpack.c.h.b16 %v268
        %v687 = vunpack.c.l.b16 %v269
        %v688 = vunpack.c.h.b16 %v269
        %v689 = vunpack.c.l.b16 %v270
        %v690 = vunpack.c.h.b16 %v270
        %v691 = vunpack.c.l.b16 %v271
        %v692 = vunpack.c.h.b16 %v271
        %v693 = vunpack.c.l.b16 %v272
        %v694 = vunpack.c.h.b16 %v272
        %v695 = vunpack.c.l.b16 %v273
        %v696 = vunpack.c.h.b16 %v273
        %v697 = vunpack.c.l.b16 %v274
        %v698 = vunpack.c.h.b16 %v274
        %v699 = vunpack.c.l.b16 %v275
        %v700 = vunpack.c.h.b16 %v275
        %v701 = vunpack.c.l.b16 %v276
        %v702 = vunpack.c.h.b16 %v276
        %v703 = vunpack.c.l.b16 %v277
        %v704 = vunpack.c.h.b16 %v277
        %v705 = vunpack.c.l.b16 %v278
        %v706 = vunpack.c.h.b16 %v278
        %v707 = vunpack.c.l.b16 %v279
        %v708 = vunpack.c.h.b16 %v279
        %v709 = vunpack.c.l.b16 %v280
        %v710 = vunpack.c.h.b16 %v280
        %v711 = vunpack.c.l.b16 %v281
        %v712 = vunpack.c.h.b16 %v281
        %v713 = vunpack.c.l.b16 %v282
        %v714 = vunpack.c.h.b16 %v282
        %v715 = vunpack.c.l.b16 %v283
        %v716 = vunpack.c.h.b16 %v283
        %v717 = vunpack.c.l.b16 %v284
        %v718 = vunpack.c.h.b16 %v284
        %v719 = vunpack.c.l.b16 %v285
        %v720 = vunpack.c.h.b16 %v285
        %v721 = vunpack.c.l.b16 %v286
        %v722 = vunpack.c.h.b16 %v286
        %v723 = vunpack.c.l.b16 %v287
        %v724 = vunpack.c.h.b16 %v287
        %v725 = vunpack.c.l.b16 %v288
        %v726 = vunpack.c.h.b16 %v288
        %v727 = vunpack.c.l.b16 %v289
        %v728 = vunpack.c.h.b16 %v289
        %v729 = vunpack.c.l.b16 %v290
        %v730 = vunpack.c.h.b16 %v290
        %v731 = vunpack.c.l.b16 %v291
        %v732 = vunpack.c.h.b16 %v291
        %v733 = vunpack.c.l.b16 %v292
        %v734 = vunpack.c.h.b16 %v292
        %v735 = vunpack.c.l.b16 %v293
        %v736 = vunpack.c.h.b16 %v293
        %v737 = vunpack.c.l.b16 %v294
        %v738 = vunpack.c.h.b16 %v294
        %v739 = vunpack.c.l.b16 %v295
        %v740 = vunpack.c.h.b16 %v295
        %v741 = vunpack.c.l.b16 %v296
        %v742 = vunpack.c.h.b16 %v296
        %v743 = vunpack.c.l.b16 %v297
        %v744 = vunpack.c.h.b16 %v297
        %v745 = vunpack.c.l.b16 %v298
        %v746 = vunpack.c.h.b16 %v298
        %v747 = vunpack.c.l.b16 %v299
        %v748 = vunpack.c.h.b16 %v299
        %v749 = vunpack.c.l.b16 %v300
        %v750 = vunpack.c.h.b16 %v300
        %v751 = vunpack.c.l.b16 %v301
        %v752 = vunpack.c.h.b16 %v301
        %v753 = vunpack.c.l.b16 %v302
        %v754 = vunpack.c.h.b16 %v302
        %v755 = vunpack.c.l.b16 %v303
        %v756 = vunpack.c.h.b16 %v303
        %v757 = vunpack.c.l.b16 %v304
        %v758 = vunpack.c.h.b16 %v304
        %v759 = vunpack.c.l.b16 %v305
        %v760 = vunpack.c.h.b16 %v305
        %v761 = vunpack.c.l.b16 %v306
        %v762 = vunpack.c.h.b16 %v306
        %v763 = vunpack.c.l.b16 %v307
        %v764 = vunpack.c.h.b16 %v307
        %v765 = vunpack.c.l.b16 %v308
        %v766 = vunpack.c.h.b16 %v308
        %v767 = vunpack.c.l.b16 %v309
        %v768 = vunpack.c.h.b16 %v309
        %v769 = vunpack.c.l.b16 %v310
        %v770 = vunpack.c.h.b16 %v310
        %v771 = vunpack.c.l.b16 %v311
        %v772 = vunpack.c.h.b16 %v311
        %v773 = vunpack.c.l.b16 %v312
        %v774 = vunpack.c.h.b16 %v312
        %v775 = vunpack.c.l.b16 %v313
        %v776 = vunpack.c.h.b16 %v313
        %v777 = vunpack.c.l.b16 %v314
        %v778 = vunpack.c.h.b16 %v314
        %v779 = vpack.c.b16 %v525, %v523
        %v780 = vpack.c.b16 %v526, %v524
        %v781 = vpack.c.b16 %v529, %v527
        %v782 = vpack.c.b16 %v530, %v528
        %v783 = vpack.c.b16 %v533, %v531
        %v784 = vpack.c.b16 %v534, %v532
        %v785 = vpack.c.b16 %v537, %v535
        %v786 = vpack.c.b16 %v538, %v536
        %v787 = vpack.c.b16 %v541, %v539
        %v788 = vpack.c.b16 %v542, %v540
        %v789 = vpack.c.b16 %v545, %v543
        %v790 = vpack.c.b16 %v546, %v544
        %v791 = vpack.c.b16 %v549, %v547
        %v792 = vpack.c.b16 %v550, %v548
        %v793 = vpack.c.b16 %v553, %v551
        %v794 = vpack.c.b16 %v554, %v552
        %v795 = vpack.c.b16 %v557, %v555
        %v796 = vpack.c.b16 %v558, %v556
        %v797 = vpack.c.b16 %v561, %v559
        %v798 = vpack.c.b16 %v562, %v560
        %v799 = vpack.c.b16 %v565, %v563
        %v800 = vpack.c.b16 %v566, %v564
        %v801 = vpack.c.b16 %v569, %v567
        %v802 = vpack.c.b16 %v570, %v568
        %v803 = vpack.c.b16 %v573, %v571
        %v804 = vpack.c.b16 %v574, %v572
        %v805 = vpack.c.b16 %v577, %v575
        %v806 = vpack.c.b16 %v578, %v576
        %v807 = vpack.c.b16 %v581, %v579
        %v808 = vpack.c.b16 %v582, %v580
        %v809 = vpack.c.b16 %v585, %v583
        %v810 = vpack.c.b16 %v586, %v584
        %v811 = vpack.c.b16 %v589, %v587
        %v812 = vpack.c.b16 %v590, %v588
        %v813 = vpack.c.b16 %v593, %v591
        %v814 = vpack.c.b16 %v594, %v592
        %v815 = vpack.c.b16 %v597, %v595
        %v816 = vpack.c.b16 %v598, %v596
        %v817 = vpack.c.b16 %v601, %v599
        %v818 = vpack.c.b16 %v602, %v600
        %v819 = vpack.c.b16 %v605, %v603
        %v820 = vpack.c.b16 %v606, %v604
        %v821 = vpack.c.b16 %v609, %v607
        %v822 = vpack.c.b16 %v610, %v608
        %v823 = vpack.c.b16 %v613, %v611
        %v824 = vpack.c.b16 %v614, %v612
        %v825 = vpack.c.b16 %v617, %v615
        %v826 = vpack.c.b16 %v618, %v616
        %v827 = vpack.c.b16 %v621, %v619
        %v828 = vpack.c.b16 %v622, %v620
        %v829 = vpack.c.b16 %v625, %v623
        %v830 = vpack.c.b16 %v626, %v624
        %v831 = vpack.c.b16 %v629, %v627
        %v832 = vpack.c.b16 %v630, %v628
        %v833 = vpack.c.b16 %v633, %v631
        %v834 = vpack.c.b16 %v634, %v632
        %v835 = vpack.c.b16 %v637, %v635
        %v836 = vpack.c.b16 %v638, %v636
        %v837 = vpack.c.b16 %v641, %v639
        %v838 = vpack.c.b16 %v642, %v640
        %v839 = vpack.c.b16 %v645, %v643
        %v840 = vpack.c.b16 %v646, %v644
        %v841 = vpack.c.b16 %v649, %v647
        %v842 = vpack.c.b16 %v650, %v648
        %v843 = vpack.c.b16 %v653, %v651
        %v844 = vpack.c.b16 %v654, %v652
        %v845 = vpack.c.b16 %v657, %v655
        %v846 = vpack.c.b16 %v658, %v656
        %v847 = vpack.c.b16 %v661, %v659
        %v848 = vpack.c.b16 %v662, %v660
        %v849 = vpack.c.b16 %v665, %v663
        %v850 = vpack.c.b16 %v666, %v664
        %v851 = vpack.c.b16 %v669, %v667
        %v852 = vpack.c.b16 %v670, %v668
        %v853 = vpack.c.b16 %v673, %v671
        %v854 = vpack.c.b16 %v674, %v672
        %v855 = vpack.c.b16 %v677, %v675
        %v856 = vpack.c.b16 %v678, %v676
        %v857 = vpack.c.b16 %v681, %v679
        %v858 = vpack.c.b16 %v682, %v680
        %v859 = vpack.c.b16 %v685, %v683
        %v860 = vpack.c.b16 %v686, %v684
        %v861 = vpack.c.b16 %v689, %v687
        %v862 = vpack.c.b16 %v690, %v688
        %v863 = vpack.c.b16 %v693, %v691
        %v864 = vpack.c.b16 %v694, %v692
        %v865 = vpack.c.b16 %v697, %v695
        %v866 = vpack.c.b16 %v698, %v696
        %v867 = vpack.c.b16 %v701, %v699
        %v868 = vpack.c.b16 %v702, %v700
        %v869 = vpack.c.b16 %v705, %v703
        %v870 = vpack.c.b16 %v706, %v704
        %v871 = vpack.c.b16 %v709, %v707
        %v872 = vpack.c.b16 %v710, %v708
        %v873 = vpack.c.b16 %v713, %v711
        %v874 = vpack.c.b16 %v714, %v712
        %v875 = vpack.c.b16 %v717, %v715
        %v876 = vpack.c.b16 %v718, %v716
        %v877 = vpack.c.b16 %v721, %v719
        %v878 = vpack.c.b16 %v722, %v720
        %v879 = vpack.c.b16 %v725, %v723
        %v880 = vpack.c.b16 %v726, %v724
        %v881 = vpack.c.b16 %v729, %v727
        %v882 = vpack.c.b16 %v730, %v728
        %v883 = vpack.c.b16 %v733, %v731
        %v884 = vpack.c.b16 %v734, %v732
        %v885 = vpack.c.b16 %v737, %v735
        %v886 = vpack.c.b16 %v738, %v736
        %v887 = vpack.c.b16 %v741, %v739
        %v888 = vpack.c.b16 %v742, %v740
        %v889 = vpack.c.b16 %v745, %v743
        %v890 = vpack.c.b16 %v746, %v744
        %v891 = vpack.c.b16 %v749, %v747
        %v892 = vpack.c.b16 %v750, %v748
        %v893 = vpack.c.b16 %v753, %v751
        %v894 = vpack.c.b16 %v754, %v752
        %v895 = vpack.c.b16 %v757, %v755
        %v896 = vpack.c.b16 %v758, %v756
        %v897 = vpack.c.b16 %v761, %v759
        %v898 = vpack.c.b16 %v762, %v760
        %v899 = vpack.c.b16 %v765, %v763
        %v900 = vpack.c.b16 %v766, %v764
        %v901 = vpack.c.b16 %v769, %v767
        %v902 = vpack.c.b16 %v770, %v768
        %v903 = vpack.c.b16 %v773, %v771
        %v904 = vpack.c.b16 %v774, %v772
        %v905 = vpack.c.b16 %v777, %v775
        %v906 = vpack.c.b16 %v778, %v776
        %1035 = vmatpush.bf16.msra.mxu0 %v793
        %1036 = vmatpush.bf16.msra.mxu0 %v791
        %1037 = vmatpush.bf16.msra.mxu0 %v789
        %1038 = vmatpush.bf16.msra.mxu0 %v787
        %1039 = vmatpush.bf16.msra.mxu0 %v785
        %1040 = vmatpush.bf16.msra.mxu0 %v783
        %1041 = vmatpush.bf16.msra.mxu0 %v781
        %1042 = vmatpush.bf16.msra.mxu0 %v779
        %1043 = vmatmul.bf16.gmra.mxu0 %v363
        %v1044 = vpop.f32.mrf.mxu0
        %v1045 = vadd.f32 0.0, %v1044
        %v1046 = vpop.f32.mrf.mxu0
        %v1047 = vadd.f32 0.0, %v1046
        %1048 = vmatmul.bf16.gmra.mxu0 %v371
        %v1049 = vpop.f32.mrf.mxu0
        %v1050 = vadd.f32 0.0, %v1049
        %v1051 = vpop.f32.mrf.mxu0
        %v1052 = vadd.f32 0.0, %v1051
        %1053 = vdwg.mxu0
        %1054 = vmatpush.bf16.msra.mxu0 %v809
        %1055 = vmatpush.bf16.msra.mxu0 %v807
        %1056 = vmatpush.bf16.msra.mxu0 %v805
        %1057 = vmatpush.bf16.msra.mxu0 %v803
        %1058 = vmatpush.bf16.msra.mxu0 %v801
        %1059 = vmatpush.bf16.msra.mxu0 %v799
        %1060 = vmatpush.bf16.msra.mxu0 %v797
        %1061 = vmatpush.bf16.msra.mxu0 %v795
        %1062 = vmatmul.bf16.gmra.mxu0 %v364
        %v1063 = vpop.f32.mrf.mxu0
        %v1064 = vadd.f32 %v1045, %v1063
        %v1065 = vpop.f32.mrf.mxu0
        %v1066 = vadd.f32 %v1047, %v1065
        %1067 = vmatmul.bf16.gmra.mxu0 %v372
        %v1068 = vpop.f32.mrf.mxu0
        %v1069 = vadd.f32 %v1050, %v1068
        %v1070 = vpop.f32.mrf.mxu0
        %v1071 = vadd.f32 %v1052, %v1070
        %1072 = vdwg.mxu0
        %1073 = vmatpush.bf16.msra.mxu0 %v825
        %1074 = vmatpush.bf16.msra.mxu0 %v823
        %1075 = vmatpush.bf16.msra.mxu0 %v821
        %1076 = vmatpush.bf16.msra.mxu0 %v819
        %1077 = vmatpush.bf16.msra.mxu0 %v817
        %1078 = vmatpush.bf16.msra.mxu0 %v815
        %1079 = vmatpush.bf16.msra.mxu0 %v813
        %1080 = vmatpush.bf16.msra.mxu0 %v811
        %1081 = vmatmul.bf16.gmra.mxu0 %v365
        %v1082 = vpop.f32.mrf.mxu0
        %v1083 = vadd.f32 %v1064, %v1082
        %v1084 = vpop.f32.mrf.mxu0
        %v1085 = vadd.f32 %v1066, %v1084
        %1086 = vmatmul.bf16.gmra.mxu0 %v373
        %v1087 = vpop.f32.mrf.mxu0
        %v1088 = vadd.f32 %v1069, %v1087
        %v1089 = vpop.f32.mrf.mxu0
        %v1090 = vadd.f32 %v1071, %v1089
        %1091 = vdwg.mxu0
        %1092 = vmatpush.bf16.msra.mxu0 %v841
        %1093 = vmatpush.bf16.msra.mxu0 %v839
        %1094 = vmatpush.bf16.msra.mxu0 %v837
        %1095 = vmatpush.bf16.msra.mxu0 %v835
        %1096 = vmatpush.bf16.msra.mxu0 %v833
        %1097 = vmatpush.bf16.msra.mxu0 %v831
        %1098 = vmatpush.bf16.msra.mxu0 %v829
        %1099 = vmatpush.bf16.msra.mxu0 %v827
        %1100 = vmatmul.bf16.gmra.mxu0 %v366
        %v1101 = vpop.f32.mrf.mxu0
        %v1102 = vadd.f32 %v1083, %v1101
        %v1103 = vpop.f32.mrf.mxu0
        %v1104 = vadd.f32 %v1085, %v1103
        %1105 = vmatmul.bf16.gmra.mxu0 %v374
        %v1106 = vpop.f32.mrf.mxu0
        %v1107 = vadd.f32 %v1088, %v1106
        %v1108 = vpop.f32.mrf.mxu0
        %v1109 = vadd.f32 %v1090, %v1108
        %1110 = vdwg.mxu0
        %1111 = vmatpush.bf16.msra.mxu0 %v857
        %1112 = vmatpush.bf16.msra.mxu0 %v855
        %1113 = vmatpush.bf16.msra.mxu0 %v853
        %1114 = vmatpush.bf16.msra.mxu0 %v851
        %1115 = vmatpush.bf16.msra.mxu0 %v849
        %1116 = vmatpush.bf16.msra.mxu0 %v847
        %1117 = vmatpush.bf16.msra.mxu0 %v845
        %1118 = vmatpush.bf16.msra.mxu0 %v843
        %1119 = vmatmul.bf16.gmra.mxu0 %v367
        %v1120 = vpop.f32.mrf.mxu0
        %v1121 = vadd.f32 %v1102, %v1120
        %v1122 = vpop.f32.mrf.mxu0
        %v1123 = vadd.f32 %v1104, %v1122
        %1124 = vmatmul.bf16.gmra.mxu0 %v375
        %v1125 = vpop.f32.mrf.mxu0
        %v1126 = vadd.f32 %v1107, %v1125
        %v1127 = vpop.f32.mrf.mxu0
        %v1128 = vadd.f32 %v1109, %v1127
        %1129 = vdwg.mxu0
        %1130 = vmatpush.bf16.msra.mxu0 %v873
        %1131 = vmatpush.bf16.msra.mxu0 %v871
        %1132 = vmatpush.bf16.msra.mxu0 %v869
        %1133 = vmatpush.bf16.msra.mxu0 %v867
        %1134 = vmatpush.bf16.msra.mxu0 %v865
        %1135 = vmatpush.bf16.msra.mxu0 %v863
        %1136 = vmatpush.bf16.msra.mxu0 %v861
        %1137 = vmatpush.bf16.msra.mxu0 %v859
        %1138 = vmatmul.bf16.gmra.mxu0 %v368
        %v1139 = vpop.f32.mrf.mxu0
        %v1140 = vadd.f32 %v1121, %v1139
        %v1141 = vpop.f32.mrf.mxu0
        %v1142 = vadd.f32 %v1123, %v1141
        %1143 = vmatmul.bf16.gmra.mxu0 %v376
        %v1144 = vpop.f32.mrf.mxu0
        %v1145 = vadd.f32 %v1126, %v1144
        %v1146 = vpop.f32.mrf.mxu0
        %v1147 = vadd.f32 %v1128, %v1146
        %1148 = vdwg.mxu0
        %1149 = vmatpush.bf16.msra.mxu0 %v889
        %1150 = vmatpush.bf16.msra.mxu0 %v887
        %1151 = vmatpush.bf16.msra.mxu0 %v885
        %1152 = vmatpush.bf16.msra.mxu0 %v883
        %1153 = vmatpush.bf16.msra.mxu0 %v881
        %1154 = vmatpush.bf16.msra.mxu0 %v879
        %1155 = vmatpush.bf16.msra.mxu0 %v877
        %1156 = vmatpush.bf16.msra.mxu0 %v875
        %1157 = vmatmul.bf16.gmra.mxu0 %v369
        %v1158 = vpop.f32.mrf.mxu0
        %v1159 = vadd.f32 %v1140, %v1158
        %v1160 = vpop.f32.mrf.mxu0
        %v1161 = vadd.f32 %v1142, %v1160
        %1162 = vmatmul.bf16.gmra.mxu0 %v377
        %v1163 = vpop.f32.mrf.mxu0
        %v1164 = vadd.f32 %v1145, %v1163
        %v1165 = vpop.f32.mrf.mxu0
        %v1166 = vadd.f32 %v1147, %v1165
        %1167 = vdwg.mxu0
        %1168 = vmatpush.bf16.msra.mxu0 %v905
        %1169 = vmatpush.bf16.msra.mxu0 %v903
        %1170 = vmatpush.bf16.msra.mxu0 %v901
        %1171 = vmatpush.bf16.msra.mxu0 %v899
        %1172 = vmatpush.bf16.msra.mxu0 %v897
        %1173 = vmatpush.bf16.msra.mxu0 %v895
        %1174 = vmatpush.bf16.msra.mxu0 %v893
        %1175 = vmatpush.bf16.msra.mxu0 %v891
        %1176 = vmatmul.bf16.gmra.mxu0 %v370
        %v1177 = vpop.f32.mrf.mxu0
        %v1178 = vadd.f32 %v1159, %v1177
        %v1179 = vpop.f32.mrf.mxu0
        %v1180 = vadd.f32 %v1161, %v1179
        %1181 = vmatmul.bf16.gmra.mxu0 %v378
        %v1182 = vpop.f32.mrf.mxu0
        %v1183 = vadd.f32 %v1164, %v1182
        %v1184 = vpop.f32.mrf.mxu0
        %v1185 = vadd.f32 %v1166, %v1184
        %1186 = vdwg.mxu0
        %1187 = vmatpush.bf16.msra.mxu0 %v794
        %1188 = vmatpush.bf16.msra.mxu0 %v792
        %1189 = vmatpush.bf16.msra.mxu0 %v790
        %1190 = vmatpush.bf16.msra.mxu0 %v788
        %1191 = vmatpush.bf16.msra.mxu0 %v786
        %1192 = vmatpush.bf16.msra.mxu0 %v784
        %1193 = vmatpush.bf16.msra.mxu0 %v782
        %1194 = vmatpush.bf16.msra.mxu0 %v780
        %1195 = vmatmul.bf16.gmra.mxu0 %v363
        %v1196 = vpop.f32.mrf.mxu0
        %v1197 = vadd.f32 0.0, %v1196
        %v1198 = vpop.f32.mrf.mxu0
        %v1199 = vadd.f32 0.0, %v1198
        %1200 = vmatmul.bf16.gmra.mxu0 %v371
        %v1201 = vpop.f32.mrf.mxu0
        %v1202 = vadd.f32 0.0, %v1201
        %v1203 = vpop.f32.mrf.mxu0
        %v1204 = vadd.f32 0.0, %v1203
        %1205 = vdwg.mxu0
        %1206 = vmatpush.bf16.msra.mxu0 %v810
        %1207 = vmatpush.bf16.msra.mxu0 %v808
        %1208 = vmatpush.bf16.msra.mxu0 %v806
        %1209 = vmatpush.bf16.msra.mxu0 %v804
        %1210 = vmatpush.bf16.msra.mxu0 %v802
        %1211 = vmatpush.bf16.msra.mxu0 %v800
        %1212 = vmatpush.bf16.msra.mxu0 %v798
        %1213 = vmatpush.bf16.msra.mxu0 %v796
        %1214 = vmatmul.bf16.gmra.mxu0 %v364
        %v1215 = vpop.f32.mrf.mxu0
        %v1216 = vadd.f32 %v1197, %v1215
        %v1217 = vpop.f32.mrf.mxu0
        %v1218 = vadd.f32 %v1199, %v1217
        %1219 = vmatmul.bf16.gmra.mxu0 %v372
        %v1220 = vpop.f32.mrf.mxu0
        %v1221 = vadd.f32 %v1202, %v1220
        %v1222 = vpop.f32.mrf.mxu0
        %v1223 = vadd.f32 %v1204, %v1222
        %1224 = vdwg.mxu0
        %1225 = vmatpush.bf16.msra.mxu0 %v826
        %1226 = vmatpush.bf16.msra.mxu0 %v824
        %1227 = vmatpush.bf16.msra.mxu0 %v822
        %1228 = vmatpush.bf16.msra.mxu0 %v820
        %1229 = vmatpush.bf16.msra.mxu0 %v818
        %1230 = vmatpush.bf16.msra.mxu0 %v816
        %1231 = vmatpush.bf16.msra.mxu0 %v814
        %1232 = vmatpush.bf16.msra.mxu0 %v812
        %1233 = vmatmul.bf16.gmra.mxu0 %v365
        %v1234 = vpop.f32.mrf.mxu0
        %v1235 = vadd.f32 %v1216, %v1234
        %v1236 = vpop.f32.mrf.mxu0
        %v1237 = vadd.f32 %v1218, %v1236
        %1238 = vmatmul.bf16.gmra.mxu0 %v373
        %v1239 = vpop.f32.mrf.mxu0
        %v1240 = vadd.f32 %v1221, %v1239
        %v1241 = vpop.f32.mrf.mxu0
        %v1242 = vadd.f32 %v1223, %v1241
        %1243 = vdwg.mxu0
        %1244 = vmatpush.bf16.msra.mxu0 %v842
        %1245 = vmatpush.bf16.msra.mxu0 %v840
        %1246 = vmatpush.bf16.msra.mxu0 %v838
        %1247 = vmatpush.bf16.msra.mxu0 %v836
        %1248 = vmatpush.bf16.msra.mxu0 %v834
        %1249 = vmatpush.bf16.msra.mxu0 %v832
        %1250 = vmatpush.bf16.msra.mxu0 %v830
        %1251 = vmatpush.bf16.msra.mxu0 %v828
        %1252 = vmatmul.bf16.gmra.mxu0 %v366
        %v1253 = vpop.f32.mrf.mxu0
        %v1254 = vadd.f32 %v1235, %v1253
        %v1255 = vpop.f32.mrf.mxu0
        %v1256 = vadd.f32 %v1237, %v1255
        %1257 = vmatmul.bf16.gmra.mxu0 %v374
        %v1258 = vpop.f32.mrf.mxu0
        %v1259 = vadd.f32 %v1240, %v1258
        %v1260 = vpop.f32.mrf.mxu0
        %v1261 = vadd.f32 %v1242, %v1260
        %1262 = vdwg.mxu0
        %1263 = vmatpush.bf16.msra.mxu0 %v858
        %1264 = vmatpush.bf16.msra.mxu0 %v856
        %1265 = vmatpush.bf16.msra.mxu0 %v854
        %1266 = vmatpush.bf16.msra.mxu0 %v852
        %1267 = vmatpush.bf16.msra.mxu0 %v850
        %1268 = vmatpush.bf16.msra.mxu0 %v848
        %1269 = vmatpush.bf16.msra.mxu0 %v846
        %1270 = vmatpush.bf16.msra.mxu0 %v844
        %1271 = vmatmul.bf16.gmra.mxu0 %v367
        %v1272 = vpop.f32.mrf.mxu0
        %v1273 = vadd.f32 %v1254, %v1272
        %v1274 = vpop.f32.mrf.mxu0
        %v1275 = vadd.f32 %v1256, %v1274
        %1276 = vmatmul.bf16.gmra.mxu0 %v375
        %v1277 = vpop.f32.mrf.mxu0
        %v1278 = vadd.f32 %v1259, %v1277
        %v1279 = vpop.f32.mrf.mxu0
        %v1280 = vadd.f32 %v1261, %v1279
        %1281 = vdwg.mxu0
        %1282 = vmatpush.bf16.msra.mxu0 %v874
        %1283 = vmatpush.bf16.msra.mxu0 %v872
        %1284 = vmatpush.bf16.msra.mxu0 %v870
        %1285 = vmatpush.bf16.msra.mxu0 %v868
        %1286 = vmatpush.bf16.msra.mxu0 %v866
        %1287 = vmatpush.bf16.msra.mxu0 %v864
        %1288 = vmatpush.bf16.msra.mxu0 %v862
        %1289 = vmatpush.bf16.msra.mxu0 %v860
        %1290 = vmatmul.bf16.gmra.mxu0 %v368
        %v1291 = vpop.f32.mrf.mxu0
        %v1292 = vadd.f32 %v1273, %v1291
        %v1293 = vpop.f32.mrf.mxu0
        %v1294 = vadd.f32 %v1275, %v1293
        %1295 = vmatmul.bf16.gmra.mxu0 %v376
        %v1296 = vpop.f32.mrf.mxu0
        %v1297 = vadd.f32 %v1278, %v1296
        %v1298 = vpop.f32.mrf.mxu0
        %v1299 = vadd.f32 %v1280, %v1298
        %1300 = vdwg.mxu0
        %1301 = vmatpush.bf16.msra.mxu0 %v890
        %1302 = vmatpush.bf16.msra.mxu0 %v888
        %1303 = vmatpush.bf16.msra.mxu0 %v886
        %1304 = vmatpush.bf16.msra.mxu0 %v884
        %1305 = vmatpush.bf16.msra.mxu0 %v882
        %1306 = vmatpush.bf16.msra.mxu0 %v880
        %1307 = vmatpush.bf16.msra.mxu0 %v878
        %1308 = vmatpush.bf16.msra.mxu0 %v876
        %1309 = vmatmul.bf16.gmra.mxu0 %v369
        %v1310 = vpop.f32.mrf.mxu0
        %v1311 = vadd.f32 %v1292, %v1310
        %v1312 = vpop.f32.mrf.mxu0
        %v1313 = vadd.f32 %v1294, %v1312
        %1314 = vmatmul.bf16.gmra.mxu0 %v377
        %v1315 = vpop.f32.mrf.mxu0
        %v1316 = vadd.f32 %v1297, %v1315
        %v1317 = vpop.f32.mrf.mxu0
        %v1318 = vadd.f32 %v1299, %v1317
        %1319 = vdwg.mxu0
        %1320 = vmatpush.bf16.msra.mxu0 %v906
        %1321 = vmatpush.bf16.msra.mxu0 %v904
        %1322 = vmatpush.bf16.msra.mxu0 %v902
        %1323 = vmatpush.bf16.msra.mxu0 %v900
        %1324 = vmatpush.bf16.msra.mxu0 %v898
        %1325 = vmatpush.bf16.msra.mxu0 %v896
        %1326 = vmatpush.bf16.msra.mxu0 %v894
        %1327 = vmatpush.bf16.msra.mxu0 %v892
        %1328 = vmatmul.bf16.gmra.mxu0 %v370
        %v1329 = vpop.f32.mrf.mxu0
        %v1330 = vadd.f32 %v1311, %v1329
        %v1331 = vpop.f32.mrf.mxu0
        %v1332 = vadd.f32 %v1313, %v1331
        %1333 = vmatmul.bf16.gmra.mxu0 %v378
        %v1334 = vpop.f32.mrf.mxu0
        %v1335 = vadd.f32 %v1316, %v1334
        %v1336 = vpop.f32.mrf.mxu0
        %v1337 = vadd.f32 %v1318, %v1336
        %1338 = vdwg.mxu0
        %s1339 = smul.u32 %s16, 8
        %s1340 = smul.addr %s1339, 8
        %s1341 = scalar_lea.vmem [#allocation2], %s1340
        %1342 = vst [vmem:[%s1341] sm:$0xff] %v1178
        %1343 = vst [vmem:[%s1341 + $0x8] sm:$0xff] %v1330
        %1344 = vst [vmem:[%s1341 + $0x10] sm:$0xff] %v1180
        %1345 = vst [vmem:[%s1341 + $0x18] sm:$0xff] %v1332
        %1346 = vst [vmem:[%s1341 + $0x20] sm:$0xff] %v1183
        %1347 = vst [vmem:[%s1341 + $0x28] sm:$0xff] %v1335
        %1348 = vst [vmem:[%s1341 + $0x30] sm:$0xff] %v1185
        %1349 = vst [vmem:[%s1341 + $0x38] sm:$0xff] %v1337
        %p1350 = scmp.eq.s32.totalorder %s16, 3
        // Predicated region
        $region33: #{generator_forward.9} parent=27 // pred_check
          %p1351 = pneg %p1350
        $region34: #{generator_forward.9} parent=27 // pred_check_branch
          %1353 = sbr.rel (%p1351) target = $region36
        $region35: #{generator_forward.9} parent=27 // pred_region
          %v1354 = vld [vmem:[#allocation2] sm:$0xff]
          %v1355 = vld [vmem:[#allocation2 + $0x8] sm:$0xff]
          %v1356 = vld [vmem:[#allocation2 + $0x10] sm:$0xff]
          %v1357 = vld [vmem:[#allocation2 + $0x18] sm:$0xff]
          %v1358 = vld [vmem:[#allocation2 + $0x20] sm:$0xff]
          %v1359 = vld [vmem:[#allocation2 + $0x28] sm:$0xff]
          %v1360 = vld [vmem:[#allocation2 + $0x30] sm:$0xff]
          %v1361 = vld [vmem:[#allocation2 + $0x38] sm:$0xff]
          %v1362 = vld [vmem:[#allocation2 + $0x40] sm:$0xff]
          %v1363 = vld [vmem:[#allocation2 + $0x48] sm:$0xff]
          %v1364 = vld [vmem:[#allocation2 + $0x50] sm:$0xff]
          %v1365 = vld [vmem:[#allocation2 + $0x58] sm:$0xff]
          %v1366 = vld [vmem:[#allocation2 + $0x60] sm:$0xff]
          %v1367 = vld [vmem:[#allocation2 + $0x68] sm:$0xff]
          %v1368 = vld [vmem:[#allocation2 + $0x70] sm:$0xff]
          %v1369 = vld [vmem:[#allocation2 + $0x78] sm:$0xff]
          %v1370 = vld [vmem:[#allocation2 + $0x80] sm:$0xff]
          %v1371 = vld [vmem:[#allocation2 + $0x88] sm:$0xff]
          %v1372 = vld [vmem:[#allocation2 + $0x90] sm:$0xff]
          %v1373 = vld [vmem:[#allocation2 + $0x98] sm:$0xff]
          %v1374 = vld [vmem:[#allocation2 + $0xa0] sm:$0xff]
          %v1375 = vld [vmem:[#allocation2 + $0xa8] sm:$0xff]
          %v1376 = vld [vmem:[#allocation2 + $0xb0] sm:$0xff]
          %v1377 = vld [vmem:[#allocation2 + $0xb8] sm:$0xff]
          %v1378 = vld [vmem:[#allocation2 + $0xc0] sm:$0xff]
          %v1379 = vld [vmem:[#allocation2 + $0xc8] sm:$0xff]
          %v1380 = vld [vmem:[#allocation2 + $0xd0] sm:$0xff]
          %v1381 = vld [vmem:[#allocation2 + $0xd8] sm:$0xff]
          %v1382 = vld [vmem:[#allocation2 + $0xe0] sm:$0xff]
          %v1383 = vld [vmem:[#allocation2 + $0xe8] sm:$0xff]
          %v1384 = vld [vmem:[#allocation2 + $0xf0] sm:$0xff]
          %v1385 = vld [vmem:[#allocation2 + $0xf8] sm:$0xff]
          %v1386 = vadd.f32 %v1354, %v1356
          %v1387 = vadd.f32 %v1386, %v1358
          %v1388 = vadd.f32 %v1387, %v1360
          %v1389 = vadd.f32 %v1388, %v1362
          %v1390 = vadd.f32 %v1389, %v1364
          %v1391 = vadd.f32 %v1390, %v1366
          %v1392 = vadd.f32 %v1391, %v1368
          %v1393 = vadd.f32 %v1392, %v1370
          %v1394 = vadd.f32 %v1393, %v1372
          %v1395 = vadd.f32 %v1394, %v1374
          %v1396 = vadd.f32 %v1395, %v1376
          %v1397 = vadd.f32 %v1396, %v1378
          %v1398 = vadd.f32 %v1397, %v1380
          %v1399 = vadd.f32 %v1398, %v1382
          %v1400 = vadd.f32 %v1399, %v1384
          %v1401 = vrot.slane %v1400, 4
          %v1402 = vadd.f32 %v1400, %v1401
          %v1403 = vrot.slane %v1402, 2
          %v1404 = vadd.f32 %v1402, %v1403
          %v1405 = vrot.slane %v1404, 1
          %v1406 = vadd.f32 %v1404, %v1405
          %v1407 = vadd.f32 %v1355, %v1357
          %v1408 = vadd.f32 %v1407, %v1359
          %v1409 = vadd.f32 %v1408, %v1361
          %v1410 = vadd.f32 %v1409, %v1363
          %v1411 = vadd.f32 %v1410, %v1365
          %v1412 = vadd.f32 %v1411, %v1367
          %v1413 = vadd.f32 %v1412, %v1369
          %v1414 = vadd.f32 %v1413, %v1371
          %v1415 = vadd.f32 %v1414, %v1373
          %v1416 = vadd.f32 %v1415, %v1375
          %v1417 = vadd.f32 %v1416, %v1377
          %v1418 = vadd.f32 %v1417, %v1379
          %v1419 = vadd.f32 %v1418, %v1381
          %v1420 = vadd.f32 %v1419, %v1383
          %v1421 = vadd.f32 %v1420, %v1385
          %v1422 = vrot.slane %v1421, 4
          %v1423 = vadd.f32 %v1421, %v1422
          %v1424 = vrot.slane %v1423, 2
          %v1425 = vadd.f32 %v1423, %v1424
          %v1426 = vrot.slane %v1425, 1
          %v1427 = vadd.f32 %v1425, %v1426
          %v1428 = vmul.f32 %v1406, 0.0078125
          %v1429 = vmul.f32 %v1427, 0.0078125
          %v1430 = vmul.f32 %v1354, %v1354
          %v1431 = vmul.f32 %v1355, %v1355
          %v1432 = vmul.f32 %v1356, %v1356
          %v1433 = vmul.f32 %v1357, %v1357
          %v1434 = vmul.f32 %v1358, %v1358
          %v1435 = vmul.f32 %v1359, %v1359
          %v1436 = vmul.f32 %v1360, %v1360
          %v1437 = vmul.f32 %v1361, %v1361
          %v1438 = vmul.f32 %v1362, %v1362
          %v1439 = vmul.f32 %v1363, %v1363
          %v1440 = vmul.f32 %v1364, %v1364
          %v1441 = vmul.f32 %v1365, %v1365
          %v1442 = vmul.f32 %v1366, %v1366
          %v1443 = vmul.f32 %v1367, %v1367
          %v1444 = vmul.f32 %v1368, %v1368
          %v1445 = vmul.f32 %v1369, %v1369
          %v1446 = vmul.f32 %v1370, %v1370
          %v1447 = vmul.f32 %v1371, %v1371
          %v1448 = vmul.f32 %v1372, %v1372
          %v1449 = vmul.f32 %v1373, %v1373
          %v1450 = vmul.f32 %v1374, %v1374
          %v1451 = vmul.f32 %v1375, %v1375
          %v1452 = vmul.f32 %v1376, %v1376
          %v1453 = vmul.f32 %v1377, %v1377
          %v1454 = vmul.f32 %v1378, %v1378
          %v1455 = vmul.f32 %v1379, %v1379
          %v1456 = vmul.f32 %v1380, %v1380
          %v1457 = vmul.f32 %v1381, %v1381
          %v1458 = vmul.f32 %v1382, %v1382
          %v1459 = vmul.f32 %v1383, %v1383
          %v1460 = vmul.f32 %v1384, %v1384
          %v1461 = vmul.f32 %v1385, %v1385
          %v1462 = vadd.f32 %v1430, %v1432
          %v1463 = vadd.f32 %v1462, %v1434
          %v1464 = vadd.f32 %v1463, %v1436
          %v1465 = vadd.f32 %v1464, %v1438
          %v1466 = vadd.f32 %v1465, %v1440
          %v1467 = vadd.f32 %v1466, %v1442
          %v1468 = vadd.f32 %v1467, %v1444
          %v1469 = vadd.f32 %v1468, %v1446
          %v1470 = vadd.f32 %v1469, %v1448
          %v1471 = vadd.f32 %v1470, %v1450
          %v1472 = vadd.f32 %v1471, %v1452
          %v1473 = vadd.f32 %v1472, %v1454
          %v1474 = vadd.f32 %v1473, %v1456
          %v1475 = vadd.f32 %v1474, %v1458
          %v1476 = vadd.f32 %v1475, %v1460
          %v1477 = vrot.slane %v1476, 4
          %v1478 = vadd.f32 %v1476, %v1477
          %v1479 = vrot.slane %v1478, 2
          %v1480 = vadd.f32 %v1478, %v1479
          %v1481 = vrot.slane %v1480, 1
          %v1482 = vadd.f32 %v1480, %v1481
          %v1483 = vadd.f32 %v1431, %v1433
          %v1484 = vadd.f32 %v1483, %v1435
          %v1485 = vadd.f32 %v1484, %v1437
          %v1486 = vadd.f32 %v1485, %v1439
          %v1487 = vadd.f32 %v1486, %v1441
          %v1488 = vadd.f32 %v1487, %v1443
          %v1489 = vadd.f32 %v1488, %v1445
          %v1490 = vadd.f32 %v1489, %v1447
          %v1491 = vadd.f32 %v1490, %v1449
          %v1492 = vadd.f32 %v1491, %v1451
          %v1493 = vadd.f32 %v1492, %v1453
          %v1494 = vadd.f32 %v1493, %v1455
          %v1495 = vadd.f32 %v1494, %v1457
          %v1496 = vadd.f32 %v1495, %v1459
          %v1497 = vadd.f32 %v1496, %v1461
          %v1498 = vrot.slane %v1497, 4
          %v1499 = vadd.f32 %v1497, %v1498
          %v1500 = vrot.slane %v1499, 2
          %v1501 = vadd.f32 %v1499, %v1500
          %v1502 = vrot.slane %v1501, 1
          %v1503 = vadd.f32 %v1501, %v1502
          %v1504 = vmul.f32 %v1482, 0.0078125
          %v1505 = vmul.f32 %v1503, 0.0078125
          %v1506 = vmul.f32 %v1428, %v1428
          %v1507 = vmul.f32 %v1429, %v1429
          %v1508 = vsub.f32 %v1504, %v1506
          %v1509 = vsub.f32 %v1505, %v1507
          %v1510 = vmax.f32 %v1508, 0.0
          %v1511 = vmax.f32 %v1509, 0.0
          %v1512 = vadd.f32 %v1510, 1e-05
          %v1513 = vadd.f32 %v1511, 1e-05
          %v1514 = vrsqrt.pop %v1512
          %v1515 = vmul.f32 %v1514, %v1512
          %v1516 = vmul.f32 %v1515, %v1514
          %v1517 = vmul.f32 0.5, %v1516
          %v1518 = vsub.f32 1.5, %v1517
          %v1519 = vmul.f32 %v1514, %v1518
          %vm1520 = vweird.f32 %v1512
          %vm1521 = vweird.f32 %v1514
          %vm1522 = vmor %vm1520, %vm1521
          %v1523 = vsel %vm1522, %v1514, %v1519
          %v1524 = vrsqrt.pop %v1513
          %v1525 = vmul.f32 %v1524, %v1513
          %v1526 = vmul.f32 %v1525, %v1524
          %v1527 = vmul.f32 0.5, %v1526
          %v1528 = vsub.f32 1.5, %v1527
          %v1529 = vmul.f32 %v1524, %v1528
          %vm1530 = vweird.f32 %v1513
          %vm1531 = vweird.f32 %v1524
          %vm1532 = vmor %vm1530, %vm1531
          %v1533 = vsel %vm1532, %v1524, %v1529
          %v1534 = vsub.f32 %v1354, %v1428
          %v1535 = vsub.f32 %v1355, %v1429
          %v1536 = vsub.f32 %v1356, %v1428
          %v1537 = vsub.f32 %v1357, %v1429
          %v1538 = vsub.f32 %v1358, %v1428
          %v1539 = vsub.f32 %v1359, %v1429
          %v1540 = vsub.f32 %v1360, %v1428
          %v1541 = vsub.f32 %v1361, %v1429
          %v1542 = vsub.f32 %v1362, %v1428
          %v1543 = vsub.f32 %v1363, %v1429
          %v1544 = vsub.f32 %v1364, %v1428
          %v1545 = vsub.f32 %v1365, %v1429
          %v1546 = vsub.f32 %v1366, %v1428
          %v1547 = vsub.f32 %v1367, %v1429
          %v1548 = vsub.f32 %v1368, %v1428
          %v1549 = vsub.f32 %v1369, %v1429
          %v1550 = vsub.f32 %v1370, %v1428
          %v1551 = vsub.f32 %v1371, %v1429
          %v1552 = vsub.f32 %v1372, %v1428
          %v1553 = vsub.f32 %v1373, %v1429
          %v1554 = vsub.f32 %v1374, %v1428
          %v1555 = vsub.f32 %v1375, %v1429
          %v1556 = vsub.f32 %v1376, %v1428
          %v1557 = vsub.f32 %v1377, %v1429
          %v1558 = vsub.f32 %v1378, %v1428
          %v1559 = vsub.f32 %v1379, %v1429
          %v1560 = vsub.f32 %v1380, %v1428
          %v1561 = vsub.f32 %v1381, %v1429
          %v1562 = vsub.f32 %v1382, %v1428
          %v1563 = vsub.f32 %v1383, %v1429
          %v1564 = vsub.f32 %v1384, %v1428
          %v1565 = vsub.f32 %v1385, %v1429
          %v1566 = vmul.f32 %v1534, %v1523
          %v1567 = vmul.f32 %v1535, %v1533
          %v1568 = vmul.f32 %v1536, %v1523
          %v1569 = vmul.f32 %v1537, %v1533
          %v1570 = vmul.f32 %v1538, %v1523
          %v1571 = vmul.f32 %v1539, %v1533
          %v1572 = vmul.f32 %v1540, %v1523
          %v1573 = vmul.f32 %v1541, %v1533
          %v1574 = vmul.f32 %v1542, %v1523
          %v1575 = vmul.f32 %v1543, %v1533
          %v1576 = vmul.f32 %v1544, %v1523
          %v1577 = vmul.f32 %v1545, %v1533
          %v1578 = vmul.f32 %v1546, %v1523
          %v1579 = vmul.f32 %v1547, %v1533
          %v1580 = vmul.f32 %v1548, %v1523
          %v1581 = vmul.f32 %v1549, %v1533
          %v1582 = vmul.f32 %v1550, %v1523
          %v1583 = vmul.f32 %v1551, %v1533
          %v1584 = vmul.f32 %v1552, %v1523
          %v1585 = vmul.f32 %v1553, %v1533
          %v1586 = vmul.f32 %v1554, %v1523
          %v1587 = vmul.f32 %v1555, %v1533
          %v1588 = vmul.f32 %v1556, %v1523
          %v1589 = vmul.f32 %v1557, %v1533
          %v1590 = vmul.f32 %v1558, %v1523
          %v1591 = vmul.f32 %v1559, %v1533
          %v1592 = vmul.f32 %v1560, %v1523
          %v1593 = vmul.f32 %v1561, %v1533
          %v1594 = vmul.f32 %v1562, %v1523
          %v1595 = vmul.f32 %v1563, %v1533
          %v1596 = vmul.f32 %v1564, %v1523
          %v1597 = vmul.f32 %v1565, %v1533
          %vm1598 = vcmp.ge.f32.partialorder %v1566, 0.0
          %vm1599 = vcmp.ge.f32.partialorder %v1567, 0.0
          %vm1600 = vcmp.ge.f32.partialorder %v1568, 0.0
          %vm1601 = vcmp.ge.f32.partialorder %v1569, 0.0
          %vm1602 = vcmp.ge.f32.partialorder %v1570, 0.0
          %vm1603 = vcmp.ge.f32.partialorder %v1571, 0.0
          %vm1604 = vcmp.ge.f32.partialorder %v1572, 0.0
          %vm1605 = vcmp.ge.f32.partialorder %v1573, 0.0
          %vm1606 = vcmp.ge.f32.partialorder %v1574, 0.0
          %vm1607 = vcmp.ge.f32.partialorder %v1575, 0.0
          %vm1608 = vcmp.ge.f32.partialorder %v1576, 0.0
          %vm1609 = vcmp.ge.f32.partialorder %v1577, 0.0
          %vm1610 = vcmp.ge.f32.partialorder %v1578, 0.0
          %vm1611 = vcmp.ge.f32.partialorder %v1579, 0.0
          %vm1612 = vcmp.ge.f32.partialorder %v1580, 0.0
          %vm1613 = vcmp.ge.f32.partialorder %v1581, 0.0
          %vm1614 = vcmp.ge.f32.partialorder %v1582, 0.0
          %vm1615 = vcmp.ge.f32.partialorder %v1583, 0.0
          %vm1616 = vcmp.ge.f32.partialorder %v1584, 0.0
          %vm1617 = vcmp.ge.f32.partialorder %v1585, 0.0
          %vm1618 = vcmp.ge.f32.partialorder %v1586, 0.0
          %vm1619 = vcmp.ge.f32.partialorder %v1587, 0.0
          %vm1620 = vcmp.ge.f32.partialorder %v1588, 0.0
          %vm1621 = vcmp.ge.f32.partialorder %v1589, 0.0
          %vm1622 = vcmp.ge.f32.partialorder %v1590, 0.0
          %vm1623 = vcmp.ge.f32.partialorder %v1591, 0.0
          %vm1624 = vcmp.ge.f32.partialorder %v1592, 0.0
          %vm1625 = vcmp.ge.f32.partialorder %v1593, 0.0
          %vm1626 = vcmp.ge.f32.partialorder %v1594, 0.0
          %vm1627 = vcmp.ge.f32.partialorder %v1595, 0.0
          %vm1628 = vcmp.ge.f32.partialorder %v1596, 0.0
          %vm1629 = vcmp.ge.f32.partialorder %v1597, 0.0
          %v1630 = vmul.f32 %v1566, 0.2
          %v1631 = vmul.f32 %v1567, 0.2
          %v1632 = vmul.f32 %v1568, 0.2
          %v1633 = vmul.f32 %v1569, 0.2
          %v1634 = vmul.f32 %v1570, 0.2
          %v1635 = vmul.f32 %v1571, 0.2
          %v1636 = vmul.f32 %v1572, 0.2
          %v1637 = vmul.f32 %v1573, 0.2
          %v1638 = vmul.f32 %v1574, 0.2
          %v1639 = vmul.f32 %v1575, 0.2
          %v1640 = vmul.f32 %v1576, 0.2
          %v1641 = vmul.f32 %v1577, 0.2
          %v1642 = vmul.f32 %v1578, 0.2
          %v1643 = vmul.f32 %v1579, 0.2
          %v1644 = vmul.f32 %v1580, 0.2
          %v1645 = vmul.f32 %v1581, 0.2
          %v1646 = vmul.f32 %v1582, 0.2
          %v1647 = vmul.f32 %v1583, 0.2
          %v1648 = vmul.f32 %v1584, 0.2
          %v1649 = vmul.f32 %v1585, 0.2
          %v1650 = vmul.f32 %v1586, 0.2
          %v1651 = vmul.f32 %v1587, 0.2
          %v1652 = vmul.f32 %v1588, 0.2
          %v1653 = vmul.f32 %v1589, 0.2
          %v1654 = vmul.f32 %v1590, 0.2
          %v1655 = vmul.f32 %v1591, 0.2
          %v1656 = vmul.f32 %v1592, 0.2
          %v1657 = vmul.f32 %v1593, 0.2
          %v1658 = vmul.f32 %v1594, 0.2
          %v1659 = vmul.f32 %v1595, 0.2
          %v1660 = vmul.f32 %v1596, 0.2
          %v1661 = vmul.f32 %v1597, 0.2
          %v1662 = vsel %vm1598, %v1566, %v1630
          %v1663 = vsel %vm1599, %v1567, %v1631
          %v1664 = vsel %vm1600, %v1568, %v1632
          %v1665 = vsel %vm1601, %v1569, %v1633
          %v1666 = vsel %vm1602, %v1570, %v1634
          %v1667 = vsel %vm1603, %v1571, %v1635
          %v1668 = vsel %vm1604, %v1572, %v1636
          %v1669 = vsel %vm1605, %v1573, %v1637
          %v1670 = vsel %vm1606, %v1574, %v1638
          %v1671 = vsel %vm1607, %v1575, %v1639
          %v1672 = vsel %vm1608, %v1576, %v1640
          %v1673 = vsel %vm1609, %v1577, %v1641
          %v1674 = vsel %vm1610, %v1578, %v1642
          %v1675 = vsel %vm1611, %v1579, %v1643
          %v1676 = vsel %vm1612, %v1580, %v1644
          %v1677 = vsel %vm1613, %v1581, %v1645
          %v1678 = vsel %vm1614, %v1582, %v1646
          %v1679 = vsel %vm1615, %v1583, %v1647
          %v1680 = vsel %vm1616, %v1584, %v1648
          %v1681 = vsel %vm1617, %v1585, %v1649
          %v1682 = vsel %vm1618, %v1586, %v1650
          %v1683 = vsel %vm1619, %v1587, %v1651
          %v1684 = vsel %vm1620, %v1588, %v1652
          %v1685 = vsel %vm1621, %v1589, %v1653
          %v1686 = vsel %vm1622, %v1590, %v1654
          %v1687 = vsel %vm1623, %v1591, %v1655
          %v1688 = vsel %vm1624, %v1592, %v1656
          %v1689 = vsel %vm1625, %v1593, %v1657
          %v1690 = vsel %vm1626, %v1594, %v1658
          %v1691 = vsel %vm1627, %v1595, %v1659
          %v1692 = vsel %vm1628, %v1596, %v1660
          %v1693 = vsel %vm1629, %v1597, %v1661
          %v1694 = vpack.c.bf16 %v1663, %v1662
          %v1695 = vpack.c.bf16 %v1665, %v1664
          %v1696 = vpack.c.bf16 %v1667, %v1666
          %v1697 = vpack.c.bf16 %v1669, %v1668
          %v1698 = vpack.c.bf16 %v1671, %v1670
          %v1699 = vpack.c.bf16 %v1673, %v1672
          %v1700 = vpack.c.bf16 %v1675, %v1674
          %v1701 = vpack.c.bf16 %v1677, %v1676
          %v1702 = vpack.c.bf16 %v1679, %v1678
          %v1703 = vpack.c.bf16 %v1681, %v1680
          %v1704 = vpack.c.bf16 %v1683, %v1682
          %v1705 = vpack.c.bf16 %v1685, %v1684
          %v1706 = vpack.c.bf16 %v1687, %v1686
          %v1707 = vpack.c.bf16 %v1689, %v1688
          %v1708 = vpack.c.bf16 %v1691, %v1690
          %v1709 = vpack.c.bf16 %v1693, %v1692
          %1710 = vst [vmem:[%s2] sm:$0xff] %v1694
          %1711 = vst [vmem:[%s2 + $0x8] sm:$0xff] %v1695
          %1712 = vst [vmem:[%s2 + $0x10] sm:$0xff] %v1696
          %1713 = vst [vmem:[%s2 + $0x18] sm:$0xff] %v1697
          %1714 = vst [vmem:[%s2 + $0x20] sm:$0xff] %v1698
          %1715 = vst [vmem:[%s2 + $0x28] sm:$0xff] %v1699
          %1716 = vst [vmem:[%s2 + $0x30] sm:$0xff] %v1700
          %1717 = vst [vmem:[%s2 + $0x38] sm:$0xff] %v1701
          %1718 = vst [vmem:[%s2 + $0x40] sm:$0xff] %v1702
          %1719 = vst [vmem:[%s2 + $0x48] sm:$0xff] %v1703
          %1720 = vst [vmem:[%s2 + $0x50] sm:$0xff] %v1704
          %1721 = vst [vmem:[%s2 + $0x58] sm:$0xff] %v1705
          %1722 = vst [vmem:[%s2 + $0x60] sm:$0xff] %v1706
          %1723 = vst [vmem:[%s2 + $0x68] sm:$0xff] %v1707
          %1724 = vst [vmem:[%s2 + $0x70] sm:$0xff] %v1708
          %1725 = vst [vmem:[%s2 + $0x78] sm:$0xff] %v1709
        $region36: #{generator_forward.9} parent=27 // pred_fallthru
          _
        // Predicated region
        $region37: #{generator_forward.9} parent=27 // pred_check
          %p1726 = pneg %p81
        $region38: #{generator_forward.9} parent=27 // pred_check_branch
          %1728 = sbr.rel (%p1726) target = $region40
        $region39: #{generator_forward.9} parent=27 // pred_region
          _
        $region40: #{generator_forward.9} parent=27 // pred_fallthru
          _
        // Predicated region
        $region41: #{generator_forward.9} parent=27 // pred_check
          %p1729 = pneg %p81
        $region42: #{generator_forward.9} parent=27 // pred_check_branch
          %1731 = sbr.rel (%p1729) target = $region44
        $region43: #{generator_forward.9} parent=27 // pred_region
          _
        $region44: #{generator_forward.9} parent=27 // pred_fallthru
          _
      $region28: #{generator_forward.9} parent=5 // pred_fallthru
        _
      %p1732 = scmp.le.s32.totalorder 2, %s11
      // Predicated region
      $region45: #{generator_forward.9} parent=5 // pred_check
        %p1733 = pneg %p1732
      $region46: #{generator_forward.9} parent=5 // pred_check_branch
        %1735 = sbr.rel (%p1733) target = $region48
      $region47: #{generator_forward.9} parent=5 // pred_region
        %s1736 = ssub.s32 %s11, 2
      $region48: #{generator_forward.9} parent=5 // pred_fallthru
        _
    $region6: #{generator_forward.9} parent=1 // loop_footer
      %s15 = sadd.s32 1, %s11
    $region7: #{generator_forward.9} parent=1 // loop_footer_branch
      %10 = sbr.rel target = $region3
    $region8: #{generator_forward.9} parent=1 // loop_exit
      _
    %1737 = vsyncpa [#allocation4], 1
    %s1738 = scalar_lea.sflag [#allocation4], 1
    %1739 = vsyncpa %s1738, 1

// kernel: generator_forward.10
$region0: #{generator_forward.10}
  #allocation0 [shape = 'u32[]', space=smem, size = 0x4, offset = 0x4, fixed_abs, tag = 'smem constant byte address 0x4 - core index']
  #allocation1 [shape = 'u32[72,128]{1,0:T(1,128)}', space=vmem, size = 0x9000, scoped, tag = 'internal scratch']
  #allocation2 [shape = 'f32[4,128,128]{2,1,0:T(8,128)}', space=vmem, size = 0x40000, scoped, tag = 'scratch operand']
  %s0 = inlined_call_operand.vmem [shape: bf16[4,128,1024], index: 0, kind: input, shape index: {}]
  %s1 = inlined_call_operand.vmem [shape: bf16[4,1024,128], index: 1, kind: input, shape index: {}]
  %s2 = inlined_call_operand.vmem [shape: bf16[4,128,128], index: 2, kind: output, shape index: {}]
  %s3 = sld [smem:[#allocation0]]
  $region45: #{generator_forward.10} parent=0
    _
  %s5 = ssub.s32 1, %s3
  %s6 = scalar_select 0, %s5, %s3
  loop: start=0, step=1, limit=6
  $region2: #{generator_forward.10} parent=0 // loop_pre_header
    _
  $region3: #{generator_forward.10} parent=0 // loop_header
    %s8 = sphi 0, %s12
    %p9 = scmp.ge.s32.totalorder %s8, 6
    %s18 = sphi 0, %s20
    %s21 = sphi 0, %s18
    %s22 = sphi 0, %s21
    %s38 = sphi 0, %s22
    %s44 = sphi 0, %s46
    %s47 = sphi 0, %s44
    %s48 = sphi 0, %s47
    %s64 = sphi 0, %s48
    %s68 = sphi 0, %s68
    %s70 = sphi 0, %s68
    %s71 = sphi 0, %s70
    %s85 = sphi 0, %s71
  $region4: #{generator_forward.10} parent=0 // loop_header_branch
    %11 = sbr.rel (%p9) target = $region8
  $region5: #{generator_forward.10} parent=0 // loop_body
    %s13 = ssub.s32 %s8, 1
    %s14 = ssub.s32 %s8, 2
    %s15 = sadd.s32 %s8, 1
    %s16 = ssub.s32 %s8, %s15
    %p17 = scmp.eq.s32.totalorder %s16, 0
    %s19 = sadd.s32 %s18, 1
    %s20 = scalar_select %p17, %s18, %s19
    %p23 = pneg %p17
    %p24 = scmp.eq.s32.totalorder %s8, 3
    %p25 = por %p23, %p24
    %p26 = scmp.ne.s32.totalorder %s18, %s21
    %p27 = scmp.eq.s32.totalorder %s8, 0
    %p28 = por %p26, %p27
    %p29 = scmp.ne.s32.totalorder %s18, %s21
    %p30 = scmp.eq.s32.totalorder %s13, 3
    %p31 = por %p29, %p30
    %p32 = scmp.ne.s32.totalorder %s21, %s22
    %p33 = scmp.eq.s32.totalorder %s13, 0
    %p34 = por %p32, %p33
    %p35 = scmp.ne.s32.totalorder %s21, %s22
    %p36 = scmp.eq.s32.totalorder %s14, 3
    %p37 = por %p35, %p36
    %p39 = scmp.ne.s32.totalorder %s22, %s38
    %p40 = scmp.eq.s32.totalorder %s14, 0
    %p41 = por %p39, %p40
    %s42 = ssub.s32 %s8, %s15
    %p43 = scmp.eq.s32.totalorder %s42, 0
    %s45 = sadd.s32 %s44, 1
    %s46 = scalar_select %p43, %s44, %s45
    %p49 = pneg %p43
    %p50 = scmp.eq.s32.totalorder %s8, 3
    %p51 = por %p49, %p50
    %p52 = scmp.ne.s32.totalorder %s44, %s47
    %p53 = scmp.eq.s32.totalorder %s8, 0
    %p54 = por %p52, %p53
    %p55 = scmp.ne.s32.totalorder %s44, %s47
    %p56 = scmp.eq.s32.totalorder %s13, 3
    %p57 = por %p55, %p56
    %p58 = scmp.ne.s32.totalorder %s47, %s48
    %p59 = scmp.eq.s32.totalorder %s13, 0
    %p60 = por %p58, %p59
    %p61 = scmp.ne.s32.totalorder %s47, %s48
    %p62 = scmp.eq.s32.totalorder %s14, 3
    %p63 = por %p61, %p62
    %p65 = scmp.ne.s32.totalorder %s48, %s64
    %p66 = scmp.eq.s32.totalorder %s14, 0
    %p67 = por %p65, %p66
    %s69 = sadd.s32 %s68, 1
    %p72 = scmp.eq.s32.totalorder %s8, 3
    %p73 = scmp.ne.s32.totalorder %s68, %s70
    %p74 = scmp.eq.s32.totalorder %s8, 0
    %p75 = por %p73, %p74
    %p76 = scmp.ne.s32.totalorder %s68, %s70
    %p77 = scmp.eq.s32.totalorder %s13, 3
    %p78 = por %p76, %p77
    %p79 = scmp.ne.s32.totalorder %s70, %s71
    %p80 = scmp.eq.s32.totalorder %s13, 0
    %p81 = por %p79, %p80
    %p82 = scmp.ne.s32.totalorder %s70, %s71
    %p83 = scmp.eq.s32.totalorder %s14, 3
    %p84 = por %p82, %p83
    %p86 = scmp.ne.s32.totalorder %s71, %s85
    %p87 = scmp.eq.s32.totalorder %s14, 0
    %p88 = por %p86, %p87
    %p89 = scmp.le.s32.totalorder 1, %s8
    %p90 = scmp.lt.s32.totalorder %s8, 5
    %p91 = pnand %p89, %p90
    %p92 = pneg %p91
    // Predicated region
    $region9: #{generator_forward.10} parent=5 // pred_check
      _
    $region10: #{generator_forward.10} parent=5 // pred_check_branch
      %94 = sbr.rel (%p91) target = $region12
    $region11: #{generator_forward.10} parent=5 // pred_region
      %s95 = ssub.s32 %s8, 1
    $region12: #{generator_forward.10} parent=5 // pred_fallthru
      _
    %p96 = scmp.lt.s32.totalorder %s8, 4
    // Predicated region
    $region13: #{generator_forward.10} parent=5 // pred_check
      %p97 = pneg %p96
    $region14: #{generator_forward.10} parent=5 // pred_check_branch
      %99 = sbr.rel (%p97) target = $region16
    $region15: #{generator_forward.10} parent=5 // pred_region
      // Predicated region
      $region17: #{generator_forward.10} parent=15 // pred_check
        %p100 = pneg %p28
      $region18: #{generator_forward.10} parent=15 // pred_check_branch
        %102 = sbr.rel (%p100) target = $region20
      $region19: #{generator_forward.10} parent=15 // pred_region
        %p103 = scmp.lt.s32.totalorder %s8, 3
        %s104 = scalar_select %p103, %s8, 3
        %s105 = smul.addr %s104, 128
        %s106 = smul.addr %s105, 4
        %s107 = scalar_lea.vmem %s0, %s106
      $region20: #{generator_forward.10} parent=15 // pred_fallthru
        _
      // Predicated region
      $region21: #{generator_forward.10} parent=15 // pred_check
        %p108 = pneg %p54
      $region22: #{generator_forward.10} parent=15 // pred_check_branch
        %110 = sbr.rel (%p108) target = $region24
      $region23: #{generator_forward.10} parent=15 // pred_region
        %p111 = scmp.lt.s32.totalorder %s8, 3
        %s112 = scalar_select %p111, %s8, 3
        %s113 = smul.addr %s112, 128
        %s114 = smul.addr %s113, 4
        %s115 = scalar_lea.vmem %s1, %s114
      $region24: #{generator_forward.10} parent=15 // pred_fallthru
        _
    $region16: #{generator_forward.10} parent=5 // pred_fallthru
      _
    %p116 = scmp.le.s32.totalorder 1, %s8
    %p117 = scmp.lt.s32.totalorder %s8, 5
    %p118 = pnand %p116, %p117
    %p119 = pneg %p118
    // Predicated region
    $region25: #{generator_forward.10} parent=5 // pred_check
      _
    $region26: #{generator_forward.10} parent=5 // pred_check_branch
      %121 = sbr.rel (%p118) target = $region28
    $region27: #{generator_forward.10} parent=5 // pred_region
      %s122 = ssub.s32 %s8, 1
      %p123 = scmp.lt.s32.totalorder %s13, 3
      %s124 = scalar_select %p123, %s13, 3
      %s125 = smul.addr %s124, 128
      %s126 = smul.addr %s125, 4
      %s127 = scalar_lea.vmem %s0, %s126
      %p128 = pneg %p34
      %p129 = pneg %p31
      %p130 = scmp.lt.s32.totalorder %s13, 3
      %s131 = scalar_select %p130, %s13, 3
      %s132 = smul.addr %s131, 128
      %s133 = smul.addr %s132, 4
      %s134 = scalar_lea.vmem %s1, %s133
      %p135 = pneg %p60
      %p136 = pneg %p57
      %p137 = pneg %p81
      %p138 = pneg %p78
      %p139 = scmp.lt.s32.totalorder %s13, 3
      %s140 = scalar_select %p139, %s13, 3
      %s141 = smul.addr %s140, 128
      %s142 = smul.addr %s141, 4
      %s143 = scalar_lea.vmem %s0, %s142
      %p144 = scmp.lt.s32.totalorder %s13, 3
      %s145 = scalar_select %p144, %s13, 3
      %s146 = smul.addr %s145, 128
      %s147 = smul.addr %s146, 4
      %s148 = scalar_lea.vmem %s1, %s147
      %v149 = vld [vmem:[%s143] sm:$0xff]
      %v150 = vld [vmem:[%s143 + $0x8] sm:$0xff]
      %v151 = vld [vmem:[%s143 + $0x10] sm:$0xff]
      %v152 = vld [vmem:[%s143 + $0x18] sm:$0xff]
      %v153 = vld [vmem:[%s143 + $0x20] sm:$0xff]
      %v154 = vld [vmem:[%s143 + $0x28] sm:$0xff]
      %v155 = vld [vmem:[%s143 + $0x30] sm:$0xff]
      %v156 = vld [vmem:[%s143 + $0x38] sm:$0xff]
      %v157 = vld [vmem:[%s143 + $0x40] sm:$0xff]
      %v158 = vld [vmem:[%s143 + $0x48] sm:$0xff]
      %v159 = vld [vmem:[%s143 + $0x50] sm:$0xff]
      %v160 = vld [vmem:[%s143 + $0x58] sm:$0xff]
      %v161 = vld [vmem:[%s143 + $0x60] sm:$0xff]
      %v162 = vld [vmem:[%s143 + $0x68] sm:$0xff]
      %v163 = vld [vmem:[%s143 + $0x70] sm:$0xff]
      %v164 = vld [vmem:[%s143 + $0x78] sm:$0xff]
      %v165 = vld [vmem:[%s143 + $0x80] sm:$0xff]
      %v166 = vld [vmem:[%s143 + $0x88] sm:$0xff]
      %v167 = vld [vmem:[%s143 + $0x90] sm:$0xff]
      %v168 = vld [vmem:[%s143 + $0x98] sm:$0xff]
      %v169 = vld [vmem:[%s143 + $0xa0] sm:$0xff]
      %v170 = vld [vmem:[%s143 + $0xa8] sm:$0xff]
      %v171 = vld [vmem:[%s143 + $0xb0] sm:$0xff]
      %v172 = vld [vmem:[%s143 + $0xb8] sm:$0xff]
      %v173 = vld [vmem:[%s143 + $0xc0] sm:$0xff]
      %v174 = vld [vmem:[%s143 + $0xc8] sm:$0xff]
      %v175 = vld [vmem:[%s143 + $0xd0] sm:$0xff]
      %v176 = vld [vmem:[%s143 + $0xd8] sm:$0xff]
      %v177 = vld [vmem:[%s143 + $0xe0] sm:$0xff]
      %v178 = vld [vmem:[%s143 + $0xe8] sm:$0xff]
      %v179 = vld [vmem:[%s143 + $0xf0] sm:$0xff]
      %v180 = vld [vmem:[%s143 + $0xf8] sm:$0xff]
      %v181 = vld [vmem:[%s143 + $0x100] sm:$0xff]
      %v182 = vld [vmem:[%s143 + $0x108] sm:$0xff]
      %v183 = vld [vmem:[%s143 + $0x110] sm:$0xff]
      %v184 = vld [vmem:[%s143 + $0x118] sm:$0xff]
      %v185 = vld [vmem:[%s143 + $0x120] sm:$0xff]
      %v186 = vld [vmem:[%s143 + $0x128] sm:$0xff]
      %v187 = vld [vmem:[%s143 + $0x130] sm:$0xff]
      %v188 = vld [vmem:[%s143 + $0x138] sm:$0xff]
      %v189 = vld [vmem:[%s143 + $0x140] sm:$0xff]
      %v190 = vld [vmem:[%s143 + $0x148] sm:$0xff]
      %v191 = vld [vmem:[%s143 + $0x150] sm:$0xff]
      %v192 = vld [vmem:[%s143 + $0x158] sm:$0xff]
      %v193 = vld [vmem:[%s143 + $0x160] sm:$0xff]
      %v194 = vld [vmem:[%s143 + $0x168] sm:$0xff]
      %v195 = vld [vmem:[%s143 + $0x170] sm:$0xff]
      %v196 = vld [vmem:[%s143 + $0x178] sm:$0xff]
      %v197 = vld [vmem:[%s143 + $0x180] sm:$0xff]
      %v198 = vld [vmem:[%s143 + $0x188] sm:$0xff]
      %v199 = vld [vmem:[%s143 + $0x190] sm:$0xff]
      %v200 = vld [vmem:[%s143 + $0x198] sm:$0xff]
      %v201 = vld [vmem:[%s143 + $0x1a0] sm:$0xff]
      %v202 = vld [vmem:[%s143 + $0x1a8] sm:$0xff]
      %v203 = vld [vmem:[%s143 + $0x1b0] sm:$0xff]
      %v204 = vld [vmem:[%s143 + $0x1b8] sm:$0xff]
      %v205 = vld [vmem:[%s143 + $0x1c0] sm:$0xff]
      %v206 = vld [vmem:[%s143 + $0x1c8] sm:$0xff]
      %v207 = vld [vmem:[%s143 + $0x1d0] sm:$0xff]
      %v208 = vld [vmem:[%s143 + $0x1d8] sm:$0xff]
      %v209 = vld [vmem:[%s143 + $0x1e0] sm:$0xff]
      %v210 = vld [vmem:[%s143 + $0x1e8] sm:$0xff]
      %v211 = vld [vmem:[%s143 + $0x1f0] sm:$0xff]
      %v212 = vld [vmem:[%s143 + $0x1f8] sm:$0xff]
      %v213 = vld [vmem:[%s148] sm:$0xf]
      %v214 = vld [vmem:[%s148 + $0x4] sm:$0xf]
      %v215 = vld [vmem:[%s148 + $0x8] sm:$0xf]
      %v216 = vld [vmem:[%s148 + $0xc] sm:$0xf]
      %v217 = vld [vmem:[%s148 + $0x10] sm:$0xf]
      %v218 = vld [vmem:[%s148 + $0x14] sm:$0xf]
      %v219 = vld [vmem:[%s148 + $0x18] sm:$0xf]
      %v220 = vld [vmem:[%s148 + $0x1c] sm:$0xf]
      %v221 = vld [vmem:[%s148 + $0x20] sm:$0xf]
      %v222 = vld [vmem:[%s148 + $0x24] sm:$0xf]
      %v223 = vld [vmem:[%s148 + $0x28] sm:$0xf]
      %v224 = vld [vmem:[%s148 + $0x2c] sm:$0xf]
      %v225 = vld [vmem:[%s148 + $0x30] sm:$0xf]
      %v226 = vld [vmem:[%s148 + $0x34] sm:$0xf]
      %v227 = vld [vmem:[%s148 + $0x38] sm:$0xf]
      %v228 = vld [vmem:[%s148 + $0x3c] sm:$0xf]
      %v229 = vld [vmem:[%s148 + $0x40] sm:$0xf]
      %v230 = vld [vmem:[%s148 + $0x44] sm:$0xf]
      %v231 = vld [vmem:[%s148 + $0x48] sm:$0xf]
      %v232 = vld [vmem:[%s148 + $0x4c] sm:$0xf]
      %v233 = vld [vmem:[%s148 + $0x50] sm:$0xf]
      %v234 = vld [vmem:[%s148 + $0x54] sm:$0xf]
      %v235 = vld [vmem:[%s148 + $0x58] sm:$0xf]
      %v236 = vld [vmem:[%s148 + $0x5c] sm:$0xf]
      %v237 = vld [vmem:[%s148 + $0x60] sm:$0xf]
      %v238 = vld [vmem:[%s148 + $0x64] sm:$0xf]
      %v239 = vld [vmem:[%s148 + $0x68] sm:$0xf]
      %v240 = vld [vmem:[%s148 + $0x6c] sm:$0xf]
      %v241 = vld [vmem:[%s148 + $0x70] sm:$0xf]
      %v242 = vld [vmem:[%s148 + $0x74] sm:$0xf]
      %v243 = vld [vmem:[%s148 + $0x78] sm:$0xf]
      %v244 = vld [vmem:[%s148 + $0x7c] sm:$0xf]
      %v245 = vld [vmem:[%s148 + $0x80] sm:$0xf]
      %v246 = vld [vmem:[%s148 + $0x84] sm:$0xf]
      %v247 = vld [vmem:[%s148 + $0x88] sm:$0xf]
      %v248 = vld [vmem:[%s148 + $0x8c] sm:$0xf]
      %v249 = vld [vmem:[%s148 + $0x90] sm:$0xf]
      %v250 = vld [vmem:[%s148 + $0x94] sm:$0xf]
      %v251 = vld [vmem:[%s148 + $0x98] sm:$0xf]
      %v252 = vld [vmem:[%s148 + $0x9c] sm:$0xf]
      %v253 = vld [vmem:[%s148 + $0xa0] sm:$0xf]
      %v254 = vld [vmem:[%s148 + $0xa4] sm:$0xf]
      %v255 = vld [vmem:[%s148 + $0xa8] sm:$0xf]
      %v256 = vld [vmem:[%s148 + $0xac] sm:$0xf]
      %v257 = vld [vmem:[%s148 + $0xb0] sm:$0xf]
      %v258 = vld [vmem:[%s148 + $0xb4] sm:$0xf]
      %v259 = vld [vmem:[%s148 + $0xb8] sm:$0xf]
      %v260 = vld [vmem:[%s148 + $0xbc] sm:$0xf]
      %v261 = vld [vmem:[%s148 + $0xc0] sm:$0xf]
      %v262 = vld [vmem:[%s148 + $0xc4] sm:$0xf]
      %v263 = vld [vmem:[%s148 + $0xc8] sm:$0xf]
      %v264 = vld [vmem:[%s148 + $0xcc] sm:$0xf]
      %v265 = vld [vmem:[%s148 + $0xd0] sm:$0xf]
      %v266 = vld [vmem:[%s148 + $0xd4] sm:$0xf]
      %v267 = vld [vmem:[%s148 + $0xd8] sm:$0xf]
      %v268 = vld [vmem:[%s148 + $0xdc] sm:$0xf]
      %v269 = vld [vmem:[%s148 + $0xe0] sm:$0xf]
      %v270 = vld [vmem:[%s148 + $0xe4] sm:$0xf]
      %v271 = vld [vmem:[%s148 + $0xe8] sm:$0xf]
      %v272 = vld [vmem:[%s148 + $0xec] sm:$0xf]
      %v273 = vld [vmem:[%s148 + $0xf0] sm:$0xf]
      %v274 = vld [vmem:[%s148 + $0xf4] sm:$0xf]
      %v275 = vld [vmem:[%s148 + $0xf8] sm:$0xf]
      %v276 = vld [vmem:[%s148 + $0xfc] sm:$0xf]
      %v277 = vld [vmem:[%s148 + $0x100] sm:$0xf]
      %v278 = vld [vmem:[%s148 + $0x104] sm:$0xf]
      %v279 = vld [vmem:[%s148 + $0x108] sm:$0xf]
      %v280 = vld [vmem:[%s148 + $0x10c] sm:$0xf]
      %v281 = vld [vmem:[%s148 + $0x110] sm:$0xf]
      %v282 = vld [vmem:[%s148 + $0x114] sm:$0xf]
      %v283 = vld [vmem:[%s148 + $0x118] sm:$0xf]
      %v284 = vld [vmem:[%s148 + $0x11c] sm:$0xf]
      %v285 = vld [vmem:[%s148 + $0x120] sm:$0xf]
      %v286 = vld [vmem:[%s148 + $0x124] sm:$0xf]
      %v287 = vld [vmem:[%s148 + $0x128] sm:$0xf]
      %v288 = vld [vmem:[%s148 + $0x12c] sm:$0xf]
      %v289 = vld [vmem:[%s148 + $0x130] sm:$0xf]
      %v290 = vld [vmem:[%s148 + $0x134] sm:$0xf]
      %v291 = vld [vmem:[%s148 + $0x138] sm:$0xf]
      %v292 = vld [vmem:[%s148 + $0x13c] sm:$0xf]
      %v293 = vld [vmem:[%s148 + $0x140] sm:$0xf]
      %v294 = vld [vmem:[%s148 + $0x144] sm:$0xf]
      %v295 = vld [vmem:[%s148 + $0x148] sm:$0xf]
      %v296 = vld [vmem:[%s148 + $0x14c] sm:$0xf]
      %v297 = vld [vmem:[%s148 + $0x150] sm:$0xf]
      %v298 = vld [vmem:[%s148 + $0x154] sm:$0xf]
      %v299 = vld [vmem:[%s148 + $0x158] sm:$0xf]
      %v300 = vld [vmem:[%s148 + $0x15c] sm:$0xf]
      %v301 = vld [vmem:[%s148 + $0x160] sm:$0xf]
      %v302 = vld [vmem:[%s148 + $0x164] sm:$0xf]
      %v303 = vld [vmem:[%s148 + $0x168] sm:$0xf]
      %v304 = vld [vmem:[%s148 + $0x16c] sm:$0xf]
      %v305 = vld [vmem:[%s148 + $0x170] sm:$0xf]
      %v306 = vld [vmem:[%s148 + $0x174] sm:$0xf]
      %v307 = vld [vmem:[%s148 + $0x178] sm:$0xf]
      %v308 = vld [vmem:[%s148 + $0x17c] sm:$0xf]
      %v309 = vld [vmem:[%s148 + $0x180] sm:$0xf]
      %v310 = vld [vmem:[%s148 + $0x184] sm:$0xf]
      %v311 = vld [vmem:[%s148 + $0x188] sm:$0xf]
      %v312 = vld [vmem:[%s148 + $0x18c] sm:$0xf]
      %v313 = vld [vmem:[%s148 + $0x190] sm:$0xf]
      %v314 = vld [vmem:[%s148 + $0x194] sm:$0xf]
      %v315 = vld [vmem:[%s148 + $0x198] sm:$0xf]
      %v316 = vld [vmem:[%s148 + $0x19c] sm:$0xf]
      %v317 = vld [vmem:[%s148 + $0x1a0] sm:$0xf]
      %v318 = vld [vmem:[%s148 + $0x1a4] sm:$0xf]
      %v319 = vld [vmem:[%s148 + $0x1a8] sm:$0xf]
      %v320 = vld [vmem:[%s148 + $0x1ac] sm:$0xf]
      %v321 = vld [vmem:[%s148 + $0x1b0] sm:$0xf]
      %v322 = vld [vmem:[%s148 + $0x1b4] sm:$0xf]
      %v323 = vld [vmem:[%s148 + $0x1b8] sm:$0xf]
      %v324 = vld [vmem:[%s148 + $0x1bc] sm:$0xf]
      %v325 = vld [vmem:[%s148 + $0x1c0] sm:$0xf]
      %v326 = vld [vmem:[%s148 + $0x1c4] sm:$0xf]
      %v327 = vld [vmem:[%s148 + $0x1c8] sm:$0xf]
      %v328 = vld [vmem:[%s148 + $0x1cc] sm:$0xf]
      %v329 = vld [vmem:[%s148 + $0x1d0] sm:$0xf]
      %v330 = vld [vmem:[%s148 + $0x1d4] sm:$0xf]
      %v331 = vld [vmem:[%s148 + $0x1d8] sm:$0xf]
      %v332 = vld [vmem:[%s148 + $0x1dc] sm:$0xf]
      %v333 = vld [vmem:[%s148 + $0x1e0] sm:$0xf]
      %v334 = vld [vmem:[%s148 + $0x1e4] sm:$0xf]
      %v335 = vld [vmem:[%s148 + $0x1e8] sm:$0xf]
      %v336 = vld [vmem:[%s148 + $0x1ec] sm:$0xf]
      %v337 = vld [vmem:[%s148 + $0x1f0] sm:$0xf]
      %v338 = vld [vmem:[%s148 + $0x1f4] sm:$0xf]
      %v339 = vld [vmem:[%s148 + $0x1f8] sm:$0xf]
      %v340 = vld [vmem:[%s148 + $0x1fc] sm:$0xf]
      %v405 = vunpack.c.l.b16 %v149
      %v406 = vunpack.c.h.b16 %v149
      %v407 = vunpack.c.l.b16 %v150
      %v408 = vunpack.c.h.b16 %v150
      %v409 = vunpack.c.l.b16 %v151
      %v410 = vunpack.c.h.b16 %v151
      %v411 = vunpack.c.l.b16 %v152
      %v412 = vunpack.c.h.b16 %v152
      %v413 = vunpack.c.l.b16 %v153
      %v414 = vunpack.c.h.b16 %v153
      %v415 = vunpack.c.l.b16 %v154
      %v416 = vunpack.c.h.b16 %v154
      %v417 = vunpack.c.l.b16 %v155
      %v418 = vunpack.c.h.b16 %v155
      %v419 = vunpack.c.l.b16 %v156
      %v420 = vunpack.c.h.b16 %v156
      %v421 = vunpack.c.l.b16 %v157
      %v422 = vunpack.c.h.b16 %v157
      %v423 = vunpack.c.l.b16 %v158
      %v424 = vunpack.c.h.b16 %v158
      %v425 = vunpack.c.l.b16 %v159
      %v426 = vunpack.c.h.b16 %v159
      %v427 = vunpack.c.l.b16 %v160
      %v428 = vunpack.c.h.b16 %v160
      %v429 = vunpack.c.l.b16 %v161
      %v430 = vunpack.c.h.b16 %v161
      %v431 = vunpack.c.l.b16 %v162
      %v432 = vunpack.c.h.b16 %v162
      %v433 = vunpack.c.l.b16 %v163
      %v434 = vunpack.c.h.b16 %v163
      %v435 = vunpack.c.l.b16 %v164
      %v436 = vunpack.c.h.b16 %v164
      %v437 = vunpack.c.l.b16 %v165
      %v438 = vunpack.c.h.b16 %v165
      %v439 = vunpack.c.l.b16 %v166
      %v440 = vunpack.c.h.b16 %v166
      %v441 = vunpack.c.l.b16 %v167
      %v442 = vunpack.c.h.b16 %v167
      %v443 = vunpack.c.l.b16 %v168
      %v444 = vunpack.c.h.b16 %v168
      %v445 = vunpack.c.l.b16 %v169
      %v446 = vunpack.c.h.b16 %v169
      %v447 = vunpack.c.l.b16 %v170
      %v448 = vunpack.c.h.b16 %v170
      %v449 = vunpack.c.l.b16 %v171
      %v450 = vunpack.c.h.b16 %v171
      %v451 = vunpack.c.l.b16 %v172
      %v452 = vunpack.c.h.b16 %v172
      %v453 = vunpack.c.l.b16 %v173
      %v454 = vunpack.c.h.b16 %v173
      %v455 = vunpack.c.l.b16 %v174
      %v456 = vunpack.c.h.b16 %v174
      %v457 = vunpack.c.l.b16 %v175
      %v458 = vunpack.c.h.b16 %v175
      %v459 = vunpack.c.l.b16 %v176
      %v460 = vunpack.c.h.b16 %v176
      %v461 = vunpack.c.l.b16 %v177
      %v462 = vunpack.c.h.b16 %v177
      %v463 = vunpack.c.l.b16 %v178
      %v464 = vunpack.c.h.b16 %v178
      %v465 = vunpack.c.l.b16 %v179
      %v466 = vunpack.c.h.b16 %v179
      %v467 = vunpack.c.l.b16 %v180
      %v468 = vunpack.c.h.b16 %v180
      %v469 = vunpack.c.l.b16 %v181
      %v470 = vunpack.c.h.b16 %v181
      %v471 = vunpack.c.l.b16 %v182
      %v472 = vunpack.c.h.b16 %v182
      %v473 = vunpack.c.l.b16 %v183
      %v474 = vunpack.c.h.b16 %v183
      %v475 = vunpack.c.l.b16 %v184
      %v476 = vunpack.c.h.b16 %v184
      %v477 = vunpack.c.l.b16 %v185
      %v478 = vunpack.c.h.b16 %v185
      %v479 = vunpack.c.l.b16 %v186
      %v480 = vunpack.c.h.b16 %v186
      %v481 = vunpack.c.l.b16 %v187
      %v482 = vunpack.c.h.b16 %v187
      %v483 = vunpack.c.l.b16 %v188
      %v484 = vunpack.c.h.b16 %v188
      %v485 = vunpack.c.l.b16 %v189
      %v486 = vunpack.c.h.b16 %v189
      %v487 = vunpack.c.l.b16 %v190
      %v488 = vunpack.c.h.b16 %v190
      %v489 = vunpack.c.l.b16 %v191
      %v490 = vunpack.c.h.b16 %v191
      %v491 = vunpack.c.l.b16 %v192
      %v492 = vunpack.c.h.b16 %v192
      %v493 = vunpack.c.l.b16 %v193
      %v494 = vunpack.c.h.b16 %v193
      %v495 = vunpack.c.l.b16 %v194
      %v496 = vunpack.c.h.b16 %v194
      %v497 = vunpack.c.l.b16 %v195
      %v498 = vunpack.c.h.b16 %v195
      %v499 = vunpack.c.l.b16 %v196
      %v500 = vunpack.c.h.b16 %v196
      %v501 = vunpack.c.l.b16 %v197
      %v502 = vunpack.c.h.b16 %v197
      %v503 = vunpack.c.l.b16 %v198
      %v504 = vunpack.c.h.b16 %v198
      %v505 = vunpack.c.l.b16 %v199
      %v506 = vunpack.c.h.b16 %v199
      %v507 = vunpack.c.l.b16 %v200
      %v508 = vunpack.c.h.b16 %v200
      %v509 = vunpack.c.l.b16 %v201
      %v510 = vunpack.c.h.b16 %v201
      %v511 = vunpack.c.l.b16 %v202
      %v512 = vunpack.c.h.b16 %v202
      %v513 = vunpack.c.l.b16 %v203
      %v514 = vunpack.c.h.b16 %v203
      %v515 = vunpack.c.l.b16 %v204
      %v516 = vunpack.c.h.b16 %v204
      %v517 = vunpack.c.l.b16 %v205
      %v518 = vunpack.c.h.b16 %v205
      %v519 = vunpack.c.l.b16 %v206
      %v520 = vunpack.c.h.b16 %v206
      %v521 = vunpack.c.l.b16 %v207
      %v522 = vunpack.c.h.b16 %v207
      %v523 = vunpack.c.l.b16 %v208
      %v524 = vunpack.c.h.b16 %v208
      %v525 = vunpack.c.l.b16 %v209
      %v526 = vunpack.c.h.b16 %v209
      %v527 = vunpack.c.l.b16 %v210
      %v528 = vunpack.c.h.b16 %v210
      %v529 = vunpack.c.l.b16 %v211
      %v530 = vunpack.c.h.b16 %v211
      %v531 = vunpack.c.l.b16 %v212
      %v532 = vunpack.c.h.b16 %v212
      %v533 = vpack.c.b16 %v413, %v405
      %v534 = vpack.c.b16 %v414, %v406
      %v535 = vpack.c.b16 %v415, %v407
      %v536 = vpack.c.b16 %v416, %v408
      %v537 = vpack.c.b16 %v417, %v409
      %v538 = vpack.c.b16 %v418, %v410
      %v539 = vpack.c.b16 %v419, %v411
      %v540 = vpack.c.b16 %v420, %v412
      %v541 = vpack.c.b16 %v429, %v421
      %v542 = vpack.c.b16 %v430, %v422
      %v543 = vpack.c.b16 %v431, %v423
      %v544 = vpack.c.b16 %v432, %v424
      %v545 = vpack.c.b16 %v433, %v425
      %v546 = vpack.c.b16 %v434, %v426
      %v547 = vpack.c.b16 %v435, %v427
      %v548 = vpack.c.b16 %v436, %v428
      %v549 = vpack.c.b16 %v445, %v437
      %v550 = vpack.c.b16 %v446, %v438
      %v551 = vpack.c.b16 %v447, %v439
      %v552 = vpack.c.b16 %v448, %v440
      %v553 = vpack.c.b16 %v449, %v441
      %v554 = vpack.c.b16 %v450, %v442
      %v555 = vpack.c.b16 %v451, %v443
      %v556 = vpack.c.b16 %v452, %v444
      %v557 = vpack.c.b16 %v461, %v453
      %v558 = vpack.c.b16 %v462, %v454
      %v559 = vpack.c.b16 %v463, %v455
      %v560 = vpack.c.b16 %v464, %v456
      %v561 = vpack.c.b16 %v465, %v457
      %v562 = vpack.c.b16 %v466, %v458
      %v563 = vpack.c.b16 %v467, %v459
      %v564 = vpack.c.b16 %v468, %v460
      %v565 = vpack.c.b16 %v477, %v469
      %v566 = vpack.c.b16 %v478, %v470
      %v567 = vpack.c.b16 %v479, %v471
      %v568 = vpack.c.b16 %v480, %v472
      %v569 = vpack.c.b16 %v481, %v473
      %v570 = vpack.c.b16 %v482, %v474
      %v571 = vpack.c.b16 %v483, %v475
      %v572 = vpack.c.b16 %v484, %v476
      %v573 = vpack.c.b16 %v493, %v485
      %v574 = vpack.c.b16 %v494, %v486
      %v575 = vpack.c.b16 %v495, %v487
      %v576 = vpack.c.b16 %v496, %v488
      %v577 = vpack.c.b16 %v497, %v489
      %v578 = vpack.c.b16 %v498, %v490
      %v579 = vpack.c.b16 %v499, %v491
      %v580 = vpack.c.b16 %v500, %v492
      %v581 = vpack.c.b16 %v509, %v501
      %v582 = vpack.c.b16 %v510, %v502
      %v583 = vpack.c.b16 %v511, %v503
      %v584 = vpack.c.b16 %v512, %v504
      %v585 = vpack.c.b16 %v513, %v505
      %v586 = vpack.c.b16 %v514, %v506
      %v587 = vpack.c.b16 %v515, %v507
      %v588 = vpack.c.b16 %v516, %v508
      %v589 = vpack.c.b16 %v525, %v517
      %v590 = vpack.c.b16 %v526, %v518
      %v591 = vpack.c.b16 %v527, %v519
      %v592 = vpack.c.b16 %v528, %v520
      %v593 = vpack.c.b16 %v529, %v521
      %v594 = vpack.c.b16 %v530, %v522
      %v595 = vpack.c.b16 %v531, %v523
      %v596 = vpack.c.b16 %v532, %v524
      %v789 = vunpack.c.l.b16 %v213
      %v790 = vunpack.c.l.b16 %v214
      %v791 = vunpack.c.l.b16 %v215
      %v792 = vunpack.c.l.b16 %v216
      %v793 = vunpack.c.l.b16 %v217
      %v794 = vunpack.c.l.b16 %v218
      %v795 = vunpack.c.l.b16 %v219
      %v796 = vunpack.c.l.b16 %v220
      %v797 = vunpack.c.l.b16 %v221
      %v798 = vunpack.c.l.b16 %v222
      %v799 = vunpack.c.l.b16 %v223
      %v800 = vunpack.c.l.b16 %v224
      %v801 = vunpack.c.l.b16 %v225
      %v802 = vunpack.c.l.b16 %v226
      %v803 = vunpack.c.l.b16 %v227
      %v804 = vunpack.c.l.b16 %v228
      %v805 = vunpack.c.l.b16 %v229
      %v806 = vunpack.c.l.b16 %v230
      %v807 = vunpack.c.l.b16 %v231
      %v808 = vunpack.c.l.b16 %v232
      %v809 = vunpack.c.l.b16 %v233
      %v810 = vunpack.c.l.b16 %v234
      %v811 = vunpack.c.l.b16 %v235
      %v812 = vunpack.c.l.b16 %v236
      %v813 = vunpack.c.l.b16 %v237
      %v814 = vunpack.c.l.b16 %v238
      %v815 = vunpack.c.l.b16 %v239
      %v816 = vunpack.c.l.b16 %v240
      %v817 = vunpack.c.l.b16 %v241
      %v818 = vunpack.c.l.b16 %v242
      %v819 = vunpack.c.l.b16 %v243
      %v820 = vunpack.c.l.b16 %v244
      %v821 = vunpack.c.l.b16 %v245
      %v822 = vunpack.c.l.b16 %v246
      %v823 = vunpack.c.l.b16 %v247
      %v824 = vunpack.c.l.b16 %v248
      %v825 = vunpack.c.l.b16 %v249
      %v826 = vunpack.c.l.b16 %v250
      %v827 = vunpack.c.l.b16 %v251
      %v828 = vunpack.c.l.b16 %v252
      %v829 = vunpack.c.l.b16 %v253
      %v830 = vunpack.c.l.b16 %v254
      %v831 = vunpack.c.l.b16 %v255
      %v832 = vunpack.c.l.b16 %v256
      %v833 = vunpack.c.l.b16 %v257
      %v834 = vunpack.c.l.b16 %v258
      %v835 = vunpack.c.l.b16 %v259
      %v836 = vunpack.c.l.b16 %v260
      %v837 = vunpack.c.l.b16 %v261
      %v838 = vunpack.c.l.b16 %v262
      %v839 = vunpack.c.l.b16 %v263
      %v840 = vunpack.c.l.b16 %v264
      %v841 = vunpack.c.l.b16 %v265
      %v842 = vunpack.c.l.b16 %v266
      %v843 = vunpack.c.l.b16 %v267
      %v844 = vunpack.c.l.b16 %v268
      %v845 = vunpack.c.l.b16 %v269
      %v846 = vunpack.c.l.b16 %v270
      %v847 = vunpack.c.l.b16 %v271
      %v848 = vunpack.c.l.b16 %v272
      %v849 = vunpack.c.l.b16 %v273
      %v850 = vunpack.c.l.b16 %v274
      %v851 = vunpack.c.l.b16 %v275
      %v852 = vunpack.c.l.b16 %v276
      %v853 = vunpack.c.l.b16 %v277
      %v854 = vunpack.c.l.b16 %v278
      %v855 = vunpack.c.l.b16 %v279
      %v856 = vunpack.c.l.b16 %v280
      %v857 = vunpack.c.l.b16 %v281
      %v858 = vunpack.c.l.b16 %v282
      %v859 = vunpack.c.l.b16 %v283
      %v860 = vunpack.c.l.b16 %v284
      %v861 = vunpack.c.l.b16 %v285
      %v862 = vunpack.c.l.b16 %v286
      %v863 = vunpack.c.l.b16 %v287
      %v864 = vunpack.c.l.b16 %v288
      %v865 = vunpack.c.l.b16 %v289
      %v866 = vunpack.c.l.b16 %v290
      %v867 = vunpack.c.l.b16 %v291
      %v868 = vunpack.c.l.b16 %v292
      %v869 = vunpack.c.l.b16 %v293
      %v870 = vunpack.c.l.b16 %v294
      %v871 = vunpack.c.l.b16 %v295
      %v872 = vunpack.c.l.b16 %v296
      %v873 = vunpack.c.l.b16 %v297
      %v874 = vunpack.c.l.b16 %v298
      %v875 = vunpack.c.l.b16 %v299
      %v876 = vunpack.c.l.b16 %v300
      %v877 = vunpack.c.l.b16 %v301
      %v878 = vunpack.c.l.b16 %v302
      %v879 = vunpack.c.l.b16 %v303
      %v880 = vunpack.c.l.b16 %v304
      %v881 = vunpack.c.l.b16 %v305
      %v882 = vunpack.c.l.b16 %v306
      %v883 = vunpack.c.l.b16 %v307
      %v884 = vunpack.c.l.b16 %v308
      %v885 = vunpack.c.l.b16 %v309
      %v886 = vunpack.c.l.b16 %v310
      %v887 = vunpack.c.l.b16 %v311
      %v888 = vunpack.c.l.b16 %v312
      %v889 = vunpack.c.l.b16 %v313
      %v890 = vunpack.c.l.b16 %v314
      %v891 = vunpack.c.l.b16 %v315
      %v892 = vunpack.c.l.b16 %v316
      %v893 = vunpack.c.l.b16 %v317
      %v894 = vunpack.c.l.b16 %v318
      %v895 = vunpack.c.l.b16 %v319
      %v896 = vunpack.c.l.b16 %v320
      %v897 = vunpack.c.l.b16 %v321
      %v898 = vunpack.c.l.b16 %v322
      %v899 = vunpack.c.l.b16 %v323
      %v900 = vunpack.c.l.b16 %v324
      %v901 = vunpack.c.l.b16 %v325
      %v902 = vunpack.c.l.b16 %v326
      %v903 = vunpack.c.l.b16 %v327
      %v904 = vunpack.c.l.b16 %v328
      %v905 = vunpack.c.l.b16 %v329
      %v906 = vunpack.c.l.b16 %v330
      %v907 = vunpack.c.l.b16 %v331
      %v908 = vunpack.c.l.b16 %v332
      %v909 = vunpack.c.l.b16 %v333
      %v910 = vunpack.c.l.b16 %v334
      %v911 = vunpack.c.l.b16 %v335
      %v912 = vunpack.c.l.b16 %v336
      %v913 = vunpack.c.l.b16 %v337
      %v914 = vunpack.c.l.b16 %v338
      %v915 = vunpack.c.l.b16 %v339
      %v916 = vunpack.c.l.b16 %v340
      %v917 = vpack.c.b16 %v790, %v789
      %v918 = vpack.c.b16 %v792, %v791
      %v919 = vpack.c.b16 %v794, %v793
      %v920 = vpack.c.b16 %v796, %v795
      %v921 = vpack.c.b16 %v798, %v797
      %v922 = vpack.c.b16 %v800, %v799
      %v923 = vpack.c.b16 %v802, %v801
      %v924 = vpack.c.b16 %v804, %v803
      %v925 = vpack.c.b16 %v806, %v805
      %v926 = vpack.c.b16 %v808, %v807
      %v927 = vpack.c.b16 %v810, %v809
      %v928 = vpack.c.b16 %v812, %v811
      %v929 = vpack.c.b16 %v814, %v813
      %v930 = vpack.c.b16 %v816, %v815
      %v931 = vpack.c.b16 %v818, %v817
      %v932 = vpack.c.b16 %v820, %v819
      %v933 = vpack.c.b16 %v822, %v821
      %v934 = vpack.c.b16 %v824, %v823
      %v935 = vpack.c.b16 %v826, %v825
      %v936 = vpack.c.b16 %v828, %v827
      %v937 = vpack.c.b16 %v830, %v829
      %v938 = vpack.c.b16 %v832, %v831
      %v939 = vpack.c.b16 %v834, %v833
      %v940 = vpack.c.b16 %v836, %v835
      %v941 = vpack.c.b16 %v838, %v837
      %v942 = vpack.c.b16 %v840, %v839
      %v943 = vpack.c.b16 %v842, %v841
      %v944 = vpack.c.b16 %v844, %v843
      %v945 = vpack.c.b16 %v846, %v845
      %v946 = vpack.c.b16 %v848, %v847
      %v947 = vpack.c.b16 %v850, %v849
      %v948 = vpack.c.b16 %v852, %v851
      %v949 = vpack.c.b16 %v854, %v853
      %v950 = vpack.c.b16 %v856, %v855
      %v951 = vpack.c.b16 %v858, %v857
      %v952 = vpack.c.b16 %v860, %v859
      %v953 = vpack.c.b16 %v862, %v861
      %v954 = vpack.c.b16 %v864, %v863
      %v955 = vpack.c.b16 %v866, %v865
      %v956 = vpack.c.b16 %v868, %v867
      %v957 = vpack.c.b16 %v870, %v869
      %v958 = vpack.c.b16 %v872, %v871
      %v959 = vpack.c.b16 %v874, %v873
      %v960 = vpack.c.b16 %v876, %v875
      %v961 = vpack.c.b16 %v878, %v877
      %v962 = vpack.c.b16 %v880, %v879
      %v963 = vpack.c.b16 %v882, %v881
      %v964 = vpack.c.b16 %v884, %v883
      %v965 = vpack.c.b16 %v886, %v885
      %v966 = vpack.c.b16 %v888, %v887
      %v967 = vpack.c.b16 %v890, %v889
      %v968 = vpack.c.b16 %v892, %v891
      %v969 = vpack.c.b16 %v894, %v893
      %v970 = vpack.c.b16 %v896, %v895
      %v971 = vpack.c.b16 %v898, %v897
      %v972 = vpack.c.b16 %v900, %v899
      %v973 = vpack.c.b16 %v902, %v901
      %v974 = vpack.c.b16 %v904, %v903
      %v975 = vpack.c.b16 %v906, %v905
      %v976 = vpack.c.b16 %v908, %v907
      %v977 = vpack.c.b16 %v910, %v909
      %v978 = vpack.c.b16 %v912, %v911
      %v979 = vpack.c.b16 %v914, %v913
      %v980 = vpack.c.b16 %v916, %v915
      %1045 = vmatpush.bf16.msra.mxu0 %v924
      %1046 = vmatpush.bf16.msra.mxu0 %v923
      %1047 = vmatpush.bf16.msra.mxu0 %v922
      %1048 = vmatpush.bf16.msra.mxu0 %v921
      %1049 = vmatpush.bf16.msra.mxu0 %v920
      %1050 = vmatpush.bf16.msra.mxu0 %v919
      %1051 = vmatpush.bf16.msra.mxu0 %v918
      %1052 = vmatpush.bf16.msra.mxu0 %v917
      %1053 = vmatmul.bf16.gmra.mxu0 %v533
      %v1054 = vpop.f32.mrf.mxu0
      %v1055 = vadd.f32 0.0, %v1054
      %v1056 = vpop.f32.mrf.mxu0
      %v1057 = vadd.f32 0.0, %v1056
      %1058 = vmatmul.bf16.gmra.mxu0 %v541
      %v1059 = vpop.f32.mrf.mxu0
      %v1060 = vadd.f32 0.0, %v1059
      %v1061 = vpop.f32.mrf.mxu0
      %v1062 = vadd.f32 0.0, %v1061
      %1063 = vmatmul.bf16.gmra.mxu0 %v549
      %v1064 = vpop.f32.mrf.mxu0
      %v1065 = vadd.f32 0.0, %v1064
      %v1066 = vpop.f32.mrf.mxu0
      %v1067 = vadd.f32 0.0, %v1066
      %1068 = vmatmul.bf16.gmra.mxu0 %v557
      %v1069 = vpop.f32.mrf.mxu0
      %v1070 = vadd.f32 0.0, %v1069
      %v1071 = vpop.f32.mrf.mxu0
      %v1072 = vadd.f32 0.0, %v1071
      %1073 = vmatmul.bf16.gmra.mxu0 %v565
      %v1074 = vpop.f32.mrf.mxu0
      %v1075 = vadd.f32 0.0, %v1074
      %v1076 = vpop.f32.mrf.mxu0
      %v1077 = vadd.f32 0.0, %v1076
      %1078 = vmatmul.bf16.gmra.mxu0 %v573
      %v1079 = vpop.f32.mrf.mxu0
      %v1080 = vadd.f32 0.0, %v1079
      %v1081 = vpop.f32.mrf.mxu0
      %v1082 = vadd.f32 0.0, %v1081
      %1083 = vmatmul.bf16.gmra.mxu0 %v581
      %v1084 = vpop.f32.mrf.mxu0
      %v1085 = vadd.f32 0.0, %v1084
      %v1086 = vpop.f32.mrf.mxu0
      %v1087 = vadd.f32 0.0, %v1086
      %1088 = vmatmul.bf16.gmra.mxu0 %v589
      %v1089 = vpop.f32.mrf.mxu0
      %v1090 = vadd.f32 0.0, %v1089
      %v1091 = vpop.f32.mrf.mxu0
      %v1092 = vadd.f32 0.0, %v1091
      %1093 = vdwg.mxu0
      %1094 = vmatpush.bf16.msra.mxu0 %v932
      %1095 = vmatpush.bf16.msra.mxu0 %v931
      %1096 = vmatpush.bf16.msra.mxu0 %v930
      %1097 = vmatpush.bf16.msra.mxu0 %v929
      %1098 = vmatpush.bf16.msra.mxu0 %v928
      %1099 = vmatpush.bf16.msra.mxu0 %v927
      %1100 = vmatpush.bf16.msra.mxu0 %v926
      %1101 = vmatpush.bf16.msra.mxu0 %v925
      %1102 = vmatmul.bf16.gmra.mxu0 %v534
      %v1103 = vpop.f32.mrf.mxu0
      %v1104 = vadd.f32 %v1055, %v1103
      %v1105 = vpop.f32.mrf.mxu0
      %v1106 = vadd.f32 %v1057, %v1105
      %1107 = vmatmul.bf16.gmra.mxu0 %v542
      %v1108 = vpop.f32.mrf.mxu0
      %v1109 = vadd.f32 %v1060, %v1108
      %v1110 = vpop.f32.mrf.mxu0
      %v1111 = vadd.f32 %v1062, %v1110
      %1112 = vmatmul.bf16.gmra.mxu0 %v550
      %v1113 = vpop.f32.mrf.mxu0
      %v1114 = vadd.f32 %v1065, %v1113
      %v1115 = vpop.f32.mrf.mxu0
      %v1116 = vadd.f32 %v1067, %v1115
      %1117 = vmatmul.bf16.gmra.mxu0 %v558
      %v1118 = vpop.f32.mrf.mxu0
      %v1119 = vadd.f32 %v1070, %v1118
      %v1120 = vpop.f32.mrf.mxu0
      %v1121 = vadd.f32 %v1072, %v1120
      %1122 = vmatmul.bf16.gmra.mxu0 %v566
      %v1123 = vpop.f32.mrf.mxu0
      %v1124 = vadd.f32 %v1075, %v1123
      %v1125 = vpop.f32.mrf.mxu0
      %v1126 = vadd.f32 %v1077, %v1125
      %1127 = vmatmul.bf16.gmra.mxu0 %v574
      %v1128 = vpop.f32.mrf.mxu0
      %v1129 = vadd.f32 %v1080, %v1128
      %v1130 = vpop.f32.mrf.mxu0
      %v1131 = vadd.f32 %v1082, %v1130
      %1132 = vmatmul.bf16.gmra.mxu0 %v582
      %v1133 = vpop.f32.mrf.mxu0
      %v1134 = vadd.f32 %v1085, %v1133
      %v1135 = vpop.f32.mrf.mxu0
      %v1136 = vadd.f32 %v1087, %v1135
      %1137 = vmatmul.bf16.gmra.mxu0 %v590
      %v1138 = vpop.f32.mrf.mxu0
      %v1139 = vadd.f32 %v1090, %v1138
      %v1140 = vpop.f32.mrf.mxu0
      %v1141 = vadd.f32 %v1092, %v1140
      %1142 = vdwg.mxu0
      %1143 = vmatpush.bf16.msra.mxu0 %v940
      %1144 = vmatpush.bf16.msra.mxu0 %v939
      %1145 = vmatpush.bf16.msra.mxu0 %v938
      %1146 = vmatpush.bf16.msra.mxu0 %v937
      %1147 = vmatpush.bf16.msra.mxu0 %v936
      %1148 = vmatpush.bf16.msra.mxu0 %v935
      %1149 = vmatpush.bf16.msra.mxu0 %v934
      %1150 = vmatpush.bf16.msra.mxu0 %v933
      %1151 = vmatmul.bf16.gmra.mxu0 %v535
      %v1152 = vpop.f32.mrf.mxu0
      %v1153 = vadd.f32 %v1104, %v1152
      %v1154 = vpop.f32.mrf.mxu0
      %v1155 = vadd.f32 %v1106, %v1154
      %1156 = vmatmul.bf16.gmra.mxu0 %v543
      %v1157 = vpop.f32.mrf.mxu0
      %v1158 = vadd.f32 %v1109, %v1157
      %v1159 = vpop.f32.mrf.mxu0
      %v1160 = vadd.f32 %v1111, %v1159
      %1161 = vmatmul.bf16.gmra.mxu0 %v551
      %v1162 = vpop.f32.mrf.mxu0
      %v1163 = vadd.f32 %v1114, %v1162
      %v1164 = vpop.f32.mrf.mxu0
      %v1165 = vadd.f32 %v1116, %v1164
      %1166 = vmatmul.bf16.gmra.mxu0 %v559
      %v1167 = vpop.f32.mrf.mxu0
      %v1168 = vadd.f32 %v1119, %v1167
      %v1169 = vpop.f32.mrf.mxu0
      %v1170 = vadd.f32 %v1121, %v1169
      %1171 = vmatmul.bf16.gmra.mxu0 %v567
      %v1172 = vpop.f32.mrf.mxu0
      %v1173 = vadd.f32 %v1124, %v1172
      %v1174 = vpop.f32.mrf.mxu0
      %v1175 = vadd.f32 %v1126, %v1174
      %1176 = vmatmul.bf16.gmra.mxu0 %v575
      %v1177 = vpop.f32.mrf.mxu0
      %v1178 = vadd.f32 %v1129, %v1177
      %v1179 = vpop.f32.mrf.mxu0
      %v1180 = vadd.f32 %v1131, %v1179
      %1181 = vmatmul.bf16.gmra.mxu0 %v583
      %v1182 = vpop.f32.mrf.mxu0
      %v1183 = vadd.f32 %v1134, %v1182
      %v1184 = vpop.f32.mrf.mxu0
      %v1185 = vadd.f32 %v1136, %v1184
      %1186 = vmatmul.bf16.gmra.mxu0 %v591
      %v1187 = vpop.f32.mrf.mxu0
      %v1188 = vadd.f32 %v1139, %v1187
      %v1189 = vpop.f32.mrf.mxu0
      %v1190 = vadd.f32 %v1141, %v1189
      %1191 = vdwg.mxu0
      %1192 = vmatpush.bf16.msra.mxu0 %v948
      %1193 = vmatpush.bf16.msra.mxu0 %v947
      %1194 = vmatpush.bf16.msra.mxu0 %v946
      %1195 = vmatpush.bf16.msra.mxu0 %v945
      %1196 = vmatpush.bf16.msra.mxu0 %v944
      %1197 = vmatpush.bf16.msra.mxu0 %v943
      %1198 = vmatpush.bf16.msra.mxu0 %v942
      %1199 = vmatpush.bf16.msra.mxu0 %v941
      %1200 = vmatmul.bf16.gmra.mxu0 %v536
      %v1201 = vpop.f32.mrf.mxu0
      %v1202 = vadd.f32 %v1153, %v1201
      %v1203 = vpop.f32.mrf.mxu0
      %v1204 = vadd.f32 %v1155, %v1203
      %1205 = vmatmul.bf16.gmra.mxu0 %v544
      %v1206 = vpop.f32.mrf.mxu0
      %v1207 = vadd.f32 %v1158, %v1206
      %v1208 = vpop.f32.mrf.mxu0
      %v1209 = vadd.f32 %v1160, %v1208
      %1210 = vmatmul.bf16.gmra.mxu0 %v552
      %v1211 = vpop.f32.mrf.mxu0
      %v1212 = vadd.f32 %v1163, %v1211
      %v1213 = vpop.f32.mrf.mxu0
      %v1214 = vadd.f32 %v1165, %v1213
      %1215 = vmatmul.bf16.gmra.mxu0 %v560
      %v1216 = vpop.f32.mrf.mxu0
      %v1217 = vadd.f32 %v1168, %v1216
      %v1218 = vpop.f32.mrf.mxu0
      %v1219 = vadd.f32 %v1170, %v1218
      %1220 = vmatmul.bf16.gmra.mxu0 %v568
      %v1221 = vpop.f32.mrf.mxu0
      %v1222 = vadd.f32 %v1173, %v1221
      %v1223 = vpop.f32.mrf.mxu0
      %v1224 = vadd.f32 %v1175, %v1223
      %1225 = vmatmul.bf16.gmra.mxu0 %v576
      %v1226 = vpop.f32.mrf.mxu0
      %v1227 = vadd.f32 %v1178, %v1226
      %v1228 = vpop.f32.mrf.mxu0
      %v1229 = vadd.f32 %v1180, %v1228
      %1230 = vmatmul.bf16.gmra.mxu0 %v584
      %v1231 = vpop.f32.mrf.mxu0
      %v1232 = vadd.f32 %v1183, %v1231
      %v1233 = vpop.f32.mrf.mxu0
      %v1234 = vadd.f32 %v1185, %v1233
      %1235 = vmatmul.bf16.gmra.mxu0 %v592
      %v1236 = vpop.f32.mrf.mxu0
      %v1237 = vadd.f32 %v1188, %v1236
      %v1238 = vpop.f32.mrf.mxu0
      %v1239 = vadd.f32 %v1190, %v1238
      %1240 = vdwg.mxu0
      %1241 = vmatpush.bf16.msra.mxu0 %v956
      %1242 = vmatpush.bf16.msra.mxu0 %v955
      %1243 = vmatpush.bf16.msra.mxu0 %v954
      %1244 = vmatpush.bf16.msra.mxu0 %v953
      %1245 = vmatpush.bf16.msra.mxu0 %v952
      %1246 = vmatpush.bf16.msra.mxu0 %v951
      %1247 = vmatpush.bf16.msra.mxu0 %v950
      %1248 = vmatpush.bf16.msra.mxu0 %v949
      %1249 = vmatmul.bf16.gmra.mxu0 %v537
      %v1250 = vpop.f32.mrf.mxu0
      %v1251 = vadd.f32 %v1202, %v1250
      %v1252 = vpop.f32.mrf.mxu0
      %v1253 = vadd.f32 %v1204, %v1252
      %1254 = vmatmul.bf16.gmra.mxu0 %v545
      %v1255 = vpop.f32.mrf.mxu0
      %v1256 = vadd.f32 %v1207, %v1255
      %v1257 = vpop.f32.mrf.mxu0
      %v1258 = vadd.f32 %v1209, %v1257
      %1259 = vmatmul.bf16.gmra.mxu0 %v553
      %v1260 = vpop.f32.mrf.mxu0
      %v1261 = vadd.f32 %v1212, %v1260
      %v1262 = vpop.f32.mrf.mxu0
      %v1263 = vadd.f32 %v1214, %v1262
      %1264 = vmatmul.bf16.gmra.mxu0 %v561
      %v1265 = vpop.f32.mrf.mxu0
      %v1266 = vadd.f32 %v1217, %v1265
      %v1267 = vpop.f32.mrf.mxu0
      %v1268 = vadd.f32 %v1219, %v1267
      %1269 = vmatmul.bf16.gmra.mxu0 %v569
      %v1270 = vpop.f32.mrf.mxu0
      %v1271 = vadd.f32 %v1222, %v1270
      %v1272 = vpop.f32.mrf.mxu0
      %v1273 = vadd.f32 %v1224, %v1272
      %1274 = vmatmul.bf16.gmra.mxu0 %v577
      %v1275 = vpop.f32.mrf.mxu0
      %v1276 = vadd.f32 %v1227, %v1275
      %v1277 = vpop.f32.mrf.mxu0
      %v1278 = vadd.f32 %v1229, %v1277
      %1279 = vmatmul.bf16.gmra.mxu0 %v585
      %v1280 = vpop.f32.mrf.mxu0
      %v1281 = vadd.f32 %v1232, %v1280
      %v1282 = vpop.f32.mrf.mxu0
      %v1283 = vadd.f32 %v1234, %v1282
      %1284 = vmatmul.bf16.gmra.mxu0 %v593
      %v1285 = vpop.f32.mrf.mxu0
      %v1286 = vadd.f32 %v1237, %v1285
      %v1287 = vpop.f32.mrf.mxu0
      %v1288 = vadd.f32 %v1239, %v1287
      %1289 = vdwg.mxu0
      %1290 = vmatpush.bf16.msra.mxu0 %v964
      %1291 = vmatpush.bf16.msra.mxu0 %v963
      %1292 = vmatpush.bf16.msra.mxu0 %v962
      %1293 = vmatpush.bf16.msra.mxu0 %v961
      %1294 = vmatpush.bf16.msra.mxu0 %v960
      %1295 = vmatpush.bf16.msra.mxu0 %v959
      %1296 = vmatpush.bf16.msra.mxu0 %v958
      %1297 = vmatpush.bf16.msra.mxu0 %v957
      %1298 = vmatmul.bf16.gmra.mxu0 %v538
      %v1299 = vpop.f32.mrf.mxu0
      %v1300 = vadd.f32 %v1251, %v1299
      %v1301 = vpop.f32.mrf.mxu0
      %v1302 = vadd.f32 %v1253, %v1301
      %1303 = vmatmul.bf16.gmra.mxu0 %v546
      %v1304 = vpop.f32.mrf.mxu0
      %v1305 = vadd.f32 %v1256, %v1304
      %v1306 = vpop.f32.mrf.mxu0
      %v1307 = vadd.f32 %v1258, %v1306
      %1308 = vmatmul.bf16.gmra.mxu0 %v554
      %v1309 = vpop.f32.mrf.mxu0
      %v1310 = vadd.f32 %v1261, %v1309
      %v1311 = vpop.f32.mrf.mxu0
      %v1312 = vadd.f32 %v1263, %v1311
      %1313 = vmatmul.bf16.gmra.mxu0 %v562
      %v1314 = vpop.f32.mrf.mxu0
      %v1315 = vadd.f32 %v1266, %v1314
      %v1316 = vpop.f32.mrf.mxu0
      %v1317 = vadd.f32 %v1268, %v1316
      %1318 = vmatmul.bf16.gmra.mxu0 %v570
      %v1319 = vpop.f32.mrf.mxu0
      %v1320 = vadd.f32 %v1271, %v1319
      %v1321 = vpop.f32.mrf.mxu0
      %v1322 = vadd.f32 %v1273, %v1321
      %1323 = vmatmul.bf16.gmra.mxu0 %v578
      %v1324 = vpop.f32.mrf.mxu0
      %v1325 = vadd.f32 %v1276, %v1324
      %v1326 = vpop.f32.mrf.mxu0
      %v1327 = vadd.f32 %v1278, %v1326
      %1328 = vmatmul.bf16.gmra.mxu0 %v586
      %v1329 = vpop.f32.mrf.mxu0
      %v1330 = vadd.f32 %v1281, %v1329
      %v1331 = vpop.f32.mrf.mxu0
      %v1332 = vadd.f32 %v1283, %v1331
      %1333 = vmatmul.bf16.gmra.mxu0 %v594
      %v1334 = vpop.f32.mrf.mxu0
      %v1335 = vadd.f32 %v1286, %v1334
      %v1336 = vpop.f32.mrf.mxu0
      %v1337 = vadd.f32 %v1288, %v1336
      %1338 = vdwg.mxu0
      %1339 = vmatpush.bf16.msra.mxu0 %v972
      %1340 = vmatpush.bf16.msra.mxu0 %v971
      %1341 = vmatpush.bf16.msra.mxu0 %v970
      %1342 = vmatpush.bf16.msra.mxu0 %v969
      %1343 = vmatpush.bf16.msra.mxu0 %v968
      %1344 = vmatpush.bf16.msra.mxu0 %v967
      %1345 = vmatpush.bf16.msra.mxu0 %v966
      %1346 = vmatpush.bf16.msra.mxu0 %v965
      %1347 = vmatmul.bf16.gmra.mxu0 %v539
      %v1348 = vpop.f32.mrf.mxu0
      %v1349 = vadd.f32 %v1300, %v1348
      %v1350 = vpop.f32.mrf.mxu0
      %v1351 = vadd.f32 %v1302, %v1350
      %1352 = vmatmul.bf16.gmra.mxu0 %v547
      %v1353 = vpop.f32.mrf.mxu0
      %v1354 = vadd.f32 %v1305, %v1353
      %v1355 = vpop.f32.mrf.mxu0
      %v1356 = vadd.f32 %v1307, %v1355
      %1357 = vmatmul.bf16.gmra.mxu0 %v555
      %v1358 = vpop.f32.mrf.mxu0
      %v1359 = vadd.f32 %v1310, %v1358
      %v1360 = vpop.f32.mrf.mxu0
      %v1361 = vadd.f32 %v1312, %v1360
      %1362 = vmatmul.bf16.gmra.mxu0 %v563
      %v1363 = vpop.f32.mrf.mxu0
      %v1364 = vadd.f32 %v1315, %v1363
      %v1365 = vpop.f32.mrf.mxu0
      %v1366 = vadd.f32 %v1317, %v1365
      %1367 = vmatmul.bf16.gmra.mxu0 %v571
      %v1368 = vpop.f32.mrf.mxu0
      %v1369 = vadd.f32 %v1320, %v1368
      %v1370 = vpop.f32.mrf.mxu0
      %v1371 = vadd.f32 %v1322, %v1370
      %1372 = vmatmul.bf16.gmra.mxu0 %v579
      %v1373 = vpop.f32.mrf.mxu0
      %v1374 = vadd.f32 %v1325, %v1373
      %v1375 = vpop.f32.mrf.mxu0
      %v1376 = vadd.f32 %v1327, %v1375
      %1377 = vmatmul.bf16.gmra.mxu0 %v587
      %v1378 = vpop.f32.mrf.mxu0
      %v1379 = vadd.f32 %v1330, %v1378
      %v1380 = vpop.f32.mrf.mxu0
      %v1381 = vadd.f32 %v1332, %v1380
      %1382 = vmatmul.bf16.gmra.mxu0 %v595
      %v1383 = vpop.f32.mrf.mxu0
      %v1384 = vadd.f32 %v1335, %v1383
      %v1385 = vpop.f32.mrf.mxu0
      %v1386 = vadd.f32 %v1337, %v1385
      %1387 = vdwg.mxu0
      %1388 = vmatpush.bf16.msra.mxu0 %v980
      %1389 = vmatpush.bf16.msra.mxu0 %v979
      %1390 = vmatpush.bf16.msra.mxu0 %v978
      %1391 = vmatpush.bf16.msra.mxu0 %v977
      %1392 = vmatpush.bf16.msra.mxu0 %v976
      %1393 = vmatpush.bf16.msra.mxu0 %v975
      %1394 = vmatpush.bf16.msra.mxu0 %v974
      %1395 = vmatpush.bf16.msra.mxu0 %v973
      %1396 = vmatmul.bf16.gmra.mxu0 %v540
      %v1397 = vpop.f32.mrf.mxu0
      %v1398 = vadd.f32 %v1349, %v1397
      %v1399 = vpop.f32.mrf.mxu0
      %v1400 = vadd.f32 %v1351, %v1399
      %1401 = vmatmul.bf16.gmra.mxu0 %v548
      %v1402 = vpop.f32.mrf.mxu0
      %v1403 = vadd.f32 %v1354, %v1402
      %v1404 = vpop.f32.mrf.mxu0
      %v1405 = vadd.f32 %v1356, %v1404
      %1406 = vmatmul.bf16.gmra.mxu0 %v556
      %v1407 = vpop.f32.mrf.mxu0
      %v1408 = vadd.f32 %v1359, %v1407
      %v1409 = vpop.f32.mrf.mxu0
      %v1410 = vadd.f32 %v1361, %v1409
      %1411 = vmatmul.bf16.gmra.mxu0 %v564
      %v1412 = vpop.f32.mrf.mxu0
      %v1413 = vadd.f32 %v1364, %v1412
      %v1414 = vpop.f32.mrf.mxu0
      %v1415 = vadd.f32 %v1366, %v1414
      %1416 = vmatmul.bf16.gmra.mxu0 %v572
      %v1417 = vpop.f32.mrf.mxu0
      %v1418 = vadd.f32 %v1369, %v1417
      %v1419 = vpop.f32.mrf.mxu0
      %v1420 = vadd.f32 %v1371, %v1419
      %1421 = vmatmul.bf16.gmra.mxu0 %v580
      %v1422 = vpop.f32.mrf.mxu0
      %v1423 = vadd.f32 %v1374, %v1422
      %v1424 = vpop.f32.mrf.mxu0
      %v1425 = vadd.f32 %v1376, %v1424
      %1426 = vmatmul.bf16.gmra.mxu0 %v588
      %v1427 = vpop.f32.mrf.mxu0
      %v1428 = vadd.f32 %v1379, %v1427
      %v1429 = vpop.f32.mrf.mxu0
      %v1430 = vadd.f32 %v1381, %v1429
      %1431 = vmatmul.bf16.gmra.mxu0 %v596
      %v1432 = vpop.f32.mrf.mxu0
      %v1433 = vadd.f32 %v1384, %v1432
      %v1434 = vpop.f32.mrf.mxu0
      %v1435 = vadd.f32 %v1386, %v1434
      %1436 = vdwg.mxu0
      %s1437 = smul.u32 %s13, 128
      %s1438 = scalar_lea.vmem [#allocation2], %s1437
      %1439 = vst [vmem:[%s1438] sm:$0xff] %v1398
      %1440 = vst [vmem:[%s1438 + $0x8] sm:$0xff] %v1400
      %1441 = vst [vmem:[%s1438 + $0x10] sm:$0xff] %v1403
      %1442 = vst [vmem:[%s1438 + $0x18] sm:$0xff] %v1405
      %1443 = vst [vmem:[%s1438 + $0x20] sm:$0xff] %v1408
      %1444 = vst [vmem:[%s1438 + $0x28] sm:$0xff] %v1410
      %1445 = vst [vmem:[%s1438 + $0x30] sm:$0xff] %v1413
      %1446 = vst [vmem:[%s1438 + $0x38] sm:$0xff] %v1415
      %1447 = vst [vmem:[%s1438 + $0x40] sm:$0xff] %v1418
      %1448 = vst [vmem:[%s1438 + $0x48] sm:$0xff] %v1420
      %1449 = vst [vmem:[%s1438 + $0x50] sm:$0xff] %v1423
      %1450 = vst [vmem:[%s1438 + $0x58] sm:$0xff] %v1425
      %1451 = vst [vmem:[%s1438 + $0x60] sm:$0xff] %v1428
      %1452 = vst [vmem:[%s1438 + $0x68] sm:$0xff] %v1430
      %1453 = vst [vmem:[%s1438 + $0x70] sm:$0xff] %v1433
      %1454 = vst [vmem:[%s1438 + $0x78] sm:$0xff] %v1435
      %p1455 = scmp.eq.s32.totalorder %s13, 3
      // Predicated region
      $region29: #{generator_forward.10} parent=27 // pred_check
        %p1456 = pneg %p1455
      $region30: #{generator_forward.10} parent=27 // pred_check_branch
        %1458 = sbr.rel (%p1456) target = $region32
      $region31: #{generator_forward.10} parent=27 // pred_region
        %v1459 = vld [vmem:[#allocation2] sm:$0xff]
        %v1460 = vld [vmem:[#allocation2 + $0x8] sm:$0xff]
        %v1461 = vld [vmem:[#allocation2 + $0x10] sm:$0xff]
        %v1462 = vld [vmem:[#allocation2 + $0x18] sm:$0xff]
        %v1463 = vld [vmem:[#allocation2 + $0x20] sm:$0xff]
        %v1464 = vld [vmem:[#allocation2 + $0x28] sm:$0xff]
        %v1465 = vld [vmem:[#allocation2 + $0x30] sm:$0xff]
        %v1466 = vld [vmem:[#allocation2 + $0x38] sm:$0xff]
        %v1467 = vld [vmem:[#allocation2 + $0x40] sm:$0xff]
        %v1468 = vld [vmem:[#allocation2 + $0x48] sm:$0xff]
        %v1469 = vld [vmem:[#allocation2 + $0x50] sm:$0xff]
        %v1470 = vld [vmem:[#allocation2 + $0x58] sm:$0xff]
        %v1471 = vld [vmem:[#allocation2 + $0x60] sm:$0xff]
        %v1472 = vld [vmem:[#allocation2 + $0x68] sm:$0xff]
        %v1473 = vld [vmem:[#allocation2 + $0x70] sm:$0xff]
        %v1474 = vld [vmem:[#allocation2 + $0x78] sm:$0xff]
        %v1475 = vld [vmem:[#allocation2 + $0x80] sm:$0xff]
        %v1476 = vld [vmem:[#allocation2 + $0x88] sm:$0xff]
        %v1477 = vld [vmem:[#allocation2 + $0x90] sm:$0xff]
        %v1478 = vld [vmem:[#allocation2 + $0x98] sm:$0xff]
        %v1479 = vld [vmem:[#allocation2 + $0xa0] sm:$0xff]
        %v1480 = vld [vmem:[#allocation2 + $0xa8] sm:$0xff]
        %v1481 = vld [vmem:[#allocation2 + $0xb0] sm:$0xff]
        %v1482 = vld [vmem:[#allocation2 + $0xb8] sm:$0xff]
        %v1483 = vld [vmem:[#allocation2 + $0xc0] sm:$0xff]
        %v1484 = vld [vmem:[#allocation2 + $0xc8] sm:$0xff]
        %v1485 = vld [vmem:[#allocation2 + $0xd0] sm:$0xff]
        %v1486 = vld [vmem:[#allocation2 + $0xd8] sm:$0xff]
        %v1487 = vld [vmem:[#allocation2 + $0xe0] sm:$0xff]
        %v1488 = vld [vmem:[#allocation2 + $0xe8] sm:$0xff]
        %v1489 = vld [vmem:[#allocation2 + $0xf0] sm:$0xff]
        %v1490 = vld [vmem:[#allocation2 + $0xf8] sm:$0xff]
        %v1491 = vld [vmem:[#allocation2 + $0x100] sm:$0xff]
        %v1492 = vld [vmem:[#allocation2 + $0x108] sm:$0xff]
        %v1493 = vld [vmem:[#allocation2 + $0x110] sm:$0xff]
        %v1494 = vld [vmem:[#allocation2 + $0x118] sm:$0xff]
        %v1495 = vld [vmem:[#allocation2 + $0x120] sm:$0xff]
        %v1496 = vld [vmem:[#allocation2 + $0x128] sm:$0xff]
        %v1497 = vld [vmem:[#allocation2 + $0x130] sm:$0xff]
        %v1498 = vld [vmem:[#allocation2 + $0x138] sm:$0xff]
        %v1499 = vld [vmem:[#allocation2 + $0x140] sm:$0xff]
        %v1500 = vld [vmem:[#allocation2 + $0x148] sm:$0xff]
        %v1501 = vld [vmem:[#allocation2 + $0x150] sm:$0xff]
        %v1502 = vld [vmem:[#allocation2 + $0x158] sm:$0xff]
        %v1503 = vld [vmem:[#allocation2 + $0x160] sm:$0xff]
        %v1504 = vld [vmem:[#allocation2 + $0x168] sm:$0xff]
        %v1505 = vld [vmem:[#allocation2 + $0x170] sm:$0xff]
        %v1506 = vld [vmem:[#allocation2 + $0x178] sm:$0xff]
        %v1507 = vld [vmem:[#allocation2 + $0x180] sm:$0xff]
        %v1508 = vld [vmem:[#allocation2 + $0x188] sm:$0xff]
        %v1509 = vld [vmem:[#allocation2 + $0x190] sm:$0xff]
        %v1510 = vld [vmem:[#allocation2 + $0x198] sm:$0xff]
        %v1511 = vld [vmem:[#allocation2 + $0x1a0] sm:$0xff]
        %v1512 = vld [vmem:[#allocation2 + $0x1a8] sm:$0xff]
        %v1513 = vld [vmem:[#allocation2 + $0x1b0] sm:$0xff]
        %v1514 = vld [vmem:[#allocation2 + $0x1b8] sm:$0xff]
        %v1515 = vld [vmem:[#allocation2 + $0x1c0] sm:$0xff]
        %v1516 = vld [vmem:[#allocation2 + $0x1c8] sm:$0xff]
        %v1517 = vld [vmem:[#allocation2 + $0x1d0] sm:$0xff]
        %v1518 = vld [vmem:[#allocation2 + $0x1d8] sm:$0xff]
        %v1519 = vld [vmem:[#allocation2 + $0x1e0] sm:$0xff]
        %v1520 = vld [vmem:[#allocation2 + $0x1e8] sm:$0xff]
        %v1521 = vld [vmem:[#allocation2 + $0x1f0] sm:$0xff]
        %v1522 = vld [vmem:[#allocation2 + $0x1f8] sm:$0xff]
        %v1523 = vadd.f32 %v1459, %v1460
        %v1524 = vadd.f32 %v1523, %v1461
        %v1525 = vadd.f32 %v1524, %v1462
        %v1526 = vadd.f32 %v1525, %v1463
        %v1527 = vadd.f32 %v1526, %v1464
        %v1528 = vadd.f32 %v1527, %v1465
        %v1529 = vadd.f32 %v1528, %v1466
        %v1530 = vadd.f32 %v1529, %v1467
        %v1531 = vadd.f32 %v1530, %v1468
        %v1532 = vadd.f32 %v1531, %v1469
        %v1533 = vadd.f32 %v1532, %v1470
        %v1534 = vadd.f32 %v1533, %v1471
        %v1535 = vadd.f32 %v1534, %v1472
        %v1536 = vadd.f32 %v1535, %v1473
        %v1537 = vadd.f32 %v1536, %v1474
        %v1538 = vadd.f32 %v1537, %v1475
        %v1539 = vadd.f32 %v1538, %v1476
        %v1540 = vadd.f32 %v1539, %v1477
        %v1541 = vadd.f32 %v1540, %v1478
        %v1542 = vadd.f32 %v1541, %v1479
        %v1543 = vadd.f32 %v1542, %v1480
        %v1544 = vadd.f32 %v1543, %v1481
        %v1545 = vadd.f32 %v1544, %v1482
        %v1546 = vadd.f32 %v1545, %v1483
        %v1547 = vadd.f32 %v1546, %v1484
        %v1548 = vadd.f32 %v1547, %v1485
        %v1549 = vadd.f32 %v1548, %v1486
        %v1550 = vadd.f32 %v1549, %v1487
        %v1551 = vadd.f32 %v1550, %v1488
        %v1552 = vadd.f32 %v1551, %v1489
        %v1553 = vadd.f32 %v1552, %v1490
        %v1554 = vadd.f32 %v1553, %v1491
        %v1555 = vadd.f32 %v1554, %v1492
        %v1556 = vadd.f32 %v1555, %v1493
        %v1557 = vadd.f32 %v1556, %v1494
        %v1558 = vadd.f32 %v1557, %v1495
        %v1559 = vadd.f32 %v1558, %v1496
        %v1560 = vadd.f32 %v1559, %v1497
        %v1561 = vadd.f32 %v1560, %v1498
        %v1562 = vadd.f32 %v1561, %v1499
        %v1563 = vadd.f32 %v1562, %v1500
        %v1564 = vadd.f32 %v1563, %v1501
        %v1565 = vadd.f32 %v1564, %v1502
        %v1566 = vadd.f32 %v1565, %v1503
        %v1567 = vadd.f32 %v1566, %v1504
        %v1568 = vadd.f32 %v1567, %v1505
        %v1569 = vadd.f32 %v1568, %v1506
        %v1570 = vadd.f32 %v1569, %v1507
        %v1571 = vadd.f32 %v1570, %v1508
        %v1572 = vadd.f32 %v1571, %v1509
        %v1573 = vadd.f32 %v1572, %v1510
        %v1574 = vadd.f32 %v1573, %v1511
        %v1575 = vadd.f32 %v1574, %v1512
        %v1576 = vadd.f32 %v1575, %v1513
        %v1577 = vadd.f32 %v1576, %v1514
        %v1578 = vadd.f32 %v1577, %v1515
        %v1579 = vadd.f32 %v1578, %v1516
        %v1580 = vadd.f32 %v1579, %v1517
        %v1581 = vadd.f32 %v1580, %v1518
        %v1582 = vadd.f32 %v1581, %v1519
        %v1583 = vadd.f32 %v1582, %v1520
        %v1584 = vadd.f32 %v1583, %v1521
        %v1585 = vadd.f32 %v1584, %v1522
        %v1586 = vrot.slane %v1585, 4
        %v1587 = vadd.f32 %v1585, %v1586
        %v1588 = vrot.slane %v1587, 2
        %v1589 = vadd.f32 %v1587, %v1588
        %v1590 = vrot.slane %v1589, 1
        %v1591 = vadd.f32 %v1589, %v1590
        %v1592 = vmul.f32 %v1591, 0.001953125
        %v1593 = vmul.f32 %v1459, %v1459
        %v1594 = vmul.f32 %v1460, %v1460
        %v1595 = vmul.f32 %v1461, %v1461
        %v1596 = vmul.f32 %v1462, %v1462
        %v1597 = vmul.f32 %v1463, %v1463
        %v1598 = vmul.f32 %v1464, %v1464
        %v1599 = vmul.f32 %v1465, %v1465
        %v1600 = vmul.f32 %v1466, %v1466
        %v1601 = vmul.f32 %v1467, %v1467
        %v1602 = vmul.f32 %v1468, %v1468
        %v1603 = vmul.f32 %v1469, %v1469
        %v1604 = vmul.f32 %v1470, %v1470
        %v1605 = vmul.f32 %v1471, %v1471
        %v1606 = vmul.f32 %v1472, %v1472
        %v1607 = vmul.f32 %v1473, %v1473
        %v1608 = vmul.f32 %v1474, %v1474
        %v1609 = vmul.f32 %v1475, %v1475
        %v1610 = vmul.f32 %v1476, %v1476
        %v1611 = vmul.f32 %v1477, %v1477
        %v1612 = vmul.f32 %v1478, %v1478
        %v1613 = vmul.f32 %v1479, %v1479
        %v1614 = vmul.f32 %v1480, %v1480
        %v1615 = vmul.f32 %v1481, %v1481
        %v1616 = vmul.f32 %v1482, %v1482
        %v1617 = vmul.f32 %v1483, %v1483
        %v1618 = vmul.f32 %v1484, %v1484
        %v1619 = vmul.f32 %v1485, %v1485
        %v1620 = vmul.f32 %v1486, %v1486
        %v1621 = vmul.f32 %v1487, %v1487
        %v1622 = vmul.f32 %v1488, %v1488
        %v1623 = vmul.f32 %v1489, %v1489
        %v1624 = vmul.f32 %v1490, %v1490
        %v1625 = vmul.f32 %v1491, %v1491
        %v1626 = vmul.f32 %v1492, %v1492
        %v1627 = vmul.f32 %v1493, %v1493
        %v1628 = vmul.f32 %v1494, %v1494
        %v1629 = vmul.f32 %v1495, %v1495
        %v1630 = vmul.f32 %v1496, %v1496
        %v1631 = vmul.f32 %v1497, %v1497
        %v1632 = vmul.f32 %v1498, %v1498
        %v1633 = vmul.f32 %v1499, %v1499
        %v1634 = vmul.f32 %v1500, %v1500
        %v1635 = vmul.f32 %v1501, %v1501
        %v1636 = vmul.f32 %v1502, %v1502
        %v1637 = vmul.f32 %v1503, %v1503
        %v1638 = vmul.f32 %v1504, %v1504
        %v1639 = vmul.f32 %v1505, %v1505
        %v1640 = vmul.f32 %v1506, %v1506
        %v1641 = vmul.f32 %v1507, %v1507
        %v1642 = vmul.f32 %v1508, %v1508
        %v1643 = vmul.f32 %v1509, %v1509
        %v1644 = vmul.f32 %v1510, %v1510
        %v1645 = vmul.f32 %v1511, %v1511
        %v1646 = vmul.f32 %v1512, %v1512
        %v1647 = vmul.f32 %v1513, %v1513
        %v1648 = vmul.f32 %v1514, %v1514
        %v1649 = vmul.f32 %v1515, %v1515
        %v1650 = vmul.f32 %v1516, %v1516
        %v1651 = vmul.f32 %v1517, %v1517
        %v1652 = vmul.f32 %v1518, %v1518
        %v1653 = vmul.f32 %v1519, %v1519
        %v1654 = vmul.f32 %v1520, %v1520
        %v1655 = vmul.f32 %v1521, %v1521
        %v1656 = vmul.f32 %v1522, %v1522
        %v1657 = vadd.f32 %v1593, %v1594
        %v1658 = vadd.f32 %v1657, %v1595
        %v1659 = vadd.f32 %v1658, %v1596
        %v1660 = vadd.f32 %v1659, %v1597
        %v1661 = vadd.f32 %v1660, %v1598
        %v1662 = vadd.f32 %v1661, %v1599
        %v1663 = vadd.f32 %v1662, %v1600
        %v1664 = vadd.f32 %v1663, %v1601
        %v1665 = vadd.f32 %v1664, %v1602
        %v1666 = vadd.f32 %v1665, %v1603
        %v1667 = vadd.f32 %v1666, %v1604
        %v1668 = vadd.f32 %v1667, %v1605
        %v1669 = vadd.f32 %v1668, %v1606
        %v1670 = vadd.f32 %v1669, %v1607
        %v1671 = vadd.f32 %v1670, %v1608
        %v1672 = vadd.f32 %v1671, %v1609
        %v1673 = vadd.f32 %v1672, %v1610
        %v1674 = vadd.f32 %v1673, %v1611
        %v1675 = vadd.f32 %v1674, %v1612
        %v1676 = vadd.f32 %v1675, %v1613
        %v1677 = vadd.f32 %v1676, %v1614
        %v1678 = vadd.f32 %v1677, %v1615
        %v1679 = vadd.f32 %v1678, %v1616
        %v1680 = vadd.f32 %v1679, %v1617
        %v1681 = vadd.f32 %v1680, %v1618
        %v1682 = vadd.f32 %v1681, %v1619
        %v1683 = vadd.f32 %v1682, %v1620
        %v1684 = vadd.f32 %v1683, %v1621
        %v1685 = vadd.f32 %v1684, %v1622
        %v1686 = vadd.f32 %v1685, %v1623
        %v1687 = vadd.f32 %v1686, %v1624
        %v1688 = vadd.f32 %v1687, %v1625
        %v1689 = vadd.f32 %v1688, %v1626
        %v1690 = vadd.f32 %v1689, %v1627
        %v1691 = vadd.f32 %v1690, %v1628
        %v1692 = vadd.f32 %v1691, %v1629
        %v1693 = vadd.f32 %v1692, %v1630
        %v1694 = vadd.f32 %v1693, %v1631
        %v1695 = vadd.f32 %v1694, %v1632
        %v1696 = vadd.f32 %v1695, %v1633
        %v1697 = vadd.f32 %v1696, %v1634
        %v1698 = vadd.f32 %v1697, %v1635
        %v1699 = vadd.f32 %v1698, %v1636
        %v1700 = vadd.f32 %v1699, %v1637
        %v1701 = vadd.f32 %v1700, %v1638
        %v1702 = vadd.f32 %v1701, %v1639
        %v1703 = vadd.f32 %v1702, %v1640
        %v1704 = vadd.f32 %v1703, %v1641
        %v1705 = vadd.f32 %v1704, %v1642
        %v1706 = vadd.f32 %v1705, %v1643
        %v1707 = vadd.f32 %v1706, %v1644
        %v1708 = vadd.f32 %v1707, %v1645
        %v1709 = vadd.f32 %v1708, %v1646
        %v1710 = vadd.f32 %v1709, %v1647
        %v1711 = vadd.f32 %v1710, %v1648
        %v1712 = vadd.f32 %v1711, %v1649
        %v1713 = vadd.f32 %v1712, %v1650
        %v1714 = vadd.f32 %v1713, %v1651
        %v1715 = vadd.f32 %v1714, %v1652
        %v1716 = vadd.f32 %v1715, %v1653
        %v1717 = vadd.f32 %v1716, %v1654
        %v1718 = vadd.f32 %v1717, %v1655
        %v1719 = vadd.f32 %v1718, %v1656
        %v1720 = vrot.slane %v1719, 4
        %v1721 = vadd.f32 %v1719, %v1720
        %v1722 = vrot.slane %v1721, 2
        %v1723 = vadd.f32 %v1721, %v1722
        %v1724 = vrot.slane %v1723, 1
        %v1725 = vadd.f32 %v1723, %v1724
        %v1726 = vmul.f32 %v1725, 0.001953125
        %v1727 = vmul.f32 %v1592, %v1592
        %v1728 = vsub.f32 %v1726, %v1727
        %v1729 = vmax.f32 %v1728, 0.0
        %v1730 = vadd.f32 %v1729, 1e-05
        %v1731 = vrsqrt.pop %v1730
        %v1732 = vmul.f32 %v1731, %v1730
        %v1733 = vmul.f32 %v1732, %v1731
        %v1734 = vmul.f32 0.5, %v1733
        %v1735 = vsub.f32 1.5, %v1734
        %v1736 = vmul.f32 %v1731, %v1735
        %vm1737 = vweird.f32 %v1730
        %vm1738 = vweird.f32 %v1731
        %vm1739 = vmor %vm1737, %vm1738
        %v1740 = vsel %vm1739, %v1731, %v1736
        %v1741 = vsub.f32 %v1459, %v1592
        %v1742 = vsub.f32 %v1460, %v1592
        %v1743 = vsub.f32 %v1461, %v1592
        %v1744 = vsub.f32 %v1462, %v1592
        %v1745 = vsub.f32 %v1463, %v1592
        %v1746 = vsub.f32 %v1464, %v1592
        %v1747 = vsub.f32 %v1465, %v1592
        %v1748 = vsub.f32 %v1466, %v1592
        %v1749 = vsub.f32 %v1467, %v1592
        %v1750 = vsub.f32 %v1468, %v1592
        %v1751 = vsub.f32 %v1469, %v1592
        %v1752 = vsub.f32 %v1470, %v1592
        %v1753 = vsub.f32 %v1471, %v1592
        %v1754 = vsub.f32 %v1472, %v1592
        %v1755 = vsub.f32 %v1473, %v1592
        %v1756 = vsub.f32 %v1474, %v1592
        %v1757 = vsub.f32 %v1475, %v1592
        %v1758 = vsub.f32 %v1476, %v1592
        %v1759 = vsub.f32 %v1477, %v1592
        %v1760 = vsub.f32 %v1478, %v1592
        %v1761 = vsub.f32 %v1479, %v1592
        %v1762 = vsub.f32 %v1480, %v1592
        %v1763 = vsub.f32 %v1481, %v1592
        %v1764 = vsub.f32 %v1482, %v1592
        %v1765 = vsub.f32 %v1483, %v1592
        %v1766 = vsub.f32 %v1484, %v1592
        %v1767 = vsub.f32 %v1485, %v1592
        %v1768 = vsub.f32 %v1486, %v1592
        %v1769 = vsub.f32 %v1487, %v1592
        %v1770 = vsub.f32 %v1488, %v1592
        %v1771 = vsub.f32 %v1489, %v1592
        %v1772 = vsub.f32 %v1490, %v1592
        %v1773 = vsub.f32 %v1491, %v1592
        %v1774 = vsub.f32 %v1492, %v1592
        %v1775 = vsub.f32 %v1493, %v1592
        %v1776 = vsub.f32 %v1494, %v1592
        %v1777 = vsub.f32 %v1495, %v1592
        %v1778 = vsub.f32 %v1496, %v1592
        %v1779 = vsub.f32 %v1497, %v1592
        %v1780 = vsub.f32 %v1498, %v1592
        %v1781 = vsub.f32 %v1499, %v1592
        %v1782 = vsub.f32 %v1500, %v1592
        %v1783 = vsub.f32 %v1501, %v1592
        %v1784 = vsub.f32 %v1502, %v1592
        %v1785 = vsub.f32 %v1503, %v1592
        %v1786 = vsub.f32 %v1504, %v1592
        %v1787 = vsub.f32 %v1505, %v1592
        %v1788 = vsub.f32 %v1506, %v1592
        %v1789 = vsub.f32 %v1507, %v1592
        %v1790 = vsub.f32 %v1508, %v1592
        %v1791 = vsub.f32 %v1509, %v1592
        %v1792 = vsub.f32 %v1510, %v1592
        %v1793 = vsub.f32 %v1511, %v1592
        %v1794 = vsub.f32 %v1512, %v1592
        %v1795 = vsub.f32 %v1513, %v1592
        %v1796 = vsub.f32 %v1514, %v1592
        %v1797 = vsub.f32 %v1515, %v1592
        %v1798 = vsub.f32 %v1516, %v1592
        %v1799 = vsub.f32 %v1517, %v1592
        %v1800 = vsub.f32 %v1518, %v1592
        %v1801 = vsub.f32 %v1519, %v1592
        %v1802 = vsub.f32 %v1520, %v1592
        %v1803 = vsub.f32 %v1521, %v1592
        %v1804 = vsub.f32 %v1522, %v1592
        %v1805 = vmul.f32 %v1741, %v1740
        %v1806 = vmul.f32 %v1742, %v1740
        %v1807 = vmul.f32 %v1743, %v1740
        %v1808 = vmul.f32 %v1744, %v1740
        %v1809 = vmul.f32 %v1745, %v1740
        %v1810 = vmul.f32 %v1746, %v1740
        %v1811 = vmul.f32 %v1747, %v1740
        %v1812 = vmul.f32 %v1748, %v1740
        %v1813 = vmul.f32 %v1749, %v1740
        %v1814 = vmul.f32 %v1750, %v1740
        %v1815 = vmul.f32 %v1751, %v1740
        %v1816 = vmul.f32 %v1752, %v1740
        %v1817 = vmul.f32 %v1753, %v1740
        %v1818 = vmul.f32 %v1754, %v1740
        %v1819 = vmul.f32 %v1755, %v1740
        %v1820 = vmul.f32 %v1756, %v1740
        %v1821 = vmul.f32 %v1757, %v1740
        %v1822 = vmul.f32 %v1758, %v1740
        %v1823 = vmul.f32 %v1759, %v1740
        %v1824 = vmul.f32 %v1760, %v1740
        %v1825 = vmul.f32 %v1761, %v1740
        %v1826 = vmul.f32 %v1762, %v1740
        %v1827 = vmul.f32 %v1763, %v1740
        %v1828 = vmul.f32 %v1764, %v1740
        %v1829 = vmul.f32 %v1765, %v1740
        %v1830 = vmul.f32 %v1766, %v1740
        %v1831 = vmul.f32 %v1767, %v1740
        %v1832 = vmul.f32 %v1768, %v1740
        %v1833 = vmul.f32 %v1769, %v1740
        %v1834 = vmul.f32 %v1770, %v1740
        %v1835 = vmul.f32 %v1771, %v1740
        %v1836 = vmul.f32 %v1772, %v1740
        %v1837 = vmul.f32 %v1773, %v1740
        %v1838 = vmul.f32 %v1774, %v1740
        %v1839 = vmul.f32 %v1775, %v1740
        %v1840 = vmul.f32 %v1776, %v1740
        %v1841 = vmul.f32 %v1777, %v1740
        %v1842 = vmul.f32 %v1778, %v1740
        %v1843 = vmul.f32 %v1779, %v1740
        %v1844 = vmul.f32 %v1780, %v1740
        %v1845 = vmul.f32 %v1781, %v1740
        %v1846 = vmul.f32 %v1782, %v1740
        %v1847 = vmul.f32 %v1783, %v1740
        %v1848 = vmul.f32 %v1784, %v1740
        %v1849 = vmul.f32 %v1785, %v1740
        %v1850 = vmul.f32 %v1786, %v1740
        %v1851 = vmul.f32 %v1787, %v1740
        %v1852 = vmul.f32 %v1788, %v1740
        %v1853 = vmul.f32 %v1789, %v1740
        %v1854 = vmul.f32 %v1790, %v1740
        %v1855 = vmul.f32 %v1791, %v1740
        %v1856 = vmul.f32 %v1792, %v1740
        %v1857 = vmul.f32 %v1793, %v1740
        %v1858 = vmul.f32 %v1794, %v1740
        %v1859 = vmul.f32 %v1795, %v1740
        %v1860 = vmul.f32 %v1796, %v1740
        %v1861 = vmul.f32 %v1797, %v1740
        %v1862 = vmul.f32 %v1798, %v1740
        %v1863 = vmul.f32 %v1799, %v1740
        %v1864 = vmul.f32 %v1800, %v1740
        %v1865 = vmul.f32 %v1801, %v1740
        %v1866 = vmul.f32 %v1802, %v1740
        %v1867 = vmul.f32 %v1803, %v1740
        %v1868 = vmul.f32 %v1804, %v1740
        %vm1869 = vcmp.ge.f32.partialorder %v1805, 0.0
        %vm1870 = vcmp.ge.f32.partialorder %v1806, 0.0
        %vm1871 = vcmp.ge.f32.partialorder %v1807, 0.0
        %vm1872 = vcmp.ge.f32.partialorder %v1808, 0.0
        %vm1873 = vcmp.ge.f32.partialorder %v1809, 0.0
        %vm1874 = vcmp.ge.f32.partialorder %v1810, 0.0
        %vm1875 = vcmp.ge.f32.partialorder %v1811, 0.0
        %vm1876 = vcmp.ge.f32.partialorder %v1812, 0.0
        %vm1877 = vcmp.ge.f32.partialorder %v1813, 0.0
        %vm1878 = vcmp.ge.f32.partialorder %v1814, 0.0
        %vm1879 = vcmp.ge.f32.partialorder %v1815, 0.0
        %vm1880 = vcmp.ge.f32.partialorder %v1816, 0.0
        %vm1881 = vcmp.ge.f32.partialorder %v1817, 0.0
        %vm1882 = vcmp.ge.f32.partialorder %v1818, 0.0
        %vm1883 = vcmp.ge.f32.partialorder %v1819, 0.0
        %vm1884 = vcmp.ge.f32.partialorder %v1820, 0.0
        %vm1885 = vcmp.ge.f32.partialorder %v1821, 0.0
        %vm1886 = vcmp.ge.f32.partialorder %v1822, 0.0
        %vm1887 = vcmp.ge.f32.partialorder %v1823, 0.0
        %vm1888 = vcmp.ge.f32.partialorder %v1824, 0.0
        %vm1889 = vcmp.ge.f32.partialorder %v1825, 0.0
        %vm1890 = vcmp.ge.f32.partialorder %v1826, 0.0
        %vm1891 = vcmp.ge.f32.partialorder %v1827, 0.0
        %vm1892 = vcmp.ge.f32.partialorder %v1828, 0.0
        %vm1893 = vcmp.ge.f32.partialorder %v1829, 0.0
        %vm1894 = vcmp.ge.f32.partialorder %v1830, 0.0
        %vm1895 = vcmp.ge.f32.partialorder %v1831, 0.0
        %vm1896 = vcmp.ge.f32.partialorder %v1832, 0.0
        %vm1897 = vcmp.ge.f32.partialorder %v1833, 0.0
        %vm1898 = vcmp.ge.f32.partialorder %v1834, 0.0
        %vm1899 = vcmp.ge.f32.partialorder %v1835, 0.0
        %vm1900 = vcmp.ge.f32.partialorder %v1836, 0.0
        %vm1901 = vcmp.ge.f32.partialorder %v1837, 0.0
        %vm1902 = vcmp.ge.f32.partialorder %v1838, 0.0
        %vm1903 = vcmp.ge.f32.partialorder %v1839, 0.0
        %vm1904 = vcmp.ge.f32.partialorder %v1840, 0.0
        %vm1905 = vcmp.ge.f32.partialorder %v1841, 0.0
        %vm1906 = vcmp.ge.f32.partialorder %v1842, 0.0
        %vm1907 = vcmp.ge.f32.partialorder %v1843, 0.0
        %vm1908 = vcmp.ge.f32.partialorder %v1844, 0.0
        %vm1909 = vcmp.ge.f32.partialorder %v1845, 0.0
        %vm1910 = vcmp.ge.f32.partialorder %v1846, 0.0
        %vm1911 = vcmp.ge.f32.partialorder %v1847, 0.0
        %vm1912 = vcmp.ge.f32.partialorder %v1848, 0.0
        %vm1913 = vcmp.ge.f32.partialorder %v1849, 0.0
        %vm1914 = vcmp.ge.f32.partialorder %v1850, 0.0
        %vm1915 = vcmp.ge.f32.partialorder %v1851, 0.0
        %vm1916 = vcmp.ge.f32.partialorder %v1852, 0.0
        %vm1917 = vcmp.ge.f32.partialorder %v1853, 0.0
        %vm1918 = vcmp.ge.f32.partialorder %v1854, 0.0
        %vm1919 = vcmp.ge.f32.partialorder %v1855, 0.0
        %vm1920 = vcmp.ge.f32.partialorder %v1856, 0.0
        %vm1921 = vcmp.ge.f32.partialorder %v1857, 0.0
        %vm1922 = vcmp.ge.f32.partialorder %v1858, 0.0
        %vm1923 = vcmp.ge.f32.partialorder %v1859, 0.0
        %vm1924 = vcmp.ge.f32.partialorder %v1860, 0.0
        %vm1925 = vcmp.ge.f32.partialorder %v1861, 0.0
        %vm1926 = vcmp.ge.f32.partialorder %v1862, 0.0
        %vm1927 = vcmp.ge.f32.partialorder %v1863, 0.0
        %vm1928 = vcmp.ge.f32.partialorder %v1864, 0.0
        %vm1929 = vcmp.ge.f32.partialorder %v1865, 0.0
        %vm1930 = vcmp.ge.f32.partialorder %v1866, 0.0
        %vm1931 = vcmp.ge.f32.partialorder %v1867, 0.0
        %vm1932 = vcmp.ge.f32.partialorder %v1868, 0.0
        %v1933 = vmul.f32 %v1805, 0.2
        %v1934 = vmul.f32 %v1806, 0.2
        %v1935 = vmul.f32 %v1807, 0.2
        %v1936 = vmul.f32 %v1808, 0.2
        %v1937 = vmul.f32 %v1809, 0.2
        %v1938 = vmul.f32 %v1810, 0.2
        %v1939 = vmul.f32 %v1811, 0.2
        %v1940 = vmul.f32 %v1812, 0.2
        %v1941 = vmul.f32 %v1813, 0.2
        %v1942 = vmul.f32 %v1814, 0.2
        %v1943 = vmul.f32 %v1815, 0.2
        %v1944 = vmul.f32 %v1816, 0.2
        %v1945 = vmul.f32 %v1817, 0.2
        %v1946 = vmul.f32 %v1818, 0.2
        %v1947 = vmul.f32 %v1819, 0.2
        %v1948 = vmul.f32 %v1820, 0.2
        %v1949 = vmul.f32 %v1821, 0.2
        %v1950 = vmul.f32 %v1822, 0.2
        %v1951 = vmul.f32 %v1823, 0.2
        %v1952 = vmul.f32 %v1824, 0.2
        %v1953 = vmul.f32 %v1825, 0.2
        %v1954 = vmul.f32 %v1826, 0.2
        %v1955 = vmul.f32 %v1827, 0.2
        %v1956 = vmul.f32 %v1828, 0.2
        %v1957 = vmul.f32 %v1829, 0.2
        %v1958 = vmul.f32 %v1830, 0.2
        %v1959 = vmul.f32 %v1831, 0.2
        %v1960 = vmul.f32 %v1832, 0.2
        %v1961 = vmul.f32 %v1833, 0.2
        %v1962 = vmul.f32 %v1834, 0.2
        %v1963 = vmul.f32 %v1835, 0.2
        %v1964 = vmul.f32 %v1836, 0.2
        %v1965 = vmul.f32 %v1837, 0.2
        %v1966 = vmul.f32 %v1838, 0.2
        %v1967 = vmul.f32 %v1839, 0.2
        %v1968 = vmul.f32 %v1840, 0.2
        %v1969 = vmul.f32 %v1841, 0.2
        %v1970 = vmul.f32 %v1842, 0.2
        %v1971 = vmul.f32 %v1843, 0.2
        %v1972 = vmul.f32 %v1844, 0.2
        %v1973 = vmul.f32 %v1845, 0.2
        %v1974 = vmul.f32 %v1846, 0.2
        %v1975 = vmul.f32 %v1847, 0.2
        %v1976 = vmul.f32 %v1848, 0.2
        %v1977 = vmul.f32 %v1849, 0.2
        %v1978 = vmul.f32 %v1850, 0.2
        %v1979 = vmul.f32 %v1851, 0.2
        %v1980 = vmul.f32 %v1852, 0.2
        %v1981 = vmul.f32 %v1853, 0.2
        %v1982 = vmul.f32 %v1854, 0.2
        %v1983 = vmul.f32 %v1855, 0.2
        %v1984 = vmul.f32 %v1856, 0.2
        %v1985 = vmul.f32 %v1857, 0.2
        %v1986 = vmul.f32 %v1858, 0.2
        %v1987 = vmul.f32 %v1859, 0.2
        %v1988 = vmul.f32 %v1860, 0.2
        %v1989 = vmul.f32 %v1861, 0.2
        %v1990 = vmul.f32 %v1862, 0.2
        %v1991 = vmul.f32 %v1863, 0.2
        %v1992 = vmul.f32 %v1864, 0.2
        %v1993 = vmul.f32 %v1865, 0.2
        %v1994 = vmul.f32 %v1866, 0.2
        %v1995 = vmul.f32 %v1867, 0.2
        %v1996 = vmul.f32 %v1868, 0.2
        %v1997 = vsel %vm1869, %v1805, %v1933
        %v1998 = vsel %vm1870, %v1806, %v1934
        %v1999 = vsel %vm1871, %v1807, %v1935
        %v2000 = vsel %vm1872, %v1808, %v1936
        %v2001 = vsel %vm1873, %v1809, %v1937
        %v2002 = vsel %vm1874, %v1810, %v1938
        %v2003 = vsel %vm1875, %v1811, %v1939
        %v2004 = vsel %vm1876, %v1812, %v1940
        %v2005 = vsel %vm1877, %v1813, %v1941
        %v2006 = vsel %vm1878, %v1814, %v1942
        %v2007 = vsel %vm1879, %v1815, %v1943
        %v2008 = vsel %vm1880, %v1816, %v1944
        %v2009 = vsel %vm1881, %v1817, %v1945
        %v2010 = vsel %vm1882, %v1818, %v1946
        %v2011 = vsel %vm1883, %v1819, %v1947
        %v2012 = vsel %vm1884, %v1820, %v1948
        %v2013 = vsel %vm1885, %v1821, %v1949
        %v2014 = vsel %vm1886, %v1822, %v1950
        %v2015 = vsel %vm1887, %v1823, %v1951
        %v2016 = vsel %vm1888, %v1824, %v1952
        %v2017 = vsel %vm1889, %v1825, %v1953
        %v2018 = vsel %vm1890, %v1826, %v1954
        %v2019 = vsel %vm1891, %v1827, %v1955
        %v2020 = vsel %vm1892, %v1828, %v1956
        %v2021 = vsel %vm1893, %v1829, %v1957
        %v2022 = vsel %vm1894, %v1830, %v1958
        %v2023 = vsel %vm1895, %v1831, %v1959
        %v2024 = vsel %vm1896, %v1832, %v1960
        %v2025 = vsel %vm1897, %v1833, %v1961
        %v2026 = vsel %vm1898, %v1834, %v1962
        %v2027 = vsel %vm1899, %v1835, %v1963
        %v2028 = vsel %vm1900, %v1836, %v1964
        %v2029 = vsel %vm1901, %v1837, %v1965
        %v2030 = vsel %vm1902, %v1838, %v1966
        %v2031 = vsel %vm1903, %v1839, %v1967
        %v2032 = vsel %vm1904, %v1840, %v1968
        %v2033 = vsel %vm1905, %v1841, %v1969
        %v2034 = vsel %vm1906, %v1842, %v1970
        %v2035 = vsel %vm1907, %v1843, %v1971
        %v2036 = vsel %vm1908, %v1844, %v1972
        %v2037 = vsel %vm1909, %v1845, %v1973
        %v2038 = vsel %vm1910, %v1846, %v1974
        %v2039 = vsel %vm1911, %v1847, %v1975
        %v2040 = vsel %vm1912, %v1848, %v1976
        %v2041 = vsel %vm1913, %v1849, %v1977
        %v2042 = vsel %vm1914, %v1850, %v1978
        %v2043 = vsel %vm1915, %v1851, %v1979
        %v2044 = vsel %vm1916, %v1852, %v1980
        %v2045 = vsel %vm1917, %v1853, %v1981
        %v2046 = vsel %vm1918, %v1854, %v1982
        %v2047 = vsel %vm1919, %v1855, %v1983
        %v2048 = vsel %vm1920, %v1856, %v1984
        %v2049 = vsel %vm1921, %v1857, %v1985
        %v2050 = vsel %vm1922, %v1858, %v1986
        %v2051 = vsel %vm1923, %v1859, %v1987
        %v2052 = vsel %vm1924, %v1860, %v1988
        %v2053 = vsel %vm1925, %v1861, %v1989
        %v2054 = vsel %vm1926, %v1862, %v1990
        %v2055 = vsel %vm1927, %v1863, %v1991
        %v2056 = vsel %vm1928, %v1864, %v1992
        %v2057 = vsel %vm1929, %v1865, %v1993
        %v2058 = vsel %vm1930, %v1866, %v1994
        %v2059 = vsel %vm1931, %v1867, %v1995
        %v2060 = vsel %vm1932, %v1868, %v1996
        %v2061 = vpack.c.bf16 %v1997, %v1997
        %v2062 = vpack.c.bf16 %v1998, %v1998
        %v2063 = vpack.c.bf16 %v1999, %v1999
        %v2064 = vpack.c.bf16 %v2000, %v2000
        %v2065 = vpack.c.bf16 %v2001, %v2001
        %v2066 = vpack.c.bf16 %v2002, %v2002
        %v2067 = vpack.c.bf16 %v2003, %v2003
        %v2068 = vpack.c.bf16 %v2004, %v2004
        %v2069 = vpack.c.bf16 %v2005, %v2005
        %v2070 = vpack.c.bf16 %v2006, %v2006
        %v2071 = vpack.c.bf16 %v2007, %v2007
        %v2072 = vpack.c.bf16 %v2008, %v2008
        %v2073 = vpack.c.bf16 %v2009, %v2009
        %v2074 = vpack.c.bf16 %v2010, %v2010
        %v2075 = vpack.c.bf16 %v2011, %v2011
        %v2076 = vpack.c.bf16 %v2012, %v2012
        %v2077 = vpack.c.bf16 %v2013, %v2013
        %v2078 = vpack.c.bf16 %v2014, %v2014
        %v2079 = vpack.c.bf16 %v2015, %v2015
        %v2080 = vpack.c.bf16 %v2016, %v2016
        %v2081 = vpack.c.bf16 %v2017, %v2017
        %v2082 = vpack.c.bf16 %v2018, %v2018
        %v2083 = vpack.c.bf16 %v2019, %v2019
        %v2084 = vpack.c.bf16 %v2020, %v2020
        %v2085 = vpack.c.bf16 %v2021, %v2021
        %v2086 = vpack.c.bf16 %v2022, %v2022
        %v2087 = vpack.c.bf16 %v2023, %v2023
        %v2088 = vpack.c.bf16 %v2024, %v2024
        %v2089 = vpack.c.bf16 %v2025, %v2025
        %v2090 = vpack.c.bf16 %v2026, %v2026
        %v2091 = vpack.c.bf16 %v2027, %v2027
        %v2092 = vpack.c.bf16 %v2028, %v2028
        %v2093 = vpack.c.bf16 %v2029, %v2029
        %v2094 = vpack.c.bf16 %v2030, %v2030
        %v2095 = vpack.c.bf16 %v2031, %v2031
        %v2096 = vpack.c.bf16 %v2032, %v2032
        %v2097 = vpack.c.bf16 %v2033, %v2033
        %v2098 = vpack.c.bf16 %v2034, %v2034
        %v2099 = vpack.c.bf16 %v2035, %v2035
        %v2100 = vpack.c.bf16 %v2036, %v2036
        %v2101 = vpack.c.bf16 %v2037, %v2037
        %v2102 = vpack.c.bf16 %v2038, %v2038
        %v2103 = vpack.c.bf16 %v2039, %v2039
        %v2104 = vpack.c.bf16 %v2040, %v2040
        %v2105 = vpack.c.bf16 %v2041, %v2041
        %v2106 = vpack.c.bf16 %v2042, %v2042
        %v2107 = vpack.c.bf16 %v2043, %v2043
        %v2108 = vpack.c.bf16 %v2044, %v2044
        %v2109 = vpack.c.bf16 %v2045, %v2045
        %v2110 = vpack.c.bf16 %v2046, %v2046
        %v2111 = vpack.c.bf16 %v2047, %v2047
        %v2112 = vpack.c.bf16 %v2048, %v2048
        %v2113 = vpack.c.bf16 %v2049, %v2049
        %v2114 = vpack.c.bf16 %v2050, %v2050
        %v2115 = vpack.c.bf16 %v2051, %v2051
        %v2116 = vpack.c.bf16 %v2052, %v2052
        %v2117 = vpack.c.bf16 %v2053, %v2053
        %v2118 = vpack.c.bf16 %v2054, %v2054
        %v2119 = vpack.c.bf16 %v2055, %v2055
        %v2120 = vpack.c.bf16 %v2056, %v2056
        %v2121 = vpack.c.bf16 %v2057, %v2057
        %v2122 = vpack.c.bf16 %v2058, %v2058
        %v2123 = vpack.c.bf16 %v2059, %v2059
        %v2124 = vpack.c.bf16 %v2060, %v2060
        %2125 = vst [vmem:[%s2] sm:$0xf] %v2061
        %2126 = vst [vmem:[%s2 + $0x4] sm:$0xf] %v2062
        %2127 = vst [vmem:[%s2 + $0x8] sm:$0xf] %v2063
        %2128 = vst [vmem:[%s2 + $0xc] sm:$0xf] %v2064
        %2129 = vst [vmem:[%s2 + $0x10] sm:$0xf] %v2065
        %2130 = vst [vmem:[%s2 + $0x14] sm:$0xf] %v2066
        %2131 = vst [vmem:[%s2 + $0x18] sm:$0xf] %v2067
        %2132 = vst [vmem:[%s2 + $0x1c] sm:$0xf] %v2068
        %2133 = vst [vmem:[%s2 + $0x20] sm:$0xf] %v2069
        %2134 = vst [vmem:[%s2 + $0x24] sm:$0xf] %v2070
        %2135 = vst [vmem:[%s2 + $0x28] sm:$0xf] %v2071
        %2136 = vst [vmem:[%s2 + $0x2c] sm:$0xf] %v2072
        %2137 = vst [vmem:[%s2 + $0x30] sm:$0xf] %v2073
        %2138 = vst [vmem:[%s2 + $0x34] sm:$0xf] %v2074
        %2139 = vst [vmem:[%s2 + $0x38] sm:$0xf] %v2075
        %2140 = vst [vmem:[%s2 + $0x3c] sm:$0xf] %v2076
        %2141 = vst [vmem:[%s2 + $0x40] sm:$0xf] %v2077
        %2142 = vst [vmem:[%s2 + $0x44] sm:$0xf] %v2078
        %2143 = vst [vmem:[%s2 + $0x48] sm:$0xf] %v2079
        %2144 = vst [vmem:[%s2 + $0x4c] sm:$0xf] %v2080
        %2145 = vst [vmem:[%s2 + $0x50] sm:$0xf] %v2081
        %2146 = vst [vmem:[%s2 + $0x54] sm:$0xf] %v2082
        %2147 = vst [vmem:[%s2 + $0x58] sm:$0xf] %v2083
        %2148 = vst [vmem:[%s2 + $0x5c] sm:$0xf] %v2084
        %2149 = vst [vmem:[%s2 + $0x60] sm:$0xf] %v2085
        %2150 = vst [vmem:[%s2 + $0x64] sm:$0xf] %v2086
        %2151 = vst [vmem:[%s2 + $0x68] sm:$0xf] %v2087
        %2152 = vst [vmem:[%s2 + $0x6c] sm:$0xf] %v2088
        %2153 = vst [vmem:[%s2 + $0x70] sm:$0xf] %v2089
        %2154 = vst [vmem:[%s2 + $0x74] sm:$0xf] %v2090
        %2155 = vst [vmem:[%s2 + $0x78] sm:$0xf] %v2091
        %2156 = vst [vmem:[%s2 + $0x7c] sm:$0xf] %v2092
        %2157 = vst [vmem:[%s2 + $0x80] sm:$0xf] %v2093
        %2158 = vst [vmem:[%s2 + $0x84] sm:$0xf] %v2094
        %2159 = vst [vmem:[%s2 + $0x88] sm:$0xf] %v2095
        %2160 = vst [vmem:[%s2 + $0x8c] sm:$0xf] %v2096
        %2161 = vst [vmem:[%s2 + $0x90] sm:$0xf] %v2097
        %2162 = vst [vmem:[%s2 + $0x94] sm:$0xf] %v2098
        %2163 = vst [vmem:[%s2 + $0x98] sm:$0xf] %v2099
        %2164 = vst [vmem:[%s2 + $0x9c] sm:$0xf] %v2100
        %2165 = vst [vmem:[%s2 + $0xa0] sm:$0xf] %v2101
        %2166 = vst [vmem:[%s2 + $0xa4] sm:$0xf] %v2102
        %2167 = vst [vmem:[%s2 + $0xa8] sm:$0xf] %v2103
        %2168 = vst [vmem:[%s2 + $0xac] sm:$0xf] %v2104
        %2169 = vst [vmem:[%s2 + $0xb0] sm:$0xf] %v2105
        %2170 = vst [vmem:[%s2 + $0xb4] sm:$0xf] %v2106
        %2171 = vst [vmem:[%s2 + $0xb8] sm:$0xf] %v2107
        %2172 = vst [vmem:[%s2 + $0xbc] sm:$0xf] %v2108
        %2173 = vst [vmem:[%s2 + $0xc0] sm:$0xf] %v2109
        %2174 = vst [vmem:[%s2 + $0xc4] sm:$0xf] %v2110
        %2175 = vst [vmem:[%s2 + $0xc8] sm:$0xf] %v2111
        %2176 = vst [vmem:[%s2 + $0xcc] sm:$0xf] %v2112
        %2177 = vst [vmem:[%s2 + $0xd0] sm:$0xf] %v2113
        %2178 = vst [vmem:[%s2 + $0xd4] sm:$0xf] %v2114
        %2179 = vst [vmem:[%s2 + $0xd8] sm:$0xf] %v2115
        %2180 = vst [vmem:[%s2 + $0xdc] sm:$0xf] %v2116
        %2181 = vst [vmem:[%s2 + $0xe0] sm:$0xf] %v2117
        %2182 = vst [vmem:[%s2 + $0xe4] sm:$0xf] %v2118
        %2183 = vst [vmem:[%s2 + $0xe8] sm:$0xf] %v2119
        %2184 = vst [vmem:[%s2 + $0xec] sm:$0xf] %v2120
        %2185 = vst [vmem:[%s2 + $0xf0] sm:$0xf] %v2121
        %2186 = vst [vmem:[%s2 + $0xf4] sm:$0xf] %v2122
        %2187 = vst [vmem:[%s2 + $0xf8] sm:$0xf] %v2123
        %2188 = vst [vmem:[%s2 + $0xfc] sm:$0xf] %v2124
      $region32: #{generator_forward.10} parent=27 // pred_fallthru
        _
      // Predicated region
      $region33: #{generator_forward.10} parent=27 // pred_check
        %p2189 = pneg %p78
      $region34: #{generator_forward.10} parent=27 // pred_check_branch
        %2191 = sbr.rel (%p2189) target = $region36
      $region35: #{generator_forward.10} parent=27 // pred_region
        _
      $region36: #{generator_forward.10} parent=27 // pred_fallthru
        _
      // Predicated region
      $region37: #{generator_forward.10} parent=27 // pred_check
        %p2192 = pneg %p78
      $region38: #{generator_forward.10} parent=27 // pred_check_branch
        %2194 = sbr.rel (%p2192) target = $region40
      $region39: #{generator_forward.10} parent=27 // pred_region
        _
      $region40: #{generator_forward.10} parent=27 // pred_fallthru
        _
    $region28: #{generator_forward.10} parent=5 // pred_fallthru
      _
    %p2195 = scmp.le.s32.totalorder 2, %s8
    // Predicated region
    $region41: #{generator_forward.10} parent=5 // pred_check
      %p2196 = pneg %p2195
    $region42: #{generator_forward.10} parent=5 // pred_check_branch
      %2198 = sbr.rel (%p2196) target = $region44
    $region43: #{generator_forward.10} parent=5 // pred_region
      %s2199 = ssub.s32 %s8, 2
    $region44: #{generator_forward.10} parent=5 // pred_fallthru
      _
  $region6: #{generator_forward.10} parent=0 // loop_footer
    %s12 = sadd.s32 1, %s8
  $region7: #{generator_forward.10} parent=0 // loop_footer_branch
    %7 = sbr.rel target = $region3
  $region8: #{generator_forward.10} parent=0 // loop_exit
    _

// kernel: generator_forward.11
$region0: #{generator_forward.11}
  #allocation0 [shape = 'u32[]', space=smem, size = 0x4, offset = 0x4, fixed_abs, tag = 'smem constant byte address 0x4 - core index']
  #allocation1 [shape = 'u32[72,128]{1,0:T(1,128)}', space=vmem, size = 0x9000, scoped, tag = 'internal scratch']
  %s0 = inlined_call_operand.vmem [shape: bf16[512,1152], index: 0, kind: input, shape index: {}]
  %s1 = inlined_call_operand.vmem [shape: bf16[1152,128], index: 1, kind: input, shape index: {}]
  %s2 = inlined_call_operand.vmem [shape: f32[1,128], index: 2, kind: input, shape index: {}]
  %s3 = inlined_call_operand.vmem [shape: f32[512,128], index: 3, kind: output, shape index: {}]
  %s4 = sld [smem:[#allocation0]]
  $region22: #{generator_forward.11} parent=0
    _
  %s6 = ssub.s32 1, %s4
  %s7 = scalar_select 0, %s6, %s4
  // Predicated region
  $region2: #{generator_forward.11} parent=0 // pred_check
    _
  $region3: #{generator_forward.11} parent=0 // pred_check_branch
    %9 = sbr.rel (0) target = $region5
  $region4: #{generator_forward.11} parent=0 // pred_region
    _
  $region5: #{generator_forward.11} parent=0 // pred_fallthru
    _
  // Predicated region
  $region6: #{generator_forward.11} parent=0 // pred_check
    _
  $region7: #{generator_forward.11} parent=0 // pred_check_branch
    %11 = sbr.rel (0) target = $region9
  $region8: #{generator_forward.11} parent=0 // pred_region
    _
  $region9: #{generator_forward.11} parent=0 // pred_fallthru
    _
  // Predicated region
  $region10: #{generator_forward.11} parent=0 // pred_check
    _
  $region11: #{generator_forward.11} parent=0 // pred_check_branch
    %13 = sbr.rel (0) target = $region13
  $region12: #{generator_forward.11} parent=0 // pred_region
    _
  $region13: #{generator_forward.11} parent=0 // pred_fallthru
    _
  %v14 = vld [vmem:[%s0] sm:$0xff]
  %v15 = vld [vmem:[%s0 + $0x8] sm:$0xff]
  %v16 = vld [vmem:[%s0 + $0x10] sm:$0xff]
  %v17 = vld [vmem:[%s0 + $0x18] sm:$0xff]
  %v18 = vld [vmem:[%s0 + $0x20] sm:$0xf]
  %v19 = vld [vmem:[%s0 + $0x24] sm:$0xff]
  %v20 = vld [vmem:[%s0 + $0x2c] sm:$0xff]
  %v21 = vld [vmem:[%s0 + $0x34] sm:$0xff]
  %v22 = vld [vmem:[%s0 + $0x3c] sm:$0xff]
  %v23 = vld [vmem:[%s0 + $0x44] sm:$0xf]
  %v24 = vld [vmem:[%s0 + $0x48] sm:$0xff]
  %v25 = vld [vmem:[%s0 + $0x50] sm:$0xff]
  %v26 = vld [vmem:[%s0 + $0x58] sm:$0xff]
  %v27 = vld [vmem:[%s0 + $0x60] sm:$0xff]
  %v28 = vld [vmem:[%s0 + $0x68] sm:$0xf]
  %v29 = vld [vmem:[%s0 + $0x6c] sm:$0xff]
  %v30 = vld [vmem:[%s0 + $0x74] sm:$0xff]
  %v31 = vld [vmem:[%s0 + $0x7c] sm:$0xff]
  %v32 = vld [vmem:[%s0 + $0x84] sm:$0xff]
  %v33 = vld [vmem:[%s0 + $0x8c] sm:$0xf]
  %v34 = vld [vmem:[%s0 + $0x90] sm:$0xff]
  %v35 = vld [vmem:[%s0 + $0x98] sm:$0xff]
  %v36 = vld [vmem:[%s0 + $0xa0] sm:$0xff]
  %v37 = vld [vmem:[%s0 + $0xa8] sm:$0xff]
  %v38 = vld [vmem:[%s0 + $0xb0] sm:$0xf]
  %v39 = vld [vmem:[%s0 + $0xb4] sm:$0xff]
  %v40 = vld [vmem:[%s0 + $0xbc] sm:$0xff]
  %v41 = vld [vmem:[%s0 + $0xc4] sm:$0xff]
  %v42 = vld [vmem:[%s0 + $0xcc] sm:$0xff]
  %v43 = vld [vmem:[%s0 + $0xd4] sm:$0xf]
  %v44 = vld [vmem:[%s0 + $0xd8] sm:$0xff]
  %v45 = vld [vmem:[%s0 + $0xe0] sm:$0xff]
  %v46 = vld [vmem:[%s0 + $0xe8] sm:$0xff]
  %v47 = vld [vmem:[%s0 + $0xf0] sm:$0xff]
  %v48 = vld [vmem:[%s0 + $0xf8] sm:$0xf]
  %v49 = vld [vmem:[%s0 + $0xfc] sm:$0xff]
  %v50 = vld [vmem:[%s0 + $0x104] sm:$0xff]
  %v51 = vld [vmem:[%s0 + $0x10c] sm:$0xff]
  %v52 = vld [vmem:[%s0 + $0x114] sm:$0xff]
  %v53 = vld [vmem:[%s0 + $0x11c] sm:$0xf]
  %v54 = vld [vmem:[%s0 + $0x120] sm:$0xff]
  %v55 = vld [vmem:[%s0 + $0x128] sm:$0xff]
  %v56 = vld [vmem:[%s0 + $0x130] sm:$0xff]
  %v57 = vld [vmem:[%s0 + $0x138] sm:$0xff]
  %v58 = vld [vmem:[%s0 + $0x140] sm:$0xf]
  %v59 = vld [vmem:[%s0 + $0x144] sm:$0xff]
  %v60 = vld [vmem:[%s0 + $0x14c] sm:$0xff]
  %v61 = vld [vmem:[%s0 + $0x154] sm:$0xff]
  %v62 = vld [vmem:[%s0 + $0x15c] sm:$0xff]
  %v63 = vld [vmem:[%s0 + $0x164] sm:$0xf]
  %v64 = vld [vmem:[%s0 + $0x168] sm:$0xff]
  %v65 = vld [vmem:[%s0 + $0x170] sm:$0xff]
  %v66 = vld [vmem:[%s0 + $0x178] sm:$0xff]
  %v67 = vld [vmem:[%s0 + $0x180] sm:$0xff]
  %v68 = vld [vmem:[%s0 + $0x188] sm:$0xf]
  %v69 = vld [vmem:[%s0 + $0x18c] sm:$0xff]
  %v70 = vld [vmem:[%s0 + $0x194] sm:$0xff]
  %v71 = vld [vmem:[%s0 + $0x19c] sm:$0xff]
  %v72 = vld [vmem:[%s0 + $0x1a4] sm:$0xff]
  %v73 = vld [vmem:[%s0 + $0x1ac] sm:$0xf]
  %v74 = vld [vmem:[%s0 + $0x1b0] sm:$0xff]
  %v75 = vld [vmem:[%s0 + $0x1b8] sm:$0xff]
  %v76 = vld [vmem:[%s0 + $0x1c0] sm:$0xff]
  %v77 = vld [vmem:[%s0 + $0x1c8] sm:$0xff]
  %v78 = vld [vmem:[%s0 + $0x1d0] sm:$0xf]
  %v79 = vld [vmem:[%s0 + $0x1d4] sm:$0xff]
  %v80 = vld [vmem:[%s0 + $0x1dc] sm:$0xff]
  %v81 = vld [vmem:[%s0 + $0x1e4] sm:$0xff]
  %v82 = vld [vmem:[%s0 + $0x1ec] sm:$0xff]
  %v83 = vld [vmem:[%s0 + $0x1f4] sm:$0xf]
  %v84 = vld [vmem:[%s0 + $0x1f8] sm:$0xff]
  %v85 = vld [vmem:[%s0 + $0x200] sm:$0xff]
  %v86 = vld [vmem:[%s0 + $0x208] sm:$0xff]
  %v87 = vld [vmem:[%s0 + $0x210] sm:$0xff]
  %v88 = vld [vmem:[%s0 + $0x218] sm:$0xf]
  %v89 = vld [vmem:[%s0 + $0x21c] sm:$0xff]
  %v90 = vld [vmem:[%s0 + $0x224] sm:$0xff]
  %v91 = vld [vmem:[%s0 + $0x22c] sm:$0xff]
  %v92 = vld [vmem:[%s0 + $0x234] sm:$0xff]
  %v93 = vld [vmem:[%s0 + $0x23c] sm:$0xf]
  %v94 = vld [vmem:[%s0 + $0x240] sm:$0xff]
  %v95 = vld [vmem:[%s0 + $0x248] sm:$0xff]
  %v96 = vld [vmem:[%s0 + $0x250] sm:$0xff]
  %v97 = vld [vmem:[%s0 + $0x258] sm:$0xff]
  %v98 = vld [vmem:[%s0 + $0x260] sm:$0xf]
  %v99 = vld [vmem:[%s0 + $0x264] sm:$0xff]
  %v100 = vld [vmem:[%s0 + $0x26c] sm:$0xff]
  %v101 = vld [vmem:[%s0 + $0x274] sm:$0xff]
  %v102 = vld [vmem:[%s0 + $0x27c] sm:$0xff]
  %v103 = vld [vmem:[%s0 + $0x284] sm:$0xf]
  %v104 = vld [vmem:[%s0 + $0x288] sm:$0xff]
  %v105 = vld [vmem:[%s0 + $0x290] sm:$0xff]
  %v106 = vld [vmem:[%s0 + $0x298] sm:$0xff]
  %v107 = vld [vmem:[%s0 + $0x2a0] sm:$0xff]
  %v108 = vld [vmem:[%s0 + $0x2a8] sm:$0xf]
  %v109 = vld [vmem:[%s0 + $0x2ac] sm:$0xff]
  %v110 = vld [vmem:[%s0 + $0x2b4] sm:$0xff]
  %v111 = vld [vmem:[%s0 + $0x2bc] sm:$0xff]
  %v112 = vld [vmem:[%s0 + $0x2c4] sm:$0xff]
  %v113 = vld [vmem:[%s0 + $0x2cc] sm:$0xf]
  %v114 = vld [vmem:[%s0 + $0x2d0] sm:$0xff]
  %v115 = vld [vmem:[%s0 + $0x2d8] sm:$0xff]
  %v116 = vld [vmem:[%s0 + $0x2e0] sm:$0xff]
  %v117 = vld [vmem:[%s0 + $0x2e8] sm:$0xff]
  %v118 = vld [vmem:[%s0 + $0x2f0] sm:$0xf]
  %v119 = vld [vmem:[%s0 + $0x2f4] sm:$0xff]
  %v120 = vld [vmem:[%s0 + $0x2fc] sm:$0xff]
  %v121 = vld [vmem:[%s0 + $0x304] sm:$0xff]
  %v122 = vld [vmem:[%s0 + $0x30c] sm:$0xff]
  %v123 = vld [vmem:[%s0 + $0x314] sm:$0xf]
  %v124 = vld [vmem:[%s0 + $0x318] sm:$0xff]
  %v125 = vld [vmem:[%s0 + $0x320] sm:$0xff]
  %v126 = vld [vmem:[%s0 + $0x328] sm:$0xff]
  %v127 = vld [vmem:[%s0 + $0x330] sm:$0xff]
  %v128 = vld [vmem:[%s0 + $0x338] sm:$0xf]
  %v129 = vld [vmem:[%s0 + $0x33c] sm:$0xff]
  %v130 = vld [vmem:[%s0 + $0x344] sm:$0xff]
  %v131 = vld [vmem:[%s0 + $0x34c] sm:$0xff]
  %v132 = vld [vmem:[%s0 + $0x354] sm:$0xff]
  %v133 = vld [vmem:[%s0 + $0x35c] sm:$0xf]
  %v134 = vld [vmem:[%s0 + $0x360] sm:$0xff]
  %v135 = vld [vmem:[%s0 + $0x368] sm:$0xff]
  %v136 = vld [vmem:[%s0 + $0x370] sm:$0xff]
  %v137 = vld [vmem:[%s0 + $0x378] sm:$0xff]
  %v138 = vld [vmem:[%s0 + $0x380] sm:$0xf]
  %v139 = vld [vmem:[%s0 + $0x384] sm:$0xff]
  %v140 = vld [vmem:[%s0 + $0x38c] sm:$0xff]
  %v141 = vld [vmem:[%s0 + $0x394] sm:$0xff]
  %v142 = vld [vmem:[%s0 + $0x39c] sm:$0xff]
  %v143 = vld [vmem:[%s0 + $0x3a4] sm:$0xf]
  %v144 = vld [vmem:[%s0 + $0x3a8] sm:$0xff]
  %v145 = vld [vmem:[%s0 + $0x3b0] sm:$0xff]
  %v146 = vld [vmem:[%s0 + $0x3b8] sm:$0xff]
  %v147 = vld [vmem:[%s0 + $0x3c0] sm:$0xff]
  %v148 = vld [vmem:[%s0 + $0x3c8] sm:$0xf]
  %v149 = vld [vmem:[%s0 + $0x3cc] sm:$0xff]
  %v150 = vld [vmem:[%s0 + $0x3d4] sm:$0xff]
  %v151 = vld [vmem:[%s0 + $0x3dc] sm:$0xff]
  %v152 = vld [vmem:[%s0 + $0x3e4] sm:$0xff]
  %v153 = vld [vmem:[%s0 + $0x3ec] sm:$0xf]
  %v154 = vld [vmem:[%s0 + $0x3f0] sm:$0xff]
  %v155 = vld [vmem:[%s0 + $0x3f8] sm:$0xff]
  %v156 = vld [vmem:[%s0 + $0x400] sm:$0xff]
  %v157 = vld [vmem:[%s0 + $0x408] sm:$0xff]
  %v158 = vld [vmem:[%s0 + $0x410] sm:$0xf]
  %v159 = vld [vmem:[%s0 + $0x414] sm:$0xff]
  %v160 = vld [vmem:[%s0 + $0x41c] sm:$0xff]
  %v161 = vld [vmem:[%s0 + $0x424] sm:$0xff]
  %v162 = vld [vmem:[%s0 + $0x42c] sm:$0xff]
  %v163 = vld [vmem:[%s0 + $0x434] sm:$0xf]
  %v164 = vld [vmem:[%s0 + $0x438] sm:$0xff]
  %v165 = vld [vmem:[%s0 + $0x440] sm:$0xff]
  %v166 = vld [vmem:[%s0 + $0x448] sm:$0xff]
  %v167 = vld [vmem:[%s0 + $0x450] sm:$0xff]
  %v168 = vld [vmem:[%s0 + $0x458] sm:$0xf]
  %v169 = vld [vmem:[%s0 + $0x45c] sm:$0xff]
  %v170 = vld [vmem:[%s0 + $0x464] sm:$0xff]
  %v171 = vld [vmem:[%s0 + $0x46c] sm:$0xff]
  %v172 = vld [vmem:[%s0 + $0x474] sm:$0xff]
  %v173 = vld [vmem:[%s0 + $0x47c] sm:$0xf]
  %v174 = vld [vmem:[%s0 + $0x480] sm:$0xff]
  %v175 = vld [vmem:[%s0 + $0x488] sm:$0xff]
  %v176 = vld [vmem:[%s0 + $0x490] sm:$0xff]
  %v177 = vld [vmem:[%s0 + $0x498] sm:$0xff]
  %v178 = vld [vmem:[%s0 + $0x4a0] sm:$0xf]
  %v179 = vld [vmem:[%s0 + $0x4a4] sm:$0xff]
  %v180 = vld [vmem:[%s0 + $0x4ac] sm:$0xff]
  %v181 = vld [vmem:[%s0 + $0x4b4] sm:$0xff]
  %v182 = vld [vmem:[%s0 + $0x4bc] sm:$0xff]
  %v183 = vld [vmem:[%s0 + $0x4c4] sm:$0xf]
  %v184 = vld [vmem:[%s0 + $0x4c8] sm:$0xff]
  %v185 = vld [vmem:[%s0 + $0x4d0] sm:$0xff]
  %v186 = vld [vmem:[%s0 + $0x4d8] sm:$0xff]
  %v187 = vld [vmem:[%s0 + $0x4e0] sm:$0xff]
  %v188 = vld [vmem:[%s0 + $0x4e8] sm:$0xf]
  %v189 = vld [vmem:[%s0 + $0x4ec] sm:$0xff]
  %v190 = vld [vmem:[%s0 + $0x4f4] sm:$0xff]
  %v191 = vld [vmem:[%s0 + $0x4fc] sm:$0xff]
  %v192 = vld [vmem:[%s0 + $0x504] sm:$0xff]
  %v193 = vld [vmem:[%s0 + $0x50c] sm:$0xf]
  %v194 = vld [vmem:[%s0 + $0x510] sm:$0xff]
  %v195 = vld [vmem:[%s0 + $0x518] sm:$0xff]
  %v196 = vld [vmem:[%s0 + $0x520] sm:$0xff]
  %v197 = vld [vmem:[%s0 + $0x528] sm:$0xff]
  %v198 = vld [vmem:[%s0 + $0x530] sm:$0xf]
  %v199 = vld [vmem:[%s0 + $0x534] sm:$0xff]
  %v200 = vld [vmem:[%s0 + $0x53c] sm:$0xff]
  %v201 = vld [vmem:[%s0 + $0x544] sm:$0xff]
  %v202 = vld [vmem:[%s0 + $0x54c] sm:$0xff]
  %v203 = vld [vmem:[%s0 + $0x554] sm:$0xf]
  %v204 = vld [vmem:[%s0 + $0x558] sm:$0xff]
  %v205 = vld [vmem:[%s0 + $0x560] sm:$0xff]
  %v206 = vld [vmem:[%s0 + $0x568] sm:$0xff]
  %v207 = vld [vmem:[%s0 + $0x570] sm:$0xff]
  %v208 = vld [vmem:[%s0 + $0x578] sm:$0xf]
  %v209 = vld [vmem:[%s0 + $0x57c] sm:$0xff]
  %v210 = vld [vmem:[%s0 + $0x584] sm:$0xff]
  %v211 = vld [vmem:[%s0 + $0x58c] sm:$0xff]
  %v212 = vld [vmem:[%s0 + $0x594] sm:$0xff]
  %v213 = vld [vmem:[%s0 + $0x59c] sm:$0xf]
  %v214 = vld [vmem:[%s0 + $0x5a0] sm:$0xff]
  %v215 = vld [vmem:[%s0 + $0x5a8] sm:$0xff]
  %v216 = vld [vmem:[%s0 + $0x5b0] sm:$0xff]
  %v217 = vld [vmem:[%s0 + $0x5b8] sm:$0xff]
  %v218 = vld [vmem:[%s0 + $0x5c0] sm:$0xf]
  %v219 = vld [vmem:[%s0 + $0x5c4] sm:$0xff]
  %v220 = vld [vmem:[%s0 + $0x5cc] sm:$0xff]
  %v221 = vld [vmem:[%s0 + $0x5d4] sm:$0xff]
  %v222 = vld [vmem:[%s0 + $0x5dc] sm:$0xff]
  %v223 = vld [vmem:[%s0 + $0x5e4] sm:$0xf]
  %v224 = vld [vmem:[%s0 + $0x5e8] sm:$0xff]
  %v225 = vld [vmem:[%s0 + $0x5f0] sm:$0xff]
  %v226 = vld [vmem:[%s0 + $0x5f8] sm:$0xff]
  %v227 = vld [vmem:[%s0 + $0x600] sm:$0xff]
  %v228 = vld [vmem:[%s0 + $0x608] sm:$0xf]
  %v229 = vld [vmem:[%s0 + $0x60c] sm:$0xff]
  %v230 = vld [vmem:[%s0 + $0x614] sm:$0xff]
  %v231 = vld [vmem:[%s0 + $0x61c] sm:$0xff]
  %v232 = vld [vmem:[%s0 + $0x624] sm:$0xff]
  %v233 = vld [vmem:[%s0 + $0x62c] sm:$0xf]
  %v234 = vld [vmem:[%s0 + $0x630] sm:$0xff]
  %v235 = vld [vmem:[%s0 + $0x638] sm:$0xff]
  %v236 = vld [vmem:[%s0 + $0x640] sm:$0xff]
  %v237 = vld [vmem:[%s0 + $0x648] sm:$0xff]
  %v238 = vld [vmem:[%s0 + $0x650] sm:$0xf]
  %v239 = vld [vmem:[%s0 + $0x654] sm:$0xff]
  %v240 = vld [vmem:[%s0 + $0x65c] sm:$0xff]
  %v241 = vld [vmem:[%s0 + $0x664] sm:$0xff]
  %v242 = vld [vmem:[%s0 + $0x66c] sm:$0xff]
  %v243 = vld [vmem:[%s0 + $0x674] sm:$0xf]
  %v244 = vld [vmem:[%s0 + $0x678] sm:$0xff]
  %v245 = vld [vmem:[%s0 + $0x680] sm:$0xff]
  %v246 = vld [vmem:[%s0 + $0x688] sm:$0xff]
  %v247 = vld [vmem:[%s0 + $0x690] sm:$0xff]
  %v248 = vld [vmem:[%s0 + $0x698] sm:$0xf]
  %v249 = vld [vmem:[%s0 + $0x69c] sm:$0xff]
  %v250 = vld [vmem:[%s0 + $0x6a4] sm:$0xff]
  %v251 = vld [vmem:[%s0 + $0x6ac] sm:$0xff]
  %v252 = vld [vmem:[%s0 + $0x6b4] sm:$0xff]
  %v253 = vld [vmem:[%s0 + $0x6bc] sm:$0xf]
  %v254 = vld [vmem:[%s0 + $0x6c0] sm:$0xff]
  %v255 = vld [vmem:[%s0 + $0x6c8] sm:$0xff]
  %v256 = vld [vmem:[%s0 + $0x6d0] sm:$0xff]
  %v257 = vld [vmem:[%s0 + $0x6d8] sm:$0xff]
  %v258 = vld [vmem:[%s0 + $0x6e0] sm:$0xf]
  %v259 = vld [vmem:[%s0 + $0x6e4] sm:$0xff]
  %v260 = vld [vmem:[%s0 + $0x6ec] sm:$0xff]
  %v261 = vld [vmem:[%s0 + $0x6f4] sm:$0xff]
  %v262 = vld [vmem:[%s0 + $0x6fc] sm:$0xff]
  %v263 = vld [vmem:[%s0 + $0x704] sm:$0xf]
  %v264 = vld [vmem:[%s0 + $0x708] sm:$0xff]
  %v265 = vld [vmem:[%s0 + $0x710] sm:$0xff]
  %v266 = vld [vmem:[%s0 + $0x718] sm:$0xff]
  %v267 = vld [vmem:[%s0 + $0x720] sm:$0xff]
  %v268 = vld [vmem:[%s0 + $0x728] sm:$0xf]
  %v269 = vld [vmem:[%s0 + $0x72c] sm:$0xff]
  %v270 = vld [vmem:[%s0 + $0x734] sm:$0xff]
  %v271 = vld [vmem:[%s0 + $0x73c] sm:$0xff]
  %v272 = vld [vmem:[%s0 + $0x744] sm:$0xff]
  %v273 = vld [vmem:[%s0 + $0x74c] sm:$0xf]
  %v274 = vld [vmem:[%s0 + $0x750] sm:$0xff]
  %v275 = vld [vmem:[%s0 + $0x758] sm:$0xff]
  %v276 = vld [vmem:[%s0 + $0x760] sm:$0xff]
  %v277 = vld [vmem:[%s0 + $0x768] sm:$0xff]
  %v278 = vld [vmem:[%s0 + $0x770] sm:$0xf]
  %v279 = vld [vmem:[%s0 + $0x774] sm:$0xff]
  %v280 = vld [vmem:[%s0 + $0x77c] sm:$0xff]
  %v281 = vld [vmem:[%s0 + $0x784] sm:$0xff]
  %v282 = vld [vmem:[%s0 + $0x78c] sm:$0xff]
  %v283 = vld [vmem:[%s0 + $0x794] sm:$0xf]
  %v284 = vld [vmem:[%s0 + $0x798] sm:$0xff]
  %v285 = vld [vmem:[%s0 + $0x7a0] sm:$0xff]
  %v286 = vld [vmem:[%s0 + $0x7a8] sm:$0xff]
  %v287 = vld [vmem:[%s0 + $0x7b0] sm:$0xff]
  %v288 = vld [vmem:[%s0 + $0x7b8] sm:$0xf]
  %v289 = vld [vmem:[%s0 + $0x7bc] sm:$0xff]
  %v290 = vld [vmem:[%s0 + $0x7c4] sm:$0xff]
  %v291 = vld [vmem:[%s0 + $0x7cc] sm:$0xff]
  %v292 = vld [vmem:[%s0 + $0x7d4] sm:$0xff]
  %v293 = vld [vmem:[%s0 + $0x7dc] sm:$0xf]
  %v294 = vld [vmem:[%s0 + $0x7e0] sm:$0xff]
  %v295 = vld [vmem:[%s0 + $0x7e8] sm:$0xff]
  %v296 = vld [vmem:[%s0 + $0x7f0] sm:$0xff]
  %v297 = vld [vmem:[%s0 + $0x7f8] sm:$0xff]
  %v298 = vld [vmem:[%s0 + $0x800] sm:$0xf]
  %v299 = vld [vmem:[%s0 + $0x804] sm:$0xff]
  %v300 = vld [vmem:[%s0 + $0x80c] sm:$0xff]
  %v301 = vld [vmem:[%s0 + $0x814] sm:$0xff]
  %v302 = vld [vmem:[%s0 + $0x81c] sm:$0xff]
  %v303 = vld [vmem:[%s0 + $0x824] sm:$0xf]
  %v304 = vld [vmem:[%s0 + $0x828] sm:$0xff]
  %v305 = vld [vmem:[%s0 + $0x830] sm:$0xff]
  %v306 = vld [vmem:[%s0 + $0x838] sm:$0xff]
  %v307 = vld [vmem:[%s0 + $0x840] sm:$0xff]
  %v308 = vld [vmem:[%s0 + $0x848] sm:$0xf]
  %v309 = vld [vmem:[%s0 + $0x84c] sm:$0xff]
  %v310 = vld [vmem:[%s0 + $0x854] sm:$0xff]
  %v311 = vld [vmem:[%s0 + $0x85c] sm:$0xff]
  %v312 = vld [vmem:[%s0 + $0x864] sm:$0xff]
  %v313 = vld [vmem:[%s0 + $0x86c] sm:$0xf]
  %v314 = vld [vmem:[%s0 + $0x870] sm:$0xff]
  %v315 = vld [vmem:[%s0 + $0x878] sm:$0xff]
  %v316 = vld [vmem:[%s0 + $0x880] sm:$0xff]
  %v317 = vld [vmem:[%s0 + $0x888] sm:$0xff]
  %v318 = vld [vmem:[%s0 + $0x890] sm:$0xf]
  %v319 = vld [vmem:[%s0 + $0x894] sm:$0xff]
  %v320 = vld [vmem:[%s0 + $0x89c] sm:$0xff]
  %v321 = vld [vmem:[%s0 + $0x8a4] sm:$0xff]
  %v322 = vld [vmem:[%s0 + $0x8ac] sm:$0xff]
  %v323 = vld [vmem:[%s0 + $0x8b4] sm:$0xf]
  %v324 = vld [vmem:[%s0 + $0x8b8] sm:$0xff]
  %v325 = vld [vmem:[%s0 + $0x8c0] sm:$0xff]
  %v326 = vld [vmem:[%s0 + $0x8c8] sm:$0xff]
  %v327 = vld [vmem:[%s0 + $0x8d0] sm:$0xff]
  %v328 = vld [vmem:[%s0 + $0x8d8] sm:$0xf]
  %v329 = vld [vmem:[%s0 + $0x8dc] sm:$0xff]
  %v330 = vld [vmem:[%s0 + $0x8e4] sm:$0xff]
  %v331 = vld [vmem:[%s0 + $0x8ec] sm:$0xff]
  %v332 = vld [vmem:[%s0 + $0x8f4] sm:$0xff]
  %v333 = vld [vmem:[%s0 + $0x8fc] sm:$0xf]
  %v334 = vld [vmem:[%s1] sm:$0xf]
  %v335 = vld [vmem:[%s1 + $0x4] sm:$0xf]
  %v336 = vld [vmem:[%s1 + $0x8] sm:$0xf]
  %v337 = vld [vmem:[%s1 + $0xc] sm:$0xf]
  %v338 = vld [vmem:[%s1 + $0x10] sm:$0xf]
  %v339 = vld [vmem:[%s1 + $0x14] sm:$0xf]
  %v340 = vld [vmem:[%s1 + $0x18] sm:$0xf]
  %v341 = vld [vmem:[%s1 + $0x1c] sm:$0xf]
  %v342 = vld [vmem:[%s1 + $0x20] sm:$0xf]
  %v343 = vld [vmem:[%s1 + $0x24] sm:$0xf]
  %v344 = vld [vmem:[%s1 + $0x28] sm:$0xf]
  %v345 = vld [vmem:[%s1 + $0x2c] sm:$0xf]
  %v346 = vld [vmem:[%s1 + $0x30] sm:$0xf]
  %v347 = vld [vmem:[%s1 + $0x34] sm:$0xf]
  %v348 = vld [vmem:[%s1 + $0x38] sm:$0xf]
  %v349 = vld [vmem:[%s1 + $0x3c] sm:$0xf]
  %v350 = vld [vmem:[%s1 + $0x40] sm:$0xf]
  %v351 = vld [vmem:[%s1 + $0x44] sm:$0xf]
  %v352 = vld [vmem:[%s1 + $0x48] sm:$0xf]
  %v353 = vld [vmem:[%s1 + $0x4c] sm:$0xf]
  %v354 = vld [vmem:[%s1 + $0x50] sm:$0xf]
  %v355 = vld [vmem:[%s1 + $0x54] sm:$0xf]
  %v356 = vld [vmem:[%s1 + $0x58] sm:$0xf]
  %v357 = vld [vmem:[%s1 + $0x5c] sm:$0xf]
  %v358 = vld [vmem:[%s1 + $0x60] sm:$0xf]
  %v359 = vld [vmem:[%s1 + $0x64] sm:$0xf]
  %v360 = vld [vmem:[%s1 + $0x68] sm:$0xf]
  %v361 = vld [vmem:[%s1 + $0x6c] sm:$0xf]
  %v362 = vld [vmem:[%s1 + $0x70] sm:$0xf]
  %v363 = vld [vmem:[%s1 + $0x74] sm:$0xf]
  %v364 = vld [vmem:[%s1 + $0x78] sm:$0xf]
  %v365 = vld [vmem:[%s1 + $0x7c] sm:$0xf]
  %v366 = vld [vmem:[%s1 + $0x80] sm:$0xf]
  %v367 = vld [vmem:[%s1 + $0x84] sm:$0xf]
  %v368 = vld [vmem:[%s1 + $0x88] sm:$0xf]
  %v369 = vld [vmem:[%s1 + $0x8c] sm:$0xf]
  %v370 = vld [vmem:[%s1 + $0x90] sm:$0xf]
  %v371 = vld [vmem:[%s1 + $0x94] sm:$0xf]
  %v372 = vld [vmem:[%s1 + $0x98] sm:$0xf]
  %v373 = vld [vmem:[%s1 + $0x9c] sm:$0xf]
  %v374 = vld [vmem:[%s1 + $0xa0] sm:$0xf]
  %v375 = vld [vmem:[%s1 + $0xa4] sm:$0xf]
  %v376 = vld [vmem:[%s1 + $0xa8] sm:$0xf]
  %v377 = vld [vmem:[%s1 + $0xac] sm:$0xf]
  %v378 = vld [vmem:[%s1 + $0xb0] sm:$0xf]
  %v379 = vld [vmem:[%s1 + $0xb4] sm:$0xf]
  %v380 = vld [vmem:[%s1 + $0xb8] sm:$0xf]
  %v381 = vld [vmem:[%s1 + $0xbc] sm:$0xf]
  %v382 = vld [vmem:[%s1 + $0xc0] sm:$0xf]
  %v383 = vld [vmem:[%s1 + $0xc4] sm:$0xf]
  %v384 = vld [vmem:[%s1 + $0xc8] sm:$0xf]
  %v385 = vld [vmem:[%s1 + $0xcc] sm:$0xf]
  %v386 = vld [vmem:[%s1 + $0xd0] sm:$0xf]
  %v387 = vld [vmem:[%s1 + $0xd4] sm:$0xf]
  %v388 = vld [vmem:[%s1 + $0xd8] sm:$0xf]
  %v389 = vld [vmem:[%s1 + $0xdc] sm:$0xf]
  %v390 = vld [vmem:[%s1 + $0xe0] sm:$0xf]
  %v391 = vld [vmem:[%s1 + $0xe4] sm:$0xf]
  %v392 = vld [vmem:[%s1 + $0xe8] sm:$0xf]
  %v393 = vld [vmem:[%s1 + $0xec] sm:$0xf]
  %v394 = vld [vmem:[%s1 + $0xf0] sm:$0xf]
  %v395 = vld [vmem:[%s1 + $0xf4] sm:$0xf]
  %v396 = vld [vmem:[%s1 + $0xf8] sm:$0xf]
  %v397 = vld [vmem:[%s1 + $0xfc] sm:$0xf]
  %v398 = vld [vmem:[%s1 + $0x100] sm:$0xf]
  %v399 = vld [vmem:[%s1 + $0x104] sm:$0xf]
  %v400 = vld [vmem:[%s1 + $0x108] sm:$0xf]
  %v401 = vld [vmem:[%s1 + $0x10c] sm:$0xf]
  %v402 = vld [vmem:[%s1 + $0x110] sm:$0xf]
  %v403 = vld [vmem:[%s1 + $0x114] sm:$0xf]
  %v404 = vld [vmem:[%s1 + $0x118] sm:$0xf]
  %v405 = vld [vmem:[%s1 + $0x11c] sm:$0xf]
  %v406 = vld [vmem:[%s1 + $0x120] sm:$0xf]
  %v407 = vld [vmem:[%s1 + $0x124] sm:$0xf]
  %v408 = vld [vmem:[%s1 + $0x128] sm:$0xf]
  %v409 = vld [vmem:[%s1 + $0x12c] sm:$0xf]
  %v410 = vld [vmem:[%s1 + $0x130] sm:$0xf]
  %v411 = vld [vmem:[%s1 + $0x134] sm:$0xf]
  %v412 = vld [vmem:[%s1 + $0x138] sm:$0xf]
  %v413 = vld [vmem:[%s1 + $0x13c] sm:$0xf]
  %v414 = vld [vmem:[%s1 + $0x140] sm:$0xf]
  %v415 = vld [vmem:[%s1 + $0x144] sm:$0xf]
  %v416 = vld [vmem:[%s1 + $0x148] sm:$0xf]
  %v417 = vld [vmem:[%s1 + $0x14c] sm:$0xf]
  %v418 = vld [vmem:[%s1 + $0x150] sm:$0xf]
  %v419 = vld [vmem:[%s1 + $0x154] sm:$0xf]
  %v420 = vld [vmem:[%s1 + $0x158] sm:$0xf]
  %v421 = vld [vmem:[%s1 + $0x15c] sm:$0xf]
  %v422 = vld [vmem:[%s1 + $0x160] sm:$0xf]
  %v423 = vld [vmem:[%s1 + $0x164] sm:$0xf]
  %v424 = vld [vmem:[%s1 + $0x168] sm:$0xf]
  %v425 = vld [vmem:[%s1 + $0x16c] sm:$0xf]
  %v426 = vld [vmem:[%s1 + $0x170] sm:$0xf]
  %v427 = vld [vmem:[%s1 + $0x174] sm:$0xf]
  %v428 = vld [vmem:[%s1 + $0x178] sm:$0xf]
  %v429 = vld [vmem:[%s1 + $0x17c] sm:$0xf]
  %v430 = vld [vmem:[%s1 + $0x180] sm:$0xf]
  %v431 = vld [vmem:[%s1 + $0x184] sm:$0xf]
  %v432 = vld [vmem:[%s1 + $0x188] sm:$0xf]
  %v433 = vld [vmem:[%s1 + $0x18c] sm:$0xf]
  %v434 = vld [vmem:[%s1 + $0x190] sm:$0xf]
  %v435 = vld [vmem:[%s1 + $0x194] sm:$0xf]
  %v436 = vld [vmem:[%s1 + $0x198] sm:$0xf]
  %v437 = vld [vmem:[%s1 + $0x19c] sm:$0xf]
  %v438 = vld [vmem:[%s1 + $0x1a0] sm:$0xf]
  %v439 = vld [vmem:[%s1 + $0x1a4] sm:$0xf]
  %v440 = vld [vmem:[%s1 + $0x1a8] sm:$0xf]
  %v441 = vld [vmem:[%s1 + $0x1ac] sm:$0xf]
  %v442 = vld [vmem:[%s1 + $0x1b0] sm:$0xf]
  %v443 = vld [vmem:[%s1 + $0x1b4] sm:$0xf]
  %v444 = vld [vmem:[%s1 + $0x1b8] sm:$0xf]
  %v445 = vld [vmem:[%s1 + $0x1bc] sm:$0xf]
  %v446 = vld [vmem:[%s1 + $0x1c0] sm:$0xf]
  %v447 = vld [vmem:[%s1 + $0x1c4] sm:$0xf]
  %v448 = vld [vmem:[%s1 + $0x1c8] sm:$0xf]
  %v449 = vld [vmem:[%s1 + $0x1cc] sm:$0xf]
  %v450 = vld [vmem:[%s1 + $0x1d0] sm:$0xf]
  %v451 = vld [vmem:[%s1 + $0x1d4] sm:$0xf]
  %v452 = vld [vmem:[%s1 + $0x1d8] sm:$0xf]
  %v453 = vld [vmem:[%s1 + $0x1dc] sm:$0xf]
  %v454 = vld [vmem:[%s1 + $0x1e0] sm:$0xf]
  %v455 = vld [vmem:[%s1 + $0x1e4] sm:$0xf]
  %v456 = vld [vmem:[%s1 + $0x1e8] sm:$0xf]
  %v457 = vld [vmem:[%s1 + $0x1ec] sm:$0xf]
  %v458 = vld [vmem:[%s1 + $0x1f0] sm:$0xf]
  %v459 = vld [vmem:[%s1 + $0x1f4] sm:$0xf]
  %v460 = vld [vmem:[%s1 + $0x1f8] sm:$0xf]
  %v461 = vld [vmem:[%s1 + $0x1fc] sm:$0xf]
  %v462 = vld [vmem:[%s1 + $0x200] sm:$0xf]
  %v463 = vld [vmem:[%s1 + $0x204] sm:$0xf]
  %v464 = vld [vmem:[%s1 + $0x208] sm:$0xf]
  %v465 = vld [vmem:[%s1 + $0x20c] sm:$0xf]
  %v466 = vld [vmem:[%s1 + $0x210] sm:$0xf]
  %v467 = vld [vmem:[%s1 + $0x214] sm:$0xf]
  %v468 = vld [vmem:[%s1 + $0x218] sm:$0xf]
  %v469 = vld [vmem:[%s1 + $0x21c] sm:$0xf]
  %v470 = vld [vmem:[%s1 + $0x220] sm:$0xf]
  %v471 = vld [vmem:[%s1 + $0x224] sm:$0xf]
  %v472 = vld [vmem:[%s1 + $0x228] sm:$0xf]
  %v473 = vld [vmem:[%s1 + $0x22c] sm:$0xf]
  %v474 = vld [vmem:[%s1 + $0x230] sm:$0xf]
  %v475 = vld [vmem:[%s1 + $0x234] sm:$0xf]
  %v476 = vld [vmem:[%s1 + $0x238] sm:$0xf]
  %v477 = vld [vmem:[%s1 + $0x23c] sm:$0xf]
  %v478 = vld [vmem:[%s2] sm:$0x1]
  %v480 = vperm.slane %v478, 0
  %v802 = vunpack.c.l.b16 %v14
  %v803 = vunpack.c.h.b16 %v14
  %v804 = vunpack.c.l.b16 %v15
  %v805 = vunpack.c.h.b16 %v15
  %v806 = vunpack.c.l.b16 %v16
  %v807 = vunpack.c.h.b16 %v16
  %v808 = vunpack.c.l.b16 %v17
  %v809 = vunpack.c.h.b16 %v17
  %v810 = vunpack.c.l.b16 %v18
  %v811 = vunpack.c.l.b16 %v19
  %v812 = vunpack.c.h.b16 %v19
  %v813 = vunpack.c.l.b16 %v20
  %v814 = vunpack.c.h.b16 %v20
  %v815 = vunpack.c.l.b16 %v21
  %v816 = vunpack.c.h.b16 %v21
  %v817 = vunpack.c.l.b16 %v22
  %v818 = vunpack.c.h.b16 %v22
  %v819 = vunpack.c.l.b16 %v23
  %v820 = vunpack.c.l.b16 %v24
  %v821 = vunpack.c.h.b16 %v24
  %v822 = vunpack.c.l.b16 %v25
  %v823 = vunpack.c.h.b16 %v25
  %v824 = vunpack.c.l.b16 %v26
  %v825 = vunpack.c.h.b16 %v26
  %v826 = vunpack.c.l.b16 %v27
  %v827 = vunpack.c.h.b16 %v27
  %v828 = vunpack.c.l.b16 %v28
  %v829 = vunpack.c.l.b16 %v29
  %v830 = vunpack.c.h.b16 %v29
  %v831 = vunpack.c.l.b16 %v30
  %v832 = vunpack.c.h.b16 %v30
  %v833 = vunpack.c.l.b16 %v31
  %v834 = vunpack.c.h.b16 %v31
  %v835 = vunpack.c.l.b16 %v32
  %v836 = vunpack.c.h.b16 %v32
  %v837 = vunpack.c.l.b16 %v33
  %v838 = vunpack.c.l.b16 %v34
  %v839 = vunpack.c.h.b16 %v34
  %v840 = vunpack.c.l.b16 %v35
  %v841 = vunpack.c.h.b16 %v35
  %v842 = vunpack.c.l.b16 %v36
  %v843 = vunpack.c.h.b16 %v36
  %v844 = vunpack.c.l.b16 %v37
  %v845 = vunpack.c.h.b16 %v37
  %v846 = vunpack.c.l.b16 %v38
  %v847 = vunpack.c.l.b16 %v39
  %v848 = vunpack.c.h.b16 %v39
  %v849 = vunpack.c.l.b16 %v40
  %v850 = vunpack.c.h.b16 %v40
  %v851 = vunpack.c.l.b16 %v41
  %v852 = vunpack.c.h.b16 %v41
  %v853 = vunpack.c.l.b16 %v42
  %v854 = vunpack.c.h.b16 %v42
  %v855 = vunpack.c.l.b16 %v43
  %v856 = vunpack.c.l.b16 %v44
  %v857 = vunpack.c.h.b16 %v44
  %v858 = vunpack.c.l.b16 %v45
  %v859 = vunpack.c.h.b16 %v45
  %v860 = vunpack.c.l.b16 %v46
  %v861 = vunpack.c.h.b16 %v46
  %v862 = vunpack.c.l.b16 %v47
  %v863 = vunpack.c.h.b16 %v47
  %v864 = vunpack.c.l.b16 %v48
  %v865 = vunpack.c.l.b16 %v49
  %v866 = vunpack.c.h.b16 %v49
  %v867 = vunpack.c.l.b16 %v50
  %v868 = vunpack.c.h.b16 %v50
  %v869 = vunpack.c.l.b16 %v51
  %v870 = vunpack.c.h.b16 %v51
  %v871 = vunpack.c.l.b16 %v52
  %v872 = vunpack.c.h.b16 %v52
  %v873 = vunpack.c.l.b16 %v53
  %v874 = vunpack.c.l.b16 %v54
  %v875 = vunpack.c.h.b16 %v54
  %v876 = vunpack.c.l.b16 %v55
  %v877 = vunpack.c.h.b16 %v55
  %v878 = vunpack.c.l.b16 %v56
  %v879 = vunpack.c.h.b16 %v56
  %v880 = vunpack.c.l.b16 %v57
  %v881 = vunpack.c.h.b16 %v57
  %v882 = vunpack.c.l.b16 %v58
  %v883 = vunpack.c.l.b16 %v59
  %v884 = vunpack.c.h.b16 %v59
  %v885 = vunpack.c.l.b16 %v60
  %v886 = vunpack.c.h.b16 %v60
  %v887 = vunpack.c.l.b16 %v61
  %v888 = vunpack.c.h.b16 %v61
  %v889 = vunpack.c.l.b16 %v62
  %v890 = vunpack.c.h.b16 %v62
  %v891 = vunpack.c.l.b16 %v63
  %v892 = vunpack.c.l.b16 %v64
  %v893 = vunpack.c.h.b16 %v64
  %v894 = vunpack.c.l.b16 %v65
  %v895 = vunpack.c.h.b16 %v65
  %v896 = vunpack.c.l.b16 %v66
  %v897 = vunpack.c.h.b16 %v66
  %v898 = vunpack.c.l.b16 %v67
  %v899 = vunpack.c.h.b16 %v67
  %v900 = vunpack.c.l.b16 %v68
  %v901 = vunpack.c.l.b16 %v69
  %v902 = vunpack.c.h.b16 %v69
  %v903 = vunpack.c.l.b16 %v70
  %v904 = vunpack.c.h.b16 %v70
  %v905 = vunpack.c.l.b16 %v71
  %v906 = vunpack.c.h.b16 %v71
  %v907 = vunpack.c.l.b16 %v72
  %v908 = vunpack.c.h.b16 %v72
  %v909 = vunpack.c.l.b16 %v73
  %v910 = vunpack.c.l.b16 %v74
  %v911 = vunpack.c.h.b16 %v74
  %v912 = vunpack.c.l.b16 %v75
  %v913 = vunpack.c.h.b16 %v75
  %v914 = vunpack.c.l.b16 %v76
  %v915 = vunpack.c.h.b16 %v76
  %v916 = vunpack.c.l.b16 %v77
  %v917 = vunpack.c.h.b16 %v77
  %v918 = vunpack.c.l.b16 %v78
  %v919 = vunpack.c.l.b16 %v79
  %v920 = vunpack.c.h.b16 %v79
  %v921 = vunpack.c.l.b16 %v80
  %v922 = vunpack.c.h.b16 %v80
  %v923 = vunpack.c.l.b16 %v81
  %v924 = vunpack.c.h.b16 %v81
  %v925 = vunpack.c.l.b16 %v82
  %v926 = vunpack.c.h.b16 %v82
  %v927 = vunpack.c.l.b16 %v83
  %v928 = vunpack.c.l.b16 %v84
  %v929 = vunpack.c.h.b16 %v84
  %v930 = vunpack.c.l.b16 %v85
  %v931 = vunpack.c.h.b16 %v85
  %v932 = vunpack.c.l.b16 %v86
  %v933 = vunpack.c.h.b16 %v86
  %v934 = vunpack.c.l.b16 %v87
  %v935 = vunpack.c.h.b16 %v87
  %v936 = vunpack.c.l.b16 %v88
  %v937 = vunpack.c.l.b16 %v89
  %v938 = vunpack.c.h.b16 %v89
  %v939 = vunpack.c.l.b16 %v90
  %v940 = vunpack.c.h.b16 %v90
  %v941 = vunpack.c.l.b16 %v91
  %v942 = vunpack.c.h.b16 %v91
  %v943 = vunpack.c.l.b16 %v92
  %v944 = vunpack.c.h.b16 %v92
  %v945 = vunpack.c.l.b16 %v93
  %v946 = vunpack.c.l.b16 %v94
  %v947 = vunpack.c.h.b16 %v94
  %v948 = vunpack.c.l.b16 %v95
  %v949 = vunpack.c.h.b16 %v95
  %v950 = vunpack.c.l.b16 %v96
  %v951 = vunpack.c.h.b16 %v96
  %v952 = vunpack.c.l.b16 %v97
  %v953 = vunpack.c.h.b16 %v97
  %v954 = vunpack.c.l.b16 %v98
  %v955 = vunpack.c.l.b16 %v99
  %v956 = vunpack.c.h.b16 %v99
  %v957 = vunpack.c.l.b16 %v100
  %v958 = vunpack.c.h.b16 %v100
  %v959 = vunpack.c.l.b16 %v101
  %v960 = vunpack.c.h.b16 %v101
  %v961 = vunpack.c.l.b16 %v102
  %v962 = vunpack.c.h.b16 %v102
  %v963 = vunpack.c.l.b16 %v103
  %v964 = vunpack.c.l.b16 %v104
  %v965 = vunpack.c.h.b16 %v104
  %v966 = vunpack.c.l.b16 %v105
  %v967 = vunpack.c.h.b16 %v105
  %v968 = vunpack.c.l.b16 %v106
  %v969 = vunpack.c.h.b16 %v106
  %v970 = vunpack.c.l.b16 %v107
  %v971 = vunpack.c.h.b16 %v107
  %v972 = vunpack.c.l.b16 %v108
  %v973 = vunpack.c.l.b16 %v109
  %v974 = vunpack.c.h.b16 %v109
  %v975 = vunpack.c.l.b16 %v110
  %v976 = vunpack.c.h.b16 %v110
  %v977 = vunpack.c.l.b16 %v111
  %v978 = vunpack.c.h.b16 %v111
  %v979 = vunpack.c.l.b16 %v112
  %v980 = vunpack.c.h.b16 %v112
  %v981 = vunpack.c.l.b16 %v113
  %v982 = vunpack.c.l.b16 %v114
  %v983 = vunpack.c.h.b16 %v114
  %v984 = vunpack.c.l.b16 %v115
  %v985 = vunpack.c.h.b16 %v115
  %v986 = vunpack.c.l.b16 %v116
  %v987 = vunpack.c.h.b16 %v116
  %v988 = vunpack.c.l.b16 %v117
  %v989 = vunpack.c.h.b16 %v117
  %v990 = vunpack.c.l.b16 %v118
  %v991 = vunpack.c.l.b16 %v119
  %v992 = vunpack.c.h.b16 %v119
  %v993 = vunpack.c.l.b16 %v120
  %v994 = vunpack.c.h.b16 %v120
  %v995 = vunpack.c.l.b16 %v121
  %v996 = vunpack.c.h.b16 %v121
  %v997 = vunpack.c.l.b16 %v122
  %v998 = vunpack.c.h.b16 %v122
  %v999 = vunpack.c.l.b16 %v123
  %v1000 = vunpack.c.l.b16 %v124
  %v1001 = vunpack.c.h.b16 %v124
  %v1002 = vunpack.c.l.b16 %v125
  %v1003 = vunpack.c.h.b16 %v125
  %v1004 = vunpack.c.l.b16 %v126
  %v1005 = vunpack.c.h.b16 %v126
  %v1006 = vunpack.c.l.b16 %v127
  %v1007 = vunpack.c.h.b16 %v127
  %v1008 = vunpack.c.l.b16 %v128
  %v1009 = vunpack.c.l.b16 %v129
  %v1010 = vunpack.c.h.b16 %v129
  %v1011 = vunpack.c.l.b16 %v130
  %v1012 = vunpack.c.h.b16 %v130
  %v1013 = vunpack.c.l.b16 %v131
  %v1014 = vunpack.c.h.b16 %v131
  %v1015 = vunpack.c.l.b16 %v132
  %v1016 = vunpack.c.h.b16 %v132
  %v1017 = vunpack.c.l.b16 %v133
  %v1018 = vunpack.c.l.b16 %v134
  %v1019 = vunpack.c.h.b16 %v134
  %v1020 = vunpack.c.l.b16 %v135
  %v1021 = vunpack.c.h.b16 %v135
  %v1022 = vunpack.c.l.b16 %v136
  %v1023 = vunpack.c.h.b16 %v136
  %v1024 = vunpack.c.l.b16 %v137
  %v1025 = vunpack.c.h.b16 %v137
  %v1026 = vunpack.c.l.b16 %v138
  %v1027 = vunpack.c.l.b16 %v139
  %v1028 = vunpack.c.h.b16 %v139
  %v1029 = vunpack.c.l.b16 %v140
  %v1030 = vunpack.c.h.b16 %v140
  %v1031 = vunpack.c.l.b16 %v141
  %v1032 = vunpack.c.h.b16 %v141
  %v1033 = vunpack.c.l.b16 %v142
  %v1034 = vunpack.c.h.b16 %v142
  %v1035 = vunpack.c.l.b16 %v143
  %v1036 = vunpack.c.l.b16 %v144
  %v1037 = vunpack.c.h.b16 %v144
  %v1038 = vunpack.c.l.b16 %v145
  %v1039 = vunpack.c.h.b16 %v145
  %v1040 = vunpack.c.l.b16 %v146
  %v1041 = vunpack.c.h.b16 %v146
  %v1042 = vunpack.c.l.b16 %v147
  %v1043 = vunpack.c.h.b16 %v147
  %v1044 = vunpack.c.l.b16 %v148
  %v1045 = vunpack.c.l.b16 %v149
  %v1046 = vunpack.c.h.b16 %v149
  %v1047 = vunpack.c.l.b16 %v150
  %v1048 = vunpack.c.h.b16 %v150
  %v1049 = vunpack.c.l.b16 %v151
  %v1050 = vunpack.c.h.b16 %v151
  %v1051 = vunpack.c.l.b16 %v152
  %v1052 = vunpack.c.h.b16 %v152
  %v1053 = vunpack.c.l.b16 %v153
  %v1054 = vunpack.c.l.b16 %v154
  %v1055 = vunpack.c.h.b16 %v154
  %v1056 = vunpack.c.l.b16 %v155
  %v1057 = vunpack.c.h.b16 %v155
  %v1058 = vunpack.c.l.b16 %v156
  %v1059 = vunpack.c.h.b16 %v156
  %v1060 = vunpack.c.l.b16 %v157
  %v1061 = vunpack.c.h.b16 %v157
  %v1062 = vunpack.c.l.b16 %v158
  %v1063 = vunpack.c.l.b16 %v159
  %v1064 = vunpack.c.h.b16 %v159
  %v1065 = vunpack.c.l.b16 %v160
  %v1066 = vunpack.c.h.b16 %v160
  %v1067 = vunpack.c.l.b16 %v161
  %v1068 = vunpack.c.h.b16 %v161
  %v1069 = vunpack.c.l.b16 %v162
  %v1070 = vunpack.c.h.b16 %v162
  %v1071 = vunpack.c.l.b16 %v163
  %v1072 = vunpack.c.l.b16 %v164
  %v1073 = vunpack.c.h.b16 %v164
  %v1074 = vunpack.c.l.b16 %v165
  %v1075 = vunpack.c.h.b16 %v165
  %v1076 = vunpack.c.l.b16 %v166
  %v1077 = vunpack.c.h.b16 %v166
  %v1078 = vunpack.c.l.b16 %v167
  %v1079 = vunpack.c.h.b16 %v167
  %v1080 = vunpack.c.l.b16 %v168
  %v1081 = vunpack.c.l.b16 %v169
  %v1082 = vunpack.c.h.b16 %v169
  %v1083 = vunpack.c.l.b16 %v170
  %v1084 = vunpack.c.h.b16 %v170
  %v1085 = vunpack.c.l.b16 %v171
  %v1086 = vunpack.c.h.b16 %v171
  %v1087 = vunpack.c.l.b16 %v172
  %v1088 = vunpack.c.h.b16 %v172
  %v1089 = vunpack.c.l.b16 %v173
  %v1090 = vunpack.c.l.b16 %v174
  %v1091 = vunpack.c.h.b16 %v174
  %v1092 = vunpack.c.l.b16 %v175
  %v1093 = vunpack.c.h.b16 %v175
  %v1094 = vunpack.c.l.b16 %v176
  %v1095 = vunpack.c.h.b16 %v176
  %v1096 = vunpack.c.l.b16 %v177
  %v1097 = vunpack.c.h.b16 %v177
  %v1098 = vunpack.c.l.b16 %v178
  %v1099 = vunpack.c.l.b16 %v179
  %v1100 = vunpack.c.h.b16 %v179
  %v1101 = vunpack.c.l.b16 %v180
  %v1102 = vunpack.c.h.b16 %v180
  %v1103 = vunpack.c.l.b16 %v181
  %v1104 = vunpack.c.h.b16 %v181
  %v1105 = vunpack.c.l.b16 %v182
  %v1106 = vunpack.c.h.b16 %v182
  %v1107 = vunpack.c.l.b16 %v183
  %v1108 = vunpack.c.l.b16 %v184
  %v1109 = vunpack.c.h.b16 %v184
  %v1110 = vunpack.c.l.b16 %v185
  %v1111 = vunpack.c.h.b16 %v185
  %v1112 = vunpack.c.l.b16 %v186
  %v1113 = vunpack.c.h.b16 %v186
  %v1114 = vunpack.c.l.b16 %v187
  %v1115 = vunpack.c.h.b16 %v187
  %v1116 = vunpack.c.l.b16 %v188
  %v1117 = vunpack.c.l.b16 %v189
  %v1118 = vunpack.c.h.b16 %v189
  %v1119 = vunpack.c.l.b16 %v190
  %v1120 = vunpack.c.h.b16 %v190
  %v1121 = vunpack.c.l.b16 %v191
  %v1122 = vunpack.c.h.b16 %v191
  %v1123 = vunpack.c.l.b16 %v192
  %v1124 = vunpack.c.h.b16 %v192
  %v1125 = vunpack.c.l.b16 %v193
  %v1126 = vunpack.c.l.b16 %v194
  %v1127 = vunpack.c.h.b16 %v194
  %v1128 = vunpack.c.l.b16 %v195
  %v1129 = vunpack.c.h.b16 %v195
  %v1130 = vunpack.c.l.b16 %v196
  %v1131 = vunpack.c.h.b16 %v196
  %v1132 = vunpack.c.l.b16 %v197
  %v1133 = vunpack.c.h.b16 %v197
  %v1134 = vunpack.c.l.b16 %v198
  %v1135 = vunpack.c.l.b16 %v199
  %v1136 = vunpack.c.h.b16 %v199
  %v1137 = vunpack.c.l.b16 %v200
  %v1138 = vunpack.c.h.b16 %v200
  %v1139 = vunpack.c.l.b16 %v201
  %v1140 = vunpack.c.h.b16 %v201
  %v1141 = vunpack.c.l.b16 %v202
  %v1142 = vunpack.c.h.b16 %v202
  %v1143 = vunpack.c.l.b16 %v203
  %v1144 = vunpack.c.l.b16 %v204
  %v1145 = vunpack.c.h.b16 %v204
  %v1146 = vunpack.c.l.b16 %v205
  %v1147 = vunpack.c.h.b16 %v205
  %v1148 = vunpack.c.l.b16 %v206
  %v1149 = vunpack.c.h.b16 %v206
  %v1150 = vunpack.c.l.b16 %v207
  %v1151 = vunpack.c.h.b16 %v207
  %v1152 = vunpack.c.l.b16 %v208
  %v1153 = vunpack.c.l.b16 %v209
  %v1154 = vunpack.c.h.b16 %v209
  %v1155 = vunpack.c.l.b16 %v210
  %v1156 = vunpack.c.h.b16 %v210
  %v1157 = vunpack.c.l.b16 %v211
  %v1158 = vunpack.c.h.b16 %v211
  %v1159 = vunpack.c.l.b16 %v212
  %v1160 = vunpack.c.h.b16 %v212
  %v1161 = vunpack.c.l.b16 %v213
  %v1162 = vunpack.c.l.b16 %v214
  %v1163 = vunpack.c.h.b16 %v214
  %v1164 = vunpack.c.l.b16 %v215
  %v1165 = vunpack.c.h.b16 %v215
  %v1166 = vunpack.c.l.b16 %v216
  %v1167 = vunpack.c.h.b16 %v216
  %v1168 = vunpack.c.l.b16 %v217
  %v1169 = vunpack.c.h.b16 %v217
  %v1170 = vunpack.c.l.b16 %v218
  %v1171 = vunpack.c.l.b16 %v219
  %v1172 = vunpack.c.h.b16 %v219
  %v1173 = vunpack.c.l.b16 %v220
  %v1174 = vunpack.c.h.b16 %v220
  %v1175 = vunpack.c.l.b16 %v221
  %v1176 = vunpack.c.h.b16 %v221
  %v1177 = vunpack.c.l.b16 %v222
  %v1178 = vunpack.c.h.b16 %v222
  %v1179 = vunpack.c.l.b16 %v223
  %v1180 = vunpack.c.l.b16 %v224
  %v1181 = vunpack.c.h.b16 %v224
  %v1182 = vunpack.c.l.b16 %v225
  %v1183 = vunpack.c.h.b16 %v225
  %v1184 = vunpack.c.l.b16 %v226
  %v1185 = vunpack.c.h.b16 %v226
  %v1186 = vunpack.c.l.b16 %v227
  %v1187 = vunpack.c.h.b16 %v227
  %v1188 = vunpack.c.l.b16 %v228
  %v1189 = vunpack.c.l.b16 %v229
  %v1190 = vunpack.c.h.b16 %v229
  %v1191 = vunpack.c.l.b16 %v230
  %v1192 = vunpack.c.h.b16 %v230
  %v1193 = vunpack.c.l.b16 %v231
  %v1194 = vunpack.c.h.b16 %v231
  %v1195 = vunpack.c.l.b16 %v232
  %v1196 = vunpack.c.h.b16 %v232
  %v1197 = vunpack.c.l.b16 %v233
  %v1198 = vunpack.c.l.b16 %v234
  %v1199 = vunpack.c.h.b16 %v234
  %v1200 = vunpack.c.l.b16 %v235
  %v1201 = vunpack.c.h.b16 %v235
  %v1202 = vunpack.c.l.b16 %v236
  %v1203 = vunpack.c.h.b16 %v236
  %v1204 = vunpack.c.l.b16 %v237
  %v1205 = vunpack.c.h.b16 %v237
  %v1206 = vunpack.c.l.b16 %v238
  %v1207 = vunpack.c.l.b16 %v239
  %v1208 = vunpack.c.h.b16 %v239
  %v1209 = vunpack.c.l.b16 %v240
  %v1210 = vunpack.c.h.b16 %v240
  %v1211 = vunpack.c.l.b16 %v241
  %v1212 = vunpack.c.h.b16 %v241
  %v1213 = vunpack.c.l.b16 %v242
  %v1214 = vunpack.c.h.b16 %v242
  %v1215 = vunpack.c.l.b16 %v243
  %v1216 = vunpack.c.l.b16 %v244
  %v1217 = vunpack.c.h.b16 %v244
  %v1218 = vunpack.c.l.b16 %v245
  %v1219 = vunpack.c.h.b16 %v245
  %v1220 = vunpack.c.l.b16 %v246
  %v1221 = vunpack.c.h.b16 %v246
  %v1222 = vunpack.c.l.b16 %v247
  %v1223 = vunpack.c.h.b16 %v247
  %v1224 = vunpack.c.l.b16 %v248
  %v1225 = vunpack.c.l.b16 %v249
  %v1226 = vunpack.c.h.b16 %v249
  %v1227 = vunpack.c.l.b16 %v250
  %v1228 = vunpack.c.h.b16 %v250
  %v1229 = vunpack.c.l.b16 %v251
  %v1230 = vunpack.c.h.b16 %v251
  %v1231 = vunpack.c.l.b16 %v252
  %v1232 = vunpack.c.h.b16 %v252
  %v1233 = vunpack.c.l.b16 %v253
  %v1234 = vunpack.c.l.b16 %v254
  %v1235 = vunpack.c.h.b16 %v254
  %v1236 = vunpack.c.l.b16 %v255
  %v1237 = vunpack.c.h.b16 %v255
  %v1238 = vunpack.c.l.b16 %v256
  %v1239 = vunpack.c.h.b16 %v256
  %v1240 = vunpack.c.l.b16 %v257
  %v1241 = vunpack.c.h.b16 %v257
  %v1242 = vunpack.c.l.b16 %v258
  %v1243 = vunpack.c.l.b16 %v259
  %v1244 = vunpack.c.h.b16 %v259
  %v1245 = vunpack.c.l.b16 %v260
  %v1246 = vunpack.c.h.b16 %v260
  %v1247 = vunpack.c.l.b16 %v261
  %v1248 = vunpack.c.h.b16 %v261
  %v1249 = vunpack.c.l.b16 %v262
  %v1250 = vunpack.c.h.b16 %v262
  %v1251 = vunpack.c.l.b16 %v263
  %v1252 = vunpack.c.l.b16 %v264
  %v1253 = vunpack.c.h.b16 %v264
  %v1254 = vunpack.c.l.b16 %v265
  %v1255 = vunpack.c.h.b16 %v265
  %v1256 = vunpack.c.l.b16 %v266
  %v1257 = vunpack.c.h.b16 %v266
  %v1258 = vunpack.c.l.b16 %v267
  %v1259 = vunpack.c.h.b16 %v267
  %v1260 = vunpack.c.l.b16 %v268
  %v1261 = vunpack.c.l.b16 %v269
  %v1262 = vunpack.c.h.b16 %v269
  %v1263 = vunpack.c.l.b16 %v270
  %v1264 = vunpack.c.h.b16 %v270
  %v1265 = vunpack.c.l.b16 %v271
  %v1266 = vunpack.c.h.b16 %v271
  %v1267 = vunpack.c.l.b16 %v272
  %v1268 = vunpack.c.h.b16 %v272
  %v1269 = vunpack.c.l.b16 %v273
  %v1270 = vunpack.c.l.b16 %v274
  %v1271 = vunpack.c.h.b16 %v274
  %v1272 = vunpack.c.l.b16 %v275
  %v1273 = vunpack.c.h.b16 %v275
  %v1274 = vunpack.c.l.b16 %v276
  %v1275 = vunpack.c.h.b16 %v276
  %v1276 = vunpack.c.l.b16 %v277
  %v1277 = vunpack.c.h.b16 %v277
  %v1278 = vunpack.c.l.b16 %v278
  %v1279 = vunpack.c.l.b16 %v279
  %v1280 = vunpack.c.h.b16 %v279
  %v1281 = vunpack.c.l.b16 %v280
  %v1282 = vunpack.c.h.b16 %v280
  %v1283 = vunpack.c.l.b16 %v281
  %v1284 = vunpack.c.h.b16 %v281
  %v1285 = vunpack.c.l.b16 %v282
  %v1286 = vunpack.c.h.b16 %v282
  %v1287 = vunpack.c.l.b16 %v283
  %v1288 = vunpack.c.l.b16 %v284
  %v1289 = vunpack.c.h.b16 %v284
  %v1290 = vunpack.c.l.b16 %v285
  %v1291 = vunpack.c.h.b16 %v285
  %v1292 = vunpack.c.l.b16 %v286
  %v1293 = vunpack.c.h.b16 %v286
  %v1294 = vunpack.c.l.b16 %v287
  %v1295 = vunpack.c.h.b16 %v287
  %v1296 = vunpack.c.l.b16 %v288
  %v1297 = vunpack.c.l.b16 %v289
  %v1298 = vunpack.c.h.b16 %v289
  %v1299 = vunpack.c.l.b16 %v290
  %v1300 = vunpack.c.h.b16 %v290
  %v1301 = vunpack.c.l.b16 %v291
  %v1302 = vunpack.c.h.b16 %v291
  %v1303 = vunpack.c.l.b16 %v292
  %v1304 = vunpack.c.h.b16 %v292
  %v1305 = vunpack.c.l.b16 %v293
  %v1306 = vunpack.c.l.b16 %v294
  %v1307 = vunpack.c.h.b16 %v294
  %v1308 = vunpack.c.l.b16 %v295
  %v1309 = vunpack.c.h.b16 %v295
  %v1310 = vunpack.c.l.b16 %v296
  %v1311 = vunpack.c.h.b16 %v296
  %v1312 = vunpack.c.l.b16 %v297
  %v1313 = vunpack.c.h.b16 %v297
  %v1314 = vunpack.c.l.b16 %v298
  %v1315 = vunpack.c.l.b16 %v299
  %v1316 = vunpack.c.h.b16 %v299
  %v1317 = vunpack.c.l.b16 %v300
  %v1318 = vunpack.c.h.b16 %v300
  %v1319 = vunpack.c.l.b16 %v301
  %v1320 = vunpack.c.h.b16 %v301
  %v1321 = vunpack.c.l.b16 %v302
  %v1322 = vunpack.c.h.b16 %v302
  %v1323 = vunpack.c.l.b16 %v303
  %v1324 = vunpack.c.l.b16 %v304
  %v1325 = vunpack.c.h.b16 %v304
  %v1326 = vunpack.c.l.b16 %v305
  %v1327 = vunpack.c.h.b16 %v305
  %v1328 = vunpack.c.l.b16 %v306
  %v1329 = vunpack.c.h.b16 %v306
  %v1330 = vunpack.c.l.b16 %v307
  %v1331 = vunpack.c.h.b16 %v307
  %v1332 = vunpack.c.l.b16 %v308
  %v1333 = vunpack.c.l.b16 %v309
  %v1334 = vunpack.c.h.b16 %v309
  %v1335 = vunpack.c.l.b16 %v310
  %v1336 = vunpack.c.h.b16 %v310
  %v1337 = vunpack.c.l.b16 %v311
  %v1338 = vunpack.c.h.b16 %v311
  %v1339 = vunpack.c.l.b16 %v312
  %v1340 = vunpack.c.h.b16 %v312
  %v1341 = vunpack.c.l.b16 %v313
  %v1342 = vunpack.c.l.b16 %v314
  %v1343 = vunpack.c.h.b16 %v314
  %v1344 = vunpack.c.l.b16 %v315
  %v1345 = vunpack.c.h.b16 %v315
  %v1346 = vunpack.c.l.b16 %v316
  %v1347 = vunpack.c.h.b16 %v316
  %v1348 = vunpack.c.l.b16 %v317
  %v1349 = vunpack.c.h.b16 %v317
  %v1350 = vunpack.c.l.b16 %v318
  %v1351 = vunpack.c.l.b16 %v319
  %v1352 = vunpack.c.h.b16 %v319
  %v1353 = vunpack.c.l.b16 %v320
  %v1354 = vunpack.c.h.b16 %v320
  %v1355 = vunpack.c.l.b16 %v321
  %v1356 = vunpack.c.h.b16 %v321
  %v1357 = vunpack.c.l.b16 %v322
  %v1358 = vunpack.c.h.b16 %v322
  %v1359 = vunpack.c.l.b16 %v323
  %v1360 = vunpack.c.l.b16 %v324
  %v1361 = vunpack.c.h.b16 %v324
  %v1362 = vunpack.c.l.b16 %v325
  %v1363 = vunpack.c.h.b16 %v325
  %v1364 = vunpack.c.l.b16 %v326
  %v1365 = vunpack.c.h.b16 %v326
  %v1366 = vunpack.c.l.b16 %v327
  %v1367 = vunpack.c.h.b16 %v327
  %v1368 = vunpack.c.l.b16 %v328
  %v1369 = vunpack.c.l.b16 %v329
  %v1370 = vunpack.c.h.b16 %v329
  %v1371 = vunpack.c.l.b16 %v330
  %v1372 = vunpack.c.h.b16 %v330
  %v1373 = vunpack.c.l.b16 %v331
  %v1374 = vunpack.c.h.b16 %v331
  %v1375 = vunpack.c.l.b16 %v332
  %v1376 = vunpack.c.h.b16 %v332
  %v1377 = vunpack.c.l.b16 %v333
  %v1378 = vpack.c.b16 %v811, %v802
  %v1379 = vpack.c.b16 %v812, %v803
  %v1380 = vpack.c.b16 %v813, %v804
  %v1381 = vpack.c.b16 %v814, %v805
  %v1382 = vpack.c.b16 %v815, %v806
  %v1383 = vpack.c.b16 %v816, %v807
  %v1384 = vpack.c.b16 %v817, %v808
  %v1385 = vpack.c.b16 %v818, %v809
  %v1386 = vpack.c.b16 %v819, %v810
  %v1387 = vpack.c.b16 %v829, %v820
  %v1388 = vpack.c.b16 %v830, %v821
  %v1389 = vpack.c.b16 %v831, %v822
  %v1390 = vpack.c.b16 %v832, %v823
  %v1391 = vpack.c.b16 %v833, %v824
  %v1392 = vpack.c.b16 %v834, %v825
  %v1393 = vpack.c.b16 %v835, %v826
  %v1394 = vpack.c.b16 %v836, %v827
  %v1395 = vpack.c.b16 %v837, %v828
  %v1396 = vpack.c.b16 %v847, %v838
  %v1397 = vpack.c.b16 %v848, %v839
  %v1398 = vpack.c.b16 %v849, %v840
  %v1399 = vpack.c.b16 %v850, %v841
  %v1400 = vpack.c.b16 %v851, %v842
  %v1401 = vpack.c.b16 %v852, %v843
  %v1402 = vpack.c.b16 %v853, %v844
  %v1403 = vpack.c.b16 %v854, %v845
  %v1404 = vpack.c.b16 %v855, %v846
  %v1405 = vpack.c.b16 %v865, %v856
  %v1406 = vpack.c.b16 %v866, %v857
  %v1407 = vpack.c.b16 %v867, %v858
  %v1408 = vpack.c.b16 %v868, %v859
  %v1409 = vpack.c.b16 %v869, %v860
  %v1410 = vpack.c.b16 %v870, %v861
  %v1411 = vpack.c.b16 %v871, %v862
  %v1412 = vpack.c.b16 %v872, %v863
  %v1413 = vpack.c.b16 %v873, %v864
  %v1414 = vpack.c.b16 %v883, %v874
  %v1415 = vpack.c.b16 %v884, %v875
  %v1416 = vpack.c.b16 %v885, %v876
  %v1417 = vpack.c.b16 %v886, %v877
  %v1418 = vpack.c.b16 %v887, %v878
  %v1419 = vpack.c.b16 %v888, %v879
  %v1420 = vpack.c.b16 %v889, %v880
  %v1421 = vpack.c.b16 %v890, %v881
  %v1422 = vpack.c.b16 %v891, %v882
  %v1423 = vpack.c.b16 %v901, %v892
  %v1424 = vpack.c.b16 %v902, %v893
  %v1425 = vpack.c.b16 %v903, %v894
  %v1426 = vpack.c.b16 %v904, %v895
  %v1427 = vpack.c.b16 %v905, %v896
  %v1428 = vpack.c.b16 %v906, %v897
  %v1429 = vpack.c.b16 %v907, %v898
  %v1430 = vpack.c.b16 %v908, %v899
  %v1431 = vpack.c.b16 %v909, %v900
  %v1432 = vpack.c.b16 %v919, %v910
  %v1433 = vpack.c.b16 %v920, %v911
  %v1434 = vpack.c.b16 %v921, %v912
  %v1435 = vpack.c.b16 %v922, %v913
  %v1436 = vpack.c.b16 %v923, %v914
  %v1437 = vpack.c.b16 %v924, %v915
  %v1438 = vpack.c.b16 %v925, %v916
  %v1439 = vpack.c.b16 %v926, %v917
  %v1440 = vpack.c.b16 %v927, %v918
  %v1441 = vpack.c.b16 %v937, %v928
  %v1442 = vpack.c.b16 %v938, %v929
  %v1443 = vpack.c.b16 %v939, %v930
  %v1444 = vpack.c.b16 %v940, %v931
  %v1445 = vpack.c.b16 %v941, %v932
  %v1446 = vpack.c.b16 %v942, %v933
  %v1447 = vpack.c.b16 %v943, %v934
  %v1448 = vpack.c.b16 %v944, %v935
  %v1449 = vpack.c.b16 %v945, %v936
  %v1450 = vpack.c.b16 %v955, %v946
  %v1451 = vpack.c.b16 %v956, %v947
  %v1452 = vpack.c.b16 %v957, %v948
  %v1453 = vpack.c.b16 %v958, %v949
  %v1454 = vpack.c.b16 %v959, %v950
  %v1455 = vpack.c.b16 %v960, %v951
  %v1456 = vpack.c.b16 %v961, %v952
  %v1457 = vpack.c.b16 %v962, %v953
  %v1458 = vpack.c.b16 %v963, %v954
  %v1459 = vpack.c.b16 %v973, %v964
  %v1460 = vpack.c.b16 %v974, %v965
  %v1461 = vpack.c.b16 %v975, %v966
  %v1462 = vpack.c.b16 %v976, %v967
  %v1463 = vpack.c.b16 %v977, %v968
  %v1464 = vpack.c.b16 %v978, %v969
  %v1465 = vpack.c.b16 %v979, %v970
  %v1466 = vpack.c.b16 %v980, %v971
  %v1467 = vpack.c.b16 %v981, %v972
  %v1468 = vpack.c.b16 %v991, %v982
  %v1469 = vpack.c.b16 %v992, %v983
  %v1470 = vpack.c.b16 %v993, %v984
  %v1471 = vpack.c.b16 %v994, %v985
  %v1472 = vpack.c.b16 %v995, %v986
  %v1473 = vpack.c.b16 %v996, %v987
  %v1474 = vpack.c.b16 %v997, %v988
  %v1475 = vpack.c.b16 %v998, %v989
  %v1476 = vpack.c.b16 %v999, %v990
  %v1477 = vpack.c.b16 %v1009, %v1000
  %v1478 = vpack.c.b16 %v1010, %v1001
  %v1479 = vpack.c.b16 %v1011, %v1002
  %v1480 = vpack.c.b16 %v1012, %v1003
  %v1481 = vpack.c.b16 %v1013, %v1004
  %v1482 = vpack.c.b16 %v1014, %v1005
  %v1483 = vpack.c.b16 %v1015, %v1006
  %v1484 = vpack.c.b16 %v1016, %v1007
  %v1485 = vpack.c.b16 %v1017, %v1008
  %v1486 = vpack.c.b16 %v1027, %v1018
  %v1487 = vpack.c.b16 %v1028, %v1019
  %v1488 = vpack.c.b16 %v1029, %v1020
  %v1489 = vpack.c.b16 %v1030, %v1021
  %v1490 = vpack.c.b16 %v1031, %v1022
  %v1491 = vpack.c.b16 %v1032, %v1023
  %v1492 = vpack.c.b16 %v1033, %v1024
  %v1493 = vpack.c.b16 %v1034, %v1025
  %v1494 = vpack.c.b16 %v1035, %v1026
  %v1495 = vpack.c.b16 %v1045, %v1036
  %v1496 = vpack.c.b16 %v1046, %v1037
  %v1497 = vpack.c.b16 %v1047, %v1038
  %v1498 = vpack.c.b16 %v1048, %v1039
  %v1499 = vpack.c.b16 %v1049, %v1040
  %v1500 = vpack.c.b16 %v1050, %v1041
  %v1501 = vpack.c.b16 %v1051, %v1042
  %v1502 = vpack.c.b16 %v1052, %v1043
  %v1503 = vpack.c.b16 %v1053, %v1044
  %v1504 = vpack.c.b16 %v1063, %v1054
  %v1505 = vpack.c.b16 %v1064, %v1055
  %v1506 = vpack.c.b16 %v1065, %v1056
  %v1507 = vpack.c.b16 %v1066, %v1057
  %v1508 = vpack.c.b16 %v1067, %v1058
  %v1509 = vpack.c.b16 %v1068, %v1059
  %v1510 = vpack.c.b16 %v1069, %v1060
  %v1511 = vpack.c.b16 %v1070, %v1061
  %v1512 = vpack.c.b16 %v1071, %v1062
  %v1513 = vpack.c.b16 %v1081, %v1072
  %v1514 = vpack.c.b16 %v1082, %v1073
  %v1515 = vpack.c.b16 %v1083, %v1074
  %v1516 = vpack.c.b16 %v1084, %v1075
  %v1517 = vpack.c.b16 %v1085, %v1076
  %v1518 = vpack.c.b16 %v1086, %v1077
  %v1519 = vpack.c.b16 %v1087, %v1078
  %v1520 = vpack.c.b16 %v1088, %v1079
  %v1521 = vpack.c.b16 %v1089, %v1080
  %v1522 = vpack.c.b16 %v1099, %v1090
  %v1523 = vpack.c.b16 %v1100, %v1091
  %v1524 = vpack.c.b16 %v1101, %v1092
  %v1525 = vpack.c.b16 %v1102, %v1093
  %v1526 = vpack.c.b16 %v1103, %v1094
  %v1527 = vpack.c.b16 %v1104, %v1095
  %v1528 = vpack.c.b16 %v1105, %v1096
  %v1529 = vpack.c.b16 %v1106, %v1097
  %v1530 = vpack.c.b16 %v1107, %v1098
  %v1531 = vpack.c.b16 %v1117, %v1108
  %v1532 = vpack.c.b16 %v1118, %v1109
  %v1533 = vpack.c.b16 %v1119, %v1110
  %v1534 = vpack.c.b16 %v1120, %v1111
  %v1535 = vpack.c.b16 %v1121, %v1112
  %v1536 = vpack.c.b16 %v1122, %v1113
  %v1537 = vpack.c.b16 %v1123, %v1114
  %v1538 = vpack.c.b16 %v1124, %v1115
  %v1539 = vpack.c.b16 %v1125, %v1116
  %v1540 = vpack.c.b16 %v1135, %v1126
  %v1541 = vpack.c.b16 %v1136, %v1127
  %v1542 = vpack.c.b16 %v1137, %v1128
  %v1543 = vpack.c.b16 %v1138, %v1129
  %v1544 = vpack.c.b16 %v1139, %v1130
  %v1545 = vpack.c.b16 %v1140, %v1131
  %v1546 = vpack.c.b16 %v1141, %v1132
  %v1547 = vpack.c.b16 %v1142, %v1133
  %v1548 = vpack.c.b16 %v1143, %v1134
  %v1549 = vpack.c.b16 %v1153, %v1144
  %v1550 = vpack.c.b16 %v1154, %v1145
  %v1551 = vpack.c.b16 %v1155, %v1146
  %v1552 = vpack.c.b16 %v1156, %v1147
  %v1553 = vpack.c.b16 %v1157, %v1148
  %v1554 = vpack.c.b16 %v1158, %v1149
  %v1555 = vpack.c.b16 %v1159, %v1150
  %v1556 = vpack.c.b16 %v1160, %v1151
  %v1557 = vpack.c.b16 %v1161, %v1152
  %v1558 = vpack.c.b16 %v1171, %v1162
  %v1559 = vpack.c.b16 %v1172, %v1163
  %v1560 = vpack.c.b16 %v1173, %v1164
  %v1561 = vpack.c.b16 %v1174, %v1165
  %v1562 = vpack.c.b16 %v1175, %v1166
  %v1563 = vpack.c.b16 %v1176, %v1167
  %v1564 = vpack.c.b16 %v1177, %v1168
  %v1565 = vpack.c.b16 %v1178, %v1169
  %v1566 = vpack.c.b16 %v1179, %v1170
  %v1567 = vpack.c.b16 %v1189, %v1180
  %v1568 = vpack.c.b16 %v1190, %v1181
  %v1569 = vpack.c.b16 %v1191, %v1182
  %v1570 = vpack.c.b16 %v1192, %v1183
  %v1571 = vpack.c.b16 %v1193, %v1184
  %v1572 = vpack.c.b16 %v1194, %v1185
  %v1573 = vpack.c.b16 %v1195, %v1186
  %v1574 = vpack.c.b16 %v1196, %v1187
  %v1575 = vpack.c.b16 %v1197, %v1188
  %v1576 = vpack.c.b16 %v1207, %v1198
  %v1577 = vpack.c.b16 %v1208, %v1199
  %v1578 = vpack.c.b16 %v1209, %v1200
  %v1579 = vpack.c.b16 %v1210, %v1201
  %v1580 = vpack.c.b16 %v1211, %v1202
  %v1581 = vpack.c.b16 %v1212, %v1203
  %v1582 = vpack.c.b16 %v1213, %v1204
  %v1583 = vpack.c.b16 %v1214, %v1205
  %v1584 = vpack.c.b16 %v1215, %v1206
  %v1585 = vpack.c.b16 %v1225, %v1216
  %v1586 = vpack.c.b16 %v1226, %v1217
  %v1587 = vpack.c.b16 %v1227, %v1218
  %v1588 = vpack.c.b16 %v1228, %v1219
  %v1589 = vpack.c.b16 %v1229, %v1220
  %v1590 = vpack.c.b16 %v1230, %v1221
  %v1591 = vpack.c.b16 %v1231, %v1222
  %v1592 = vpack.c.b16 %v1232, %v1223
  %v1593 = vpack.c.b16 %v1233, %v1224
  %v1594 = vpack.c.b16 %v1243, %v1234
  %v1595 = vpack.c.b16 %v1244, %v1235
  %v1596 = vpack.c.b16 %v1245, %v1236
  %v1597 = vpack.c.b16 %v1246, %v1237
  %v1598 = vpack.c.b16 %v1247, %v1238
  %v1599 = vpack.c.b16 %v1248, %v1239
  %v1600 = vpack.c.b16 %v1249, %v1240
  %v1601 = vpack.c.b16 %v1250, %v1241
  %v1602 = vpack.c.b16 %v1251, %v1242
  %v1603 = vpack.c.b16 %v1261, %v1252
  %v1604 = vpack.c.b16 %v1262, %v1253
  %v1605 = vpack.c.b16 %v1263, %v1254
  %v1606 = vpack.c.b16 %v1264, %v1255
  %v1607 = vpack.c.b16 %v1265, %v1256
  %v1608 = vpack.c.b16 %v1266, %v1257
  %v1609 = vpack.c.b16 %v1267, %v1258
  %v1610 = vpack.c.b16 %v1268, %v1259
  %v1611 = vpack.c.b16 %v1269, %v1260
  %v1612 = vpack.c.b16 %v1279, %v1270
  %v1613 = vpack.c.b16 %v1280, %v1271
  %v1614 = vpack.c.b16 %v1281, %v1272
  %v1615 = vpack.c.b16 %v1282, %v1273
  %v1616 = vpack.c.b16 %v1283, %v1274
  %v1617 = vpack.c.b16 %v1284, %v1275
  %v1618 = vpack.c.b16 %v1285, %v1276
  %v1619 = vpack.c.b16 %v1286, %v1277
  %v1620 = vpack.c.b16 %v1287, %v1278
  %v1621 = vpack.c.b16 %v1297, %v1288
  %v1622 = vpack.c.b16 %v1298, %v1289
  %v1623 = vpack.c.b16 %v1299, %v1290
  %v1624 = vpack.c.b16 %v1300, %v1291
  %v1625 = vpack.c.b16 %v1301, %v1292
  %v1626 = vpack.c.b16 %v1302, %v1293
  %v1627 = vpack.c.b16 %v1303, %v1294
  %v1628 = vpack.c.b16 %v1304, %v1295
  %v1629 = vpack.c.b16 %v1305, %v1296
  %v1630 = vpack.c.b16 %v1315, %v1306
  %v1631 = vpack.c.b16 %v1316, %v1307
  %v1632 = vpack.c.b16 %v1317, %v1308
  %v1633 = vpack.c.b16 %v1318, %v1309
  %v1634 = vpack.c.b16 %v1319, %v1310
  %v1635 = vpack.c.b16 %v1320, %v1311
  %v1636 = vpack.c.b16 %v1321, %v1312
  %v1637 = vpack.c.b16 %v1322, %v1313
  %v1638 = vpack.c.b16 %v1323, %v1314
  %v1639 = vpack.c.b16 %v1333, %v1324
  %v1640 = vpack.c.b16 %v1334, %v1325
  %v1641 = vpack.c.b16 %v1335, %v1326
  %v1642 = vpack.c.b16 %v1336, %v1327
  %v1643 = vpack.c.b16 %v1337, %v1328
  %v1644 = vpack.c.b16 %v1338, %v1329
  %v1645 = vpack.c.b16 %v1339, %v1330
  %v1646 = vpack.c.b16 %v1340, %v1331
  %v1647 = vpack.c.b16 %v1341, %v1332
  %v1648 = vpack.c.b16 %v1351, %v1342
  %v1649 = vpack.c.b16 %v1352, %v1343
  %v1650 = vpack.c.b16 %v1353, %v1344
  %v1651 = vpack.c.b16 %v1354, %v1345
  %v1652 = vpack.c.b16 %v1355, %v1346
  %v1653 = vpack.c.b16 %v1356, %v1347
  %v1654 = vpack.c.b16 %v1357, %v1348
  %v1655 = vpack.c.b16 %v1358, %v1349
  %v1656 = vpack.c.b16 %v1359, %v1350
  %v1657 = vpack.c.b16 %v1369, %v1360
  %v1658 = vpack.c.b16 %v1370, %v1361
  %v1659 = vpack.c.b16 %v1371, %v1362
  %v1660 = vpack.c.b16 %v1372, %v1363
  %v1661 = vpack.c.b16 %v1373, %v1364
  %v1662 = vpack.c.b16 %v1374, %v1365
  %v1663 = vpack.c.b16 %v1375, %v1366
  %v1664 = vpack.c.b16 %v1376, %v1367
  %v1665 = vpack.c.b16 %v1377, %v1368
  %v2098 = vunpack.c.l.b16 %v334
  %v2099 = vunpack.c.l.b16 %v335
  %v2100 = vunpack.c.l.b16 %v336
  %v2101 = vunpack.c.l.b16 %v337
  %v2102 = vunpack.c.l.b16 %v338
  %v2103 = vunpack.c.l.b16 %v339
  %v2104 = vunpack.c.l.b16 %v340
  %v2105 = vunpack.c.l.b16 %v341
  %v2106 = vunpack.c.l.b16 %v342
  %v2107 = vunpack.c.l.b16 %v343
  %v2108 = vunpack.c.l.b16 %v344
  %v2109 = vunpack.c.l.b16 %v345
  %v2110 = vunpack.c.l.b16 %v346
  %v2111 = vunpack.c.l.b16 %v347
  %v2112 = vunpack.c.l.b16 %v348
  %v2113 = vunpack.c.l.b16 %v349
  %v2114 = vunpack.c.l.b16 %v350
  %v2115 = vunpack.c.l.b16 %v351
  %v2116 = vunpack.c.l.b16 %v352
  %v2117 = vunpack.c.l.b16 %v353
  %v2118 = vunpack.c.l.b16 %v354
  %v2119 = vunpack.c.l.b16 %v355
  %v2120 = vunpack.c.l.b16 %v356
  %v2121 = vunpack.c.l.b16 %v357
  %v2122 = vunpack.c.l.b16 %v358
  %v2123 = vunpack.c.l.b16 %v359
  %v2124 = vunpack.c.l.b16 %v360
  %v2125 = vunpack.c.l.b16 %v361
  %v2126 = vunpack.c.l.b16 %v362
  %v2127 = vunpack.c.l.b16 %v363
  %v2128 = vunpack.c.l.b16 %v364
  %v2129 = vunpack.c.l.b16 %v365
  %v2130 = vunpack.c.l.b16 %v366
  %v2131 = vunpack.c.l.b16 %v367
  %v2132 = vunpack.c.l.b16 %v368
  %v2133 = vunpack.c.l.b16 %v369
  %v2134 = vunpack.c.l.b16 %v370
  %v2135 = vunpack.c.l.b16 %v371
  %v2136 = vunpack.c.l.b16 %v372
  %v2137 = vunpack.c.l.b16 %v373
  %v2138 = vunpack.c.l.b16 %v374
  %v2139 = vunpack.c.l.b16 %v375
  %v2140 = vunpack.c.l.b16 %v376
  %v2141 = vunpack.c.l.b16 %v377
  %v2142 = vunpack.c.l.b16 %v378
  %v2143 = vunpack.c.l.b16 %v379
  %v2144 = vunpack.c.l.b16 %v380
  %v2145 = vunpack.c.l.b16 %v381
  %v2146 = vunpack.c.l.b16 %v382
  %v2147 = vunpack.c.l.b16 %v383
  %v2148 = vunpack.c.l.b16 %v384
  %v2149 = vunpack.c.l.b16 %v385
  %v2150 = vunpack.c.l.b16 %v386
  %v2151 = vunpack.c.l.b16 %v387
  %v2152 = vunpack.c.l.b16 %v388
  %v2153 = vunpack.c.l.b16 %v389
  %v2154 = vunpack.c.l.b16 %v390
  %v2155 = vunpack.c.l.b16 %v391
  %v2156 = vunpack.c.l.b16 %v392
  %v2157 = vunpack.c.l.b16 %v393
  %v2158 = vunpack.c.l.b16 %v394
  %v2159 = vunpack.c.l.b16 %v395
  %v2160 = vunpack.c.l.b16 %v396
  %v2161 = vunpack.c.l.b16 %v397
  %v2162 = vunpack.c.l.b16 %v398
  %v2163 = vunpack.c.l.b16 %v399
  %v2164 = vunpack.c.l.b16 %v400
  %v2165 = vunpack.c.l.b16 %v401
  %v2166 = vunpack.c.l.b16 %v402
  %v2167 = vunpack.c.l.b16 %v403
  %v2168 = vunpack.c.l.b16 %v404
  %v2169 = vunpack.c.l.b16 %v405
  %v2170 = vunpack.c.l.b16 %v406
  %v2171 = vunpack.c.l.b16 %v407
  %v2172 = vunpack.c.l.b16 %v408
  %v2173 = vunpack.c.l.b16 %v409
  %v2174 = vunpack.c.l.b16 %v410
  %v2175 = vunpack.c.l.b16 %v411
  %v2176 = vunpack.c.l.b16 %v412
  %v2177 = vunpack.c.l.b16 %v413
  %v2178 = vunpack.c.l.b16 %v414
  %v2179 = vunpack.c.l.b16 %v415
  %v2180 = vunpack.c.l.b16 %v416
  %v2181 = vunpack.c.l.b16 %v417
  %v2182 = vunpack.c.l.b16 %v418
  %v2183 = vunpack.c.l.b16 %v419
  %v2184 = vunpack.c.l.b16 %v420
  %v2185 = vunpack.c.l.b16 %v421
  %v2186 = vunpack.c.l.b16 %v422
  %v2187 = vunpack.c.l.b16 %v423
  %v2188 = vunpack.c.l.b16 %v424
  %v2189 = vunpack.c.l.b16 %v425
  %v2190 = vunpack.c.l.b16 %v426
  %v2191 = vunpack.c.l.b16 %v427
  %v2192 = vunpack.c.l.b16 %v428
  %v2193 = vunpack.c.l.b16 %v429
  %v2194 = vunpack.c.l.b16 %v430
  %v2195 = vunpack.c.l.b16 %v431
  %v2196 = vunpack.c.l.b16 %v432
  %v2197 = vunpack.c.l.b16 %v433
  %v2198 = vunpack.c.l.b16 %v434
  %v2199 = vunpack.c.l.b16 %v435
  %v2200 = vunpack.c.l.b16 %v436
  %v2201 = vunpack.c.l.b16 %v437
  %v2202 = vunpack.c.l.b16 %v438
  %v2203 = vunpack.c.l.b16 %v439
  %v2204 = vunpack.c.l.b16 %v440
  %v2205 = vunpack.c.l.b16 %v441
  %v2206 = vunpack.c.l.b16 %v442
  %v2207 = vunpack.c.l.b16 %v443
  %v2208 = vunpack.c.l.b16 %v444
  %v2209 = vunpack.c.l.b16 %v445
  %v2210 = vunpack.c.l.b16 %v446
  %v2211 = vunpack.c.l.b16 %v447
  %v2212 = vunpack.c.l.b16 %v448
  %v2213 = vunpack.c.l.b16 %v449
  %v2214 = vunpack.c.l.b16 %v450
  %v2215 = vunpack.c.l.b16 %v451
  %v2216 = vunpack.c.l.b16 %v452
  %v2217 = vunpack.c.l.b16 %v453
  %v2218 = vunpack.c.l.b16 %v454
  %v2219 = vunpack.c.l.b16 %v455
  %v2220 = vunpack.c.l.b16 %v456
  %v2221 = vunpack.c.l.b16 %v457
  %v2222 = vunpack.c.l.b16 %v458
  %v2223 = vunpack.c.l.b16 %v459
  %v2224 = vunpack.c.l.b16 %v460
  %v2225 = vunpack.c.l.b16 %v461
  %v2226 = vunpack.c.l.b16 %v462
  %v2227 = vunpack.c.l.b16 %v463
  %v2228 = vunpack.c.l.b16 %v464
  %v2229 = vunpack.c.l.b16 %v465
  %v2230 = vunpack.c.l.b16 %v466
  %v2231 = vunpack.c.l.b16 %v467
  %v2232 = vunpack.c.l.b16 %v468
  %v2233 = vunpack.c.l.b16 %v469
  %v2234 = vunpack.c.l.b16 %v470
  %v2235 = vunpack.c.l.b16 %v471
  %v2236 = vunpack.c.l.b16 %v472
  %v2237 = vunpack.c.l.b16 %v473
  %v2238 = vunpack.c.l.b16 %v474
  %v2239 = vunpack.c.l.b16 %v475
  %v2240 = vunpack.c.l.b16 %v476
  %v2241 = vunpack.c.l.b16 %v477
  %v2242 = vpack.c.b16 %v2099, %v2098
  %v2243 = vpack.c.b16 %v2101, %v2100
  %v2244 = vpack.c.b16 %v2103, %v2102
  %v2245 = vpack.c.b16 %v2105, %v2104
  %v2246 = vpack.c.b16 %v2107, %v2106
  %v2247 = vpack.c.b16 %v2109, %v2108
  %v2248 = vpack.c.b16 %v2111, %v2110
  %v2249 = vpack.c.b16 %v2113, %v2112
  %v2250 = vpack.c.b16 %v2115, %v2114
  %v2251 = vpack.c.b16 %v2117, %v2116
  %v2252 = vpack.c.b16 %v2119, %v2118
  %v2253 = vpack.c.b16 %v2121, %v2120
  %v2254 = vpack.c.b16 %v2123, %v2122
  %v2255 = vpack.c.b16 %v2125, %v2124
  %v2256 = vpack.c.b16 %v2127, %v2126
  %v2257 = vpack.c.b16 %v2129, %v2128
  %v2258 = vpack.c.b16 %v2131, %v2130
  %v2259 = vpack.c.b16 %v2133, %v2132
  %v2260 = vpack.c.b16 %v2135, %v2134
  %v2261 = vpack.c.b16 %v2137, %v2136
  %v2262 = vpack.c.b16 %v2139, %v2138
  %v2263 = vpack.c.b16 %v2141, %v2140
  %v2264 = vpack.c.b16 %v2143, %v2142
  %v2265 = vpack.c.b16 %v2145, %v2144
  %v2266 = vpack.c.b16 %v2147, %v2146
  %v2267 = vpack.c.b16 %v2149, %v2148
  %v2268 = vpack.c.b16 %v2151, %v2150
  %v2269 = vpack.c.b16 %v2153, %v2152
  %v2270 = vpack.c.b16 %v2155, %v2154
  %v2271 = vpack.c.b16 %v2157, %v2156
  %v2272 = vpack.c.b16 %v2159, %v2158
  %v2273 = vpack.c.b16 %v2161, %v2160
  %v2274 = vpack.c.b16 %v2163, %v2162
  %v2275 = vpack.c.b16 %v2165, %v2164
  %v2276 = vpack.c.b16 %v2167, %v2166
  %v2277 = vpack.c.b16 %v2169, %v2168
  %v2278 = vpack.c.b16 %v2171, %v2170
  %v2279 = vpack.c.b16 %v2173, %v2172
  %v2280 = vpack.c.b16 %v2175, %v2174
  %v2281 = vpack.c.b16 %v2177, %v2176
  %v2282 = vpack.c.b16 %v2179, %v2178
  %v2283 = vpack.c.b16 %v2181, %v2180
  %v2284 = vpack.c.b16 %v2183, %v2182
  %v2285 = vpack.c.b16 %v2185, %v2184
  %v2286 = vpack.c.b16 %v2187, %v2186
  %v2287 = vpack.c.b16 %v2189, %v2188
  %v2288 = vpack.c.b16 %v2191, %v2190
  %v2289 = vpack.c.b16 %v2193, %v2192
  %v2290 = vpack.c.b16 %v2195, %v2194
  %v2291 = vpack.c.b16 %v2197, %v2196
  %v2292 = vpack.c.b16 %v2199, %v2198
  %v2293 = vpack.c.b16 %v2201, %v2200
  %v2294 = vpack.c.b16 %v2203, %v2202
  %v2295 = vpack.c.b16 %v2205, %v2204
  %v2296 = vpack.c.b16 %v2207, %v2206
  %v2297 = vpack.c.b16 %v2209, %v2208
  %v2298 = vpack.c.b16 %v2211, %v2210
  %v2299 = vpack.c.b16 %v2213, %v2212
  %v2300 = vpack.c.b16 %v2215, %v2214
  %v2301 = vpack.c.b16 %v2217, %v2216
  %v2302 = vpack.c.b16 %v2219, %v2218
  %v2303 = vpack.c.b16 %v2221, %v2220
  %v2304 = vpack.c.b16 %v2223, %v2222
  %v2305 = vpack.c.b16 %v2225, %v2224
  %v2306 = vpack.c.b16 %v2227, %v2226
  %v2307 = vpack.c.b16 %v2229, %v2228
  %v2308 = vpack.c.b16 %v2231, %v2230
  %v2309 = vpack.c.b16 %v2233, %v2232
  %v2310 = vpack.c.b16 %v2235, %v2234
  %v2311 = vpack.c.b16 %v2237, %v2236
  %v2312 = vpack.c.b16 %v2239, %v2238
  %v2313 = vpack.c.b16 %v2241, %v2240
  %2386 = vmatpush.bf16.msra.mxu0 %v2249
  %2387 = vmatpush.bf16.msra.mxu0 %v2248
  %2388 = vmatpush.bf16.msra.mxu0 %v2247
  %2389 = vmatpush.bf16.msra.mxu0 %v2246
  %2390 = vmatpush.bf16.msra.mxu0 %v2245
  %2391 = vmatpush.bf16.msra.mxu0 %v2244
  %2392 = vmatpush.bf16.msra.mxu0 %v2243
  %2393 = vmatpush.bf16.msra.mxu0 %v2242
  %2394 = vmatmul.bf16.gmra.mxu0 %v1378
  %v2395 = vpop.f32.mrf.mxu0
  %v2396 = vadd.f32 %v480, %v2395
  %v2397 = vpop.f32.mrf.mxu0
  %v2398 = vadd.f32 %v480, %v2397
  %2399 = vmatmul.bf16.gmra.mxu0 %v1387
  %v2400 = vpop.f32.mrf.mxu0
  %v2401 = vadd.f32 %v480, %v2400
  %v2402 = vpop.f32.mrf.mxu0
  %v2403 = vadd.f32 %v480, %v2402
  %2404 = vmatmul.bf16.gmra.mxu0 %v1396
  %v2405 = vpop.f32.mrf.mxu0
  %v2406 = vadd.f32 %v480, %v2405
  %v2407 = vpop.f32.mrf.mxu0
  %v2408 = vadd.f32 %v480, %v2407
  %2409 = vmatmul.bf16.gmra.mxu0 %v1405
  %v2410 = vpop.f32.mrf.mxu0
  %v2411 = vadd.f32 %v480, %v2410
  %v2412 = vpop.f32.mrf.mxu0
  %v2413 = vadd.f32 %v480, %v2412
  %2414 = vmatmul.bf16.gmra.mxu0 %v1414
  %v2415 = vpop.f32.mrf.mxu0
  %v2416 = vadd.f32 %v480, %v2415
  %v2417 = vpop.f32.mrf.mxu0
  %v2418 = vadd.f32 %v480, %v2417
  %2419 = vmatmul.bf16.gmra.mxu0 %v1423
  %v2420 = vpop.f32.mrf.mxu0
  %v2421 = vadd.f32 %v480, %v2420
  %v2422 = vpop.f32.mrf.mxu0
  %v2423 = vadd.f32 %v480, %v2422
  %2424 = vmatmul.bf16.gmra.mxu0 %v1432
  %v2425 = vpop.f32.mrf.mxu0
  %v2426 = vadd.f32 %v480, %v2425
  %v2427 = vpop.f32.mrf.mxu0
  %v2428 = vadd.f32 %v480, %v2427
  %2429 = vmatmul.bf16.gmra.mxu0 %v1441
  %v2430 = vpop.f32.mrf.mxu0
  %v2431 = vadd.f32 %v480, %v2430
  %v2432 = vpop.f32.mrf.mxu0
  %v2433 = vadd.f32 %v480, %v2432
  %2434 = vmatmul.bf16.gmra.mxu0 %v1450
  %v2435 = vpop.f32.mrf.mxu0
  %v2436 = vadd.f32 %v480, %v2435
  %v2437 = vpop.f32.mrf.mxu0
  %v2438 = vadd.f32 %v480, %v2437
  %2439 = vmatmul.bf16.gmra.mxu0 %v1459
  %v2440 = vpop.f32.mrf.mxu0
  %v2441 = vadd.f32 %v480, %v2440
  %v2442 = vpop.f32.mrf.mxu0
  %v2443 = vadd.f32 %v480, %v2442
  %2444 = vmatmul.bf16.gmra.mxu0 %v1468
  %v2445 = vpop.f32.mrf.mxu0
  %v2446 = vadd.f32 %v480, %v2445
  %v2447 = vpop.f32.mrf.mxu0
  %v2448 = vadd.f32 %v480, %v2447
  %2449 = vmatmul.bf16.gmra.mxu0 %v1477
  %v2450 = vpop.f32.mrf.mxu0
  %v2451 = vadd.f32 %v480, %v2450
  %v2452 = vpop.f32.mrf.mxu0
  %v2453 = vadd.f32 %v480, %v2452
  %2454 = vmatmul.bf16.gmra.mxu0 %v1486
  %v2455 = vpop.f32.mrf.mxu0
  %v2456 = vadd.f32 %v480, %v2455
  %v2457 = vpop.f32.mrf.mxu0
  %v2458 = vadd.f32 %v480, %v2457
  %2459 = vmatmul.bf16.gmra.mxu0 %v1495
  %v2460 = vpop.f32.mrf.mxu0
  %v2461 = vadd.f32 %v480, %v2460
  %v2462 = vpop.f32.mrf.mxu0
  %v2463 = vadd.f32 %v480, %v2462
  %2464 = vmatmul.bf16.gmra.mxu0 %v1504
  %v2465 = vpop.f32.mrf.mxu0
  %v2466 = vadd.f32 %v480, %v2465
  %v2467 = vpop.f32.mrf.mxu0
  %v2468 = vadd.f32 %v480, %v2467
  %2469 = vmatmul.bf16.gmra.mxu0 %v1513
  %v2470 = vpop.f32.mrf.mxu0
  %v2471 = vadd.f32 %v480, %v2470
  %v2472 = vpop.f32.mrf.mxu0
  %v2473 = vadd.f32 %v480, %v2472
  %2474 = vmatmul.bf16.gmra.mxu0 %v1522
  %v2475 = vpop.f32.mrf.mxu0
  %v2476 = vadd.f32 %v480, %v2475
  %v2477 = vpop.f32.mrf.mxu0
  %v2478 = vadd.f32 %v480, %v2477
  %2479 = vmatmul.bf16.gmra.mxu0 %v1531
  %v2480 = vpop.f32.mrf.mxu0
  %v2481 = vadd.f32 %v480, %v2480
  %v2482 = vpop.f32.mrf.mxu0
  %v2483 = vadd.f32 %v480, %v2482
  %2484 = vmatmul.bf16.gmra.mxu0 %v1540
  %v2485 = vpop.f32.mrf.mxu0
  %v2486 = vadd.f32 %v480, %v2485
  %v2487 = vpop.f32.mrf.mxu0
  %v2488 = vadd.f32 %v480, %v2487
  %2489 = vmatmul.bf16.gmra.mxu0 %v1549
  %v2490 = vpop.f32.mrf.mxu0
  %v2491 = vadd.f32 %v480, %v2490
  %v2492 = vpop.f32.mrf.mxu0
  %v2493 = vadd.f32 %v480, %v2492
  %2494 = vmatmul.bf16.gmra.mxu0 %v1558
  %v2495 = vpop.f32.mrf.mxu0
  %v2496 = vadd.f32 %v480, %v2495
  %v2497 = vpop.f32.mrf.mxu0
  %v2498 = vadd.f32 %v480, %v2497
  %2499 = vmatmul.bf16.gmra.mxu0 %v1567
  %v2500 = vpop.f32.mrf.mxu0
  %v2501 = vadd.f32 %v480, %v2500
  %v2502 = vpop.f32.mrf.mxu0
  %v2503 = vadd.f32 %v480, %v2502
  %2504 = vmatmul.bf16.gmra.mxu0 %v1576
  %v2505 = vpop.f32.mrf.mxu0
  %v2506 = vadd.f32 %v480, %v2505
  %v2507 = vpop.f32.mrf.mxu0
  %v2508 = vadd.f32 %v480, %v2507
  %2509 = vmatmul.bf16.gmra.mxu0 %v1585
  %v2510 = vpop.f32.mrf.mxu0
  %v2511 = vadd.f32 %v480, %v2510
  %v2512 = vpop.f32.mrf.mxu0
  %v2513 = vadd.f32 %v480, %v2512
  %2514 = vmatmul.bf16.gmra.mxu0 %v1594
  %v2515 = vpop.f32.mrf.mxu0
  %v2516 = vadd.f32 %v480, %v2515
  %v2517 = vpop.f32.mrf.mxu0
  %v2518 = vadd.f32 %v480, %v2517
  %2519 = vmatmul.bf16.gmra.mxu0 %v1603
  %v2520 = vpop.f32.mrf.mxu0
  %v2521 = vadd.f32 %v480, %v2520
  %v2522 = vpop.f32.mrf.mxu0
  %v2523 = vadd.f32 %v480, %v2522
  %2524 = vmatmul.bf16.gmra.mxu0 %v1612
  %v2525 = vpop.f32.mrf.mxu0
  %v2526 = vadd.f32 %v480, %v2525
  %v2527 = vpop.f32.mrf.mxu0
  %v2528 = vadd.f32 %v480, %v2527
  %2529 = vmatmul.bf16.gmra.mxu0 %v1621
  %v2530 = vpop.f32.mrf.mxu0
  %v2531 = vadd.f32 %v480, %v2530
  %v2532 = vpop.f32.mrf.mxu0
  %v2533 = vadd.f32 %v480, %v2532
  %2534 = vmatmul.bf16.gmra.mxu0 %v1630
  %v2535 = vpop.f32.mrf.mxu0
  %v2536 = vadd.f32 %v480, %v2535
  %v2537 = vpop.f32.mrf.mxu0
  %v2538 = vadd.f32 %v480, %v2537
  %2539 = vmatmul.bf16.gmra.mxu0 %v1639
  %v2540 = vpop.f32.mrf.mxu0
  %v2541 = vadd.f32 %v480, %v2540
  %v2542 = vpop.f32.mrf.mxu0
  %v2543 = vadd.f32 %v480, %v2542
  %2544 = vmatmul.bf16.gmra.mxu0 %v1648
  %v2545 = vpop.f32.mrf.mxu0
  %v2546 = vadd.f32 %v480, %v2545
  %v2547 = vpop.f32.mrf.mxu0
  %v2548 = vadd.f32 %v480, %v2547
  %2549 = vmatmul.bf16.gmra.mxu0 %v1657
  %v2550 = vpop.f32.mrf.mxu0
  %v2551 = vadd.f32 %v480, %v2550
  %v2552 = vpop.f32.mrf.mxu0
  %v2553 = vadd.f32 %v480, %v2552
  %2554 = vdwg.mxu0
  %2555 = vmatpush.bf16.msra.mxu0 %v2257
  %2556 = vmatpush.bf16.msra.mxu0 %v2256
  %2557 = vmatpush.bf16.msra.mxu0 %v2255
  %2558 = vmatpush.bf16.msra.mxu0 %v2254
  %2559 = vmatpush.bf16.msra.mxu0 %v2253
  %2560 = vmatpush.bf16.msra.mxu0 %v2252
  %2561 = vmatpush.bf16.msra.mxu0 %v2251
  %2562 = vmatpush.bf16.msra.mxu0 %v2250
  %2563 = vmatmul.bf16.gmra.mxu0 %v1379
  %v2564 = vpop.f32.mrf.mxu0
  %v2565 = vadd.f32 %v2396, %v2564
  %v2566 = vpop.f32.mrf.mxu0
  %v2567 = vadd.f32 %v2398, %v2566
  %2568 = vmatmul.bf16.gmra.mxu0 %v1388
  %v2569 = vpop.f32.mrf.mxu0
  %v2570 = vadd.f32 %v2401, %v2569
  %v2571 = vpop.f32.mrf.mxu0
  %v2572 = vadd.f32 %v2403, %v2571
  %2573 = vmatmul.bf16.gmra.mxu0 %v1397
  %v2574 = vpop.f32.mrf.mxu0
  %v2575 = vadd.f32 %v2406, %v2574
  %v2576 = vpop.f32.mrf.mxu0
  %v2577 = vadd.f32 %v2408, %v2576
  %2578 = vmatmul.bf16.gmra.mxu0 %v1406
  %v2579 = vpop.f32.mrf.mxu0
  %v2580 = vadd.f32 %v2411, %v2579
  %v2581 = vpop.f32.mrf.mxu0
  %v2582 = vadd.f32 %v2413, %v2581
  %2583 = vmatmul.bf16.gmra.mxu0 %v1415
  %v2584 = vpop.f32.mrf.mxu0
  %v2585 = vadd.f32 %v2416, %v2584
  %v2586 = vpop.f32.mrf.mxu0
  %v2587 = vadd.f32 %v2418, %v2586
  %2588 = vmatmul.bf16.gmra.mxu0 %v1424
  %v2589 = vpop.f32.mrf.mxu0
  %v2590 = vadd.f32 %v2421, %v2589
  %v2591 = vpop.f32.mrf.mxu0
  %v2592 = vadd.f32 %v2423, %v2591
  %2593 = vmatmul.bf16.gmra.mxu0 %v1433
  %v2594 = vpop.f32.mrf.mxu0
  %v2595 = vadd.f32 %v2426, %v2594
  %v2596 = vpop.f32.mrf.mxu0
  %v2597 = vadd.f32 %v2428, %v2596
  %2598 = vmatmul.bf16.gmra.mxu0 %v1442
  %v2599 = vpop.f32.mrf.mxu0
  %v2600 = vadd.f32 %v2431, %v2599
  %v2601 = vpop.f32.mrf.mxu0
  %v2602 = vadd.f32 %v2433, %v2601
  %2603 = vmatmul.bf16.gmra.mxu0 %v1451
  %v2604 = vpop.f32.mrf.mxu0
  %v2605 = vadd.f32 %v2436, %v2604
  %v2606 = vpop.f32.mrf.mxu0
  %v2607 = vadd.f32 %v2438, %v2606
  %2608 = vmatmul.bf16.gmra.mxu0 %v1460
  %v2609 = vpop.f32.mrf.mxu0
  %v2610 = vadd.f32 %v2441, %v2609
  %v2611 = vpop.f32.mrf.mxu0
  %v2612 = vadd.f32 %v2443, %v2611
  %2613 = vmatmul.bf16.gmra.mxu0 %v1469
  %v2614 = vpop.f32.mrf.mxu0
  %v2615 = vadd.f32 %v2446, %v2614
  %v2616 = vpop.f32.mrf.mxu0
  %v2617 = vadd.f32 %v2448, %v2616
  %2618 = vmatmul.bf16.gmra.mxu0 %v1478
  %v2619 = vpop.f32.mrf.mxu0
  %v2620 = vadd.f32 %v2451, %v2619
  %v2621 = vpop.f32.mrf.mxu0
  %v2622 = vadd.f32 %v2453, %v2621
  %2623 = vmatmul.bf16.gmra.mxu0 %v1487
  %v2624 = vpop.f32.mrf.mxu0
  %v2625 = vadd.f32 %v2456, %v2624
  %v2626 = vpop.f32.mrf.mxu0
  %v2627 = vadd.f32 %v2458, %v2626
  %2628 = vmatmul.bf16.gmra.mxu0 %v1496
  %v2629 = vpop.f32.mrf.mxu0
  %v2630 = vadd.f32 %v2461, %v2629
  %v2631 = vpop.f32.mrf.mxu0
  %v2632 = vadd.f32 %v2463, %v2631
  %2633 = vmatmul.bf16.gmra.mxu0 %v1505
  %v2634 = vpop.f32.mrf.mxu0
  %v2635 = vadd.f32 %v2466, %v2634
  %v2636 = vpop.f32.mrf.mxu0
  %v2637 = vadd.f32 %v2468, %v2636
  %2638 = vmatmul.bf16.gmra.mxu0 %v1514
  %v2639 = vpop.f32.mrf.mxu0
  %v2640 = vadd.f32 %v2471, %v2639
  %v2641 = vpop.f32.mrf.mxu0
  %v2642 = vadd.f32 %v2473, %v2641
  %2643 = vmatmul.bf16.gmra.mxu0 %v1523
  %v2644 = vpop.f32.mrf.mxu0
  %v2645 = vadd.f32 %v2476, %v2644
  %v2646 = vpop.f32.mrf.mxu0
  %v2647 = vadd.f32 %v2478, %v2646
  %2648 = vmatmul.bf16.gmra.mxu0 %v1532
  %v2649 = vpop.f32.mrf.mxu0
  %v2650 = vadd.f32 %v2481, %v2649
  %v2651 = vpop.f32.mrf.mxu0
  %v2652 = vadd.f32 %v2483, %v2651
  %2653 = vmatmul.bf16.gmra.mxu0 %v1541
  %v2654 = vpop.f32.mrf.mxu0
  %v2655 = vadd.f32 %v2486, %v2654
  %v2656 = vpop.f32.mrf.mxu0
  %v2657 = vadd.f32 %v2488, %v2656
  %2658 = vmatmul.bf16.gmra.mxu0 %v1550
  %v2659 = vpop.f32.mrf.mxu0
  %v2660 = vadd.f32 %v2491, %v2659
  %v2661 = vpop.f32.mrf.mxu0
  %v2662 = vadd.f32 %v2493, %v2661
  %2663 = vmatmul.bf16.gmra.mxu0 %v1559
  %v2664 = vpop.f32.mrf.mxu0
  %v2665 = vadd.f32 %v2496, %v2664
  %v2666 = vpop.f32.mrf.mxu0
  %v2667 = vadd.f32 %v2498, %v2666
  %2668 = vmatmul.bf16.gmra.mxu0 %v1568
  %v2669 = vpop.f32.mrf.mxu0
  %v2670 = vadd.f32 %v2501, %v2669
  %v2671 = vpop.f32.mrf.mxu0
  %v2672 = vadd.f32 %v2503, %v2671
  %2673 = vmatmul.bf16.gmra.mxu0 %v1577
  %v2674 = vpop.f32.mrf.mxu0
  %v2675 = vadd.f32 %v2506, %v2674
  %v2676 = vpop.f32.mrf.mxu0
  %v2677 = vadd.f32 %v2508, %v2676
  %2678 = vmatmul.bf16.gmra.mxu0 %v1586
  %v2679 = vpop.f32.mrf.mxu0
  %v2680 = vadd.f32 %v2511, %v2679
  %v2681 = vpop.f32.mrf.mxu0
  %v2682 = vadd.f32 %v2513, %v2681
  %2683 = vmatmul.bf16.gmra.mxu0 %v1595
  %v2684 = vpop.f32.mrf.mxu0
  %v2685 = vadd.f32 %v2516, %v2684
  %v2686 = vpop.f32.mrf.mxu0
  %v2687 = vadd.f32 %v2518, %v2686
  %2688 = vmatmul.bf16.gmra.mxu0 %v1604
  %v2689 = vpop.f32.mrf.mxu0
  %v2690 = vadd.f32 %v2521, %v2689
  %v2691 = vpop.f32.mrf.mxu0
  %v2692 = vadd.f32 %v2523, %v2691
  %2693 = vmatmul.bf16.gmra.mxu0 %v1613
  %v2694 = vpop.f32.mrf.mxu0
  %v2695 = vadd.f32 %v2526, %v2694
  %v2696 = vpop.f32.mrf.mxu0
  %v2697 = vadd.f32 %v2528, %v2696
  %2698 = vmatmul.bf16.gmra.mxu0 %v1622
  %v2699 = vpop.f32.mrf.mxu0
  %v2700 = vadd.f32 %v2531, %v2699
  %v2701 = vpop.f32.mrf.mxu0
  %v2702 = vadd.f32 %v2533, %v2701
  %2703 = vmatmul.bf16.gmra.mxu0 %v1631
  %v2704 = vpop.f32.mrf.mxu0
  %v2705 = vadd.f32 %v2536, %v2704
  %v2706 = vpop.f32.mrf.mxu0
  %v2707 = vadd.f32 %v2538, %v2706
  %2708 = vmatmul.bf16.gmra.mxu0 %v1640
  %v2709 = vpop.f32.mrf.mxu0
  %v2710 = vadd.f32 %v2541, %v2709
  %v2711 = vpop.f32.mrf.mxu0
  %v2712 = vadd.f32 %v2543, %v2711
  %2713 = vmatmul.bf16.gmra.mxu0 %v1649
  %v2714 = vpop.f32.mrf.mxu0
  %v2715 = vadd.f32 %v2546, %v2714
  %v2716 = vpop.f32.mrf.mxu0
  %v2717 = vadd.f32 %v2548, %v2716
  %2718 = vmatmul.bf16.gmra.mxu0 %v1658
  %v2719 = vpop.f32.mrf.mxu0
  %v2720 = vadd.f32 %v2551, %v2719
  %v2721 = vpop.f32.mrf.mxu0
  %v2722 = vadd.f32 %v2553, %v2721
  %2723 = vdwg.mxu0
  %2724 = vmatpush.bf16.msra.mxu0 %v2265
  %2725 = vmatpush.bf16.msra.mxu0 %v2264
  %2726 = vmatpush.bf16.msra.mxu0 %v2263
  %2727 = vmatpush.bf16.msra.mxu0 %v2262
  %2728 = vmatpush.bf16.msra.mxu0 %v2261
  %2729 = vmatpush.bf16.msra.mxu0 %v2260
  %2730 = vmatpush.bf16.msra.mxu0 %v2259
  %2731 = vmatpush.bf16.msra.mxu0 %v2258
  %2732 = vmatmul.bf16.gmra.mxu0 %v1380
  %v2733 = vpop.f32.mrf.mxu0
  %v2734 = vadd.f32 %v2565, %v2733
  %v2735 = vpop.f32.mrf.mxu0
  %v2736 = vadd.f32 %v2567, %v2735
  %2737 = vmatmul.bf16.gmra.mxu0 %v1389
  %v2738 = vpop.f32.mrf.mxu0
  %v2739 = vadd.f32 %v2570, %v2738
  %v2740 = vpop.f32.mrf.mxu0
  %v2741 = vadd.f32 %v2572, %v2740
  %2742 = vmatmul.bf16.gmra.mxu0 %v1398
  %v2743 = vpop.f32.mrf.mxu0
  %v2744 = vadd.f32 %v2575, %v2743
  %v2745 = vpop.f32.mrf.mxu0
  %v2746 = vadd.f32 %v2577, %v2745
  %2747 = vmatmul.bf16.gmra.mxu0 %v1407
  %v2748 = vpop.f32.mrf.mxu0
  %v2749 = vadd.f32 %v2580, %v2748
  %v2750 = vpop.f32.mrf.mxu0
  %v2751 = vadd.f32 %v2582, %v2750
  %2752 = vmatmul.bf16.gmra.mxu0 %v1416
  %v2753 = vpop.f32.mrf.mxu0
  %v2754 = vadd.f32 %v2585, %v2753
  %v2755 = vpop.f32.mrf.mxu0
  %v2756 = vadd.f32 %v2587, %v2755
  %2757 = vmatmul.bf16.gmra.mxu0 %v1425
  %v2758 = vpop.f32.mrf.mxu0
  %v2759 = vadd.f32 %v2590, %v2758
  %v2760 = vpop.f32.mrf.mxu0
  %v2761 = vadd.f32 %v2592, %v2760
  %2762 = vmatmul.bf16.gmra.mxu0 %v1434
  %v2763 = vpop.f32.mrf.mxu0
  %v2764 = vadd.f32 %v2595, %v2763
  %v2765 = vpop.f32.mrf.mxu0
  %v2766 = vadd.f32 %v2597, %v2765
  %2767 = vmatmul.bf16.gmra.mxu0 %v1443
  %v2768 = vpop.f32.mrf.mxu0
  %v2769 = vadd.f32 %v2600, %v2768
  %v2770 = vpop.f32.mrf.mxu0
  %v2771 = vadd.f32 %v2602, %v2770
  %2772 = vmatmul.bf16.gmra.mxu0 %v1452
  %v2773 = vpop.f32.mrf.mxu0
  %v2774 = vadd.f32 %v2605, %v2773
  %v2775 = vpop.f32.mrf.mxu0
  %v2776 = vadd.f32 %v2607, %v2775
  %2777 = vmatmul.bf16.gmra.mxu0 %v1461
  %v2778 = vpop.f32.mrf.mxu0
  %v2779 = vadd.f32 %v2610, %v2778
  %v2780 = vpop.f32.mrf.mxu0
  %v2781 = vadd.f32 %v2612, %v2780
  %2782 = vmatmul.bf16.gmra.mxu0 %v1470
  %v2783 = vpop.f32.mrf.mxu0
  %v2784 = vadd.f32 %v2615, %v2783
  %v2785 = vpop.f32.mrf.mxu0
  %v2786 = vadd.f32 %v2617, %v2785
  %2787 = vmatmul.bf16.gmra.mxu0 %v1479
  %v2788 = vpop.f32.mrf.mxu0
  %v2789 = vadd.f32 %v2620, %v2788
  %v2790 = vpop.f32.mrf.mxu0
  %v2791 = vadd.f32 %v2622, %v2790
  %2792 = vmatmul.bf16.gmra.mxu0 %v1488
  %v2793 = vpop.f32.mrf.mxu0
  %v2794 = vadd.f32 %v2625, %v2793
  %v2795 = vpop.f32.mrf.mxu0
  %v2796 = vadd.f32 %v2627, %v2795
  %2797 = vmatmul.bf16.gmra.mxu0 %v1497
  %v2798 = vpop.f32.mrf.mxu0
  %v2799 = vadd.f32 %v2630, %v2798
  %v2800 = vpop.f32.mrf.mxu0
  %v2801 = vadd.f32 %v2632, %v2800
  %2802 = vmatmul.bf16.gmra.mxu0 %v1506
  %v2803 = vpop.f32.mrf.mxu0
  %v2804 = vadd.f32 %v2635, %v2803
  %v2805 = vpop.f32.mrf.mxu0
  %v2806 = vadd.f32 %v2637, %v2805
  %2807 = vmatmul.bf16.gmra.mxu0 %v1515
  %v2808 = vpop.f32.mrf.mxu0
  %v2809 = vadd.f32 %v2640, %v2808
  %v2810 = vpop.f32.mrf.mxu0
  %v2811 = vadd.f32 %v2642, %v2810
  %2812 = vmatmul.bf16.gmra.mxu0 %v1524
  %v2813 = vpop.f32.mrf.mxu0
  %v2814 = vadd.f32 %v2645, %v2813
  %v2815 = vpop.f32.mrf.mxu0
  %v2816 = vadd.f32 %v2647, %v2815
  %2817 = vmatmul.bf16.gmra.mxu0 %v1533
  %v2818 = vpop.f32.mrf.mxu0
  %v2819 = vadd.f32 %v2650, %v2818
  %v2820 = vpop.f32.mrf.mxu0
  %v2821 = vadd.f32 %v2652, %v2820
  %2822 = vmatmul.bf16.gmra.mxu0 %v1542
  %v2823 = vpop.f32.mrf.mxu0
  %v2824 = vadd.f32 %v2655, %v2823
  %v2825 = vpop.f32.mrf.mxu0
  %v2826 = vadd.f32 %v2657, %v2825
  %2827 = vmatmul.bf16.gmra.mxu0 %v1551
  %v2828 = vpop.f32.mrf.mxu0
  %v2829 = vadd.f32 %v2660, %v2828
  %v2830 = vpop.f32.mrf.mxu0
  %v2831 = vadd.f32 %v2662, %v2830
  %2832 = vmatmul.bf16.gmra.mxu0 %v1560
  %v2833 = vpop.f32.mrf.mxu0
  %v2834 = vadd.f32 %v2665, %v2833
  %v2835 = vpop.f32.mrf.mxu0
  %v2836 = vadd.f32 %v2667, %v2835
  %2837 = vmatmul.bf16.gmra.mxu0 %v1569
  %v2838 = vpop.f32.mrf.mxu0
  %v2839 = vadd.f32 %v2670, %v2838
  %v2840 = vpop.f32.mrf.mxu0
  %v2841 = vadd.f32 %v2672, %v2840
  %2842 = vmatmul.bf16.gmra.mxu0 %v1578
  %v2843 = vpop.f32.mrf.mxu0
  %v2844 = vadd.f32 %v2675, %v2843
  %v2845 = vpop.f32.mrf.mxu0
  %v2846 = vadd.f32 %v2677, %v2845
  %2847 = vmatmul.bf16.gmra.mxu0 %v1587
  %v2848 = vpop.f32.mrf.mxu0
  %v2849 = vadd.f32 %v2680, %v2848
  %v2850 = vpop.f32.mrf.mxu0
  %v2851 = vadd.f32 %v2682, %v2850
  %2852 = vmatmul.bf16.gmra.mxu0 %v1596
  %v2853 = vpop.f32.mrf.mxu0
  %v2854 = vadd.f32 %v2685, %v2853
  %v2855 = vpop.f32.mrf.mxu0
  %v2856 = vadd.f32 %v2687, %v2855
  %2857 = vmatmul.bf16.gmra.mxu0 %v1605
  %v2858 = vpop.f32.mrf.mxu0
  %v2859 = vadd.f32 %v2690, %v2858
  %v2860 = vpop.f32.mrf.mxu0
  %v2861 = vadd.f32 %v2692, %v2860
  %2862 = vmatmul.bf16.gmra.mxu0 %v1614
  %v2863 = vpop.f32.mrf.mxu0
  %v2864 = vadd.f32 %v2695, %v2863
  %v2865 = vpop.f32.mrf.mxu0
  %v2866 = vadd.f32 %v2697, %v2865
  %2867 = vmatmul.bf16.gmra.mxu0 %v1623
  %v2868 = vpop.f32.mrf.mxu0
  %v2869 = vadd.f32 %v2700, %v2868
  %v2870 = vpop.f32.mrf.mxu0
  %v2871 = vadd.f32 %v2702, %v2870
  %2872 = vmatmul.bf16.gmra.mxu0 %v1632
  %v2873 = vpop.f32.mrf.mxu0
  %v2874 = vadd.f32 %v2705, %v2873
  %v2875 = vpop.f32.mrf.mxu0
  %v2876 = vadd.f32 %v2707, %v2875
  %2877 = vmatmul.bf16.gmra.mxu0 %v1641
  %v2878 = vpop.f32.mrf.mxu0
  %v2879 = vadd.f32 %v2710, %v2878
  %v2880 = vpop.f32.mrf.mxu0
  %v2881 = vadd.f32 %v2712, %v2880
  %2882 = vmatmul.bf16.gmra.mxu0 %v1650
  %v2883 = vpop.f32.mrf.mxu0
  %v2884 = vadd.f32 %v2715, %v2883
  %v2885 = vpop.f32.mrf.mxu0
  %v2886 = vadd.f32 %v2717, %v2885
  %2887 = vmatmul.bf16.gmra.mxu0 %v1659
  %v2888 = vpop.f32.mrf.mxu0
  %v2889 = vadd.f32 %v2720, %v2888
  %v2890 = vpop.f32.mrf.mxu0
  %v2891 = vadd.f32 %v2722, %v2890
  %2892 = vdwg.mxu0
  %2893 = vmatpush.bf16.msra.mxu0 %v2273
  %2894 = vmatpush.bf16.msra.mxu0 %v2272
  %2895 = vmatpush.bf16.msra.mxu0 %v2271
  %2896 = vmatpush.bf16.msra.mxu0 %v2270
  %2897 = vmatpush.bf16.msra.mxu0 %v2269
  %2898 = vmatpush.bf16.msra.mxu0 %v2268
  %2899 = vmatpush.bf16.msra.mxu0 %v2267
  %2900 = vmatpush.bf16.msra.mxu0 %v2266
  %2901 = vmatmul.bf16.gmra.mxu0 %v1381
  %v2902 = vpop.f32.mrf.mxu0
  %v2903 = vadd.f32 %v2734, %v2902
  %v2904 = vpop.f32.mrf.mxu0
  %v2905 = vadd.f32 %v2736, %v2904
  %2906 = vmatmul.bf16.gmra.mxu0 %v1390
  %v2907 = vpop.f32.mrf.mxu0
  %v2908 = vadd.f32 %v2739, %v2907
  %v2909 = vpop.f32.mrf.mxu0
  %v2910 = vadd.f32 %v2741, %v2909
  %2911 = vmatmul.bf16.gmra.mxu0 %v1399
  %v2912 = vpop.f32.mrf.mxu0
  %v2913 = vadd.f32 %v2744, %v2912
  %v2914 = vpop.f32.mrf.mxu0
  %v2915 = vadd.f32 %v2746, %v2914
  %2916 = vmatmul.bf16.gmra.mxu0 %v1408
  %v2917 = vpop.f32.mrf.mxu0
  %v2918 = vadd.f32 %v2749, %v2917
  %v2919 = vpop.f32.mrf.mxu0
  %v2920 = vadd.f32 %v2751, %v2919
  %2921 = vmatmul.bf16.gmra.mxu0 %v1417
  %v2922 = vpop.f32.mrf.mxu0
  %v2923 = vadd.f32 %v2754, %v2922
  %v2924 = vpop.f32.mrf.mxu0
  %v2925 = vadd.f32 %v2756, %v2924
  %2926 = vmatmul.bf16.gmra.mxu0 %v1426
  %v2927 = vpop.f32.mrf.mxu0
  %v2928 = vadd.f32 %v2759, %v2927
  %v2929 = vpop.f32.mrf.mxu0
  %v2930 = vadd.f32 %v2761, %v2929
  %2931 = vmatmul.bf16.gmra.mxu0 %v1435
  %v2932 = vpop.f32.mrf.mxu0
  %v2933 = vadd.f32 %v2764, %v2932
  %v2934 = vpop.f32.mrf.mxu0
  %v2935 = vadd.f32 %v2766, %v2934
  %2936 = vmatmul.bf16.gmra.mxu0 %v1444
  %v2937 = vpop.f32.mrf.mxu0
  %v2938 = vadd.f32 %v2769, %v2937
  %v2939 = vpop.f32.mrf.mxu0
  %v2940 = vadd.f32 %v2771, %v2939
  %2941 = vmatmul.bf16.gmra.mxu0 %v1453
  %v2942 = vpop.f32.mrf.mxu0
  %v2943 = vadd.f32 %v2774, %v2942
  %v2944 = vpop.f32.mrf.mxu0
  %v2945 = vadd.f32 %v2776, %v2944
  %2946 = vmatmul.bf16.gmra.mxu0 %v1462
  %v2947 = vpop.f32.mrf.mxu0
  %v2948 = vadd.f32 %v2779, %v2947
  %v2949 = vpop.f32.mrf.mxu0
  %v2950 = vadd.f32 %v2781, %v2949
  %2951 = vmatmul.bf16.gmra.mxu0 %v1471
  %v2952 = vpop.f32.mrf.mxu0
  %v2953 = vadd.f32 %v2784, %v2952
  %v2954 = vpop.f32.mrf.mxu0
  %v2955 = vadd.f32 %v2786, %v2954
  %2956 = vmatmul.bf16.gmra.mxu0 %v1480
  %v2957 = vpop.f32.mrf.mxu0
  %v2958 = vadd.f32 %v2789, %v2957
  %v2959 = vpop.f32.mrf.mxu0
  %v2960 = vadd.f32 %v2791, %v2959
  %2961 = vmatmul.bf16.gmra.mxu0 %v1489
  %v2962 = vpop.f32.mrf.mxu0
  %v2963 = vadd.f32 %v2794, %v2962
  %v2964 = vpop.f32.mrf.mxu0
  %v2965 = vadd.f32 %v2796, %v2964
  %2966 = vmatmul.bf16.gmra.mxu0 %v1498
  %v2967 = vpop.f32.mrf.mxu0
  %v2968 = vadd.f32 %v2799, %v2967
  %v2969 = vpop.f32.mrf.mxu0
  %v2970 = vadd.f32 %v2801, %v2969
  %2971 = vmatmul.bf16.gmra.mxu0 %v1507
  %v2972 = vpop.f32.mrf.mxu0
  %v2973 = vadd.f32 %v2804, %v2972
  %v2974 = vpop.f32.mrf.mxu0
  %v2975 = vadd.f32 %v2806, %v2974
  %2976 = vmatmul.bf16.gmra.mxu0 %v1516
  %v2977 = vpop.f32.mrf.mxu0
  %v2978 = vadd.f32 %v2809, %v2977
  %v2979 = vpop.f32.mrf.mxu0
  %v2980 = vadd.f32 %v2811, %v2979
  %2981 = vmatmul.bf16.gmra.mxu0 %v1525
  %v2982 = vpop.f32.mrf.mxu0
  %v2983 = vadd.f32 %v2814, %v2982
  %v2984 = vpop.f32.mrf.mxu0
  %v2985 = vadd.f32 %v2816, %v2984
  %2986 = vmatmul.bf16.gmra.mxu0 %v1534
  %v2987 = vpop.f32.mrf.mxu0
  %v2988 = vadd.f32 %v2819, %v2987
  %v2989 = vpop.f32.mrf.mxu0
  %v2990 = vadd.f32 %v2821, %v2989
  %2991 = vmatmul.bf16.gmra.mxu0 %v1543
  %v2992 = vpop.f32.mrf.mxu0
  %v2993 = vadd.f32 %v2824, %v2992
  %v2994 = vpop.f32.mrf.mxu0
  %v2995 = vadd.f32 %v2826, %v2994
  %2996 = vmatmul.bf16.gmra.mxu0 %v1552
  %v2997 = vpop.f32.mrf.mxu0
  %v2998 = vadd.f32 %v2829, %v2997
  %v2999 = vpop.f32.mrf.mxu0
  %v3000 = vadd.f32 %v2831, %v2999
  %3001 = vmatmul.bf16.gmra.mxu0 %v1561
  %v3002 = vpop.f32.mrf.mxu0
  %v3003 = vadd.f32 %v2834, %v3002
  %v3004 = vpop.f32.mrf.mxu0
  %v3005 = vadd.f32 %v2836, %v3004
  %3006 = vmatmul.bf16.gmra.mxu0 %v1570
  %v3007 = vpop.f32.mrf.mxu0
  %v3008 = vadd.f32 %v2839, %v3007
  %v3009 = vpop.f32.mrf.mxu0
  %v3010 = vadd.f32 %v2841, %v3009
  %3011 = vmatmul.bf16.gmra.mxu0 %v1579
  %v3012 = vpop.f32.mrf.mxu0
  %v3013 = vadd.f32 %v2844, %v3012
  %v3014 = vpop.f32.mrf.mxu0
  %v3015 = vadd.f32 %v2846, %v3014
  %3016 = vmatmul.bf16.gmra.mxu0 %v1588
  %v3017 = vpop.f32.mrf.mxu0
  %v3018 = vadd.f32 %v2849, %v3017
  %v3019 = vpop.f32.mrf.mxu0
  %v3020 = vadd.f32 %v2851, %v3019
  %3021 = vmatmul.bf16.gmra.mxu0 %v1597
  %v3022 = vpop.f32.mrf.mxu0
  %v3023 = vadd.f32 %v2854, %v3022
  %v3024 = vpop.f32.mrf.mxu0
  %v3025 = vadd.f32 %v2856, %v3024
  %3026 = vmatmul.bf16.gmra.mxu0 %v1606
  %v3027 = vpop.f32.mrf.mxu0
  %v3028 = vadd.f32 %v2859, %v3027
  %v3029 = vpop.f32.mrf.mxu0
  %v3030 = vadd.f32 %v2861, %v3029
  %3031 = vmatmul.bf16.gmra.mxu0 %v1615
  %v3032 = vpop.f32.mrf.mxu0
  %v3033 = vadd.f32 %v2864, %v3032
  %v3034 = vpop.f32.mrf.mxu0
  %v3035 = vadd.f32 %v2866, %v3034
  %3036 = vmatmul.bf16.gmra.mxu0 %v1624
  %v3037 = vpop.f32.mrf.mxu0
  %v3038 = vadd.f32 %v2869, %v3037
  %v3039 = vpop.f32.mrf.mxu0
  %v3040 = vadd.f32 %v2871, %v3039
  %3041 = vmatmul.bf16.gmra.mxu0 %v1633
  %v3042 = vpop.f32.mrf.mxu0
  %v3043 = vadd.f32 %v2874, %v3042
  %v3044 = vpop.f32.mrf.mxu0
  %v3045 = vadd.f32 %v2876, %v3044
  %3046 = vmatmul.bf16.gmra.mxu0 %v1642
  %v3047 = vpop.f32.mrf.mxu0
  %v3048 = vadd.f32 %v2879, %v3047
  %v3049 = vpop.f32.mrf.mxu0
  %v3050 = vadd.f32 %v2881, %v3049
  %3051 = vmatmul.bf16.gmra.mxu0 %v1651
  %v3052 = vpop.f32.mrf.mxu0
  %v3053 = vadd.f32 %v2884, %v3052
  %v3054 = vpop.f32.mrf.mxu0
  %v3055 = vadd.f32 %v2886, %v3054
  %3056 = vmatmul.bf16.gmra.mxu0 %v1660
  %v3057 = vpop.f32.mrf.mxu0
  %v3058 = vadd.f32 %v2889, %v3057
  %v3059 = vpop.f32.mrf.mxu0
  %v3060 = vadd.f32 %v2891, %v3059
  %3061 = vdwg.mxu0
  %3062 = vmatpush.bf16.msra.mxu0 %v2281
  %3063 = vmatpush.bf16.msra.mxu0 %v2280
  %3064 = vmatpush.bf16.msra.mxu0 %v2279
  %3065 = vmatpush.bf16.msra.mxu0 %v2278
  %3066 = vmatpush.bf16.msra.mxu0 %v2277
  %3067 = vmatpush.bf16.msra.mxu0 %v2276
  %3068 = vmatpush.bf16.msra.mxu0 %v2275
  %3069 = vmatpush.bf16.msra.mxu0 %v2274
  %3070 = vmatmul.bf16.gmra.mxu0 %v1382
  %v3071 = vpop.f32.mrf.mxu0
  %v3072 = vadd.f32 %v2903, %v3071
  %v3073 = vpop.f32.mrf.mxu0
  %v3074 = vadd.f32 %v2905, %v3073
  %3075 = vmatmul.bf16.gmra.mxu0 %v1391
  %v3076 = vpop.f32.mrf.mxu0
  %v3077 = vadd.f32 %v2908, %v3076
  %v3078 = vpop.f32.mrf.mxu0
  %v3079 = vadd.f32 %v2910, %v3078
  %3080 = vmatmul.bf16.gmra.mxu0 %v1400
  %v3081 = vpop.f32.mrf.mxu0
  %v3082 = vadd.f32 %v2913, %v3081
  %v3083 = vpop.f32.mrf.mxu0
  %v3084 = vadd.f32 %v2915, %v3083
  %3085 = vmatmul.bf16.gmra.mxu0 %v1409
  %v3086 = vpop.f32.mrf.mxu0
  %v3087 = vadd.f32 %v2918, %v3086
  %v3088 = vpop.f32.mrf.mxu0
  %v3089 = vadd.f32 %v2920, %v3088
  %3090 = vmatmul.bf16.gmra.mxu0 %v1418
  %v3091 = vpop.f32.mrf.mxu0
  %v3092 = vadd.f32 %v2923, %v3091
  %v3093 = vpop.f32.mrf.mxu0
  %v3094 = vadd.f32 %v2925, %v3093
  %3095 = vmatmul.bf16.gmra.mxu0 %v1427
  %v3096 = vpop.f32.mrf.mxu0
  %v3097 = vadd.f32 %v2928, %v3096
  %v3098 = vpop.f32.mrf.mxu0
  %v3099 = vadd.f32 %v2930, %v3098
  %3100 = vmatmul.bf16.gmra.mxu0 %v1436
  %v3101 = vpop.f32.mrf.mxu0
  %v3102 = vadd.f32 %v2933, %v3101
  %v3103 = vpop.f32.mrf.mxu0
  %v3104 = vadd.f32 %v2935, %v3103
  %3105 = vmatmul.bf16.gmra.mxu0 %v1445
  %v3106 = vpop.f32.mrf.mxu0
  %v3107 = vadd.f32 %v2938, %v3106
  %v3108 = vpop.f32.mrf.mxu0
  %v3109 = vadd.f32 %v2940, %v3108
  %3110 = vmatmul.bf16.gmra.mxu0 %v1454
  %v3111 = vpop.f32.mrf.mxu0
  %v3112 = vadd.f32 %v2943, %v3111
  %v3113 = vpop.f32.mrf.mxu0
  %v3114 = vadd.f32 %v2945, %v3113
  %3115 = vmatmul.bf16.gmra.mxu0 %v1463
  %v3116 = vpop.f32.mrf.mxu0
  %v3117 = vadd.f32 %v2948, %v3116
  %v3118 = vpop.f32.mrf.mxu0
  %v3119 = vadd.f32 %v2950, %v3118
  %3120 = vmatmul.bf16.gmra.mxu0 %v1472
  %v3121 = vpop.f32.mrf.mxu0
  %v3122 = vadd.f32 %v2953, %v3121
  %v3123 = vpop.f32.mrf.mxu0
  %v3124 = vadd.f32 %v2955, %v3123
  %3125 = vmatmul.bf16.gmra.mxu0 %v1481
  %v3126 = vpop.f32.mrf.mxu0
  %v3127 = vadd.f32 %v2958, %v3126
  %v3128 = vpop.f32.mrf.mxu0
  %v3129 = vadd.f32 %v2960, %v3128
  %3130 = vmatmul.bf16.gmra.mxu0 %v1490
  %v3131 = vpop.f32.mrf.mxu0
  %v3132 = vadd.f32 %v2963, %v3131
  %v3133 = vpop.f32.mrf.mxu0
  %v3134 = vadd.f32 %v2965, %v3133
  %3135 = vmatmul.bf16.gmra.mxu0 %v1499
  %v3136 = vpop.f32.mrf.mxu0
  %v3137 = vadd.f32 %v2968, %v3136
  %v3138 = vpop.f32.mrf.mxu0
  %v3139 = vadd.f32 %v2970, %v3138
  %3140 = vmatmul.bf16.gmra.mxu0 %v1508
  %v3141 = vpop.f32.mrf.mxu0
  %v3142 = vadd.f32 %v2973, %v3141
  %v3143 = vpop.f32.mrf.mxu0
  %v3144 = vadd.f32 %v2975, %v3143
  %3145 = vmatmul.bf16.gmra.mxu0 %v1517
  %v3146 = vpop.f32.mrf.mxu0
  %v3147 = vadd.f32 %v2978, %v3146
  %v3148 = vpop.f32.mrf.mxu0
  %v3149 = vadd.f32 %v2980, %v3148
  %3150 = vmatmul.bf16.gmra.mxu0 %v1526
  %v3151 = vpop.f32.mrf.mxu0
  %v3152 = vadd.f32 %v2983, %v3151
  %v3153 = vpop.f32.mrf.mxu0
  %v3154 = vadd.f32 %v2985, %v3153
  %3155 = vmatmul.bf16.gmra.mxu0 %v1535
  %v3156 = vpop.f32.mrf.mxu0
  %v3157 = vadd.f32 %v2988, %v3156
  %v3158 = vpop.f32.mrf.mxu0
  %v3159 = vadd.f32 %v2990, %v3158
  %3160 = vmatmul.bf16.gmra.mxu0 %v1544
  %v3161 = vpop.f32.mrf.mxu0
  %v3162 = vadd.f32 %v2993, %v3161
  %v3163 = vpop.f32.mrf.mxu0
  %v3164 = vadd.f32 %v2995, %v3163
  %3165 = vmatmul.bf16.gmra.mxu0 %v1553
  %v3166 = vpop.f32.mrf.mxu0
  %v3167 = vadd.f32 %v2998, %v3166
  %v3168 = vpop.f32.mrf.mxu0
  %v3169 = vadd.f32 %v3000, %v3168
  %3170 = vmatmul.bf16.gmra.mxu0 %v1562
  %v3171 = vpop.f32.mrf.mxu0
  %v3172 = vadd.f32 %v3003, %v3171
  %v3173 = vpop.f32.mrf.mxu0
  %v3174 = vadd.f32 %v3005, %v3173
  %3175 = vmatmul.bf16.gmra.mxu0 %v1571
  %v3176 = vpop.f32.mrf.mxu0
  %v3177 = vadd.f32 %v3008, %v3176
  %v3178 = vpop.f32.mrf.mxu0
  %v3179 = vadd.f32 %v3010, %v3178
  %3180 = vmatmul.bf16.gmra.mxu0 %v1580
  %v3181 = vpop.f32.mrf.mxu0
  %v3182 = vadd.f32 %v3013, %v3181
  %v3183 = vpop.f32.mrf.mxu0
  %v3184 = vadd.f32 %v3015, %v3183
  %3185 = vmatmul.bf16.gmra.mxu0 %v1589
  %v3186 = vpop.f32.mrf.mxu0
  %v3187 = vadd.f32 %v3018, %v3186
  %v3188 = vpop.f32.mrf.mxu0
  %v3189 = vadd.f32 %v3020, %v3188
  %3190 = vmatmul.bf16.gmra.mxu0 %v1598
  %v3191 = vpop.f32.mrf.mxu0
  %v3192 = vadd.f32 %v3023, %v3191
  %v3193 = vpop.f32.mrf.mxu0
  %v3194 = vadd.f32 %v3025, %v3193
  %3195 = vmatmul.bf16.gmra.mxu0 %v1607
  %v3196 = vpop.f32.mrf.mxu0
  %v3197 = vadd.f32 %v3028, %v3196
  %v3198 = vpop.f32.mrf.mxu0
  %v3199 = vadd.f32 %v3030, %v3198
  %3200 = vmatmul.bf16.gmra.mxu0 %v1616
  %v3201 = vpop.f32.mrf.mxu0
  %v3202 = vadd.f32 %v3033, %v3201
  %v3203 = vpop.f32.mrf.mxu0
  %v3204 = vadd.f32 %v3035, %v3203
  %3205 = vmatmul.bf16.gmra.mxu0 %v1625
  %v3206 = vpop.f32.mrf.mxu0
  %v3207 = vadd.f32 %v3038, %v3206
  %v3208 = vpop.f32.mrf.mxu0
  %v3209 = vadd.f32 %v3040, %v3208
  %3210 = vmatmul.bf16.gmra.mxu0 %v1634
  %v3211 = vpop.f32.mrf.mxu0
  %v3212 = vadd.f32 %v3043, %v3211
  %v3213 = vpop.f32.mrf.mxu0
  %v3214 = vadd.f32 %v3045, %v3213
  %3215 = vmatmul.bf16.gmra.mxu0 %v1643
  %v3216 = vpop.f32.mrf.mxu0
  %v3217 = vadd.f32 %v3048, %v3216
  %v3218 = vpop.f32.mrf.mxu0
  %v3219 = vadd.f32 %v3050, %v3218
  %3220 = vmatmul.bf16.gmra.mxu0 %v1652
  %v3221 = vpop.f32.mrf.mxu0
  %v3222 = vadd.f32 %v3053, %v3221
  %v3223 = vpop.f32.mrf.mxu0
  %v3224 = vadd.f32 %v3055, %v3223
  %3225 = vmatmul.bf16.gmra.mxu0 %v1661
  %v3226 = vpop.f32.mrf.mxu0
  %v3227 = vadd.f32 %v3058, %v3226
  %v3228 = vpop.f32.mrf.mxu0
  %v3229 = vadd.f32 %v3060, %v3228
  %3230 = vdwg.mxu0
  %3231 = vmatpush.bf16.msra.mxu0 %v2289
  %3232 = vmatpush.bf16.msra.mxu0 %v2288
  %3233 = vmatpush.bf16.msra.mxu0 %v2287
  %3234 = vmatpush.bf16.msra.mxu0 %v2286
  %3235 = vmatpush.bf16.msra.mxu0 %v2285
  %3236 = vmatpush.bf16.msra.mxu0 %v2284
  %3237 = vmatpush.bf16.msra.mxu0 %v2283
  %3238 = vmatpush.bf16.msra.mxu0 %v2282
  %3239 = vmatmul.bf16.gmra.mxu0 %v1383
  %v3240 = vpop.f32.mrf.mxu0
  %v3241 = vadd.f32 %v3072, %v3240
  %v3242 = vpop.f32.mrf.mxu0
  %v3243 = vadd.f32 %v3074, %v3242
  %3244 = vmatmul.bf16.gmra.mxu0 %v1392
  %v3245 = vpop.f32.mrf.mxu0
  %v3246 = vadd.f32 %v3077, %v3245
  %v3247 = vpop.f32.mrf.mxu0
  %v3248 = vadd.f32 %v3079, %v3247
  %3249 = vmatmul.bf16.gmra.mxu0 %v1401
  %v3250 = vpop.f32.mrf.mxu0
  %v3251 = vadd.f32 %v3082, %v3250
  %v3252 = vpop.f32.mrf.mxu0
  %v3253 = vadd.f32 %v3084, %v3252
  %3254 = vmatmul.bf16.gmra.mxu0 %v1410
  %v3255 = vpop.f32.mrf.mxu0
  %v3256 = vadd.f32 %v3087, %v3255
  %v3257 = vpop.f32.mrf.mxu0
  %v3258 = vadd.f32 %v3089, %v3257
  %3259 = vmatmul.bf16.gmra.mxu0 %v1419
  %v3260 = vpop.f32.mrf.mxu0
  %v3261 = vadd.f32 %v3092, %v3260
  %v3262 = vpop.f32.mrf.mxu0
  %v3263 = vadd.f32 %v3094, %v3262
  %3264 = vmatmul.bf16.gmra.mxu0 %v1428
  %v3265 = vpop.f32.mrf.mxu0
  %v3266 = vadd.f32 %v3097, %v3265
  %v3267 = vpop.f32.mrf.mxu0
  %v3268 = vadd.f32 %v3099, %v3267
  %3269 = vmatmul.bf16.gmra.mxu0 %v1437
  %v3270 = vpop.f32.mrf.mxu0
  %v3271 = vadd.f32 %v3102, %v3270
  %v3272 = vpop.f32.mrf.mxu0
  %v3273 = vadd.f32 %v3104, %v3272
  %3274 = vmatmul.bf16.gmra.mxu0 %v1446
  %v3275 = vpop.f32.mrf.mxu0
  %v3276 = vadd.f32 %v3107, %v3275
  %v3277 = vpop.f32.mrf.mxu0
  %v3278 = vadd.f32 %v3109, %v3277
  %3279 = vmatmul.bf16.gmra.mxu0 %v1455
  %v3280 = vpop.f32.mrf.mxu0
  %v3281 = vadd.f32 %v3112, %v3280
  %v3282 = vpop.f32.mrf.mxu0
  %v3283 = vadd.f32 %v3114, %v3282
  %3284 = vmatmul.bf16.gmra.mxu0 %v1464
  %v3285 = vpop.f32.mrf.mxu0
  %v3286 = vadd.f32 %v3117, %v3285
  %v3287 = vpop.f32.mrf.mxu0
  %v3288 = vadd.f32 %v3119, %v3287
  %3289 = vmatmul.bf16.gmra.mxu0 %v1473
  %v3290 = vpop.f32.mrf.mxu0
  %v3291 = vadd.f32 %v3122, %v3290
  %v3292 = vpop.f32.mrf.mxu0
  %v3293 = vadd.f32 %v3124, %v3292
  %3294 = vmatmul.bf16.gmra.mxu0 %v1482
  %v3295 = vpop.f32.mrf.mxu0
  %v3296 = vadd.f32 %v3127, %v3295
  %v3297 = vpop.f32.mrf.mxu0
  %v3298 = vadd.f32 %v3129, %v3297
  %3299 = vmatmul.bf16.gmra.mxu0 %v1491
  %v3300 = vpop.f32.mrf.mxu0
  %v3301 = vadd.f32 %v3132, %v3300
  %v3302 = vpop.f32.mrf.mxu0
  %v3303 = vadd.f32 %v3134, %v3302
  %3304 = vmatmul.bf16.gmra.mxu0 %v1500
  %v3305 = vpop.f32.mrf.mxu0
  %v3306 = vadd.f32 %v3137, %v3305
  %v3307 = vpop.f32.mrf.mxu0
  %v3308 = vadd.f32 %v3139, %v3307
  %3309 = vmatmul.bf16.gmra.mxu0 %v1509
  %v3310 = vpop.f32.mrf.mxu0
  %v3311 = vadd.f32 %v3142, %v3310
  %v3312 = vpop.f32.mrf.mxu0
  %v3313 = vadd.f32 %v3144, %v3312
  %3314 = vmatmul.bf16.gmra.mxu0 %v1518
  %v3315 = vpop.f32.mrf.mxu0
  %v3316 = vadd.f32 %v3147, %v3315
  %v3317 = vpop.f32.mrf.mxu0
  %v3318 = vadd.f32 %v3149, %v3317
  %3319 = vmatmul.bf16.gmra.mxu0 %v1527
  %v3320 = vpop.f32.mrf.mxu0
  %v3321 = vadd.f32 %v3152, %v3320
  %v3322 = vpop.f32.mrf.mxu0
  %v3323 = vadd.f32 %v3154, %v3322
  %3324 = vmatmul.bf16.gmra.mxu0 %v1536
  %v3325 = vpop.f32.mrf.mxu0
  %v3326 = vadd.f32 %v3157, %v3325
  %v3327 = vpop.f32.mrf.mxu0
  %v3328 = vadd.f32 %v3159, %v3327
  %3329 = vmatmul.bf16.gmra.mxu0 %v1545
  %v3330 = vpop.f32.mrf.mxu0
  %v3331 = vadd.f32 %v3162, %v3330
  %v3332 = vpop.f32.mrf.mxu0
  %v3333 = vadd.f32 %v3164, %v3332
  %3334 = vmatmul.bf16.gmra.mxu0 %v1554
  %v3335 = vpop.f32.mrf.mxu0
  %v3336 = vadd.f32 %v3167, %v3335
  %v3337 = vpop.f32.mrf.mxu0
  %v3338 = vadd.f32 %v3169, %v3337
  %3339 = vmatmul.bf16.gmra.mxu0 %v1563
  %v3340 = vpop.f32.mrf.mxu0
  %v3341 = vadd.f32 %v3172, %v3340
  %v3342 = vpop.f32.mrf.mxu0
  %v3343 = vadd.f32 %v3174, %v3342
  %3344 = vmatmul.bf16.gmra.mxu0 %v1572
  %v3345 = vpop.f32.mrf.mxu0
  %v3346 = vadd.f32 %v3177, %v3345
  %v3347 = vpop.f32.mrf.mxu0
  %v3348 = vadd.f32 %v3179, %v3347
  %3349 = vmatmul.bf16.gmra.mxu0 %v1581
  %v3350 = vpop.f32.mrf.mxu0
  %v3351 = vadd.f32 %v3182, %v3350
  %v3352 = vpop.f32.mrf.mxu0
  %v3353 = vadd.f32 %v3184, %v3352
  %3354 = vmatmul.bf16.gmra.mxu0 %v1590
  %v3355 = vpop.f32.mrf.mxu0
  %v3356 = vadd.f32 %v3187, %v3355
  %v3357 = vpop.f32.mrf.mxu0
  %v3358 = vadd.f32 %v3189, %v3357
  %3359 = vmatmul.bf16.gmra.mxu0 %v1599
  %v3360 = vpop.f32.mrf.mxu0
  %v3361 = vadd.f32 %v3192, %v3360
  %v3362 = vpop.f32.mrf.mxu0
  %v3363 = vadd.f32 %v3194, %v3362
  %3364 = vmatmul.bf16.gmra.mxu0 %v1608
  %v3365 = vpop.f32.mrf.mxu0
  %v3366 = vadd.f32 %v3197, %v3365
  %v3367 = vpop.f32.mrf.mxu0
  %v3368 = vadd.f32 %v3199, %v3367
  %3369 = vmatmul.bf16.gmra.mxu0 %v1617
  %v3370 = vpop.f32.mrf.mxu0
  %v3371 = vadd.f32 %v3202, %v3370
  %v3372 = vpop.f32.mrf.mxu0
  %v3373 = vadd.f32 %v3204, %v3372
  %3374 = vmatmul.bf16.gmra.mxu0 %v1626
  %v3375 = vpop.f32.mrf.mxu0
  %v3376 = vadd.f32 %v3207, %v3375
  %v3377 = vpop.f32.mrf.mxu0
  %v3378 = vadd.f32 %v3209, %v3377
  %3379 = vmatmul.bf16.gmra.mxu0 %v1635
  %v3380 = vpop.f32.mrf.mxu0
  %v3381 = vadd.f32 %v3212, %v3380
  %v3382 = vpop.f32.mrf.mxu0
  %v3383 = vadd.f32 %v3214, %v3382
  %3384 = vmatmul.bf16.gmra.mxu0 %v1644
  %v3385 = vpop.f32.mrf.mxu0
  %v3386 = vadd.f32 %v3217, %v3385
  %v3387 = vpop.f32.mrf.mxu0
  %v3388 = vadd.f32 %v3219, %v3387
  %3389 = vmatmul.bf16.gmra.mxu0 %v1653
  %v3390 = vpop.f32.mrf.mxu0
  %v3391 = vadd.f32 %v3222, %v3390
  %v3392 = vpop.f32.mrf.mxu0
  %v3393 = vadd.f32 %v3224, %v3392
  %3394 = vmatmul.bf16.gmra.mxu0 %v1662
  %v3395 = vpop.f32.mrf.mxu0
  %v3396 = vadd.f32 %v3227, %v3395
  %v3397 = vpop.f32.mrf.mxu0
  %v3398 = vadd.f32 %v3229, %v3397
  %3399 = vdwg.mxu0
  %3400 = vmatpush.bf16.msra.mxu0 %v2297
  %3401 = vmatpush.bf16.msra.mxu0 %v2296
  %3402 = vmatpush.bf16.msra.mxu0 %v2295
  %3403 = vmatpush.bf16.msra.mxu0 %v2294
  %3404 = vmatpush.bf16.msra.mxu0 %v2293
  %3405 = vmatpush.bf16.msra.mxu0 %v2292
  %3406 = vmatpush.bf16.msra.mxu0 %v2291
  %3407 = vmatpush.bf16.msra.mxu0 %v2290
  %3408 = vmatmul.bf16.gmra.mxu0 %v1384
  %v3409 = vpop.f32.mrf.mxu0
  %v3410 = vadd.f32 %v3241, %v3409
  %v3411 = vpop.f32.mrf.mxu0
  %v3412 = vadd.f32 %v3243, %v3411
  %3413 = vmatmul.bf16.gmra.mxu0 %v1393
  %v3414 = vpop.f32.mrf.mxu0
  %v3415 = vadd.f32 %v3246, %v3414
  %v3416 = vpop.f32.mrf.mxu0
  %v3417 = vadd.f32 %v3248, %v3416
  %3418 = vmatmul.bf16.gmra.mxu0 %v1402
  %v3419 = vpop.f32.mrf.mxu0
  %v3420 = vadd.f32 %v3251, %v3419
  %v3421 = vpop.f32.mrf.mxu0
  %v3422 = vadd.f32 %v3253, %v3421
  %3423 = vmatmul.bf16.gmra.mxu0 %v1411
  %v3424 = vpop.f32.mrf.mxu0
  %v3425 = vadd.f32 %v3256, %v3424
  %v3426 = vpop.f32.mrf.mxu0
  %v3427 = vadd.f32 %v3258, %v3426
  %3428 = vmatmul.bf16.gmra.mxu0 %v1420
  %v3429 = vpop.f32.mrf.mxu0
  %v3430 = vadd.f32 %v3261, %v3429
  %v3431 = vpop.f32.mrf.mxu0
  %v3432 = vadd.f32 %v3263, %v3431
  %3433 = vmatmul.bf16.gmra.mxu0 %v1429
  %v3434 = vpop.f32.mrf.mxu0
  %v3435 = vadd.f32 %v3266, %v3434
  %v3436 = vpop.f32.mrf.mxu0
  %v3437 = vadd.f32 %v3268, %v3436
  %3438 = vmatmul.bf16.gmra.mxu0 %v1438
  %v3439 = vpop.f32.mrf.mxu0
  %v3440 = vadd.f32 %v3271, %v3439
  %v3441 = vpop.f32.mrf.mxu0
  %v3442 = vadd.f32 %v3273, %v3441
  %3443 = vmatmul.bf16.gmra.mxu0 %v1447
  %v3444 = vpop.f32.mrf.mxu0
  %v3445 = vadd.f32 %v3276, %v3444
  %v3446 = vpop.f32.mrf.mxu0
  %v3447 = vadd.f32 %v3278, %v3446
  %3448 = vmatmul.bf16.gmra.mxu0 %v1456
  %v3449 = vpop.f32.mrf.mxu0
  %v3450 = vadd.f32 %v3281, %v3449
  %v3451 = vpop.f32.mrf.mxu0
  %v3452 = vadd.f32 %v3283, %v3451
  %3453 = vmatmul.bf16.gmra.mxu0 %v1465
  %v3454 = vpop.f32.mrf.mxu0
  %v3455 = vadd.f32 %v3286, %v3454
  %v3456 = vpop.f32.mrf.mxu0
  %v3457 = vadd.f32 %v3288, %v3456
  %3458 = vmatmul.bf16.gmra.mxu0 %v1474
  %v3459 = vpop.f32.mrf.mxu0
  %v3460 = vadd.f32 %v3291, %v3459
  %v3461 = vpop.f32.mrf.mxu0
  %v3462 = vadd.f32 %v3293, %v3461
  %3463 = vmatmul.bf16.gmra.mxu0 %v1483
  %v3464 = vpop.f32.mrf.mxu0
  %v3465 = vadd.f32 %v3296, %v3464
  %v3466 = vpop.f32.mrf.mxu0
  %v3467 = vadd.f32 %v3298, %v3466
  %3468 = vmatmul.bf16.gmra.mxu0 %v1492
  %v3469 = vpop.f32.mrf.mxu0
  %v3470 = vadd.f32 %v3301, %v3469
  %v3471 = vpop.f32.mrf.mxu0
  %v3472 = vadd.f32 %v3303, %v3471
  %3473 = vmatmul.bf16.gmra.mxu0 %v1501
  %v3474 = vpop.f32.mrf.mxu0
  %v3475 = vadd.f32 %v3306, %v3474
  %v3476 = vpop.f32.mrf.mxu0
  %v3477 = vadd.f32 %v3308, %v3476
  %3478 = vmatmul.bf16.gmra.mxu0 %v1510
  %v3479 = vpop.f32.mrf.mxu0
  %v3480 = vadd.f32 %v3311, %v3479
  %v3481 = vpop.f32.mrf.mxu0
  %v3482 = vadd.f32 %v3313, %v3481
  %3483 = vmatmul.bf16.gmra.mxu0 %v1519
  %v3484 = vpop.f32.mrf.mxu0
  %v3485 = vadd.f32 %v3316, %v3484
  %v3486 = vpop.f32.mrf.mxu0
  %v3487 = vadd.f32 %v3318, %v3486
  %3488 = vmatmul.bf16.gmra.mxu0 %v1528
  %v3489 = vpop.f32.mrf.mxu0
  %v3490 = vadd.f32 %v3321, %v3489
  %v3491 = vpop.f32.mrf.mxu0
  %v3492 = vadd.f32 %v3323, %v3491
  %3493 = vmatmul.bf16.gmra.mxu0 %v1537
  %v3494 = vpop.f32.mrf.mxu0
  %v3495 = vadd.f32 %v3326, %v3494
  %v3496 = vpop.f32.mrf.mxu0
  %v3497 = vadd.f32 %v3328, %v3496
  %3498 = vmatmul.bf16.gmra.mxu0 %v1546
  %v3499 = vpop.f32.mrf.mxu0
  %v3500 = vadd.f32 %v3331, %v3499
  %v3501 = vpop.f32.mrf.mxu0
  %v3502 = vadd.f32 %v3333, %v3501
  %3503 = vmatmul.bf16.gmra.mxu0 %v1555
  %v3504 = vpop.f32.mrf.mxu0
  %v3505 = vadd.f32 %v3336, %v3504
  %v3506 = vpop.f32.mrf.mxu0
  %v3507 = vadd.f32 %v3338, %v3506
  %3508 = vmatmul.bf16.gmra.mxu0 %v1564
  %v3509 = vpop.f32.mrf.mxu0
  %v3510 = vadd.f32 %v3341, %v3509
  %v3511 = vpop.f32.mrf.mxu0
  %v3512 = vadd.f32 %v3343, %v3511
  %3513 = vmatmul.bf16.gmra.mxu0 %v1573
  %v3514 = vpop.f32.mrf.mxu0
  %v3515 = vadd.f32 %v3346, %v3514
  %v3516 = vpop.f32.mrf.mxu0
  %v3517 = vadd.f32 %v3348, %v3516
  %3518 = vmatmul.bf16.gmra.mxu0 %v1582
  %v3519 = vpop.f32.mrf.mxu0
  %v3520 = vadd.f32 %v3351, %v3519
  %v3521 = vpop.f32.mrf.mxu0
  %v3522 = vadd.f32 %v3353, %v3521
  %3523 = vmatmul.bf16.gmra.mxu0 %v1591
  %v3524 = vpop.f32.mrf.mxu0
  %v3525 = vadd.f32 %v3356, %v3524
  %v3526 = vpop.f32.mrf.mxu0
  %v3527 = vadd.f32 %v3358, %v3526
  %3528 = vmatmul.bf16.gmra.mxu0 %v1600
  %v3529 = vpop.f32.mrf.mxu0
  %v3530 = vadd.f32 %v3361, %v3529
  %v3531 = vpop.f32.mrf.mxu0
  %v3532 = vadd.f32 %v3363, %v3531
  %3533 = vmatmul.bf16.gmra.mxu0 %v1609
  %v3534 = vpop.f32.mrf.mxu0
  %v3535 = vadd.f32 %v3366, %v3534
  %v3536 = vpop.f32.mrf.mxu0
  %v3537 = vadd.f32 %v3368, %v3536
  %3538 = vmatmul.bf16.gmra.mxu0 %v1618
  %v3539 = vpop.f32.mrf.mxu0
  %v3540 = vadd.f32 %v3371, %v3539
  %v3541 = vpop.f32.mrf.mxu0
  %v3542 = vadd.f32 %v3373, %v3541
  %3543 = vmatmul.bf16.gmra.mxu0 %v1627
  %v3544 = vpop.f32.mrf.mxu0
  %v3545 = vadd.f32 %v3376, %v3544
  %v3546 = vpop.f32.mrf.mxu0
  %v3547 = vadd.f32 %v3378, %v3546
  %3548 = vmatmul.bf16.gmra.mxu0 %v1636
  %v3549 = vpop.f32.mrf.mxu0
  %v3550 = vadd.f32 %v3381, %v3549
  %v3551 = vpop.f32.mrf.mxu0
  %v3552 = vadd.f32 %v3383, %v3551
  %3553 = vmatmul.bf16.gmra.mxu0 %v1645
  %v3554 = vpop.f32.mrf.mxu0
  %v3555 = vadd.f32 %v3386, %v3554
  %v3556 = vpop.f32.mrf.mxu0
  %v3557 = vadd.f32 %v3388, %v3556
  %3558 = vmatmul.bf16.gmra.mxu0 %v1654
  %v3559 = vpop.f32.mrf.mxu0
  %v3560 = vadd.f32 %v3391, %v3559
  %v3561 = vpop.f32.mrf.mxu0
  %v3562 = vadd.f32 %v3393, %v3561
  %3563 = vmatmul.bf16.gmra.mxu0 %v1663
  %v3564 = vpop.f32.mrf.mxu0
  %v3565 = vadd.f32 %v3396, %v3564
  %v3566 = vpop.f32.mrf.mxu0
  %v3567 = vadd.f32 %v3398, %v3566
  %3568 = vdwg.mxu0
  %3569 = vmatpush.bf16.msra.mxu0 %v2305
  %3570 = vmatpush.bf16.msra.mxu0 %v2304
  %3571 = vmatpush.bf16.msra.mxu0 %v2303
  %3572 = vmatpush.bf16.msra.mxu0 %v2302
  %3573 = vmatpush.bf16.msra.mxu0 %v2301
  %3574 = vmatpush.bf16.msra.mxu0 %v2300
  %3575 = vmatpush.bf16.msra.mxu0 %v2299
  %3576 = vmatpush.bf16.msra.mxu0 %v2298
  %3577 = vmatmul.bf16.gmra.mxu0 %v1385
  %v3578 = vpop.f32.mrf.mxu0
  %v3579 = vadd.f32 %v3410, %v3578
  %v3580 = vpop.f32.mrf.mxu0
  %v3581 = vadd.f32 %v3412, %v3580
  %3582 = vmatmul.bf16.gmra.mxu0 %v1394
  %v3583 = vpop.f32.mrf.mxu0
  %v3584 = vadd.f32 %v3415, %v3583
  %v3585 = vpop.f32.mrf.mxu0
  %v3586 = vadd.f32 %v3417, %v3585
  %3587 = vmatmul.bf16.gmra.mxu0 %v1403
  %v3588 = vpop.f32.mrf.mxu0
  %v3589 = vadd.f32 %v3420, %v3588
  %v3590 = vpop.f32.mrf.mxu0
  %v3591 = vadd.f32 %v3422, %v3590
  %3592 = vmatmul.bf16.gmra.mxu0 %v1412
  %v3593 = vpop.f32.mrf.mxu0
  %v3594 = vadd.f32 %v3425, %v3593
  %v3595 = vpop.f32.mrf.mxu0
  %v3596 = vadd.f32 %v3427, %v3595
  %3597 = vmatmul.bf16.gmra.mxu0 %v1421
  %v3598 = vpop.f32.mrf.mxu0
  %v3599 = vadd.f32 %v3430, %v3598
  %v3600 = vpop.f32.mrf.mxu0
  %v3601 = vadd.f32 %v3432, %v3600
  %3602 = vmatmul.bf16.gmra.mxu0 %v1430
  %v3603 = vpop.f32.mrf.mxu0
  %v3604 = vadd.f32 %v3435, %v3603
  %v3605 = vpop.f32.mrf.mxu0
  %v3606 = vadd.f32 %v3437, %v3605
  %3607 = vmatmul.bf16.gmra.mxu0 %v1439
  %v3608 = vpop.f32.mrf.mxu0
  %v3609 = vadd.f32 %v3440, %v3608
  %v3610 = vpop.f32.mrf.mxu0
  %v3611 = vadd.f32 %v3442, %v3610
  %3612 = vmatmul.bf16.gmra.mxu0 %v1448
  %v3613 = vpop.f32.mrf.mxu0
  %v3614 = vadd.f32 %v3445, %v3613
  %v3615 = vpop.f32.mrf.mxu0
  %v3616 = vadd.f32 %v3447, %v3615
  %3617 = vmatmul.bf16.gmra.mxu0 %v1457
  %v3618 = vpop.f32.mrf.mxu0
  %v3619 = vadd.f32 %v3450, %v3618
  %v3620 = vpop.f32.mrf.mxu0
  %v3621 = vadd.f32 %v3452, %v3620
  %3622 = vmatmul.bf16.gmra.mxu0 %v1466
  %v3623 = vpop.f32.mrf.mxu0
  %v3624 = vadd.f32 %v3455, %v3623
  %v3625 = vpop.f32.mrf.mxu0
  %v3626 = vadd.f32 %v3457, %v3625
  %3627 = vmatmul.bf16.gmra.mxu0 %v1475
  %v3628 = vpop.f32.mrf.mxu0
  %v3629 = vadd.f32 %v3460, %v3628
  %v3630 = vpop.f32.mrf.mxu0
  %v3631 = vadd.f32 %v3462, %v3630
  %3632 = vmatmul.bf16.gmra.mxu0 %v1484
  %v3633 = vpop.f32.mrf.mxu0
  %v3634 = vadd.f32 %v3465, %v3633
  %v3635 = vpop.f32.mrf.mxu0
  %v3636 = vadd.f32 %v3467, %v3635
  %3637 = vmatmul.bf16.gmra.mxu0 %v1493
  %v3638 = vpop.f32.mrf.mxu0
  %v3639 = vadd.f32 %v3470, %v3638
  %v3640 = vpop.f32.mrf.mxu0
  %v3641 = vadd.f32 %v3472, %v3640
  %3642 = vmatmul.bf16.gmra.mxu0 %v1502
  %v3643 = vpop.f32.mrf.mxu0
  %v3644 = vadd.f32 %v3475, %v3643
  %v3645 = vpop.f32.mrf.mxu0
  %v3646 = vadd.f32 %v3477, %v3645
  %3647 = vmatmul.bf16.gmra.mxu0 %v1511
  %v3648 = vpop.f32.mrf.mxu0
  %v3649 = vadd.f32 %v3480, %v3648
  %v3650 = vpop.f32.mrf.mxu0
  %v3651 = vadd.f32 %v3482, %v3650
  %3652 = vmatmul.bf16.gmra.mxu0 %v1520
  %v3653 = vpop.f32.mrf.mxu0
  %v3654 = vadd.f32 %v3485, %v3653
  %v3655 = vpop.f32.mrf.mxu0
  %v3656 = vadd.f32 %v3487, %v3655
  %3657 = vmatmul.bf16.gmra.mxu0 %v1529
  %v3658 = vpop.f32.mrf.mxu0
  %v3659 = vadd.f32 %v3490, %v3658
  %v3660 = vpop.f32.mrf.mxu0
  %v3661 = vadd.f32 %v3492, %v3660
  %3662 = vmatmul.bf16.gmra.mxu0 %v1538
  %v3663 = vpop.f32.mrf.mxu0
  %v3664 = vadd.f32 %v3495, %v3663
  %v3665 = vpop.f32.mrf.mxu0
  %v3666 = vadd.f32 %v3497, %v3665
  %3667 = vmatmul.bf16.gmra.mxu0 %v1547
  %v3668 = vpop.f32.mrf.mxu0
  %v3669 = vadd.f32 %v3500, %v3668
  %v3670 = vpop.f32.mrf.mxu0
  %v3671 = vadd.f32 %v3502, %v3670
  %3672 = vmatmul.bf16.gmra.mxu0 %v1556
  %v3673 = vpop.f32.mrf.mxu0
  %v3674 = vadd.f32 %v3505, %v3673
  %v3675 = vpop.f32.mrf.mxu0
  %v3676 = vadd.f32 %v3507, %v3675
  %3677 = vmatmul.bf16.gmra.mxu0 %v1565
  %v3678 = vpop.f32.mrf.mxu0
  %v3679 = vadd.f32 %v3510, %v3678
  %v3680 = vpop.f32.mrf.mxu0
  %v3681 = vadd.f32 %v3512, %v3680
  %3682 = vmatmul.bf16.gmra.mxu0 %v1574
  %v3683 = vpop.f32.mrf.mxu0
  %v3684 = vadd.f32 %v3515, %v3683
  %v3685 = vpop.f32.mrf.mxu0
  %v3686 = vadd.f32 %v3517, %v3685
  %3687 = vmatmul.bf16.gmra.mxu0 %v1583
  %v3688 = vpop.f32.mrf.mxu0
  %v3689 = vadd.f32 %v3520, %v3688
  %v3690 = vpop.f32.mrf.mxu0
  %v3691 = vadd.f32 %v3522, %v3690
  %3692 = vmatmul.bf16.gmra.mxu0 %v1592
  %v3693 = vpop.f32.mrf.mxu0
  %v3694 = vadd.f32 %v3525, %v3693
  %v3695 = vpop.f32.mrf.mxu0
  %v3696 = vadd.f32 %v3527, %v3695
  %3697 = vmatmul.bf16.gmra.mxu0 %v1601
  %v3698 = vpop.f32.mrf.mxu0
  %v3699 = vadd.f32 %v3530, %v3698
  %v3700 = vpop.f32.mrf.mxu0
  %v3701 = vadd.f32 %v3532, %v3700
  %3702 = vmatmul.bf16.gmra.mxu0 %v1610
  %v3703 = vpop.f32.mrf.mxu0
  %v3704 = vadd.f32 %v3535, %v3703
  %v3705 = vpop.f32.mrf.mxu0
  %v3706 = vadd.f32 %v3537, %v3705
  %3707 = vmatmul.bf16.gmra.mxu0 %v1619
  %v3708 = vpop.f32.mrf.mxu0
  %v3709 = vadd.f32 %v3540, %v3708
  %v3710 = vpop.f32.mrf.mxu0
  %v3711 = vadd.f32 %v3542, %v3710
  %3712 = vmatmul.bf16.gmra.mxu0 %v1628
  %v3713 = vpop.f32.mrf.mxu0
  %v3714 = vadd.f32 %v3545, %v3713
  %v3715 = vpop.f32.mrf.mxu0
  %v3716 = vadd.f32 %v3547, %v3715
  %3717 = vmatmul.bf16.gmra.mxu0 %v1637
  %v3718 = vpop.f32.mrf.mxu0
  %v3719 = vadd.f32 %v3550, %v3718
  %v3720 = vpop.f32.mrf.mxu0
  %v3721 = vadd.f32 %v3552, %v3720
  %3722 = vmatmul.bf16.gmra.mxu0 %v1646
  %v3723 = vpop.f32.mrf.mxu0
  %v3724 = vadd.f32 %v3555, %v3723
  %v3725 = vpop.f32.mrf.mxu0
  %v3726 = vadd.f32 %v3557, %v3725
  %3727 = vmatmul.bf16.gmra.mxu0 %v1655
  %v3728 = vpop.f32.mrf.mxu0
  %v3729 = vadd.f32 %v3560, %v3728
  %v3730 = vpop.f32.mrf.mxu0
  %v3731 = vadd.f32 %v3562, %v3730
  %3732 = vmatmul.bf16.gmra.mxu0 %v1664
  %v3733 = vpop.f32.mrf.mxu0
  %v3734 = vadd.f32 %v3565, %v3733
  %v3735 = vpop.f32.mrf.mxu0
  %v3736 = vadd.f32 %v3567, %v3735
  %3737 = vdwg.mxu0
  %3738 = vmatpush.bf16.msra.mxu0 %v2313
  %3739 = vmatpush.bf16.msra.mxu0 %v2312
  %3740 = vmatpush.bf16.msra.mxu0 %v2311
  %3741 = vmatpush.bf16.msra.mxu0 %v2310
  %3742 = vmatpush.bf16.msra.mxu0 %v2309
  %3743 = vmatpush.bf16.msra.mxu0 %v2308
  %3744 = vmatpush.bf16.msra.mxu0 %v2307
  %3745 = vmatpush.bf16.msra.mxu0 %v2306
  %3746 = vmatmul.bf16.gmra.mxu0 %v1386
  %v3747 = vpop.f32.mrf.mxu0
  %v3748 = vadd.f32 %v3579, %v3747
  %v3749 = vpop.f32.mrf.mxu0
  %v3750 = vadd.f32 %v3581, %v3749
  %3751 = vmatmul.bf16.gmra.mxu0 %v1395
  %v3752 = vpop.f32.mrf.mxu0
  %v3753 = vadd.f32 %v3584, %v3752
  %v3754 = vpop.f32.mrf.mxu0
  %v3755 = vadd.f32 %v3586, %v3754
  %3756 = vmatmul.bf16.gmra.mxu0 %v1404
  %v3757 = vpop.f32.mrf.mxu0
  %v3758 = vadd.f32 %v3589, %v3757
  %v3759 = vpop.f32.mrf.mxu0
  %v3760 = vadd.f32 %v3591, %v3759
  %3761 = vmatmul.bf16.gmra.mxu0 %v1413
  %v3762 = vpop.f32.mrf.mxu0
  %v3763 = vadd.f32 %v3594, %v3762
  %v3764 = vpop.f32.mrf.mxu0
  %v3765 = vadd.f32 %v3596, %v3764
  %3766 = vmatmul.bf16.gmra.mxu0 %v1422
  %v3767 = vpop.f32.mrf.mxu0
  %v3768 = vadd.f32 %v3599, %v3767
  %v3769 = vpop.f32.mrf.mxu0
  %v3770 = vadd.f32 %v3601, %v3769
  %3771 = vmatmul.bf16.gmra.mxu0 %v1431
  %v3772 = vpop.f32.mrf.mxu0
  %v3773 = vadd.f32 %v3604, %v3772
  %v3774 = vpop.f32.mrf.mxu0
  %v3775 = vadd.f32 %v3606, %v3774
  %3776 = vmatmul.bf16.gmra.mxu0 %v1440
  %v3777 = vpop.f32.mrf.mxu0
  %v3778 = vadd.f32 %v3609, %v3777
  %v3779 = vpop.f32.mrf.mxu0
  %v3780 = vadd.f32 %v3611, %v3779
  %3781 = vmatmul.bf16.gmra.mxu0 %v1449
  %v3782 = vpop.f32.mrf.mxu0
  %v3783 = vadd.f32 %v3614, %v3782
  %v3784 = vpop.f32.mrf.mxu0
  %v3785 = vadd.f32 %v3616, %v3784
  %3786 = vmatmul.bf16.gmra.mxu0 %v1458
  %v3787 = vpop.f32.mrf.mxu0
  %v3788 = vadd.f32 %v3619, %v3787
  %v3789 = vpop.f32.mrf.mxu0
  %v3790 = vadd.f32 %v3621, %v3789
  %3791 = vmatmul.bf16.gmra.mxu0 %v1467
  %v3792 = vpop.f32.mrf.mxu0
  %v3793 = vadd.f32 %v3624, %v3792
  %v3794 = vpop.f32.mrf.mxu0
  %v3795 = vadd.f32 %v3626, %v3794
  %3796 = vmatmul.bf16.gmra.mxu0 %v1476
  %v3797 = vpop.f32.mrf.mxu0
  %v3798 = vadd.f32 %v3629, %v3797
  %v3799 = vpop.f32.mrf.mxu0
  %v3800 = vadd.f32 %v3631, %v3799
  %3801 = vmatmul.bf16.gmra.mxu0 %v1485
  %v3802 = vpop.f32.mrf.mxu0
  %v3803 = vadd.f32 %v3634, %v3802
  %v3804 = vpop.f32.mrf.mxu0
  %v3805 = vadd.f32 %v3636, %v3804
  %3806 = vmatmul.bf16.gmra.mxu0 %v1494
  %v3807 = vpop.f32.mrf.mxu0
  %v3808 = vadd.f32 %v3639, %v3807
  %v3809 = vpop.f32.mrf.mxu0
  %v3810 = vadd.f32 %v3641, %v3809
  %3811 = vmatmul.bf16.gmra.mxu0 %v1503
  %v3812 = vpop.f32.mrf.mxu0
  %v3813 = vadd.f32 %v3644, %v3812
  %v3814 = vpop.f32.mrf.mxu0
  %v3815 = vadd.f32 %v3646, %v3814
  %3816 = vmatmul.bf16.gmra.mxu0 %v1512
  %v3817 = vpop.f32.mrf.mxu0
  %v3818 = vadd.f32 %v3649, %v3817
  %v3819 = vpop.f32.mrf.mxu0
  %v3820 = vadd.f32 %v3651, %v3819
  %3821 = vmatmul.bf16.gmra.mxu0 %v1521
  %v3822 = vpop.f32.mrf.mxu0
  %v3823 = vadd.f32 %v3654, %v3822
  %v3824 = vpop.f32.mrf.mxu0
  %v3825 = vadd.f32 %v3656, %v3824
  %3826 = vmatmul.bf16.gmra.mxu0 %v1530
  %v3827 = vpop.f32.mrf.mxu0
  %v3828 = vadd.f32 %v3659, %v3827
  %v3829 = vpop.f32.mrf.mxu0
  %v3830 = vadd.f32 %v3661, %v3829
  %3831 = vmatmul.bf16.gmra.mxu0 %v1539
  %v3832 = vpop.f32.mrf.mxu0
  %v3833 = vadd.f32 %v3664, %v3832
  %v3834 = vpop.f32.mrf.mxu0
  %v3835 = vadd.f32 %v3666, %v3834
  %3836 = vmatmul.bf16.gmra.mxu0 %v1548
  %v3837 = vpop.f32.mrf.mxu0
  %v3838 = vadd.f32 %v3669, %v3837
  %v3839 = vpop.f32.mrf.mxu0
  %v3840 = vadd.f32 %v3671, %v3839
  %3841 = vmatmul.bf16.gmra.mxu0 %v1557
  %v3842 = vpop.f32.mrf.mxu0
  %v3843 = vadd.f32 %v3674, %v3842
  %v3844 = vpop.f32.mrf.mxu0
  %v3845 = vadd.f32 %v3676, %v3844
  %3846 = vmatmul.bf16.gmra.mxu0 %v1566
  %v3847 = vpop.f32.mrf.mxu0
  %v3848 = vadd.f32 %v3679, %v3847
  %v3849 = vpop.f32.mrf.mxu0
  %v3850 = vadd.f32 %v3681, %v3849
  %3851 = vmatmul.bf16.gmra.mxu0 %v1575
  %v3852 = vpop.f32.mrf.mxu0
  %v3853 = vadd.f32 %v3684, %v3852
  %v3854 = vpop.f32.mrf.mxu0
  %v3855 = vadd.f32 %v3686, %v3854
  %3856 = vmatmul.bf16.gmra.mxu0 %v1584
  %v3857 = vpop.f32.mrf.mxu0
  %v3858 = vadd.f32 %v3689, %v3857
  %v3859 = vpop.f32.mrf.mxu0
  %v3860 = vadd.f32 %v3691, %v3859
  %3861 = vmatmul.bf16.gmra.mxu0 %v1593
  %v3862 = vpop.f32.mrf.mxu0
  %v3863 = vadd.f32 %v3694, %v3862
  %v3864 = vpop.f32.mrf.mxu0
  %v3865 = vadd.f32 %v3696, %v3864
  %3866 = vmatmul.bf16.gmra.mxu0 %v1602
  %v3867 = vpop.f32.mrf.mxu0
  %v3868 = vadd.f32 %v3699, %v3867
  %v3869 = vpop.f32.mrf.mxu0
  %v3870 = vadd.f32 %v3701, %v3869
  %3871 = vmatmul.bf16.gmra.mxu0 %v1611
  %v3872 = vpop.f32.mrf.mxu0
  %v3873 = vadd.f32 %v3704, %v3872
  %v3874 = vpop.f32.mrf.mxu0
  %v3875 = vadd.f32 %v3706, %v3874
  %3876 = vmatmul.bf16.gmra.mxu0 %v1620
  %v3877 = vpop.f32.mrf.mxu0
  %v3878 = vadd.f32 %v3709, %v3877
  %v3879 = vpop.f32.mrf.mxu0
  %v3880 = vadd.f32 %v3711, %v3879
  %3881 = vmatmul.bf16.gmra.mxu0 %v1629
  %v3882 = vpop.f32.mrf.mxu0
  %v3883 = vadd.f32 %v3714, %v3882
  %v3884 = vpop.f32.mrf.mxu0
  %v3885 = vadd.f32 %v3716, %v3884
  %3886 = vmatmul.bf16.gmra.mxu0 %v1638
  %v3887 = vpop.f32.mrf.mxu0
  %v3888 = vadd.f32 %v3719, %v3887
  %v3889 = vpop.f32.mrf.mxu0
  %v3890 = vadd.f32 %v3721, %v3889
  %3891 = vmatmul.bf16.gmra.mxu0 %v1647
  %v3892 = vpop.f32.mrf.mxu0
  %v3893 = vadd.f32 %v3724, %v3892
  %v3894 = vpop.f32.mrf.mxu0
  %v3895 = vadd.f32 %v3726, %v3894
  %3896 = vmatmul.bf16.gmra.mxu0 %v1656
  %v3897 = vpop.f32.mrf.mxu0
  %v3898 = vadd.f32 %v3729, %v3897
  %v3899 = vpop.f32.mrf.mxu0
  %v3900 = vadd.f32 %v3731, %v3899
  %3901 = vmatmul.bf16.gmra.mxu0 %v1665
  %v3902 = vpop.f32.mrf.mxu0
  %v3903 = vadd.f32 %v3734, %v3902
  %v3904 = vpop.f32.mrf.mxu0
  %v3905 = vadd.f32 %v3736, %v3904
  %3906 = vdwg.mxu0
  %v3907 = vtanh.pop %v3748
  %v3908 = vtanh.pop %v3750
  %v3909 = vtanh.pop %v3753
  %v3910 = vtanh.pop %v3755
  %v3911 = vtanh.pop %v3758
  %v3912 = vtanh.pop %v3760
  %v3913 = vtanh.pop %v3763
  %v3914 = vtanh.pop %v3765
  %v3915 = vtanh.pop %v3768
  %v3916 = vtanh.pop %v3770
  %v3917 = vtanh.pop %v3773
  %v3918 = vtanh.pop %v3775
  %v3919 = vtanh.pop %v3778
  %v3920 = vtanh.pop %v3780
  %v3921 = vtanh.pop %v3783
  %v3922 = vtanh.pop %v3785
  %v3923 = vtanh.pop %v3788
  %v3924 = vtanh.pop %v3790
  %v3925 = vtanh.pop %v3793
  %v3926 = vtanh.pop %v3795
  %v3927 = vtanh.pop %v3798
  %v3928 = vtanh.pop %v3800
  %v3929 = vtanh.pop %v3803
  %v3930 = vtanh.pop %v3805
  %v3931 = vtanh.pop %v3808
  %v3932 = vtanh.pop %v3810
  %v3933 = vtanh.pop %v3813
  %v3934 = vtanh.pop %v3815
  %v3935 = vtanh.pop %v3818
  %v3936 = vtanh.pop %v3820
  %v3937 = vtanh.pop %v3823
  %v3938 = vtanh.pop %v3825
  %v3939 = vtanh.pop %v3828
  %v3940 = vtanh.pop %v3830
  %v3941 = vtanh.pop %v3833
  %v3942 = vtanh.pop %v3835
  %v3943 = vtanh.pop %v3838
  %v3944 = vtanh.pop %v3840
  %v3945 = vtanh.pop %v3843
  %v3946 = vtanh.pop %v3845
  %v3947 = vtanh.pop %v3848
  %v3948 = vtanh.pop %v3850
  %v3949 = vtanh.pop %v3853
  %v3950 = vtanh.pop %v3855
  %v3951 = vtanh.pop %v3858
  %v3952 = vtanh.pop %v3860
  %v3953 = vtanh.pop %v3863
  %v3954 = vtanh.pop %v3865
  %v3955 = vtanh.pop %v3868
  %v3956 = vtanh.pop %v3870
  %v3957 = vtanh.pop %v3873
  %v3958 = vtanh.pop %v3875
  %v3959 = vtanh.pop %v3878
  %v3960 = vtanh.pop %v3880
  %v3961 = vtanh.pop %v3883
  %v3962 = vtanh.pop %v3885
  %v3963 = vtanh.pop %v3888
  %v3964 = vtanh.pop %v3890
  %v3965 = vtanh.pop %v3893
  %v3966 = vtanh.pop %v3895
  %v3967 = vtanh.pop %v3898
  %v3968 = vtanh.pop %v3900
  %v3969 = vtanh.pop %v3903
  %v3970 = vtanh.pop %v3905
  %3971 = vst [vmem:[%s3] sm:$0xff] %v3907
  %3972 = vst [vmem:[%s3 + $0x8] sm:$0xff] %v3908
  %3973 = vst [vmem:[%s3 + $0x10] sm:$0xff] %v3909
  %3974 = vst [vmem:[%s3 + $0x18] sm:$0xff] %v3910
  %3975 = vst [vmem:[%s3 + $0x20] sm:$0xff] %v3911
  %3976 = vst [vmem:[%s3 + $0x28] sm:$0xff] %v3912
  %3977 = vst [vmem:[%s3 + $0x30] sm:$0xff] %v3913
  %3978 = vst [vmem:[%s3 + $0x38] sm:$0xff] %v3914
  %3979 = vst [vmem:[%s3 + $0x40] sm:$0xff] %v3915
  %3980 = vst [vmem:[%s3 + $0x48] sm:$0xff] %v3916
  %3981 = vst [vmem:[%s3 + $0x50] sm:$0xff] %v3917
  %3982 = vst [vmem:[%s3 + $0x58] sm:$0xff] %v3918
  %3983 = vst [vmem:[%s3 + $0x60] sm:$0xff] %v3919
  %3984 = vst [vmem:[%s3 + $0x68] sm:$0xff] %v3920
  %3985 = vst [vmem:[%s3 + $0x70] sm:$0xff] %v3921
  %3986 = vst [vmem:[%s3 + $0x78] sm:$0xff] %v3922
  %3987 = vst [vmem:[%s3 + $0x80] sm:$0xff] %v3923
  %3988 = vst [vmem:[%s3 + $0x88] sm:$0xff] %v3924
  %3989 = vst [vmem:[%s3 + $0x90] sm:$0xff] %v3925
  %3990 = vst [vmem:[%s3 + $0x98] sm:$0xff] %v3926
  %3991 = vst [vmem:[%s3 + $0xa0] sm:$0xff] %v3927
  %3992 = vst [vmem:[%s3 + $0xa8] sm:$0xff] %v3928
  %3993 = vst [vmem:[%s3 + $0xb0] sm:$0xff] %v3929
  %3994 = vst [vmem:[%s3 + $0xb8] sm:$0xff] %v3930
  %3995 = vst [vmem:[%s3 + $0xc0] sm:$0xff] %v3931
  %3996 = vst [vmem:[%s3 + $0xc8] sm:$0xff] %v3932
  %3997 = vst [vmem:[%s3 + $0xd0] sm:$0xff] %v3933
  %3998 = vst [vmem:[%s3 + $0xd8] sm:$0xff] %v3934
  %3999 = vst [vmem:[%s3 + $0xe0] sm:$0xff] %v3935
  %4000 = vst [vmem:[%s3 + $0xe8] sm:$0xff] %v3936
  %4001 = vst [vmem:[%s3 + $0xf0] sm:$0xff] %v3937
  %4002 = vst [vmem:[%s3 + $0xf8] sm:$0xff] %v3938
  %4003 = vst [vmem:[%s3 + $0x100] sm:$0xff] %v3939
  %4004 = vst [vmem:[%s3 + $0x108] sm:$0xff] %v3940
  %4005 = vst [vmem:[%s3 + $0x110] sm:$0xff] %v3941
  %4006 = vst [vmem:[%s3 + $0x118] sm:$0xff] %v3942
  %4007 = vst [vmem:[%s3 + $0x120] sm:$0xff] %v3943
  %4008 = vst [vmem:[%s3 + $0x128] sm:$0xff] %v3944
  %4009 = vst [vmem:[%s3 + $0x130] sm:$0xff] %v3945
  %4010 = vst [vmem:[%s3 + $0x138] sm:$0xff] %v3946
  %4011 = vst [vmem:[%s3 + $0x140] sm:$0xff] %v3947
  %4012 = vst [vmem:[%s3 + $0x148] sm:$0xff] %v3948
  %4013 = vst [vmem:[%s3 + $0x150] sm:$0xff] %v3949
  %4014 = vst [vmem:[%s3 + $0x158] sm:$0xff] %v3950
  %4015 = vst [vmem:[%s3 + $0x160] sm:$0xff] %v3951
  %4016 = vst [vmem:[%s3 + $0x168] sm:$0xff] %v3952
  %4017 = vst [vmem:[%s3 + $0x170] sm:$0xff] %v3953
  %4018 = vst [vmem:[%s3 + $0x178] sm:$0xff] %v3954
  %4019 = vst [vmem:[%s3 + $0x180] sm:$0xff] %v3955
  %4020 = vst [vmem:[%s3 + $0x188] sm:$0xff] %v3956
  %4021 = vst [vmem:[%s3 + $0x190] sm:$0xff] %v3957
  %4022 = vst [vmem:[%s3 + $0x198] sm:$0xff] %v3958
  %4023 = vst [vmem:[%s3 + $0x1a0] sm:$0xff] %v3959
  %4024 = vst [vmem:[%s3 + $0x1a8] sm:$0xff] %v3960
  %4025 = vst [vmem:[%s3 + $0x1b0] sm:$0xff] %v3961
  %4026 = vst [vmem:[%s3 + $0x1b8] sm:$0xff] %v3962
  %4027 = vst [vmem:[%s3 + $0x1c0] sm:$0xff] %v3963
  %4028 = vst [vmem:[%s3 + $0x1c8] sm:$0xff] %v3964
  %4029 = vst [vmem:[%s3 + $0x1d0] sm:$0xff] %v3965
  %4030 = vst [vmem:[%s3 + $0x1d8] sm:$0xff] %v3966
  %4031 = vst [vmem:[%s3 + $0x1e0] sm:$0xff] %v3967
  %4032 = vst [vmem:[%s3 + $0x1e8] sm:$0xff] %v3968
  %4033 = vst [vmem:[%s3 + $0x1f0] sm:$0xff] %v3969
  %4034 = vst [vmem:[%s3 + $0x1f8] sm:$0xff] %v3970
  // Predicated region
  $region14: #{generator_forward.11} parent=0 // pred_check
    _
  $region15: #{generator_forward.11} parent=0 // pred_check_branch
    %4036 = sbr.rel (0) target = $region17
  $region16: #{generator_forward.11} parent=0 // pred_region
    _
  $region17: #{generator_forward.11} parent=0 // pred_fallthru
    _
  // Predicated region
  $region18: #{generator_forward.11} parent=0 // pred_check
    _
  $region19: #{generator_forward.11} parent=0 // pred_check_branch
    %4038 = sbr.rel (0) target = $region21
  $region20: #{generator_forward.11} parent=0 // pred_region
    _
  $region21: #{generator_forward.11} parent=0 // pred_fallthru
    _

</llo_original>
